<compile_context>
chip_gen: v6e
topology: v6e:2x2x1
jax: 0.10.0
libtpu: 0.0.40
codegen_flags: <defaults>
</compile_context>

<pallas_src>
import jax
import jax.numpy as jnp
import numpy as np
from jax.experimental import pallas as pl
from jax.experimental.pallas import tpu as pltpu

# ---- KAN hyper-parameters (fixed by Model.__init__) -------------------------
GRID_SIZE = 5
SPLINE_ORDER = 3
GRID_RANGE = (-1.0, 1.0)
SCALE_NOISE = 0.1
SCALE_BASE = 1.0
SCALE_SPLINE = 1.0
N_GRID_PTS = GRID_SIZE + 2 * SPLINE_ORDER + 1   # 12 knots per input feature
N_COEFF = GRID_SIZE + SPLINE_ORDER              # 8 B-spline basis functions
N_FEAT = 1 + N_COEFF                            # silu(x) + 8 spline bases
GRID_H = (GRID_RANGE[1] - GRID_RANGE[0]) / GRID_SIZE
# Uniform knot positions as compile-time Python floats (shared with reference).
GRID_PTS = [GRID_RANGE[0] + (j - SPLINE_ORDER) * GRID_H for j in range(N_GRID_PTS)]


# ---- In-kernel KAN layer math ------------------------------------------------
def _spline_bases(x):
    """x: (B, in) f32 -> list of N_COEFF (B, in) f32 B-spline bases.

    Uniform grid => knots / Cox-de-Boor denominators are compile-time scalar
    constants (multiply by 1/(k*h), no divides, no grid tensor)."""
    g = GRID_PTS
    bases = [
        jnp.logical_and(x >= g[j], x < g[j + 1]).astype(jnp.float32)
        for j in range(N_GRID_PTS - 1)
    ]
    for k in range(1, SPLINE_ORDER + 1):
        inv = 1.0 / (k * GRID_H)
        bases = [
            ((x - g[j]) * inv) * bases[j]
            + ((g[j + k + 1] - x) * inv) * bases[j + 1]
            for j in range(N_GRID_PTS - k - 1)
        ]
    return bases  # len == N_COEFF


def _kan_layer_accum(x, w_ref, c):
    """Narrow-input layer (in=16): accumulate 9 partial matmuls.

    Avoids the lane-misaligned 9x16-lane concat; weight rows are sliced with
    static pl.ds.  x: (B, in) f32; w_ref[c]: (N_FEAT*in, out) bf16 -> (B, out) f32."""
    in_f = x.shape[-1]
    acc = jnp.dot(jax.nn.silu(x).astype(jnp.bfloat16),
                  w_ref[c, pl.ds(0, in_f), :],
                  preferred_element_type=jnp.float32)
    for j, b in enumerate(_spline_bases(x)):
        acc = acc + jnp.dot(b.astype(jnp.bfloat16),
                            w_ref[c, pl.ds((1 + j) * in_f, in_f), :],
                            preferred_element_type=jnp.float32)
    return acc


def _kan_layer_wide(x, w_ref, c):
    """Wide-input layer (in=256/128): one wide-K matmul on the concatenated slab.

    Every piece is a multiple of 128 lanes, so the concat is layout-aligned."""
    feats = jnp.concatenate([jax.nn.silu(x)] + _spline_bases(x), axis=-1)
    return jnp.dot(feats.astype(jnp.bfloat16), w_ref[c],
                   preferred_element_type=jnp.float32)


def fused_kan_kernel(x_ref, w1_ref, w2_ref, w3_ref, out_ref):
    """One grid step = a chunk of channels, each through 3 chained KAN layers.

    Intermediates (B,256)/(B,128) never leave vregs/VMEM.
    x_ref:   (chunk, B, seq_len)          f32
    w*_ref:  (chunk, N_FEAT*in_l, out_l)  bf16  ([base | spline] rows)
    out_ref: (chunk, B, pred_len)         f32
    """
    chunk = x_ref.shape[0]
    for c in range(chunk):                       # static unroll over channels
        h = x_ref[c]                             # (B, S) f32
        h = _kan_layer_accum(h, w1_ref, c)       # (B, 256)
        h = _kan_layer_wide(h, w2_ref, c)        # (B, 128)
        h = _kan_layer_wide(h, w3_ref, c)        # (B, pred_len)
        out_ref[c] = h.astype(out_ref.dtype)


def fused_kan_call(x_cbs, w1, w2, w3):
    """x_cbs: (C, B, S) f32;  w_l: (C, N_FEAT*in_l, out_l) bf16  ->  (C, B, P) f32."""
    C, B, S = x_cbs.shape
    P = int(w3.shape[-1])

    # 2 "parallel" grid steps when channel count allows: v7x's two TensorCores
    # each take one, single-TC v5e/v6e only pay 2 per-step overheads.
    n_steps = 2 if (C % 2 == 0 and C >= 2) else 1
    chunk = C // n_steps

    # Advisory cost estimate (kernel is weight-DMA / overhead bound here).
    flops = int(2 * B * C * sum(int(w.shape[1]) * int(w.shape[2]) for w in (w1, w2, w3)))
    transcendentals = int(B * C * (S + int(w1.shape[2]) + int(w2.shape[2])))
    bytes_accessed = int(sum(int(a.size) * a.dtype.itemsize for a in (x_cbs, w1, w2, w3))
                         + C * B * P * 4)

    return pl.pallas_call(
        fused_kan_kernel,
        out_shape=jax.ShapeDtypeStruct((C, B, P), jnp.float32),
        grid=(n_steps,),
        in_specs=[
            pl.BlockSpec((chunk, B, S), lambda g: (g, 0, 0)),
            pl.BlockSpec((chunk,) + tuple(w1.shape[1:]), lambda g: (g, 0, 0)),
            pl.BlockSpec((chunk,) + tuple(w2.shape[1:]), lambda g: (g, 0, 0)),
            pl.BlockSpec((chunk,) + tuple(w3.shape[1:]), lambda g: (g, 0, 0)),
        ],
        out_specs=pl.BlockSpec((chunk, B, P), lambda g: (g, 0, 0)),
        compiler_params=pltpu.CompilerParams(
            dimension_semantics=("parallel",)),
        cost_estimate=pl.CostEstimate(
            flops=flops, transcendentals=transcendentals,
            bytes_accessed=bytes_accessed),
    )(x_cbs, w1, w2, w3)


# ---- Model forward (matches PyTorch Model.forward semantics) -----------------
@jax.jit
def model_forward(x, w1, w2, w3):
    """x: (B, seq_len, C) -> (B, seq_len + pred_len, C)."""
    x_cbs = jnp.transpose(x, (2, 0, 1))          # (C, B, seq_len)
    pred = fused_kan_call(x_cbs, w1, w2, w3)     # (C, B, pred_len)
    pred = jnp.transpose(pred, (1, 2, 0))        # (B, pred_len, C)
    # output[:, :seq_len] = x ; output[:, -pred_len:, i] = pred_i
    return jnp.concatenate([x, pred], axis=1)


# ---- Pure-JAX reference (independent math path, f32, same bf16 weights) ------
def _kan_layer_ref(x, w):
    in_f = x.shape[1]
    out_f = w.shape[1]
    grid = jnp.asarray(np.array(GRID_PTS, dtype=np.float32))[None, None, :]   # (1,1,12)
    xb = x[:, :, None]                                                        # (B, in, 1)
    bases = ((xb >= grid[..., :-1]) & (xb < grid[..., 1:])).astype(x.dtype)
    for k in range(1, SPLINE_ORDER + 1):
        bases = (
            (xb - grid[..., :-(k + 1)])
            / (grid[..., k:-1] - grid[..., :-(k + 1)]) * bases[..., :-1]
            + (grid[..., k + 1:] - xb)
            / (grid[..., k + 1:] - grid[..., 1:-k]) * bases[..., 1:]
        )
    wf = w.astype(jnp.float32)
    wb = wf[:in_f]                                             # (in, out)
    wsp = wf[in_f:].reshape(N_COEFF, in_f, out_f)              # (coeff, in, out)
    return jax.nn.silu(x) @ wb + jnp.einsum("bic,cio->bo", bases, wsp)


def model_forward_ref(x, w1, w2, w3):
    B, S, C = x.shape
    preds = []
    for c in range(C):
        h = x[:, :, c]
        for w in (w1[c], w2[c], w3[c]):
            h = _kan_layer_ref(h, w)
        preds.append(h)
    pred = jnp.stack(preds, axis=-1)
    return jnp.concatenate([x, pred], axis=1)


# ---- Parameter construction (deterministic, synthetic) ------------------------
def _init_layer_weight(key, in_f, out_f):
    """Combined [base | spline] weight, pre-transposed/flattened for the kernel."""
    k1, k2, k3 = jax.random.split(key, 3)
    bound = 1.0 / np.sqrt(in_f)
    base_w = SCALE_BASE * jax.random.uniform(
        k1, (out_f, in_f), jnp.float32, -bound, bound)
    spline_w = (SCALE_NOISE / GRID_SIZE) * jax.random.normal(
        k2, (out_f, in_f, N_COEFF), jnp.float32)
    spline_scaler = SCALE_SPLINE * jax.random.uniform(
        k3, (out_f, in_f), jnp.float32, -bound, bound)
    scaled = spline_w * spline_scaler[:, :, None]              # (out, in, coeff)
    wb = base_w.T                                              # (in, out)
    wsp = jnp.transpose(scaled, (2, 1, 0))                     # (coeff, in, out)
    return jnp.concatenate([wb, wsp.reshape(N_COEFF * in_f, out_f)], axis=0)


def init_model_params(key, seq_len, pred_len, channels):
    """Stacked per-channel weights: 3 arrays of shape (C, N_FEAT*in_l, out_l), bf16."""
    layers_hidden = [seq_len, 256, 128, pred_len]
    stacked = []
    for li, (fin, fout) in enumerate(zip(layers_hidden[:-1], layers_hidden[1:])):
        per_ch = []
        for c in range(channels):
            ch_key = jax.random.fold_in(jax.random.fold_in(key, c), li)
            per_ch.append(_init_layer_weight(ch_key, fin, fout))
        # bf16 storage halves the compulsory weight-DMA that dominates runtime.
        stacked.append(jnp.stack(per_ch, axis=0).astype(jnp.bfloat16))
    return tuple(stacked)   # (W1, W2, W3)


if __name__ == "__main__":
    # Small config consistent with the module: features='M', enc_in=4
    batch, seq_len, pred_len, channels = 2, 16, 8, 4

    key = jax.random.PRNGKey(0)
    x = jax.random.uniform(key, (batch, seq_len, channels), jnp.float32, -1.0, 1.0)

    w1, w2, w3 = init_model_params(jax.random.PRNGKey(1), seq_len, pred_len, channels)

    out = jax.block_until_ready(model_forward(x, w1, w2, w3))
    assert out.shape == (batch, seq_len + pred_len, channels)

    # Self-check against the pure-f32-math reference using the same bf16-valued
    # weights.  Tolerance loosened because the kernel feeds bf16 feature slabs
    # to the MXU (f32 accumulate); f32 prefix rows of the output match exactly.
    ref = jax.block_until_ready(model_forward_ref(x, w1, w2, w3))
    np.testing.assert_allclose(np.asarray(out), np.asarray(ref), rtol=4e-2, atol=4e-2)

    # TODO(synk): regularization_loss (training-time penalty on raw spline
    # weights) is not part of the inference forward pass and is not implemented.
    print("KERNEL_OK")
</pallas_src>

<mosaic_0001>
module attributes {stable_mosaic.version = 11 : i64} {
  func.func @fused_kan_kernel(%arg0: i32, %arg1: memref<2x2x16xf32, #tpu.memory_space<vmem>>, %arg2: memref<2x144x256xbf16, #tpu.memory_space<vmem>>, %arg3: memref<2x2304x128xbf16, #tpu.memory_space<vmem>>, %arg4: memref<2x1152x8xbf16, #tpu.memory_space<vmem>>, %arg5: memref<2x2x8xf32, #tpu.memory_space<vmem>>) attributes {dimension_semantics = [#tpu.dimension_semantics<parallel>], iteration_bounds = array<i64: 2>, scalar_prefetch = 0 : i64, scratch_operands = 0 : i64, tpu.core_type = #tpu.core_type<tc>, window_params = [{transform_indices = @transform_0, window_bounds = array<i64: 2, 2, 16>}, {transform_indices = @transform_1, window_bounds = array<i64: 2, 144, 256>}, {transform_indices = @transform_2, window_bounds = array<i64: 2, 2304, 128>}, {transform_indices = @transform_3, window_bounds = array<i64: 2, 1152, 8>}, {transform_indices = @transform_4, window_bounds = array<i64: 2, 2, 8>}]} {
    %c0 = arith.constant 0 : index
    %c0_0 = arith.constant 0 : index
    %c0_1 = arith.constant 0 : index
    %0 = vector.load %arg1[%c0, %c0_0, %c0_1] : memref<2x2x16xf32, #tpu.memory_space<vmem>>, vector<1x2x16xf32>
    %1 = vector.shape_cast %0 : vector<1x2x16xf32> to vector<2x16xf32>
    %2 = arith.negf %1 : vector<2x16xf32>
    %3 = math.exp %2 : vector<2x16xf32>
    %cst = arith.constant 1.000000e+00 : f32
    %4 = vector.broadcast %cst : f32 to vector<2x16xf32>
    %5 = arith.addf %4, %3 : vector<2x16xf32>
    %6 = arith.divf %4, %5 : vector<2x16xf32>
    %7 = arith.mulf %1, %6 : vector<2x16xf32>
    %8 = arith.truncf %7 : vector<2x16xf32> to vector<2x16xbf16>
    %c0_2 = arith.constant 0 : index
    %c0_3 = arith.constant 0 : index
    %c0_4 = arith.constant 0 : index
    %9 = vector.load %arg2[%c0_2, %c0_3, %c0_4] : memref<2x144x256xbf16, #tpu.memory_space<vmem>>, vector<1x16x256xbf16>
    %10 = vector.shape_cast %9 : vector<1x16x256xbf16> to vector<16x256xbf16>
    %cst_5 = arith.constant dense<0.000000e+00> : vector<2x256xf32>
    %11 = tpu.matmul %8, %10, %cst_5 {dimension_numbers = #tpu.dot_dimension_numbers<[1], [0], [0], [1], [0, 0, 1, 1], [], []>} : vector<2x16xbf16>, vector<16x256xbf16>, vector<2x256xf32> -> vector<2x256xf32>
    %cst_6 = arith.constant -2.200000e+00 : f32
    %12 = vector.broadcast %cst_6 : f32 to vector<2x16xf32>
    %13 = arith.cmpf oge, %1, %12 : vector<2x16xf32>
    %cst_7 = arith.constant -1.800000e+00 : f32
    %14 = vector.broadcast %cst_7 : f32 to vector<2x16xf32>
    %15 = arith.cmpf olt, %1, %14 : vector<2x16xf32>
    %16 = arith.andi %13, %15 : vector<2x16xi1>
    %17 = arith.extui %16 : vector<2x16xi1> to vector<2x16xi32>
    %18 = arith.sitofp %17 : vector<2x16xi32> to vector<2x16xf32>
    %cst_8 = arith.constant -1.800000e+00 : f32
    %19 = vector.broadcast %cst_8 : f32 to vector<2x16xf32>
    %20 = arith.cmpf oge, %1, %19 : vector<2x16xf32>
    %cst_9 = arith.constant -1.400000e+00 : f32
    %21 = vector.broadcast %cst_9 : f32 to vector<2x16xf32>
    %22 = arith.cmpf olt, %1, %21 : vector<2x16xf32>
    %23 = arith.andi %20, %22 : vector<2x16xi1>
    %24 = arith.extui %23 : vector<2x16xi1> to vector<2x16xi32>
    %25 = arith.sitofp %24 : vector<2x16xi32> to vector<2x16xf32>
    %cst_10 = arith.constant -1.400000e+00 : f32
    %26 = vector.broadcast %cst_10 : f32 to vector<2x16xf32>
    %27 = arith.cmpf oge, %1, %26 : vector<2x16xf32>
    %cst_11 = arith.constant -1.000000e+00 : f32
    %28 = vector.broadcast %cst_11 : f32 to vector<2x16xf32>
    %29 = arith.cmpf olt, %1, %28 : vector<2x16xf32>
    %30 = arith.andi %27, %29 : vector<2x16xi1>
    %31 = arith.extui %30 : vector<2x16xi1> to vector<2x16xi32>
    %32 = arith.sitofp %31 : vector<2x16xi32> to vector<2x16xf32>
    %cst_12 = arith.constant -1.000000e+00 : f32
    %33 = vector.broadcast %cst_12 : f32 to vector<2x16xf32>
    %34 = arith.cmpf oge, %1, %33 : vector<2x16xf32>
    %cst_13 = arith.constant -6.000000e-01 : f32
    %35 = vector.broadcast %cst_13 : f32 to vector<2x16xf32>
    %36 = arith.cmpf olt, %1, %35 : vector<2x16xf32>
    %37 = arith.andi %34, %36 : vector<2x16xi1>
    %38 = arith.extui %37 : vector<2x16xi1> to vector<2x16xi32>
    %39 = arith.sitofp %38 : vector<2x16xi32> to vector<2x16xf32>
    %cst_14 = arith.constant -6.000000e-01 : f32
    %40 = vector.broadcast %cst_14 : f32 to vector<2x16xf32>
    %41 = arith.cmpf oge, %1, %40 : vector<2x16xf32>
    %cst_15 = arith.constant -2.000000e-01 : f32
    %42 = vector.broadcast %cst_15 : f32 to vector<2x16xf32>
    %43 = arith.cmpf olt, %1, %42 : vector<2x16xf32>
    %44 = arith.andi %41, %43 : vector<2x16xi1>
    %45 = arith.extui %44 : vector<2x16xi1> to vector<2x16xi32>
    %46 = arith.sitofp %45 : vector<2x16xi32> to vector<2x16xf32>
    %cst_16 = arith.constant -2.000000e-01 : f32
    %47 = vector.broadcast %cst_16 : f32 to vector<2x16xf32>
    %48 = arith.cmpf oge, %1, %47 : vector<2x16xf32>
    %cst_17 = arith.constant 2.000000e-01 : f32
    %49 = vector.broadcast %cst_17 : f32 to vector<2x16xf32>
    %50 = arith.cmpf olt, %1, %49 : vector<2x16xf32>
    %51 = arith.andi %48, %50 : vector<2x16xi1>
    %52 = arith.extui %51 : vector<2x16xi1> to vector<2x16xi32>
    %53 = arith.sitofp %52 : vector<2x16xi32> to vector<2x16xf32>
    %cst_18 = arith.constant 2.000000e-01 : f32
    %54 = vector.broadcast %cst_18 : f32 to vector<2x16xf32>
    %55 = arith.cmpf oge, %1, %54 : vector<2x16xf32>
    %cst_19 = arith.constant 6.000000e-01 : f32
    %56 = vector.broadcast %cst_19 : f32 to vector<2x16xf32>
    %57 = arith.cmpf olt, %1, %56 : vector<2x16xf32>
    %58 = arith.andi %55, %57 : vector<2x16xi1>
    %59 = arith.extui %58 : vector<2x16xi1> to vector<2x16xi32>
    %60 = arith.sitofp %59 : vector<2x16xi32> to vector<2x16xf32>
    %cst_20 = arith.constant 6.000000e-01 : f32
    %61 = vector.broadcast %cst_20 : f32 to vector<2x16xf32>
    %62 = arith.cmpf oge, %1, %61 : vector<2x16xf32>
    %cst_21 = arith.constant 1.000000e+00 : f32
    %63 = vector.broadcast %cst_21 : f32 to vector<2x16xf32>
    %64 = arith.cmpf olt, %1, %63 : vector<2x16xf32>
    %65 = arith.andi %62, %64 : vector<2x16xi1>
    %66 = arith.extui %65 : vector<2x16xi1> to vector<2x16xi32>
    %67 = arith.sitofp %66 : vector<2x16xi32> to vector<2x16xf32>
    %cst_22 = arith.constant 1.000000e+00 : f32
    %68 = vector.broadcast %cst_22 : f32 to vector<2x16xf32>
    %69 = arith.cmpf oge, %1, %68 : vector<2x16xf32>
    %cst_23 = arith.constant 1.400000e+00 : f32
    %70 = vector.broadcast %cst_23 : f32 to vector<2x16xf32>
    %71 = arith.cmpf olt, %1, %70 : vector<2x16xf32>
    %72 = arith.andi %69, %71 : vector<2x16xi1>
    %73 = arith.extui %72 : vector<2x16xi1> to vector<2x16xi32>
    %74 = arith.sitofp %73 : vector<2x16xi32> to vector<2x16xf32>
    %cst_24 = arith.constant 1.400000e+00 : f32
    %75 = vector.broadcast %cst_24 : f32 to vector<2x16xf32>
    %76 = arith.cmpf oge, %1, %75 : vector<2x16xf32>
    %cst_25 = arith.constant 1.800000e+00 : f32
    %77 = vector.broadcast %cst_25 : f32 to vector<2x16xf32>
    %78 = arith.cmpf olt, %1, %77 : vector<2x16xf32>
    %79 = arith.andi %76, %78 : vector<2x16xi1>
    %80 = arith.extui %79 : vector<2x16xi1> to vector<2x16xi32>
    %81 = arith.sitofp %80 : vector<2x16xi32> to vector<2x16xf32>
    %cst_26 = arith.constant 1.800000e+00 : f32
    %82 = vector.broadcast %cst_26 : f32 to vector<2x16xf32>
    %83 = arith.cmpf oge, %1, %82 : vector<2x16xf32>
    %cst_27 = arith.constant 2.200000e+00 : f32
    %84 = vector.broadcast %cst_27 : f32 to vector<2x16xf32>
    %85 = arith.cmpf olt, %1, %84 : vector<2x16xf32>
    %86 = arith.andi %83, %85 : vector<2x16xi1>
    %87 = arith.extui %86 : vector<2x16xi1> to vector<2x16xi32>
    %88 = arith.sitofp %87 : vector<2x16xi32> to vector<2x16xf32>
    %cst_28 = arith.constant -2.200000e+00 : f32
    %89 = vector.broadcast %cst_28 : f32 to vector<2x16xf32>
    %90 = arith.subf %1, %89 : vector<2x16xf32>
    %cst_29 = arith.constant 2.500000e+00 : f32
    %91 = vector.broadcast %cst_29 : f32 to vector<2x16xf32>
    %92 = arith.mulf %90, %91 : vector<2x16xf32>
    %93 = arith.mulf %92, %18 : vector<2x16xf32>
    %cst_30 = arith.constant -1.400000e+00 : f32
    %94 = vector.broadcast %cst_30 : f32 to vector<2x16xf32>
    %95 = arith.subf %94, %1 : vector<2x16xf32>
    %cst_31 = arith.constant 2.500000e+00 : f32
    %96 = vector.broadcast %cst_31 : f32 to vector<2x16xf32>
    %97 = arith.mulf %95, %96 : vector<2x16xf32>
    %98 = arith.mulf %97, %25 : vector<2x16xf32>
    %99 = arith.addf %93, %98 : vector<2x16xf32>
    %cst_32 = arith.constant -1.800000e+00 : f32
    %100 = vector.broadcast %cst_32 : f32 to vector<2x16xf32>
    %101 = arith.subf %1, %100 : vector<2x16xf32>
    %cst_33 = arith.constant 2.500000e+00 : f32
    %102 = vector.broadcast %cst_33 : f32 to vector<2x16xf32>
    %103 = arith.mulf %101, %102 : vector<2x16xf32>
    %104 = arith.mulf %103, %25 : vector<2x16xf32>
    %cst_34 = arith.constant -1.000000e+00 : f32
    %105 = vector.broadcast %cst_34 : f32 to vector<2x16xf32>
    %106 = arith.subf %105, %1 : vector<2x16xf32>
    %cst_35 = arith.constant 2.500000e+00 : f32
    %107 = vector.broadcast %cst_35 : f32 to vector<2x16xf32>
    %108 = arith.mulf %106, %107 : vector<2x16xf32>
    %109 = arith.mulf %108, %32 : vector<2x16xf32>
    %110 = arith.addf %104, %109 : vector<2x16xf32>
    %cst_36 = arith.constant -1.400000e+00 : f32
    %111 = vector.broadcast %cst_36 : f32 to vector<2x16xf32>
    %112 = arith.subf %1, %111 : vector<2x16xf32>
    %cst_37 = arith.constant 2.500000e+00 : f32
    %113 = vector.broadcast %cst_37 : f32 to vector<2x16xf32>
    %114 = arith.mulf %112, %113 : vector<2x16xf32>
    %115 = arith.mulf %114, %32 : vector<2x16xf32>
    %cst_38 = arith.constant -6.000000e-01 : f32
    %116 = vector.broadcast %cst_38 : f32 to vector<2x16xf32>
    %117 = arith.subf %116, %1 : vector<2x16xf32>
    %cst_39 = arith.constant 2.500000e+00 : f32
    %118 = vector.broadcast %cst_39 : f32 to vector<2x16xf32>
    %119 = arith.mulf %117, %118 : vector<2x16xf32>
    %120 = arith.mulf %119, %39 : vector<2x16xf32>
    %121 = arith.addf %115, %120 : vector<2x16xf32>
    %cst_40 = arith.constant -1.000000e+00 : f32
    %122 = vector.broadcast %cst_40 : f32 to vector<2x16xf32>
    %123 = arith.subf %1, %122 : vector<2x16xf32>
    %cst_41 = arith.constant 2.500000e+00 : f32
    %124 = vector.broadcast %cst_41 : f32 to vector<2x16xf32>
    %125 = arith.mulf %123, %124 : vector<2x16xf32>
    %126 = arith.mulf %125, %39 : vector<2x16xf32>
    %cst_42 = arith.constant -2.000000e-01 : f32
    %127 = vector.broadcast %cst_42 : f32 to vector<2x16xf32>
    %128 = arith.subf %127, %1 : vector<2x16xf32>
    %cst_43 = arith.constant 2.500000e+00 : f32
    %129 = vector.broadcast %cst_43 : f32 to vector<2x16xf32>
    %130 = arith.mulf %128, %129 : vector<2x16xf32>
    %131 = arith.mulf %130, %46 : vector<2x16xf32>
    %132 = arith.addf %126, %131 : vector<2x16xf32>
    %cst_44 = arith.constant -6.000000e-01 : f32
    %133 = vector.broadcast %cst_44 : f32 to vector<2x16xf32>
    %134 = arith.subf %1, %133 : vector<2x16xf32>
    %cst_45 = arith.constant 2.500000e+00 : f32
    %135 = vector.broadcast %cst_45 : f32 to vector<2x16xf32>
    %136 = arith.mulf %134, %135 : vector<2x16xf32>
    %137 = arith.mulf %136, %46 : vector<2x16xf32>
    %cst_46 = arith.constant 2.000000e-01 : f32
    %138 = vector.broadcast %cst_46 : f32 to vector<2x16xf32>
    %139 = arith.subf %138, %1 : vector<2x16xf32>
    %cst_47 = arith.constant 2.500000e+00 : f32
    %140 = vector.broadcast %cst_47 : f32 to vector<2x16xf32>
    %141 = arith.mulf %139, %140 : vector<2x16xf32>
    %142 = arith.mulf %141, %53 : vector<2x16xf32>
    %143 = arith.addf %137, %142 : vector<2x16xf32>
    %cst_48 = arith.constant -2.000000e-01 : f32
    %144 = vector.broadcast %cst_48 : f32 to vector<2x16xf32>
    %145 = arith.subf %1, %144 : vector<2x16xf32>
    %cst_49 = arith.constant 2.500000e+00 : f32
    %146 = vector.broadcast %cst_49 : f32 to vector<2x16xf32>
    %147 = arith.mulf %145, %146 : vector<2x16xf32>
    %148 = arith.mulf %147, %53 : vector<2x16xf32>
    %cst_50 = arith.constant 6.000000e-01 : f32
    %149 = vector.broadcast %cst_50 : f32 to vector<2x16xf32>
    %150 = arith.subf %149, %1 : vector<2x16xf32>
    %cst_51 = arith.constant 2.500000e+00 : f32
    %151 = vector.broadcast %cst_51 : f32 to vector<2x16xf32>
    %152 = arith.mulf %150, %151 : vector<2x16xf32>
    %153 = arith.mulf %152, %60 : vector<2x16xf32>
    %154 = arith.addf %148, %153 : vector<2x16xf32>
    %cst_52 = arith.constant 2.000000e-01 : f32
    %155 = vector.broadcast %cst_52 : f32 to vector<2x16xf32>
    %156 = arith.subf %1, %155 : vector<2x16xf32>
    %cst_53 = arith.constant 2.500000e+00 : f32
    %157 = vector.broadcast %cst_53 : f32 to vector<2x16xf32>
    %158 = arith.mulf %156, %157 : vector<2x16xf32>
    %159 = arith.mulf %158, %60 : vector<2x16xf32>
    %cst_54 = arith.constant 1.000000e+00 : f32
    %160 = vector.broadcast %cst_54 : f32 to vector<2x16xf32>
    %161 = arith.subf %160, %1 : vector<2x16xf32>
    %cst_55 = arith.constant 2.500000e+00 : f32
    %162 = vector.broadcast %cst_55 : f32 to vector<2x16xf32>
    %163 = arith.mulf %161, %162 : vector<2x16xf32>
    %164 = arith.mulf %163, %67 : vector<2x16xf32>
    %165 = arith.addf %159, %164 : vector<2x16xf32>
    %cst_56 = arith.constant 6.000000e-01 : f32
    %166 = vector.broadcast %cst_56 : f32 to vector<2x16xf32>
    %167 = arith.subf %1, %166 : vector<2x16xf32>
    %cst_57 = arith.constant 2.500000e+00 : f32
    %168 = vector.broadcast %cst_57 : f32 to vector<2x16xf32>
    %169 = arith.mulf %167, %168 : vector<2x16xf32>
    %170 = arith.mulf %169, %67 : vector<2x16xf32>
    %cst_58 = arith.constant 1.400000e+00 : f32
    %171 = vector.broadcast %cst_58 : f32 to vector<2x16xf32>
    %172 = arith.subf %171, %1 : vector<2x16xf32>
    %cst_59 = arith.constant 2.500000e+00 : f32
    %173 = vector.broadcast %cst_59 : f32 to vector<2x16xf32>
    %174 = arith.mulf %172, %173 : vector<2x16xf32>
    %175 = arith.mulf %174, %74 : vector<2x16xf32>
    %176 = arith.addf %170, %175 : vector<2x16xf32>
    %cst_60 = arith.constant 1.000000e+00 : f32
    %177 = vector.broadcast %cst_60 : f32 to vector<2x16xf32>
    %178 = arith.subf %1, %177 : vector<2x16xf32>
    %cst_61 = arith.constant 2.500000e+00 : f32
    %179 = vector.broadcast %cst_61 : f32 to vector<2x16xf32>
    %180 = arith.mulf %178, %179 : vector<2x16xf32>
    %181 = arith.mulf %180, %74 : vector<2x16xf32>
    %cst_62 = arith.constant 1.800000e+00 : f32
    %182 = vector.broadcast %cst_62 : f32 to vector<2x16xf32>
    %183 = arith.subf %182, %1 : vector<2x16xf32>
    %cst_63 = arith.constant 2.500000e+00 : f32
    %184 = vector.broadcast %cst_63 : f32 to vector<2x16xf32>
    %185 = arith.mulf %183, %184 : vector<2x16xf32>
    %186 = arith.mulf %185, %81 : vector<2x16xf32>
    %187 = arith.addf %181, %186 : vector<2x16xf32>
    %cst_64 = arith.constant 1.400000e+00 : f32
    %188 = vector.broadcast %cst_64 : f32 to vector<2x16xf32>
    %189 = arith.subf %1, %188 : vector<2x16xf32>
    %cst_65 = arith.constant 2.500000e+00 : f32
    %190 = vector.broadcast %cst_65 : f32 to vector<2x16xf32>
    %191 = arith.mulf %189, %190 : vector<2x16xf32>
    %192 = arith.mulf %191, %81 : vector<2x16xf32>
    %cst_66 = arith.constant 2.200000e+00 : f32
    %193 = vector.broadcast %cst_66 : f32 to vector<2x16xf32>
    %194 = arith.subf %193, %1 : vector<2x16xf32>
    %cst_67 = arith.constant 2.500000e+00 : f32
    %195 = vector.broadcast %cst_67 : f32 to vector<2x16xf32>
    %196 = arith.mulf %194, %195 : vector<2x16xf32>
    %197 = arith.mulf %196, %88 : vector<2x16xf32>
    %198 = arith.addf %192, %197 : vector<2x16xf32>
    %cst_68 = arith.constant -2.200000e+00 : f32
    %199 = vector.broadcast %cst_68 : f32 to vector<2x16xf32>
    %200 = arith.subf %1, %199 : vector<2x16xf32>
    %cst_69 = arith.constant 1.250000e+00 : f32
    %201 = vector.broadcast %cst_69 : f32 to vector<2x16xf32>
    %202 = arith.mulf %200, %201 : vector<2x16xf32>
    %203 = arith.mulf %202, %99 : vector<2x16xf32>
    %cst_70 = arith.constant -1.000000e+00 : f32
    %204 = vector.broadcast %cst_70 : f32 to vector<2x16xf32>
    %205 = arith.subf %204, %1 : vector<2x16xf32>
    %cst_71 = arith.constant 1.250000e+00 : f32
    %206 = vector.broadcast %cst_71 : f32 to vector<2x16xf32>
    %207 = arith.mulf %205, %206 : vector<2x16xf32>
    %208 = arith.mulf %207, %110 : vector<2x16xf32>
    %209 = arith.addf %203, %208 : vector<2x16xf32>
    %cst_72 = arith.constant -1.800000e+00 : f32
    %210 = vector.broadcast %cst_72 : f32 to vector<2x16xf32>
    %211 = arith.subf %1, %210 : vector<2x16xf32>
    %cst_73 = arith.constant 1.250000e+00 : f32
    %212 = vector.broadcast %cst_73 : f32 to vector<2x16xf32>
    %213 = arith.mulf %211, %212 : vector<2x16xf32>
    %214 = arith.mulf %213, %110 : vector<2x16xf32>
    %cst_74 = arith.constant -6.000000e-01 : f32
    %215 = vector.broadcast %cst_74 : f32 to vector<2x16xf32>
    %216 = arith.subf %215, %1 : vector<2x16xf32>
    %cst_75 = arith.constant 1.250000e+00 : f32
    %217 = vector.broadcast %cst_75 : f32 to vector<2x16xf32>
    %218 = arith.mulf %216, %217 : vector<2x16xf32>
    %219 = arith.mulf %218, %121 : vector<2x16xf32>
    %220 = arith.addf %214, %219 : vector<2x16xf32>
    %cst_76 = arith.constant -1.400000e+00 : f32
    %221 = vector.broadcast %cst_76 : f32 to vector<2x16xf32>
    %222 = arith.subf %1, %221 : vector<2x16xf32>
    %cst_77 = arith.constant 1.250000e+00 : f32
    %223 = vector.broadcast %cst_77 : f32 to vector<2x16xf32>
    %224 = arith.mulf %222, %223 : vector<2x16xf32>
    %225 = arith.mulf %224, %121 : vector<2x16xf32>
    %cst_78 = arith.constant -2.000000e-01 : f32
    %226 = vector.broadcast %cst_78 : f32 to vector<2x16xf32>
    %227 = arith.subf %226, %1 : vector<2x16xf32>
    %cst_79 = arith.constant 1.250000e+00 : f32
    %228 = vector.broadcast %cst_79 : f32 to vector<2x16xf32>
    %229 = arith.mulf %227, %228 : vector<2x16xf32>
    %230 = arith.mulf %229, %132 : vector<2x16xf32>
    %231 = arith.addf %225, %230 : vector<2x16xf32>
    %cst_80 = arith.constant -1.000000e+00 : f32
    %232 = vector.broadcast %cst_80 : f32 to vector<2x16xf32>
    %233 = arith.subf %1, %232 : vector<2x16xf32>
    %cst_81 = arith.constant 1.250000e+00 : f32
    %234 = vector.broadcast %cst_81 : f32 to vector<2x16xf32>
    %235 = arith.mulf %233, %234 : vector<2x16xf32>
    %236 = arith.mulf %235, %132 : vector<2x16xf32>
    %cst_82 = arith.constant 2.000000e-01 : f32
    %237 = vector.broadcast %cst_82 : f32 to vector<2x16xf32>
    %238 = arith.subf %237, %1 : vector<2x16xf32>
    %cst_83 = arith.constant 1.250000e+00 : f32
    %239 = vector.broadcast %cst_83 : f32 to vector<2x16xf32>
    %240 = arith.mulf %238, %239 : vector<2x16xf32>
    %241 = arith.mulf %240, %143 : vector<2x16xf32>
    %242 = arith.addf %236, %241 : vector<2x16xf32>
    %cst_84 = arith.constant -6.000000e-01 : f32
    %243 = vector.broadcast %cst_84 : f32 to vector<2x16xf32>
    %244 = arith.subf %1, %243 : vector<2x16xf32>
    %cst_85 = arith.constant 1.250000e+00 : f32
    %245 = vector.broadcast %cst_85 : f32 to vector<2x16xf32>
    %246 = arith.mulf %244, %245 : vector<2x16xf32>
    %247 = arith.mulf %246, %143 : vector<2x16xf32>
    %cst_86 = arith.constant 6.000000e-01 : f32
    %248 = vector.broadcast %cst_86 : f32 to vector<2x16xf32>
    %249 = arith.subf %248, %1 : vector<2x16xf32>
    %cst_87 = arith.constant 1.250000e+00 : f32
    %250 = vector.broadcast %cst_87 : f32 to vector<2x16xf32>
    %251 = arith.mulf %249, %250 : vector<2x16xf32>
    %252 = arith.mulf %251, %154 : vector<2x16xf32>
    %253 = arith.addf %247, %252 : vector<2x16xf32>
    %cst_88 = arith.constant -2.000000e-01 : f32
    %254 = vector.broadcast %cst_88 : f32 to vector<2x16xf32>
    %255 = arith.subf %1, %254 : vector<2x16xf32>
    %cst_89 = arith.constant 1.250000e+00 : f32
    %256 = vector.broadcast %cst_89 : f32 to vector<2x16xf32>
    %257 = arith.mulf %255, %256 : vector<2x16xf32>
    %258 = arith.mulf %257, %154 : vector<2x16xf32>
    %cst_90 = arith.constant 1.000000e+00 : f32
    %259 = vector.broadcast %cst_90 : f32 to vector<2x16xf32>
    %260 = arith.subf %259, %1 : vector<2x16xf32>
    %cst_91 = arith.constant 1.250000e+00 : f32
    %261 = vector.broadcast %cst_91 : f32 to vector<2x16xf32>
    %262 = arith.mulf %260, %261 : vector<2x16xf32>
    %263 = arith.mulf %262, %165 : vector<2x16xf32>
    %264 = arith.addf %258, %263 : vector<2x16xf32>
    %cst_92 = arith.constant 2.000000e-01 : f32
    %265 = vector.broadcast %cst_92 : f32 to vector<2x16xf32>
    %266 = arith.subf %1, %265 : vector<2x16xf32>
    %cst_93 = arith.constant 1.250000e+00 : f32
    %267 = vector.broadcast %cst_93 : f32 to vector<2x16xf32>
    %268 = arith.mulf %266, %267 : vector<2x16xf32>
    %269 = arith.mulf %268, %165 : vector<2x16xf32>
    %cst_94 = arith.constant 1.400000e+00 : f32
    %270 = vector.broadcast %cst_94 : f32 to vector<2x16xf32>
    %271 = arith.subf %270, %1 : vector<2x16xf32>
    %cst_95 = arith.constant 1.250000e+00 : f32
    %272 = vector.broadcast %cst_95 : f32 to vector<2x16xf32>
    %273 = arith.mulf %271, %272 : vector<2x16xf32>
    %274 = arith.mulf %273, %176 : vector<2x16xf32>
    %275 = arith.addf %269, %274 : vector<2x16xf32>
    %cst_96 = arith.constant 6.000000e-01 : f32
    %276 = vector.broadcast %cst_96 : f32 to vector<2x16xf32>
    %277 = arith.subf %1, %276 : vector<2x16xf32>
    %cst_97 = arith.constant 1.250000e+00 : f32
    %278 = vector.broadcast %cst_97 : f32 to vector<2x16xf32>
    %279 = arith.mulf %277, %278 : vector<2x16xf32>
    %280 = arith.mulf %279, %176 : vector<2x16xf32>
    %cst_98 = arith.constant 1.800000e+00 : f32
    %281 = vector.broadcast %cst_98 : f32 to vector<2x16xf32>
    %282 = arith.subf %281, %1 : vector<2x16xf32>
    %cst_99 = arith.constant 1.250000e+00 : f32
    %283 = vector.broadcast %cst_99 : f32 to vector<2x16xf32>
    %284 = arith.mulf %282, %283 : vector<2x16xf32>
    %285 = arith.mulf %284, %187 : vector<2x16xf32>
    %286 = arith.addf %280, %285 : vector<2x16xf32>
    %cst_100 = arith.constant 1.000000e+00 : f32
    %287 = vector.broadcast %cst_100 : f32 to vector<2x16xf32>
    %288 = arith.subf %1, %287 : vector<2x16xf32>
    %cst_101 = arith.constant 1.250000e+00 : f32
    %289 = vector.broadcast %cst_101 : f32 to vector<2x16xf32>
    %290 = arith.mulf %288, %289 : vector<2x16xf32>
    %291 = arith.mulf %290, %187 : vector<2x16xf32>
    %cst_102 = arith.constant 2.200000e+00 : f32
    %292 = vector.broadcast %cst_102 : f32 to vector<2x16xf32>
    %293 = arith.subf %292, %1 : vector<2x16xf32>
    %cst_103 = arith.constant 1.250000e+00 : f32
    %294 = vector.broadcast %cst_103 : f32 to vector<2x16xf32>
    %295 = arith.mulf %293, %294 : vector<2x16xf32>
    %296 = arith.mulf %295, %198 : vector<2x16xf32>
    %297 = arith.addf %291, %296 : vector<2x16xf32>
    %cst_104 = arith.constant -2.200000e+00 : f32
    %298 = vector.broadcast %cst_104 : f32 to vector<2x16xf32>
    %299 = arith.subf %1, %298 : vector<2x16xf32>
    %cst_105 = arith.constant 0.833333313 : f32
    %300 = vector.broadcast %cst_105 : f32 to vector<2x16xf32>
    %301 = arith.mulf %299, %300 : vector<2x16xf32>
    %302 = arith.mulf %301, %209 : vector<2x16xf32>
    %cst_106 = arith.constant -6.000000e-01 : f32
    %303 = vector.broadcast %cst_106 : f32 to vector<2x16xf32>
    %304 = arith.subf %303, %1 : vector<2x16xf32>
    %cst_107 = arith.constant 0.833333313 : f32
    %305 = vector.broadcast %cst_107 : f32 to vector<2x16xf32>
    %306 = arith.mulf %304, %305 : vector<2x16xf32>
    %307 = arith.mulf %306, %220 : vector<2x16xf32>
    %308 = arith.addf %302, %307 : vector<2x16xf32>
    %cst_108 = arith.constant -1.800000e+00 : f32
    %309 = vector.broadcast %cst_108 : f32 to vector<2x16xf32>
    %310 = arith.subf %1, %309 : vector<2x16xf32>
    %cst_109 = arith.constant 0.833333313 : f32
    %311 = vector.broadcast %cst_109 : f32 to vector<2x16xf32>
    %312 = arith.mulf %310, %311 : vector<2x16xf32>
    %313 = arith.mulf %312, %220 : vector<2x16xf32>
    %cst_110 = arith.constant -2.000000e-01 : f32
    %314 = vector.broadcast %cst_110 : f32 to vector<2x16xf32>
    %315 = arith.subf %314, %1 : vector<2x16xf32>
    %cst_111 = arith.constant 0.833333313 : f32
    %316 = vector.broadcast %cst_111 : f32 to vector<2x16xf32>
    %317 = arith.mulf %315, %316 : vector<2x16xf32>
    %318 = arith.mulf %317, %231 : vector<2x16xf32>
    %319 = arith.addf %313, %318 : vector<2x16xf32>
    %cst_112 = arith.constant -1.400000e+00 : f32
    %320 = vector.broadcast %cst_112 : f32 to vector<2x16xf32>
    %321 = arith.subf %1, %320 : vector<2x16xf32>
    %cst_113 = arith.constant 0.833333313 : f32
    %322 = vector.broadcast %cst_113 : f32 to vector<2x16xf32>
    %323 = arith.mulf %321, %322 : vector<2x16xf32>
    %324 = arith.mulf %323, %231 : vector<2x16xf32>
    %cst_114 = arith.constant 2.000000e-01 : f32
    %325 = vector.broadcast %cst_114 : f32 to vector<2x16xf32>
    %326 = arith.subf %325, %1 : vector<2x16xf32>
    %cst_115 = arith.constant 0.833333313 : f32
    %327 = vector.broadcast %cst_115 : f32 to vector<2x16xf32>
    %328 = arith.mulf %326, %327 : vector<2x16xf32>
    %329 = arith.mulf %328, %242 : vector<2x16xf32>
    %330 = arith.addf %324, %329 : vector<2x16xf32>
    %cst_116 = arith.constant -1.000000e+00 : f32
    %331 = vector.broadcast %cst_116 : f32 to vector<2x16xf32>
    %332 = arith.subf %1, %331 : vector<2x16xf32>
    %cst_117 = arith.constant 0.833333313 : f32
    %333 = vector.broadcast %cst_117 : f32 to vector<2x16xf32>
    %334 = arith.mulf %332, %333 : vector<2x16xf32>
    %335 = arith.mulf %334, %242 : vector<2x16xf32>
    %cst_118 = arith.constant 6.000000e-01 : f32
    %336 = vector.broadcast %cst_118 : f32 to vector<2x16xf32>
    %337 = arith.subf %336, %1 : vector<2x16xf32>
    %cst_119 = arith.constant 0.833333313 : f32
    %338 = vector.broadcast %cst_119 : f32 to vector<2x16xf32>
    %339 = arith.mulf %337, %338 : vector<2x16xf32>
    %340 = arith.mulf %339, %253 : vector<2x16xf32>
    %341 = arith.addf %335, %340 : vector<2x16xf32>
    %cst_120 = arith.constant -6.000000e-01 : f32
    %342 = vector.broadcast %cst_120 : f32 to vector<2x16xf32>
    %343 = arith.subf %1, %342 : vector<2x16xf32>
    %cst_121 = arith.constant 0.833333313 : f32
    %344 = vector.broadcast %cst_121 : f32 to vector<2x16xf32>
    %345 = arith.mulf %343, %344 : vector<2x16xf32>
    %346 = arith.mulf %345, %253 : vector<2x16xf32>
    %cst_122 = arith.constant 1.000000e+00 : f32
    %347 = vector.broadcast %cst_122 : f32 to vector<2x16xf32>
    %348 = arith.subf %347, %1 : vector<2x16xf32>
    %cst_123 = arith.constant 0.833333313 : f32
    %349 = vector.broadcast %cst_123 : f32 to vector<2x16xf32>
    %350 = arith.mulf %348, %349 : vector<2x16xf32>
    %351 = arith.mulf %350, %264 : vector<2x16xf32>
    %352 = arith.addf %346, %351 : vector<2x16xf32>
    %cst_124 = arith.constant -2.000000e-01 : f32
    %353 = vector.broadcast %cst_124 : f32 to vector<2x16xf32>
    %354 = arith.subf %1, %353 : vector<2x16xf32>
    %cst_125 = arith.constant 0.833333313 : f32
    %355 = vector.broadcast %cst_125 : f32 to vector<2x16xf32>
    %356 = arith.mulf %354, %355 : vector<2x16xf32>
    %357 = arith.mulf %356, %264 : vector<2x16xf32>
    %cst_126 = arith.constant 1.400000e+00 : f32
    %358 = vector.broadcast %cst_126 : f32 to vector<2x16xf32>
    %359 = arith.subf %358, %1 : vector<2x16xf32>
    %cst_127 = arith.constant 0.833333313 : f32
    %360 = vector.broadcast %cst_127 : f32 to vector<2x16xf32>
    %361 = arith.mulf %359, %360 : vector<2x16xf32>
    %362 = arith.mulf %361, %275 : vector<2x16xf32>
    %363 = arith.addf %357, %362 : vector<2x16xf32>
    %cst_128 = arith.constant 2.000000e-01 : f32
    %364 = vector.broadcast %cst_128 : f32 to vector<2x16xf32>
    %365 = arith.subf %1, %364 : vector<2x16xf32>
    %cst_129 = arith.constant 0.833333313 : f32
    %366 = vector.broadcast %cst_129 : f32 to vector<2x16xf32>
    %367 = arith.mulf %365, %366 : vector<2x16xf32>
    %368 = arith.mulf %367, %275 : vector<2x16xf32>
    %cst_130 = arith.constant 1.800000e+00 : f32
    %369 = vector.broadcast %cst_130 : f32 to vector<2x16xf32>
    %370 = arith.subf %369, %1 : vector<2x16xf32>
    %cst_131 = arith.constant 0.833333313 : f32
    %371 = vector.broadcast %cst_131 : f32 to vector<2x16xf32>
    %372 = arith.mulf %370, %371 : vector<2x16xf32>
    %373 = arith.mulf %372, %286 : vector<2x16xf32>
    %374 = arith.addf %368, %373 : vector<2x16xf32>
    %cst_132 = arith.constant 6.000000e-01 : f32
    %375 = vector.broadcast %cst_132 : f32 to vector<2x16xf32>
    %376 = arith.subf %1, %375 : vector<2x16xf32>
    %cst_133 = arith.constant 0.833333313 : f32
    %377 = vector.broadcast %cst_133 : f32 to vector<2x16xf32>
    %378 = arith.mulf %376, %377 : vector<2x16xf32>
    %379 = arith.mulf %378, %286 : vector<2x16xf32>
    %cst_134 = arith.constant 2.200000e+00 : f32
    %380 = vector.broadcast %cst_134 : f32 to vector<2x16xf32>
    %381 = arith.subf %380, %1 : vector<2x16xf32>
    %cst_135 = arith.constant 0.833333313 : f32
    %382 = vector.broadcast %cst_135 : f32 to vector<2x16xf32>
    %383 = arith.mulf %381, %382 : vector<2x16xf32>
    %384 = arith.mulf %383, %297 : vector<2x16xf32>
    %385 = arith.addf %379, %384 : vector<2x16xf32>
    %386 = arith.truncf %308 : vector<2x16xf32> to vector<2x16xbf16>
    %c0_136 = arith.constant 0 : index
    %c16 = arith.constant 16 : index
    %c0_137 = arith.constant 0 : index
    %387 = vector.load %arg2[%c0_136, %c16, %c0_137] : memref<2x144x256xbf16, #tpu.memory_space<vmem>>, vector<1x16x256xbf16>
    %388 = vector.shape_cast %387 : vector<1x16x256xbf16> to vector<16x256xbf16>
    %cst_138 = arith.constant dense<0.000000e+00> : vector<2x256xf32>
    %389 = tpu.matmul %386, %388, %cst_138 {dimension_numbers = #tpu.dot_dimension_numbers<[1], [0], [0], [1], [0, 0, 1, 1], [], []>} : vector<2x16xbf16>, vector<16x256xbf16>, vector<2x256xf32> -> vector<2x256xf32>
    %390 = arith.addf %11, %389 : vector<2x256xf32>
    %391 = arith.truncf %319 : vector<2x16xf32> to vector<2x16xbf16>
    %c0_139 = arith.constant 0 : index
    %c32 = arith.constant 32 : index
    %c0_140 = arith.constant 0 : index
    %392 = vector.load %arg2[%c0_139, %c32, %c0_140] : memref<2x144x256xbf16, #tpu.memory_space<vmem>>, vector<1x16x256xbf16>
    %393 = vector.shape_cast %392 : vector<1x16x256xbf16> to vector<16x256xbf16>
    %cst_141 = arith.constant dense<0.000000e+00> : vector<2x256xf32>
    %394 = tpu.matmul %391, %393, %cst_141 {dimension_numbers = #tpu.dot_dimension_numbers<[1], [0], [0], [1], [0, 0, 1, 1], [], []>} : vector<2x16xbf16>, vector<16x256xbf16>, vector<2x256xf32> -> vector<2x256xf32>
    %395 = arith.addf %390, %394 : vector<2x256xf32>
    %396 = arith.truncf %330 : vector<2x16xf32> to vector<2x16xbf16>
    %c0_142 = arith.constant 0 : index
    %c48 = arith.constant 48 : index
    %c0_143 = arith.constant 0 : index
    %397 = vector.load %arg2[%c0_142, %c48, %c0_143] : memref<2x144x256xbf16, #tpu.memory_space<vmem>>, vector<1x16x256xbf16>
    %398 = vector.shape_cast %397 : vector<1x16x256xbf16> to vector<16x256xbf16>
    %cst_144 = arith.constant dense<0.000000e+00> : vector<2x256xf32>
    %399 = tpu.matmul %396, %398, %cst_144 {dimension_numbers = #tpu.dot_dimension_numbers<[1], [0], [0], [1], [0, 0, 1, 1], [], []>} : vector<2x16xbf16>, vector<16x256xbf16>, vector<2x256xf32> -> vector<2x256xf32>
    %400 = arith.addf %395, %399 : vector<2x256xf32>
    %401 = arith.truncf %341 : vector<2x16xf32> to vector<2x16xbf16>
    %c0_145 = arith.constant 0 : index
    %c64 = arith.constant 64 : index
    %c0_146 = arith.constant 0 : index
    %402 = vector.load %arg2[%c0_145, %c64, %c0_146] : memref<2x144x256xbf16, #tpu.memory_space<vmem>>, vector<1x16x256xbf16>
    %403 = vector.shape_cast %402 : vector<1x16x256xbf16> to vector<16x256xbf16>
    %cst_147 = arith.constant dense<0.000000e+00> : vector<2x256xf32>
    %404 = tpu.matmul %401, %403, %cst_147 {dimension_numbers = #tpu.dot_dimension_numbers<[1], [0], [0], [1], [0, 0, 1, 1], [], []>} : vector<2x16xbf16>, vector<16x256xbf16>, vector<2x256xf32> -> vector<2x256xf32>
    %405 = arith.addf %400, %404 : vector<2x256xf32>
    %406 = arith.truncf %352 : vector<2x16xf32> to vector<2x16xbf16>
    %c0_148 = arith.constant 0 : index
    %c80 = arith.constant 80 : index
    %c0_149 = arith.constant 0 : index
    %407 = vector.load %arg2[%c0_148, %c80, %c0_149] : memref<2x144x256xbf16, #tpu.memory_space<vmem>>, vector<1x16x256xbf16>
    %408 = vector.shape_cast %407 : vector<1x16x256xbf16> to vector<16x256xbf16>
    %cst_150 = arith.constant dense<0.000000e+00> : vector<2x256xf32>
    %409 = tpu.matmul %406, %408, %cst_150 {dimension_numbers = #tpu.dot_dimension_numbers<[1], [0], [0], [1], [0, 0, 1, 1], [], []>} : vector<2x16xbf16>, vector<16x256xbf16>, vector<2x256xf32> -> vector<2x256xf32>
    %410 = arith.addf %405, %409 : vector<2x256xf32>
    %411 = arith.truncf %363 : vector<2x16xf32> to vector<2x16xbf16>
    %c0_151 = arith.constant 0 : index
    %c96 = arith.constant 96 : index
    %c0_152 = arith.constant 0 : index
    %412 = vector.load %arg2[%c0_151, %c96, %c0_152] : memref<2x144x256xbf16, #tpu.memory_space<vmem>>, vector<1x16x256xbf16>
    %413 = vector.shape_cast %412 : vector<1x16x256xbf16> to vector<16x256xbf16>
    %cst_153 = arith.constant dense<0.000000e+00> : vector<2x256xf32>
    %414 = tpu.matmul %411, %413, %cst_153 {dimension_numbers = #tpu.dot_dimension_numbers<[1], [0], [0], [1], [0, 0, 1, 1], [], []>} : vector<2x16xbf16>, vector<16x256xbf16>, vector<2x256xf32> -> vector<2x256xf32>
    %415 = arith.addf %410, %414 : vector<2x256xf32>
    %416 = arith.truncf %374 : vector<2x16xf32> to vector<2x16xbf16>
    %c0_154 = arith.constant 0 : index
    %c112 = arith.constant 112 : index
    %c0_155 = arith.constant 0 : index
    %417 = vector.load %arg2[%c0_154, %c112, %c0_155] : memref<2x144x256xbf16, #tpu.memory_space<vmem>>, vector<1x16x256xbf16>
    %418 = vector.shape_cast %417 : vector<1x16x256xbf16> to vector<16x256xbf16>
    %cst_156 = arith.constant dense<0.000000e+00> : vector<2x256xf32>
    %419 = tpu.matmul %416, %418, %cst_156 {dimension_numbers = #tpu.dot_dimension_numbers<[1], [0], [0], [1], [0, 0, 1, 1], [], []>} : vector<2x16xbf16>, vector<16x256xbf16>, vector<2x256xf32> -> vector<2x256xf32>
    %420 = arith.addf %415, %419 : vector<2x256xf32>
    %421 = arith.truncf %385 : vector<2x16xf32> to vector<2x16xbf16>
    %c0_157 = arith.constant 0 : index
    %c128 = arith.constant 128 : index
    %c0_158 = arith.constant 0 : index
    %422 = vector.load %arg2[%c0_157, %c128, %c0_158] : memref<2x144x256xbf16, #tpu.memory_space<vmem>>, vector<1x16x256xbf16>
    %423 = vector.shape_cast %422 : vector<1x16x256xbf16> to vector<16x256xbf16>
    %cst_159 = arith.constant dense<0.000000e+00> : vector<2x256xf32>
    %424 = tpu.matmul %421, %423, %cst_159 {dimension_numbers = #tpu.dot_dimension_numbers<[1], [0], [0], [1], [0, 0, 1, 1], [], []>} : vector<2x16xbf16>, vector<16x256xbf16>, vector<2x256xf32> -> vector<2x256xf32>
    %425 = arith.addf %420, %424 : vector<2x256xf32>
    %426 = arith.negf %425 : vector<2x256xf32>
    %427 = math.exp %426 : vector<2x256xf32>
    %cst_160 = arith.constant 1.000000e+00 : f32
    %428 = vector.broadcast %cst_160 : f32 to vector<2x256xf32>
    %429 = arith.addf %428, %427 : vector<2x256xf32>
    %430 = arith.divf %428, %429 : vector<2x256xf32>
    %431 = arith.mulf %425, %430 : vector<2x256xf32>
    %cst_161 = arith.constant -2.200000e+00 : f32
    %432 = vector.broadcast %cst_161 : f32 to vector<2x256xf32>
    %433 = arith.cmpf oge, %425, %432 : vector<2x256xf32>
    %cst_162 = arith.constant -1.800000e+00 : f32
    %434 = vector.broadcast %cst_162 : f32 to vector<2x256xf32>
    %435 = arith.cmpf olt, %425, %434 : vector<2x256xf32>
    %436 = arith.andi %433, %435 : vector<2x256xi1>
    %437 = arith.extui %436 : vector<2x256xi1> to vector<2x256xi32>
    %438 = arith.sitofp %437 : vector<2x256xi32> to vector<2x256xf32>
    %cst_163 = arith.constant -1.800000e+00 : f32
    %439 = vector.broadcast %cst_163 : f32 to vector<2x256xf32>
    %440 = arith.cmpf oge, %425, %439 : vector<2x256xf32>
    %cst_164 = arith.constant -1.400000e+00 : f32
    %441 = vector.broadcast %cst_164 : f32 to vector<2x256xf32>
    %442 = arith.cmpf olt, %425, %441 : vector<2x256xf32>
    %443 = arith.andi %440, %442 : vector<2x256xi1>
    %444 = arith.extui %443 : vector<2x256xi1> to vector<2x256xi32>
    %445 = arith.sitofp %444 : vector<2x256xi32> to vector<2x256xf32>
    %cst_165 = arith.constant -1.400000e+00 : f32
    %446 = vector.broadcast %cst_165 : f32 to vector<2x256xf32>
    %447 = arith.cmpf oge, %425, %446 : vector<2x256xf32>
    %cst_166 = arith.constant -1.000000e+00 : f32
    %448 = vector.broadcast %cst_166 : f32 to vector<2x256xf32>
    %449 = arith.cmpf olt, %425, %448 : vector<2x256xf32>
    %450 = arith.andi %447, %449 : vector<2x256xi1>
    %451 = arith.extui %450 : vector<2x256xi1> to vector<2x256xi32>
    %452 = arith.sitofp %451 : vector<2x256xi32> to vector<2x256xf32>
    %cst_167 = arith.constant -1.000000e+00 : f32
    %453 = vector.broadcast %cst_167 : f32 to vector<2x256xf32>
    %454 = arith.cmpf oge, %425, %453 : vector<2x256xf32>
    %cst_168 = arith.constant -6.000000e-01 : f32
    %455 = vector.broadcast %cst_168 : f32 to vector<2x256xf32>
    %456 = arith.cmpf olt, %425, %455 : vector<2x256xf32>
    %457 = arith.andi %454, %456 : vector<2x256xi1>
    %458 = arith.extui %457 : vector<2x256xi1> to vector<2x256xi32>
    %459 = arith.sitofp %458 : vector<2x256xi32> to vector<2x256xf32>
    %cst_169 = arith.constant -6.000000e-01 : f32
    %460 = vector.broadcast %cst_169 : f32 to vector<2x256xf32>
    %461 = arith.cmpf oge, %425, %460 : vector<2x256xf32>
    %cst_170 = arith.constant -2.000000e-01 : f32
    %462 = vector.broadcast %cst_170 : f32 to vector<2x256xf32>
    %463 = arith.cmpf olt, %425, %462 : vector<2x256xf32>
    %464 = arith.andi %461, %463 : vector<2x256xi1>
    %465 = arith.extui %464 : vector<2x256xi1> to vector<2x256xi32>
    %466 = arith.sitofp %465 : vector<2x256xi32> to vector<2x256xf32>
    %cst_171 = arith.constant -2.000000e-01 : f32
    %467 = vector.broadcast %cst_171 : f32 to vector<2x256xf32>
    %468 = arith.cmpf oge, %425, %467 : vector<2x256xf32>
    %cst_172 = arith.constant 2.000000e-01 : f32
    %469 = vector.broadcast %cst_172 : f32 to vector<2x256xf32>
    %470 = arith.cmpf olt, %425, %469 : vector<2x256xf32>
    %471 = arith.andi %468, %470 : vector<2x256xi1>
    %472 = arith.extui %471 : vector<2x256xi1> to vector<2x256xi32>
    %473 = arith.sitofp %472 : vector<2x256xi32> to vector<2x256xf32>
    %cst_173 = arith.constant 2.000000e-01 : f32
    %474 = vector.broadcast %cst_173 : f32 to vector<2x256xf32>
    %475 = arith.cmpf oge, %425, %474 : vector<2x256xf32>
    %cst_174 = arith.constant 6.000000e-01 : f32
    %476 = vector.broadcast %cst_174 : f32 to vector<2x256xf32>
    %477 = arith.cmpf olt, %425, %476 : vector<2x256xf32>
    %478 = arith.andi %475, %477 : vector<2x256xi1>
    %479 = arith.extui %478 : vector<2x256xi1> to vector<2x256xi32>
    %480 = arith.sitofp %479 : vector<2x256xi32> to vector<2x256xf32>
    %cst_175 = arith.constant 6.000000e-01 : f32
    %481 = vector.broadcast %cst_175 : f32 to vector<2x256xf32>
    %482 = arith.cmpf oge, %425, %481 : vector<2x256xf32>
    %cst_176 = arith.constant 1.000000e+00 : f32
    %483 = vector.broadcast %cst_176 : f32 to vector<2x256xf32>
    %484 = arith.cmpf olt, %425, %483 : vector<2x256xf32>
    %485 = arith.andi %482, %484 : vector<2x256xi1>
    %486 = arith.extui %485 : vector<2x256xi1> to vector<2x256xi32>
    %487 = arith.sitofp %486 : vector<2x256xi32> to vector<2x256xf32>
    %cst_177 = arith.constant 1.000000e+00 : f32
    %488 = vector.broadcast %cst_177 : f32 to vector<2x256xf32>
    %489 = arith.cmpf oge, %425, %488 : vector<2x256xf32>
    %cst_178 = arith.constant 1.400000e+00 : f32
    %490 = vector.broadcast %cst_178 : f32 to vector<2x256xf32>
    %491 = arith.cmpf olt, %425, %490 : vector<2x256xf32>
    %492 = arith.andi %489, %491 : vector<2x256xi1>
    %493 = arith.extui %492 : vector<2x256xi1> to vector<2x256xi32>
    %494 = arith.sitofp %493 : vector<2x256xi32> to vector<2x256xf32>
    %cst_179 = arith.constant 1.400000e+00 : f32
    %495 = vector.broadcast %cst_179 : f32 to vector<2x256xf32>
    %496 = arith.cmpf oge, %425, %495 : vector<2x256xf32>
    %cst_180 = arith.constant 1.800000e+00 : f32
    %497 = vector.broadcast %cst_180 : f32 to vector<2x256xf32>
    %498 = arith.cmpf olt, %425, %497 : vector<2x256xf32>
    %499 = arith.andi %496, %498 : vector<2x256xi1>
    %500 = arith.extui %499 : vector<2x256xi1> to vector<2x256xi32>
    %501 = arith.sitofp %500 : vector<2x256xi32> to vector<2x256xf32>
    %cst_181 = arith.constant 1.800000e+00 : f32
    %502 = vector.broadcast %cst_181 : f32 to vector<2x256xf32>
    %503 = arith.cmpf oge, %425, %502 : vector<2x256xf32>
    %cst_182 = arith.constant 2.200000e+00 : f32
    %504 = vector.broadcast %cst_182 : f32 to vector<2x256xf32>
    %505 = arith.cmpf olt, %425, %504 : vector<2x256xf32>
    %506 = arith.andi %503, %505 : vector<2x256xi1>
    %507 = arith.extui %506 : vector<2x256xi1> to vector<2x256xi32>
    %508 = arith.sitofp %507 : vector<2x256xi32> to vector<2x256xf32>
    %cst_183 = arith.constant -2.200000e+00 : f32
    %509 = vector.broadcast %cst_183 : f32 to vector<2x256xf32>
    %510 = arith.subf %425, %509 : vector<2x256xf32>
    %cst_184 = arith.constant 2.500000e+00 : f32
    %511 = vector.broadcast %cst_184 : f32 to vector<2x256xf32>
    %512 = arith.mulf %510, %511 : vector<2x256xf32>
    %513 = arith.mulf %512, %438 : vector<2x256xf32>
    %cst_185 = arith.constant -1.400000e+00 : f32
    %514 = vector.broadcast %cst_185 : f32 to vector<2x256xf32>
    %515 = arith.subf %514, %425 : vector<2x256xf32>
    %cst_186 = arith.constant 2.500000e+00 : f32
    %516 = vector.broadcast %cst_186 : f32 to vector<2x256xf32>
    %517 = arith.mulf %515, %516 : vector<2x256xf32>
    %518 = arith.mulf %517, %445 : vector<2x256xf32>
    %519 = arith.addf %513, %518 : vector<2x256xf32>
    %cst_187 = arith.constant -1.800000e+00 : f32
    %520 = vector.broadcast %cst_187 : f32 to vector<2x256xf32>
    %521 = arith.subf %425, %520 : vector<2x256xf32>
    %cst_188 = arith.constant 2.500000e+00 : f32
    %522 = vector.broadcast %cst_188 : f32 to vector<2x256xf32>
    %523 = arith.mulf %521, %522 : vector<2x256xf32>
    %524 = arith.mulf %523, %445 : vector<2x256xf32>
    %cst_189 = arith.constant -1.000000e+00 : f32
    %525 = vector.broadcast %cst_189 : f32 to vector<2x256xf32>
    %526 = arith.subf %525, %425 : vector<2x256xf32>
    %cst_190 = arith.constant 2.500000e+00 : f32
    %527 = vector.broadcast %cst_190 : f32 to vector<2x256xf32>
    %528 = arith.mulf %526, %527 : vector<2x256xf32>
    %529 = arith.mulf %528, %452 : vector<2x256xf32>
    %530 = arith.addf %524, %529 : vector<2x256xf32>
    %cst_191 = arith.constant -1.400000e+00 : f32
    %531 = vector.broadcast %cst_191 : f32 to vector<2x256xf32>
    %532 = arith.subf %425, %531 : vector<2x256xf32>
    %cst_192 = arith.constant 2.500000e+00 : f32
    %533 = vector.broadcast %cst_192 : f32 to vector<2x256xf32>
    %534 = arith.mulf %532, %533 : vector<2x256xf32>
    %535 = arith.mulf %534, %452 : vector<2x256xf32>
    %cst_193 = arith.constant -6.000000e-01 : f32
    %536 = vector.broadcast %cst_193 : f32 to vector<2x256xf32>
    %537 = arith.subf %536, %425 : vector<2x256xf32>
    %cst_194 = arith.constant 2.500000e+00 : f32
    %538 = vector.broadcast %cst_194 : f32 to vector<2x256xf32>
    %539 = arith.mulf %537, %538 : vector<2x256xf32>
    %540 = arith.mulf %539, %459 : vector<2x256xf32>
    %541 = arith.addf %535, %540 : vector<2x256xf32>
    %cst_195 = arith.constant -1.000000e+00 : f32
    %542 = vector.broadcast %cst_195 : f32 to vector<2x256xf32>
    %543 = arith.subf %425, %542 : vector<2x256xf32>
    %cst_196 = arith.constant 2.500000e+00 : f32
    %544 = vector.broadcast %cst_196 : f32 to vector<2x256xf32>
    %545 = arith.mulf %543, %544 : vector<2x256xf32>
    %546 = arith.mulf %545, %459 : vector<2x256xf32>
    %cst_197 = arith.constant -2.000000e-01 : f32
    %547 = vector.broadcast %cst_197 : f32 to vector<2x256xf32>
    %548 = arith.subf %547, %425 : vector<2x256xf32>
    %cst_198 = arith.constant 2.500000e+00 : f32
    %549 = vector.broadcast %cst_198 : f32 to vector<2x256xf32>
    %550 = arith.mulf %548, %549 : vector<2x256xf32>
    %551 = arith.mulf %550, %466 : vector<2x256xf32>
    %552 = arith.addf %546, %551 : vector<2x256xf32>
    %cst_199 = arith.constant -6.000000e-01 : f32
    %553 = vector.broadcast %cst_199 : f32 to vector<2x256xf32>
    %554 = arith.subf %425, %553 : vector<2x256xf32>
    %cst_200 = arith.constant 2.500000e+00 : f32
    %555 = vector.broadcast %cst_200 : f32 to vector<2x256xf32>
    %556 = arith.mulf %554, %555 : vector<2x256xf32>
    %557 = arith.mulf %556, %466 : vector<2x256xf32>
    %cst_201 = arith.constant 2.000000e-01 : f32
    %558 = vector.broadcast %cst_201 : f32 to vector<2x256xf32>
    %559 = arith.subf %558, %425 : vector<2x256xf32>
    %cst_202 = arith.constant 2.500000e+00 : f32
    %560 = vector.broadcast %cst_202 : f32 to vector<2x256xf32>
    %561 = arith.mulf %559, %560 : vector<2x256xf32>
    %562 = arith.mulf %561, %473 : vector<2x256xf32>
    %563 = arith.addf %557, %562 : vector<2x256xf32>
    %cst_203 = arith.constant -2.000000e-01 : f32
    %564 = vector.broadcast %cst_203 : f32 to vector<2x256xf32>
    %565 = arith.subf %425, %564 : vector<2x256xf32>
    %cst_204 = arith.constant 2.500000e+00 : f32
    %566 = vector.broadcast %cst_204 : f32 to vector<2x256xf32>
    %567 = arith.mulf %565, %566 : vector<2x256xf32>
    %568 = arith.mulf %567, %473 : vector<2x256xf32>
    %cst_205 = arith.constant 6.000000e-01 : f32
    %569 = vector.broadcast %cst_205 : f32 to vector<2x256xf32>
    %570 = arith.subf %569, %425 : vector<2x256xf32>
    %cst_206 = arith.constant 2.500000e+00 : f32
    %571 = vector.broadcast %cst_206 : f32 to vector<2x256xf32>
    %572 = arith.mulf %570, %571 : vector<2x256xf32>
    %573 = arith.mulf %572, %480 : vector<2x256xf32>
    %574 = arith.addf %568, %573 : vector<2x256xf32>
    %cst_207 = arith.constant 2.000000e-01 : f32
    %575 = vector.broadcast %cst_207 : f32 to vector<2x256xf32>
    %576 = arith.subf %425, %575 : vector<2x256xf32>
    %cst_208 = arith.constant 2.500000e+00 : f32
    %577 = vector.broadcast %cst_208 : f32 to vector<2x256xf32>
    %578 = arith.mulf %576, %577 : vector<2x256xf32>
    %579 = arith.mulf %578, %480 : vector<2x256xf32>
    %cst_209 = arith.constant 1.000000e+00 : f32
    %580 = vector.broadcast %cst_209 : f32 to vector<2x256xf32>
    %581 = arith.subf %580, %425 : vector<2x256xf32>
    %cst_210 = arith.constant 2.500000e+00 : f32
    %582 = vector.broadcast %cst_210 : f32 to vector<2x256xf32>
    %583 = arith.mulf %581, %582 : vector<2x256xf32>
    %584 = arith.mulf %583, %487 : vector<2x256xf32>
    %585 = arith.addf %579, %584 : vector<2x256xf32>
    %cst_211 = arith.constant 6.000000e-01 : f32
    %586 = vector.broadcast %cst_211 : f32 to vector<2x256xf32>
    %587 = arith.subf %425, %586 : vector<2x256xf32>
    %cst_212 = arith.constant 2.500000e+00 : f32
    %588 = vector.broadcast %cst_212 : f32 to vector<2x256xf32>
    %589 = arith.mulf %587, %588 : vector<2x256xf32>
    %590 = arith.mulf %589, %487 : vector<2x256xf32>
    %cst_213 = arith.constant 1.400000e+00 : f32
    %591 = vector.broadcast %cst_213 : f32 to vector<2x256xf32>
    %592 = arith.subf %591, %425 : vector<2x256xf32>
    %cst_214 = arith.constant 2.500000e+00 : f32
    %593 = vector.broadcast %cst_214 : f32 to vector<2x256xf32>
    %594 = arith.mulf %592, %593 : vector<2x256xf32>
    %595 = arith.mulf %594, %494 : vector<2x256xf32>
    %596 = arith.addf %590, %595 : vector<2x256xf32>
    %cst_215 = arith.constant 1.000000e+00 : f32
    %597 = vector.broadcast %cst_215 : f32 to vector<2x256xf32>
    %598 = arith.subf %425, %597 : vector<2x256xf32>
    %cst_216 = arith.constant 2.500000e+00 : f32
    %599 = vector.broadcast %cst_216 : f32 to vector<2x256xf32>
    %600 = arith.mulf %598, %599 : vector<2x256xf32>
    %601 = arith.mulf %600, %494 : vector<2x256xf32>
    %cst_217 = arith.constant 1.800000e+00 : f32
    %602 = vector.broadcast %cst_217 : f32 to vector<2x256xf32>
    %603 = arith.subf %602, %425 : vector<2x256xf32>
    %cst_218 = arith.constant 2.500000e+00 : f32
    %604 = vector.broadcast %cst_218 : f32 to vector<2x256xf32>
    %605 = arith.mulf %603, %604 : vector<2x256xf32>
    %606 = arith.mulf %605, %501 : vector<2x256xf32>
    %607 = arith.addf %601, %606 : vector<2x256xf32>
    %cst_219 = arith.constant 1.400000e+00 : f32
    %608 = vector.broadcast %cst_219 : f32 to vector<2x256xf32>
    %609 = arith.subf %425, %608 : vector<2x256xf32>
    %cst_220 = arith.constant 2.500000e+00 : f32
    %610 = vector.broadcast %cst_220 : f32 to vector<2x256xf32>
    %611 = arith.mulf %609, %610 : vector<2x256xf32>
    %612 = arith.mulf %611, %501 : vector<2x256xf32>
    %cst_221 = arith.constant 2.200000e+00 : f32
    %613 = vector.broadcast %cst_221 : f32 to vector<2x256xf32>
    %614 = arith.subf %613, %425 : vector<2x256xf32>
    %cst_222 = arith.constant 2.500000e+00 : f32
    %615 = vector.broadcast %cst_222 : f32 to vector<2x256xf32>
    %616 = arith.mulf %614, %615 : vector<2x256xf32>
    %617 = arith.mulf %616, %508 : vector<2x256xf32>
    %618 = arith.addf %612, %617 : vector<2x256xf32>
    %cst_223 = arith.constant -2.200000e+00 : f32
    %619 = vector.broadcast %cst_223 : f32 to vector<2x256xf32>
    %620 = arith.subf %425, %619 : vector<2x256xf32>
    %cst_224 = arith.constant 1.250000e+00 : f32
    %621 = vector.broadcast %cst_224 : f32 to vector<2x256xf32>
    %622 = arith.mulf %620, %621 : vector<2x256xf32>
    %623 = arith.mulf %622, %519 : vector<2x256xf32>
    %cst_225 = arith.constant -1.000000e+00 : f32
    %624 = vector.broadcast %cst_225 : f32 to vector<2x256xf32>
    %625 = arith.subf %624, %425 : vector<2x256xf32>
    %cst_226 = arith.constant 1.250000e+00 : f32
    %626 = vector.broadcast %cst_226 : f32 to vector<2x256xf32>
    %627 = arith.mulf %625, %626 : vector<2x256xf32>
    %628 = arith.mulf %627, %530 : vector<2x256xf32>
    %629 = arith.addf %623, %628 : vector<2x256xf32>
    %cst_227 = arith.constant -1.800000e+00 : f32
    %630 = vector.broadcast %cst_227 : f32 to vector<2x256xf32>
    %631 = arith.subf %425, %630 : vector<2x256xf32>
    %cst_228 = arith.constant 1.250000e+00 : f32
    %632 = vector.broadcast %cst_228 : f32 to vector<2x256xf32>
    %633 = arith.mulf %631, %632 : vector<2x256xf32>
    %634 = arith.mulf %633, %530 : vector<2x256xf32>
    %cst_229 = arith.constant -6.000000e-01 : f32
    %635 = vector.broadcast %cst_229 : f32 to vector<2x256xf32>
    %636 = arith.subf %635, %425 : vector<2x256xf32>
    %cst_230 = arith.constant 1.250000e+00 : f32
    %637 = vector.broadcast %cst_230 : f32 to vector<2x256xf32>
    %638 = arith.mulf %636, %637 : vector<2x256xf32>
    %639 = arith.mulf %638, %541 : vector<2x256xf32>
    %640 = arith.addf %634, %639 : vector<2x256xf32>
    %cst_231 = arith.constant -1.400000e+00 : f32
    %641 = vector.broadcast %cst_231 : f32 to vector<2x256xf32>
    %642 = arith.subf %425, %641 : vector<2x256xf32>
    %cst_232 = arith.constant 1.250000e+00 : f32
    %643 = vector.broadcast %cst_232 : f32 to vector<2x256xf32>
    %644 = arith.mulf %642, %643 : vector<2x256xf32>
    %645 = arith.mulf %644, %541 : vector<2x256xf32>
    %cst_233 = arith.constant -2.000000e-01 : f32
    %646 = vector.broadcast %cst_233 : f32 to vector<2x256xf32>
    %647 = arith.subf %646, %425 : vector<2x256xf32>
    %cst_234 = arith.constant 1.250000e+00 : f32
    %648 = vector.broadcast %cst_234 : f32 to vector<2x256xf32>
    %649 = arith.mulf %647, %648 : vector<2x256xf32>
    %650 = arith.mulf %649, %552 : vector<2x256xf32>
    %651 = arith.addf %645, %650 : vector<2x256xf32>
    %cst_235 = arith.constant -1.000000e+00 : f32
    %652 = vector.broadcast %cst_235 : f32 to vector<2x256xf32>
    %653 = arith.subf %425, %652 : vector<2x256xf32>
    %cst_236 = arith.constant 1.250000e+00 : f32
    %654 = vector.broadcast %cst_236 : f32 to vector<2x256xf32>
    %655 = arith.mulf %653, %654 : vector<2x256xf32>
    %656 = arith.mulf %655, %552 : vector<2x256xf32>
    %cst_237 = arith.constant 2.000000e-01 : f32
    %657 = vector.broadcast %cst_237 : f32 to vector<2x256xf32>
    %658 = arith.subf %657, %425 : vector<2x256xf32>
    %cst_238 = arith.constant 1.250000e+00 : f32
    %659 = vector.broadcast %cst_238 : f32 to vector<2x256xf32>
    %660 = arith.mulf %658, %659 : vector<2x256xf32>
    %661 = arith.mulf %660, %563 : vector<2x256xf32>
    %662 = arith.addf %656, %661 : vector<2x256xf32>
    %cst_239 = arith.constant -6.000000e-01 : f32
    %663 = vector.broadcast %cst_239 : f32 to vector<2x256xf32>
    %664 = arith.subf %425, %663 : vector<2x256xf32>
    %cst_240 = arith.constant 1.250000e+00 : f32
    %665 = vector.broadcast %cst_240 : f32 to vector<2x256xf32>
    %666 = arith.mulf %664, %665 : vector<2x256xf32>
    %667 = arith.mulf %666, %563 : vector<2x256xf32>
    %cst_241 = arith.constant 6.000000e-01 : f32
    %668 = vector.broadcast %cst_241 : f32 to vector<2x256xf32>
    %669 = arith.subf %668, %425 : vector<2x256xf32>
    %cst_242 = arith.constant 1.250000e+00 : f32
    %670 = vector.broadcast %cst_242 : f32 to vector<2x256xf32>
    %671 = arith.mulf %669, %670 : vector<2x256xf32>
    %672 = arith.mulf %671, %574 : vector<2x256xf32>
    %673 = arith.addf %667, %672 : vector<2x256xf32>
    %cst_243 = arith.constant -2.000000e-01 : f32
    %674 = vector.broadcast %cst_243 : f32 to vector<2x256xf32>
    %675 = arith.subf %425, %674 : vector<2x256xf32>
    %cst_244 = arith.constant 1.250000e+00 : f32
    %676 = vector.broadcast %cst_244 : f32 to vector<2x256xf32>
    %677 = arith.mulf %675, %676 : vector<2x256xf32>
    %678 = arith.mulf %677, %574 : vector<2x256xf32>
    %cst_245 = arith.constant 1.000000e+00 : f32
    %679 = vector.broadcast %cst_245 : f32 to vector<2x256xf32>
    %680 = arith.subf %679, %425 : vector<2x256xf32>
    %cst_246 = arith.constant 1.250000e+00 : f32
    %681 = vector.broadcast %cst_246 : f32 to vector<2x256xf32>
    %682 = arith.mulf %680, %681 : vector<2x256xf32>
    %683 = arith.mulf %682, %585 : vector<2x256xf32>
    %684 = arith.addf %678, %683 : vector<2x256xf32>
    %cst_247 = arith.constant 2.000000e-01 : f32
    %685 = vector.broadcast %cst_247 : f32 to vector<2x256xf32>
    %686 = arith.subf %425, %685 : vector<2x256xf32>
    %cst_248 = arith.constant 1.250000e+00 : f32
    %687 = vector.broadcast %cst_248 : f32 to vector<2x256xf32>
    %688 = arith.mulf %686, %687 : vector<2x256xf32>
    %689 = arith.mulf %688, %585 : vector<2x256xf32>
    %cst_249 = arith.constant 1.400000e+00 : f32
    %690 = vector.broadcast %cst_249 : f32 to vector<2x256xf32>
    %691 = arith.subf %690, %425 : vector<2x256xf32>
    %cst_250 = arith.constant 1.250000e+00 : f32
    %692 = vector.broadcast %cst_250 : f32 to vector<2x256xf32>
    %693 = arith.mulf %691, %692 : vector<2x256xf32>
    %694 = arith.mulf %693, %596 : vector<2x256xf32>
    %695 = arith.addf %689, %694 : vector<2x256xf32>
    %cst_251 = arith.constant 6.000000e-01 : f32
    %696 = vector.broadcast %cst_251 : f32 to vector<2x256xf32>
    %697 = arith.subf %425, %696 : vector<2x256xf32>
    %cst_252 = arith.constant 1.250000e+00 : f32
    %698 = vector.broadcast %cst_252 : f32 to vector<2x256xf32>
    %699 = arith.mulf %697, %698 : vector<2x256xf32>
    %700 = arith.mulf %699, %596 : vector<2x256xf32>
    %cst_253 = arith.constant 1.800000e+00 : f32
    %701 = vector.broadcast %cst_253 : f32 to vector<2x256xf32>
    %702 = arith.subf %701, %425 : vector<2x256xf32>
    %cst_254 = arith.constant 1.250000e+00 : f32
    %703 = vector.broadcast %cst_254 : f32 to vector<2x256xf32>
    %704 = arith.mulf %702, %703 : vector<2x256xf32>
    %705 = arith.mulf %704, %607 : vector<2x256xf32>
    %706 = arith.addf %700, %705 : vector<2x256xf32>
    %cst_255 = arith.constant 1.000000e+00 : f32
    %707 = vector.broadcast %cst_255 : f32 to vector<2x256xf32>
    %708 = arith.subf %425, %707 : vector<2x256xf32>
    %cst_256 = arith.constant 1.250000e+00 : f32
    %709 = vector.broadcast %cst_256 : f32 to vector<2x256xf32>
    %710 = arith.mulf %708, %709 : vector<2x256xf32>
    %711 = arith.mulf %710, %607 : vector<2x256xf32>
    %cst_257 = arith.constant 2.200000e+00 : f32
    %712 = vector.broadcast %cst_257 : f32 to vector<2x256xf32>
    %713 = arith.subf %712, %425 : vector<2x256xf32>
    %cst_258 = arith.constant 1.250000e+00 : f32
    %714 = vector.broadcast %cst_258 : f32 to vector<2x256xf32>
    %715 = arith.mulf %713, %714 : vector<2x256xf32>
    %716 = arith.mulf %715, %618 : vector<2x256xf32>
    %717 = arith.addf %711, %716 : vector<2x256xf32>
    %cst_259 = arith.constant -2.200000e+00 : f32
    %718 = vector.broadcast %cst_259 : f32 to vector<2x256xf32>
    %719 = arith.subf %425, %718 : vector<2x256xf32>
    %cst_260 = arith.constant 0.833333313 : f32
    %720 = vector.broadcast %cst_260 : f32 to vector<2x256xf32>
    %721 = arith.mulf %719, %720 : vector<2x256xf32>
    %722 = arith.mulf %721, %629 : vector<2x256xf32>
    %cst_261 = arith.constant -6.000000e-01 : f32
    %723 = vector.broadcast %cst_261 : f32 to vector<2x256xf32>
    %724 = arith.subf %723, %425 : vector<2x256xf32>
    %cst_262 = arith.constant 0.833333313 : f32
    %725 = vector.broadcast %cst_262 : f32 to vector<2x256xf32>
    %726 = arith.mulf %724, %725 : vector<2x256xf32>
    %727 = arith.mulf %726, %640 : vector<2x256xf32>
    %728 = arith.addf %722, %727 : vector<2x256xf32>
    %cst_263 = arith.constant -1.800000e+00 : f32
    %729 = vector.broadcast %cst_263 : f32 to vector<2x256xf32>
    %730 = arith.subf %425, %729 : vector<2x256xf32>
    %cst_264 = arith.constant 0.833333313 : f32
    %731 = vector.broadcast %cst_264 : f32 to vector<2x256xf32>
    %732 = arith.mulf %730, %731 : vector<2x256xf32>
    %733 = arith.mulf %732, %640 : vector<2x256xf32>
    %cst_265 = arith.constant -2.000000e-01 : f32
    %734 = vector.broadcast %cst_265 : f32 to vector<2x256xf32>
    %735 = arith.subf %734, %425 : vector<2x256xf32>
    %cst_266 = arith.constant 0.833333313 : f32
    %736 = vector.broadcast %cst_266 : f32 to vector<2x256xf32>
    %737 = arith.mulf %735, %736 : vector<2x256xf32>
    %738 = arith.mulf %737, %651 : vector<2x256xf32>
    %739 = arith.addf %733, %738 : vector<2x256xf32>
    %cst_267 = arith.constant -1.400000e+00 : f32
    %740 = vector.broadcast %cst_267 : f32 to vector<2x256xf32>
    %741 = arith.subf %425, %740 : vector<2x256xf32>
    %cst_268 = arith.constant 0.833333313 : f32
    %742 = vector.broadcast %cst_268 : f32 to vector<2x256xf32>
    %743 = arith.mulf %741, %742 : vector<2x256xf32>
    %744 = arith.mulf %743, %651 : vector<2x256xf32>
    %cst_269 = arith.constant 2.000000e-01 : f32
    %745 = vector.broadcast %cst_269 : f32 to vector<2x256xf32>
    %746 = arith.subf %745, %425 : vector<2x256xf32>
    %cst_270 = arith.constant 0.833333313 : f32
    %747 = vector.broadcast %cst_270 : f32 to vector<2x256xf32>
    %748 = arith.mulf %746, %747 : vector<2x256xf32>
    %749 = arith.mulf %748, %662 : vector<2x256xf32>
    %750 = arith.addf %744, %749 : vector<2x256xf32>
    %cst_271 = arith.constant -1.000000e+00 : f32
    %751 = vector.broadcast %cst_271 : f32 to vector<2x256xf32>
    %752 = arith.subf %425, %751 : vector<2x256xf32>
    %cst_272 = arith.constant 0.833333313 : f32
    %753 = vector.broadcast %cst_272 : f32 to vector<2x256xf32>
    %754 = arith.mulf %752, %753 : vector<2x256xf32>
    %755 = arith.mulf %754, %662 : vector<2x256xf32>
    %cst_273 = arith.constant 6.000000e-01 : f32
    %756 = vector.broadcast %cst_273 : f32 to vector<2x256xf32>
    %757 = arith.subf %756, %425 : vector<2x256xf32>
    %cst_274 = arith.constant 0.833333313 : f32
    %758 = vector.broadcast %cst_274 : f32 to vector<2x256xf32>
    %759 = arith.mulf %757, %758 : vector<2x256xf32>
    %760 = arith.mulf %759, %673 : vector<2x256xf32>
    %761 = arith.addf %755, %760 : vector<2x256xf32>
    %cst_275 = arith.constant -6.000000e-01 : f32
    %762 = vector.broadcast %cst_275 : f32 to vector<2x256xf32>
    %763 = arith.subf %425, %762 : vector<2x256xf32>
    %cst_276 = arith.constant 0.833333313 : f32
    %764 = vector.broadcast %cst_276 : f32 to vector<2x256xf32>
    %765 = arith.mulf %763, %764 : vector<2x256xf32>
    %766 = arith.mulf %765, %673 : vector<2x256xf32>
    %cst_277 = arith.constant 1.000000e+00 : f32
    %767 = vector.broadcast %cst_277 : f32 to vector<2x256xf32>
    %768 = arith.subf %767, %425 : vector<2x256xf32>
    %cst_278 = arith.constant 0.833333313 : f32
    %769 = vector.broadcast %cst_278 : f32 to vector<2x256xf32>
    %770 = arith.mulf %768, %769 : vector<2x256xf32>
    %771 = arith.mulf %770, %684 : vector<2x256xf32>
    %772 = arith.addf %766, %771 : vector<2x256xf32>
    %cst_279 = arith.constant -2.000000e-01 : f32
    %773 = vector.broadcast %cst_279 : f32 to vector<2x256xf32>
    %774 = arith.subf %425, %773 : vector<2x256xf32>
    %cst_280 = arith.constant 0.833333313 : f32
    %775 = vector.broadcast %cst_280 : f32 to vector<2x256xf32>
    %776 = arith.mulf %774, %775 : vector<2x256xf32>
    %777 = arith.mulf %776, %684 : vector<2x256xf32>
    %cst_281 = arith.constant 1.400000e+00 : f32
    %778 = vector.broadcast %cst_281 : f32 to vector<2x256xf32>
    %779 = arith.subf %778, %425 : vector<2x256xf32>
    %cst_282 = arith.constant 0.833333313 : f32
    %780 = vector.broadcast %cst_282 : f32 to vector<2x256xf32>
    %781 = arith.mulf %779, %780 : vector<2x256xf32>
    %782 = arith.mulf %781, %695 : vector<2x256xf32>
    %783 = arith.addf %777, %782 : vector<2x256xf32>
    %cst_283 = arith.constant 2.000000e-01 : f32
    %784 = vector.broadcast %cst_283 : f32 to vector<2x256xf32>
    %785 = arith.subf %425, %784 : vector<2x256xf32>
    %cst_284 = arith.constant 0.833333313 : f32
    %786 = vector.broadcast %cst_284 : f32 to vector<2x256xf32>
    %787 = arith.mulf %785, %786 : vector<2x256xf32>
    %788 = arith.mulf %787, %695 : vector<2x256xf32>
    %cst_285 = arith.constant 1.800000e+00 : f32
    %789 = vector.broadcast %cst_285 : f32 to vector<2x256xf32>
    %790 = arith.subf %789, %425 : vector<2x256xf32>
    %cst_286 = arith.constant 0.833333313 : f32
    %791 = vector.broadcast %cst_286 : f32 to vector<2x256xf32>
    %792 = arith.mulf %790, %791 : vector<2x256xf32>
    %793 = arith.mulf %792, %706 : vector<2x256xf32>
    %794 = arith.addf %788, %793 : vector<2x256xf32>
    %cst_287 = arith.constant 6.000000e-01 : f32
    %795 = vector.broadcast %cst_287 : f32 to vector<2x256xf32>
    %796 = arith.subf %425, %795 : vector<2x256xf32>
    %cst_288 = arith.constant 0.833333313 : f32
    %797 = vector.broadcast %cst_288 : f32 to vector<2x256xf32>
    %798 = arith.mulf %796, %797 : vector<2x256xf32>
    %799 = arith.mulf %798, %706 : vector<2x256xf32>
    %cst_289 = arith.constant 2.200000e+00 : f32
    %800 = vector.broadcast %cst_289 : f32 to vector<2x256xf32>
    %801 = arith.subf %800, %425 : vector<2x256xf32>
    %cst_290 = arith.constant 0.833333313 : f32
    %802 = vector.broadcast %cst_290 : f32 to vector<2x256xf32>
    %803 = arith.mulf %801, %802 : vector<2x256xf32>
    %804 = arith.mulf %803, %717 : vector<2x256xf32>
    %805 = arith.addf %799, %804 : vector<2x256xf32>
    %806 = tpu.concatenate %431, %728, %739, %750, %761, %772, %783, %794, %805 in 1 : vector<2x256xf32>, vector<2x256xf32>, vector<2x256xf32>, vector<2x256xf32>, vector<2x256xf32>, vector<2x256xf32>, vector<2x256xf32>, vector<2x256xf32>, vector<2x256xf32> -> vector<2x2304xf32>
    %807 = arith.truncf %806 : vector<2x2304xf32> to vector<2x2304xbf16>
    %c0_291 = arith.constant 0 : index
    %c0_292 = arith.constant 0 : index
    %c0_293 = arith.constant 0 : index
    %808 = vector.load %arg3[%c0_291, %c0_292, %c0_293] : memref<2x2304x128xbf16, #tpu.memory_space<vmem>>, vector<1x2304x128xbf16>
    %809 = vector.shape_cast %808 : vector<1x2304x128xbf16> to vector<2304x128xbf16>
    %cst_294 = arith.constant dense<0.000000e+00> : vector<2x128xf32>
    %810 = tpu.matmul %807, %809, %cst_294 {dimension_numbers = #tpu.dot_dimension_numbers<[1], [0], [0], [1], [0, 0, 1, 1], [], []>} : vector<2x2304xbf16>, vector<2304x128xbf16>, vector<2x128xf32> -> vector<2x128xf32>
    %811 = arith.negf %810 : vector<2x128xf32>
    %812 = math.exp %811 : vector<2x128xf32>
    %cst_295 = arith.constant 1.000000e+00 : f32
    %813 = vector.broadcast %cst_295 : f32 to vector<2x128xf32>
    %814 = arith.addf %813, %812 : vector<2x128xf32>
    %815 = arith.divf %813, %814 : vector<2x128xf32>
    %816 = arith.mulf %810, %815 : vector<2x128xf32>
    %cst_296 = arith.constant -2.200000e+00 : f32
    %817 = vector.broadcast %cst_296 : f32 to vector<2x128xf32>
    %818 = arith.cmpf oge, %810, %817 : vector<2x128xf32>
    %cst_297 = arith.constant -1.800000e+00 : f32
    %819 = vector.broadcast %cst_297 : f32 to vector<2x128xf32>
    %820 = arith.cmpf olt, %810, %819 : vector<2x128xf32>
    %821 = arith.andi %818, %820 : vector<2x128xi1>
    %822 = arith.extui %821 : vector<2x128xi1> to vector<2x128xi32>
    %823 = arith.sitofp %822 : vector<2x128xi32> to vector<2x128xf32>
    %cst_298 = arith.constant -1.800000e+00 : f32
    %824 = vector.broadcast %cst_298 : f32 to vector<2x128xf32>
    %825 = arith.cmpf oge, %810, %824 : vector<2x128xf32>
    %cst_299 = arith.constant -1.400000e+00 : f32
    %826 = vector.broadcast %cst_299 : f32 to vector<2x128xf32>
    %827 = arith.cmpf olt, %810, %826 : vector<2x128xf32>
    %828 = arith.andi %825, %827 : vector<2x128xi1>
    %829 = arith.extui %828 : vector<2x128xi1> to vector<2x128xi32>
    %830 = arith.sitofp %829 : vector<2x128xi32> to vector<2x128xf32>
    %cst_300 = arith.constant -1.400000e+00 : f32
    %831 = vector.broadcast %cst_300 : f32 to vector<2x128xf32>
    %832 = arith.cmpf oge, %810, %831 : vector<2x128xf32>
    %cst_301 = arith.constant -1.000000e+00 : f32
    %833 = vector.broadcast %cst_301 : f32 to vector<2x128xf32>
    %834 = arith.cmpf olt, %810, %833 : vector<2x128xf32>
    %835 = arith.andi %832, %834 : vector<2x128xi1>
    %836 = arith.extui %835 : vector<2x128xi1> to vector<2x128xi32>
    %837 = arith.sitofp %836 : vector<2x128xi32> to vector<2x128xf32>
    %cst_302 = arith.constant -1.000000e+00 : f32
    %838 = vector.broadcast %cst_302 : f32 to vector<2x128xf32>
    %839 = arith.cmpf oge, %810, %838 : vector<2x128xf32>
    %cst_303 = arith.constant -6.000000e-01 : f32
    %840 = vector.broadcast %cst_303 : f32 to vector<2x128xf32>
    %841 = arith.cmpf olt, %810, %840 : vector<2x128xf32>
    %842 = arith.andi %839, %841 : vector<2x128xi1>
    %843 = arith.extui %842 : vector<2x128xi1> to vector<2x128xi32>
    %844 = arith.sitofp %843 : vector<2x128xi32> to vector<2x128xf32>
    %cst_304 = arith.constant -6.000000e-01 : f32
    %845 = vector.broadcast %cst_304 : f32 to vector<2x128xf32>
    %846 = arith.cmpf oge, %810, %845 : vector<2x128xf32>
    %cst_305 = arith.constant -2.000000e-01 : f32
    %847 = vector.broadcast %cst_305 : f32 to vector<2x128xf32>
    %848 = arith.cmpf olt, %810, %847 : vector<2x128xf32>
    %849 = arith.andi %846, %848 : vector<2x128xi1>
    %850 = arith.extui %849 : vector<2x128xi1> to vector<2x128xi32>
    %851 = arith.sitofp %850 : vector<2x128xi32> to vector<2x128xf32>
    %cst_306 = arith.constant -2.000000e-01 : f32
    %852 = vector.broadcast %cst_306 : f32 to vector<2x128xf32>
    %853 = arith.cmpf oge, %810, %852 : vector<2x128xf32>
    %cst_307 = arith.constant 2.000000e-01 : f32
    %854 = vector.broadcast %cst_307 : f32 to vector<2x128xf32>
    %855 = arith.cmpf olt, %810, %854 : vector<2x128xf32>
    %856 = arith.andi %853, %855 : vector<2x128xi1>
    %857 = arith.extui %856 : vector<2x128xi1> to vector<2x128xi32>
    %858 = arith.sitofp %857 : vector<2x128xi32> to vector<2x128xf32>
    %cst_308 = arith.constant 2.000000e-01 : f32
    %859 = vector.broadcast %cst_308 : f32 to vector<2x128xf32>
    %860 = arith.cmpf oge, %810, %859 : vector<2x128xf32>
    %cst_309 = arith.constant 6.000000e-01 : f32
    %861 = vector.broadcast %cst_309 : f32 to vector<2x128xf32>
    %862 = arith.cmpf olt, %810, %861 : vector<2x128xf32>
    %863 = arith.andi %860, %862 : vector<2x128xi1>
    %864 = arith.extui %863 : vector<2x128xi1> to vector<2x128xi32>
    %865 = arith.sitofp %864 : vector<2x128xi32> to vector<2x128xf32>
    %cst_310 = arith.constant 6.000000e-01 : f32
    %866 = vector.broadcast %cst_310 : f32 to vector<2x128xf32>
    %867 = arith.cmpf oge, %810, %866 : vector<2x128xf32>
    %cst_311 = arith.constant 1.000000e+00 : f32
    %868 = vector.broadcast %cst_311 : f32 to vector<2x128xf32>
    %869 = arith.cmpf olt, %810, %868 : vector<2x128xf32>
    %870 = arith.andi %867, %869 : vector<2x128xi1>
    %871 = arith.extui %870 : vector<2x128xi1> to vector<2x128xi32>
    %872 = arith.sitofp %871 : vector<2x128xi32> to vector<2x128xf32>
    %cst_312 = arith.constant 1.000000e+00 : f32
    %873 = vector.broadcast %cst_312 : f32 to vector<2x128xf32>
    %874 = arith.cmpf oge, %810, %873 : vector<2x128xf32>
    %cst_313 = arith.constant 1.400000e+00 : f32
    %875 = vector.broadcast %cst_313 : f32 to vector<2x128xf32>
    %876 = arith.cmpf olt, %810, %875 : vector<2x128xf32>
    %877 = arith.andi %874, %876 : vector<2x128xi1>
    %878 = arith.extui %877 : vector<2x128xi1> to vector<2x128xi32>
    %879 = arith.sitofp %878 : vector<2x128xi32> to vector<2x128xf32>
    %cst_314 = arith.constant 1.400000e+00 : f32
    %880 = vector.broadcast %cst_314 : f32 to vector<2x128xf32>
    %881 = arith.cmpf oge, %810, %880 : vector<2x128xf32>
    %cst_315 = arith.constant 1.800000e+00 : f32
    %882 = vector.broadcast %cst_315 : f32 to vector<2x128xf32>
    %883 = arith.cmpf olt, %810, %882 : vector<2x128xf32>
    %884 = arith.andi %881, %883 : vector<2x128xi1>
    %885 = arith.extui %884 : vector<2x128xi1> to vector<2x128xi32>
    %886 = arith.sitofp %885 : vector<2x128xi32> to vector<2x128xf32>
    %cst_316 = arith.constant 1.800000e+00 : f32
    %887 = vector.broadcast %cst_316 : f32 to vector<2x128xf32>
    %888 = arith.cmpf oge, %810, %887 : vector<2x128xf32>
    %cst_317 = arith.constant 2.200000e+00 : f32
    %889 = vector.broadcast %cst_317 : f32 to vector<2x128xf32>
    %890 = arith.cmpf olt, %810, %889 : vector<2x128xf32>
    %891 = arith.andi %888, %890 : vector<2x128xi1>
    %892 = arith.extui %891 : vector<2x128xi1> to vector<2x128xi32>
    %893 = arith.sitofp %892 : vector<2x128xi32> to vector<2x128xf32>
    %cst_318 = arith.constant -2.200000e+00 : f32
    %894 = vector.broadcast %cst_318 : f32 to vector<2x128xf32>
    %895 = arith.subf %810, %894 : vector<2x128xf32>
    %cst_319 = arith.constant 2.500000e+00 : f32
    %896 = vector.broadcast %cst_319 : f32 to vector<2x128xf32>
    %897 = arith.mulf %895, %896 : vector<2x128xf32>
    %898 = arith.mulf %897, %823 : vector<2x128xf32>
    %cst_320 = arith.constant -1.400000e+00 : f32
    %899 = vector.broadcast %cst_320 : f32 to vector<2x128xf32>
    %900 = arith.subf %899, %810 : vector<2x128xf32>
    %cst_321 = arith.constant 2.500000e+00 : f32
    %901 = vector.broadcast %cst_321 : f32 to vector<2x128xf32>
    %902 = arith.mulf %900, %901 : vector<2x128xf32>
    %903 = arith.mulf %902, %830 : vector<2x128xf32>
    %904 = arith.addf %898, %903 : vector<2x128xf32>
    %cst_322 = arith.constant -1.800000e+00 : f32
    %905 = vector.broadcast %cst_322 : f32 to vector<2x128xf32>
    %906 = arith.subf %810, %905 : vector<2x128xf32>
    %cst_323 = arith.constant 2.500000e+00 : f32
    %907 = vector.broadcast %cst_323 : f32 to vector<2x128xf32>
    %908 = arith.mulf %906, %907 : vector<2x128xf32>
    %909 = arith.mulf %908, %830 : vector<2x128xf32>
    %cst_324 = arith.constant -1.000000e+00 : f32
    %910 = vector.broadcast %cst_324 : f32 to vector<2x128xf32>
    %911 = arith.subf %910, %810 : vector<2x128xf32>
    %cst_325 = arith.constant 2.500000e+00 : f32
    %912 = vector.broadcast %cst_325 : f32 to vector<2x128xf32>
    %913 = arith.mulf %911, %912 : vector<2x128xf32>
    %914 = arith.mulf %913, %837 : vector<2x128xf32>
    %915 = arith.addf %909, %914 : vector<2x128xf32>
    %cst_326 = arith.constant -1.400000e+00 : f32
    %916 = vector.broadcast %cst_326 : f32 to vector<2x128xf32>
    %917 = arith.subf %810, %916 : vector<2x128xf32>
    %cst_327 = arith.constant 2.500000e+00 : f32
    %918 = vector.broadcast %cst_327 : f32 to vector<2x128xf32>
    %919 = arith.mulf %917, %918 : vector<2x128xf32>
    %920 = arith.mulf %919, %837 : vector<2x128xf32>
    %cst_328 = arith.constant -6.000000e-01 : f32
    %921 = vector.broadcast %cst_328 : f32 to vector<2x128xf32>
    %922 = arith.subf %921, %810 : vector<2x128xf32>
    %cst_329 = arith.constant 2.500000e+00 : f32
    %923 = vector.broadcast %cst_329 : f32 to vector<2x128xf32>
    %924 = arith.mulf %922, %923 : vector<2x128xf32>
    %925 = arith.mulf %924, %844 : vector<2x128xf32>
    %926 = arith.addf %920, %925 : vector<2x128xf32>
    %cst_330 = arith.constant -1.000000e+00 : f32
    %927 = vector.broadcast %cst_330 : f32 to vector<2x128xf32>
    %928 = arith.subf %810, %927 : vector<2x128xf32>
    %cst_331 = arith.constant 2.500000e+00 : f32
    %929 = vector.broadcast %cst_331 : f32 to vector<2x128xf32>
    %930 = arith.mulf %928, %929 : vector<2x128xf32>
    %931 = arith.mulf %930, %844 : vector<2x128xf32>
    %cst_332 = arith.constant -2.000000e-01 : f32
    %932 = vector.broadcast %cst_332 : f32 to vector<2x128xf32>
    %933 = arith.subf %932, %810 : vector<2x128xf32>
    %cst_333 = arith.constant 2.500000e+00 : f32
    %934 = vector.broadcast %cst_333 : f32 to vector<2x128xf32>
    %935 = arith.mulf %933, %934 : vector<2x128xf32>
    %936 = arith.mulf %935, %851 : vector<2x128xf32>
    %937 = arith.addf %931, %936 : vector<2x128xf32>
    %cst_334 = arith.constant -6.000000e-01 : f32
    %938 = vector.broadcast %cst_334 : f32 to vector<2x128xf32>
    %939 = arith.subf %810, %938 : vector<2x128xf32>
    %cst_335 = arith.constant 2.500000e+00 : f32
    %940 = vector.broadcast %cst_335 : f32 to vector<2x128xf32>
    %941 = arith.mulf %939, %940 : vector<2x128xf32>
    %942 = arith.mulf %941, %851 : vector<2x128xf32>
    %cst_336 = arith.constant 2.000000e-01 : f32
    %943 = vector.broadcast %cst_336 : f32 to vector<2x128xf32>
    %944 = arith.subf %943, %810 : vector<2x128xf32>
    %cst_337 = arith.constant 2.500000e+00 : f32
    %945 = vector.broadcast %cst_337 : f32 to vector<2x128xf32>
    %946 = arith.mulf %944, %945 : vector<2x128xf32>
    %947 = arith.mulf %946, %858 : vector<2x128xf32>
    %948 = arith.addf %942, %947 : vector<2x128xf32>
    %cst_338 = arith.constant -2.000000e-01 : f32
    %949 = vector.broadcast %cst_338 : f32 to vector<2x128xf32>
    %950 = arith.subf %810, %949 : vector<2x128xf32>
    %cst_339 = arith.constant 2.500000e+00 : f32
    %951 = vector.broadcast %cst_339 : f32 to vector<2x128xf32>
    %952 = arith.mulf %950, %951 : vector<2x128xf32>
    %953 = arith.mulf %952, %858 : vector<2x128xf32>
    %cst_340 = arith.constant 6.000000e-01 : f32
    %954 = vector.broadcast %cst_340 : f32 to vector<2x128xf32>
    %955 = arith.subf %954, %810 : vector<2x128xf32>
    %cst_341 = arith.constant 2.500000e+00 : f32
    %956 = vector.broadcast %cst_341 : f32 to vector<2x128xf32>
    %957 = arith.mulf %955, %956 : vector<2x128xf32>
    %958 = arith.mulf %957, %865 : vector<2x128xf32>
    %959 = arith.addf %953, %958 : vector<2x128xf32>
    %cst_342 = arith.constant 2.000000e-01 : f32
    %960 = vector.broadcast %cst_342 : f32 to vector<2x128xf32>
    %961 = arith.subf %810, %960 : vector<2x128xf32>
    %cst_343 = arith.constant 2.500000e+00 : f32
    %962 = vector.broadcast %cst_343 : f32 to vector<2x128xf32>
    %963 = arith.mulf %961, %962 : vector<2x128xf32>
    %964 = arith.mulf %963, %865 : vector<2x128xf32>
    %cst_344 = arith.constant 1.000000e+00 : f32
    %965 = vector.broadcast %cst_344 : f32 to vector<2x128xf32>
    %966 = arith.subf %965, %810 : vector<2x128xf32>
    %cst_345 = arith.constant 2.500000e+00 : f32
    %967 = vector.broadcast %cst_345 : f32 to vector<2x128xf32>
    %968 = arith.mulf %966, %967 : vector<2x128xf32>
    %969 = arith.mulf %968, %872 : vector<2x128xf32>
    %970 = arith.addf %964, %969 : vector<2x128xf32>
    %cst_346 = arith.constant 6.000000e-01 : f32
    %971 = vector.broadcast %cst_346 : f32 to vector<2x128xf32>
    %972 = arith.subf %810, %971 : vector<2x128xf32>
    %cst_347 = arith.constant 2.500000e+00 : f32
    %973 = vector.broadcast %cst_347 : f32 to vector<2x128xf32>
    %974 = arith.mulf %972, %973 : vector<2x128xf32>
    %975 = arith.mulf %974, %872 : vector<2x128xf32>
    %cst_348 = arith.constant 1.400000e+00 : f32
    %976 = vector.broadcast %cst_348 : f32 to vector<2x128xf32>
    %977 = arith.subf %976, %810 : vector<2x128xf32>
    %cst_349 = arith.constant 2.500000e+00 : f32
    %978 = vector.broadcast %cst_349 : f32 to vector<2x128xf32>
    %979 = arith.mulf %977, %978 : vector<2x128xf32>
    %980 = arith.mulf %979, %879 : vector<2x128xf32>
    %981 = arith.addf %975, %980 : vector<2x128xf32>
    %cst_350 = arith.constant 1.000000e+00 : f32
    %982 = vector.broadcast %cst_350 : f32 to vector<2x128xf32>
    %983 = arith.subf %810, %982 : vector<2x128xf32>
    %cst_351 = arith.constant 2.500000e+00 : f32
    %984 = vector.broadcast %cst_351 : f32 to vector<2x128xf32>
    %985 = arith.mulf %983, %984 : vector<2x128xf32>
    %986 = arith.mulf %985, %879 : vector<2x128xf32>
    %cst_352 = arith.constant 1.800000e+00 : f32
    %987 = vector.broadcast %cst_352 : f32 to vector<2x128xf32>
    %988 = arith.subf %987, %810 : vector<2x128xf32>
    %cst_353 = arith.constant 2.500000e+00 : f32
    %989 = vector.broadcast %cst_353 : f32 to vector<2x128xf32>
    %990 = arith.mulf %988, %989 : vector<2x128xf32>
    %991 = arith.mulf %990, %886 : vector<2x128xf32>
    %992 = arith.addf %986, %991 : vector<2x128xf32>
    %cst_354 = arith.constant 1.400000e+00 : f32
    %993 = vector.broadcast %cst_354 : f32 to vector<2x128xf32>
    %994 = arith.subf %810, %993 : vector<2x128xf32>
    %cst_355 = arith.constant 2.500000e+00 : f32
    %995 = vector.broadcast %cst_355 : f32 to vector<2x128xf32>
    %996 = arith.mulf %994, %995 : vector<2x128xf32>
    %997 = arith.mulf %996, %886 : vector<2x128xf32>
    %cst_356 = arith.constant 2.200000e+00 : f32
    %998 = vector.broadcast %cst_356 : f32 to vector<2x128xf32>
    %999 = arith.subf %998, %810 : vector<2x128xf32>
    %cst_357 = arith.constant 2.500000e+00 : f32
    %1000 = vector.broadcast %cst_357 : f32 to vector<2x128xf32>
    %1001 = arith.mulf %999, %1000 : vector<2x128xf32>
    %1002 = arith.mulf %1001, %893 : vector<2x128xf32>
    %1003 = arith.addf %997, %1002 : vector<2x128xf32>
    %cst_358 = arith.constant -2.200000e+00 : f32
    %1004 = vector.broadcast %cst_358 : f32 to vector<2x128xf32>
    %1005 = arith.subf %810, %1004 : vector<2x128xf32>
    %cst_359 = arith.constant 1.250000e+00 : f32
    %1006 = vector.broadcast %cst_359 : f32 to vector<2x128xf32>
    %1007 = arith.mulf %1005, %1006 : vector<2x128xf32>
    %1008 = arith.mulf %1007, %904 : vector<2x128xf32>
    %cst_360 = arith.constant -1.000000e+00 : f32
    %1009 = vector.broadcast %cst_360 : f32 to vector<2x128xf32>
    %1010 = arith.subf %1009, %810 : vector<2x128xf32>
    %cst_361 = arith.constant 1.250000e+00 : f32
    %1011 = vector.broadcast %cst_361 : f32 to vector<2x128xf32>
    %1012 = arith.mulf %1010, %1011 : vector<2x128xf32>
    %1013 = arith.mulf %1012, %915 : vector<2x128xf32>
    %1014 = arith.addf %1008, %1013 : vector<2x128xf32>
    %cst_362 = arith.constant -1.800000e+00 : f32
    %1015 = vector.broadcast %cst_362 : f32 to vector<2x128xf32>
    %1016 = arith.subf %810, %1015 : vector<2x128xf32>
    %cst_363 = arith.constant 1.250000e+00 : f32
    %1017 = vector.broadcast %cst_363 : f32 to vector<2x128xf32>
    %1018 = arith.mulf %1016, %1017 : vector<2x128xf32>
    %1019 = arith.mulf %1018, %915 : vector<2x128xf32>
    %cst_364 = arith.constant -6.000000e-01 : f32
    %1020 = vector.broadcast %cst_364 : f32 to vector<2x128xf32>
    %1021 = arith.subf %1020, %810 : vector<2x128xf32>
    %cst_365 = arith.constant 1.250000e+00 : f32
    %1022 = vector.broadcast %cst_365 : f32 to vector<2x128xf32>
    %1023 = arith.mulf %1021, %1022 : vector<2x128xf32>
    %1024 = arith.mulf %1023, %926 : vector<2x128xf32>
    %1025 = arith.addf %1019, %1024 : vector<2x128xf32>
    %cst_366 = arith.constant -1.400000e+00 : f32
    %1026 = vector.broadcast %cst_366 : f32 to vector<2x128xf32>
    %1027 = arith.subf %810, %1026 : vector<2x128xf32>
    %cst_367 = arith.constant 1.250000e+00 : f32
    %1028 = vector.broadcast %cst_367 : f32 to vector<2x128xf32>
    %1029 = arith.mulf %1027, %1028 : vector<2x128xf32>
    %1030 = arith.mulf %1029, %926 : vector<2x128xf32>
    %cst_368 = arith.constant -2.000000e-01 : f32
    %1031 = vector.broadcast %cst_368 : f32 to vector<2x128xf32>
    %1032 = arith.subf %1031, %810 : vector<2x128xf32>
    %cst_369 = arith.constant 1.250000e+00 : f32
    %1033 = vector.broadcast %cst_369 : f32 to vector<2x128xf32>
    %1034 = arith.mulf %1032, %1033 : vector<2x128xf32>
    %1035 = arith.mulf %1034, %937 : vector<2x128xf32>
    %1036 = arith.addf %1030, %1035 : vector<2x128xf32>
    %cst_370 = arith.constant -1.000000e+00 : f32
    %1037 = vector.broadcast %cst_370 : f32 to vector<2x128xf32>
    %1038 = arith.subf %810, %1037 : vector<2x128xf32>
    %cst_371 = arith.constant 1.250000e+00 : f32
    %1039 = vector.broadcast %cst_371 : f32 to vector<2x128xf32>
    %1040 = arith.mulf %1038, %1039 : vector<2x128xf32>
    %1041 = arith.mulf %1040, %937 : vector<2x128xf32>
    %cst_372 = arith.constant 2.000000e-01 : f32
    %1042 = vector.broadcast %cst_372 : f32 to vector<2x128xf32>
    %1043 = arith.subf %1042, %810 : vector<2x128xf32>
    %cst_373 = arith.constant 1.250000e+00 : f32
    %1044 = vector.broadcast %cst_373 : f32 to vector<2x128xf32>
    %1045 = arith.mulf %1043, %1044 : vector<2x128xf32>
    %1046 = arith.mulf %1045, %948 : vector<2x128xf32>
    %1047 = arith.addf %1041, %1046 : vector<2x128xf32>
    %cst_374 = arith.constant -6.000000e-01 : f32
    %1048 = vector.broadcast %cst_374 : f32 to vector<2x128xf32>
    %1049 = arith.subf %810, %1048 : vector<2x128xf32>
    %cst_375 = arith.constant 1.250000e+00 : f32
    %1050 = vector.broadcast %cst_375 : f32 to vector<2x128xf32>
    %1051 = arith.mulf %1049, %1050 : vector<2x128xf32>
    %1052 = arith.mulf %1051, %948 : vector<2x128xf32>
    %cst_376 = arith.constant 6.000000e-01 : f32
    %1053 = vector.broadcast %cst_376 : f32 to vector<2x128xf32>
    %1054 = arith.subf %1053, %810 : vector<2x128xf32>
    %cst_377 = arith.constant 1.250000e+00 : f32
    %1055 = vector.broadcast %cst_377 : f32 to vector<2x128xf32>
    %1056 = arith.mulf %1054, %1055 : vector<2x128xf32>
    %1057 = arith.mulf %1056, %959 : vector<2x128xf32>
    %1058 = arith.addf %1052, %1057 : vector<2x128xf32>
    %cst_378 = arith.constant -2.000000e-01 : f32
    %1059 = vector.broadcast %cst_378 : f32 to vector<2x128xf32>
    %1060 = arith.subf %810, %1059 : vector<2x128xf32>
    %cst_379 = arith.constant 1.250000e+00 : f32
    %1061 = vector.broadcast %cst_379 : f32 to vector<2x128xf32>
    %1062 = arith.mulf %1060, %1061 : vector<2x128xf32>
    %1063 = arith.mulf %1062, %959 : vector<2x128xf32>
    %cst_380 = arith.constant 1.000000e+00 : f32
    %1064 = vector.broadcast %cst_380 : f32 to vector<2x128xf32>
    %1065 = arith.subf %1064, %810 : vector<2x128xf32>
    %cst_381 = arith.constant 1.250000e+00 : f32
    %1066 = vector.broadcast %cst_381 : f32 to vector<2x128xf32>
    %1067 = arith.mulf %1065, %1066 : vector<2x128xf32>
    %1068 = arith.mulf %1067, %970 : vector<2x128xf32>
    %1069 = arith.addf %1063, %1068 : vector<2x128xf32>
    %cst_382 = arith.constant 2.000000e-01 : f32
    %1070 = vector.broadcast %cst_382 : f32 to vector<2x128xf32>
    %1071 = arith.subf %810, %1070 : vector<2x128xf32>
    %cst_383 = arith.constant 1.250000e+00 : f32
    %1072 = vector.broadcast %cst_383 : f32 to vector<2x128xf32>
    %1073 = arith.mulf %1071, %1072 : vector<2x128xf32>
    %1074 = arith.mulf %1073, %970 : vector<2x128xf32>
    %cst_384 = arith.constant 1.400000e+00 : f32
    %1075 = vector.broadcast %cst_384 : f32 to vector<2x128xf32>
    %1076 = arith.subf %1075, %810 : vector<2x128xf32>
    %cst_385 = arith.constant 1.250000e+00 : f32
    %1077 = vector.broadcast %cst_385 : f32 to vector<2x128xf32>
    %1078 = arith.mulf %1076, %1077 : vector<2x128xf32>
    %1079 = arith.mulf %1078, %981 : vector<2x128xf32>
    %1080 = arith.addf %1074, %1079 : vector<2x128xf32>
    %cst_386 = arith.constant 6.000000e-01 : f32
    %1081 = vector.broadcast %cst_386 : f32 to vector<2x128xf32>
    %1082 = arith.subf %810, %1081 : vector<2x128xf32>
    %cst_387 = arith.constant 1.250000e+00 : f32
    %1083 = vector.broadcast %cst_387 : f32 to vector<2x128xf32>
    %1084 = arith.mulf %1082, %1083 : vector<2x128xf32>
    %1085 = arith.mulf %1084, %981 : vector<2x128xf32>
    %cst_388 = arith.constant 1.800000e+00 : f32
    %1086 = vector.broadcast %cst_388 : f32 to vector<2x128xf32>
    %1087 = arith.subf %1086, %810 : vector<2x128xf32>
    %cst_389 = arith.constant 1.250000e+00 : f32
    %1088 = vector.broadcast %cst_389 : f32 to vector<2x128xf32>
    %1089 = arith.mulf %1087, %1088 : vector<2x128xf32>
    %1090 = arith.mulf %1089, %992 : vector<2x128xf32>
    %1091 = arith.addf %1085, %1090 : vector<2x128xf32>
    %cst_390 = arith.constant 1.000000e+00 : f32
    %1092 = vector.broadcast %cst_390 : f32 to vector<2x128xf32>
    %1093 = arith.subf %810, %1092 : vector<2x128xf32>
    %cst_391 = arith.constant 1.250000e+00 : f32
    %1094 = vector.broadcast %cst_391 : f32 to vector<2x128xf32>
    %1095 = arith.mulf %1093, %1094 : vector<2x128xf32>
    %1096 = arith.mulf %1095, %992 : vector<2x128xf32>
    %cst_392 = arith.constant 2.200000e+00 : f32
    %1097 = vector.broadcast %cst_392 : f32 to vector<2x128xf32>
    %1098 = arith.subf %1097, %810 : vector<2x128xf32>
    %cst_393 = arith.constant 1.250000e+00 : f32
    %1099 = vector.broadcast %cst_393 : f32 to vector<2x128xf32>
    %1100 = arith.mulf %1098, %1099 : vector<2x128xf32>
    %1101 = arith.mulf %1100, %1003 : vector<2x128xf32>
    %1102 = arith.addf %1096, %1101 : vector<2x128xf32>
    %cst_394 = arith.constant -2.200000e+00 : f32
    %1103 = vector.broadcast %cst_394 : f32 to vector<2x128xf32>
    %1104 = arith.subf %810, %1103 : vector<2x128xf32>
    %cst_395 = arith.constant 0.833333313 : f32
    %1105 = vector.broadcast %cst_395 : f32 to vector<2x128xf32>
    %1106 = arith.mulf %1104, %1105 : vector<2x128xf32>
    %1107 = arith.mulf %1106, %1014 : vector<2x128xf32>
    %cst_396 = arith.constant -6.000000e-01 : f32
    %1108 = vector.broadcast %cst_396 : f32 to vector<2x128xf32>
    %1109 = arith.subf %1108, %810 : vector<2x128xf32>
    %cst_397 = arith.constant 0.833333313 : f32
    %1110 = vector.broadcast %cst_397 : f32 to vector<2x128xf32>
    %1111 = arith.mulf %1109, %1110 : vector<2x128xf32>
    %1112 = arith.mulf %1111, %1025 : vector<2x128xf32>
    %1113 = arith.addf %1107, %1112 : vector<2x128xf32>
    %cst_398 = arith.constant -1.800000e+00 : f32
    %1114 = vector.broadcast %cst_398 : f32 to vector<2x128xf32>
    %1115 = arith.subf %810, %1114 : vector<2x128xf32>
    %cst_399 = arith.constant 0.833333313 : f32
    %1116 = vector.broadcast %cst_399 : f32 to vector<2x128xf32>
    %1117 = arith.mulf %1115, %1116 : vector<2x128xf32>
    %1118 = arith.mulf %1117, %1025 : vector<2x128xf32>
    %cst_400 = arith.constant -2.000000e-01 : f32
    %1119 = vector.broadcast %cst_400 : f32 to vector<2x128xf32>
    %1120 = arith.subf %1119, %810 : vector<2x128xf32>
    %cst_401 = arith.constant 0.833333313 : f32
    %1121 = vector.broadcast %cst_401 : f32 to vector<2x128xf32>
    %1122 = arith.mulf %1120, %1121 : vector<2x128xf32>
    %1123 = arith.mulf %1122, %1036 : vector<2x128xf32>
    %1124 = arith.addf %1118, %1123 : vector<2x128xf32>
    %cst_402 = arith.constant -1.400000e+00 : f32
    %1125 = vector.broadcast %cst_402 : f32 to vector<2x128xf32>
    %1126 = arith.subf %810, %1125 : vector<2x128xf32>
    %cst_403 = arith.constant 0.833333313 : f32
    %1127 = vector.broadcast %cst_403 : f32 to vector<2x128xf32>
    %1128 = arith.mulf %1126, %1127 : vector<2x128xf32>
    %1129 = arith.mulf %1128, %1036 : vector<2x128xf32>
    %cst_404 = arith.constant 2.000000e-01 : f32
    %1130 = vector.broadcast %cst_404 : f32 to vector<2x128xf32>
    %1131 = arith.subf %1130, %810 : vector<2x128xf32>
    %cst_405 = arith.constant 0.833333313 : f32
    %1132 = vector.broadcast %cst_405 : f32 to vector<2x128xf32>
    %1133 = arith.mulf %1131, %1132 : vector<2x128xf32>
    %1134 = arith.mulf %1133, %1047 : vector<2x128xf32>
    %1135 = arith.addf %1129, %1134 : vector<2x128xf32>
    %cst_406 = arith.constant -1.000000e+00 : f32
    %1136 = vector.broadcast %cst_406 : f32 to vector<2x128xf32>
    %1137 = arith.subf %810, %1136 : vector<2x128xf32>
    %cst_407 = arith.constant 0.833333313 : f32
    %1138 = vector.broadcast %cst_407 : f32 to vector<2x128xf32>
    %1139 = arith.mulf %1137, %1138 : vector<2x128xf32>
    %1140 = arith.mulf %1139, %1047 : vector<2x128xf32>
    %cst_408 = arith.constant 6.000000e-01 : f32
    %1141 = vector.broadcast %cst_408 : f32 to vector<2x128xf32>
    %1142 = arith.subf %1141, %810 : vector<2x128xf32>
    %cst_409 = arith.constant 0.833333313 : f32
    %1143 = vector.broadcast %cst_409 : f32 to vector<2x128xf32>
    %1144 = arith.mulf %1142, %1143 : vector<2x128xf32>
    %1145 = arith.mulf %1144, %1058 : vector<2x128xf32>
    %1146 = arith.addf %1140, %1145 : vector<2x128xf32>
    %cst_410 = arith.constant -6.000000e-01 : f32
    %1147 = vector.broadcast %cst_410 : f32 to vector<2x128xf32>
    %1148 = arith.subf %810, %1147 : vector<2x128xf32>
    %cst_411 = arith.constant 0.833333313 : f32
    %1149 = vector.broadcast %cst_411 : f32 to vector<2x128xf32>
    %1150 = arith.mulf %1148, %1149 : vector<2x128xf32>
    %1151 = arith.mulf %1150, %1058 : vector<2x128xf32>
    %cst_412 = arith.constant 1.000000e+00 : f32
    %1152 = vector.broadcast %cst_412 : f32 to vector<2x128xf32>
    %1153 = arith.subf %1152, %810 : vector<2x128xf32>
    %cst_413 = arith.constant 0.833333313 : f32
    %1154 = vector.broadcast %cst_413 : f32 to vector<2x128xf32>
    %1155 = arith.mulf %1153, %1154 : vector<2x128xf32>
    %1156 = arith.mulf %1155, %1069 : vector<2x128xf32>
    %1157 = arith.addf %1151, %1156 : vector<2x128xf32>
    %cst_414 = arith.constant -2.000000e-01 : f32
    %1158 = vector.broadcast %cst_414 : f32 to vector<2x128xf32>
    %1159 = arith.subf %810, %1158 : vector<2x128xf32>
    %cst_415 = arith.constant 0.833333313 : f32
    %1160 = vector.broadcast %cst_415 : f32 to vector<2x128xf32>
    %1161 = arith.mulf %1159, %1160 : vector<2x128xf32>
    %1162 = arith.mulf %1161, %1069 : vector<2x128xf32>
    %cst_416 = arith.constant 1.400000e+00 : f32
    %1163 = vector.broadcast %cst_416 : f32 to vector<2x128xf32>
    %1164 = arith.subf %1163, %810 : vector<2x128xf32>
    %cst_417 = arith.constant 0.833333313 : f32
    %1165 = vector.broadcast %cst_417 : f32 to vector<2x128xf32>
    %1166 = arith.mulf %1164, %1165 : vector<2x128xf32>
    %1167 = arith.mulf %1166, %1080 : vector<2x128xf32>
    %1168 = arith.addf %1162, %1167 : vector<2x128xf32>
    %cst_418 = arith.constant 2.000000e-01 : f32
    %1169 = vector.broadcast %cst_418 : f32 to vector<2x128xf32>
    %1170 = arith.subf %810, %1169 : vector<2x128xf32>
    %cst_419 = arith.constant 0.833333313 : f32
    %1171 = vector.broadcast %cst_419 : f32 to vector<2x128xf32>
    %1172 = arith.mulf %1170, %1171 : vector<2x128xf32>
    %1173 = arith.mulf %1172, %1080 : vector<2x128xf32>
    %cst_420 = arith.constant 1.800000e+00 : f32
    %1174 = vector.broadcast %cst_420 : f32 to vector<2x128xf32>
    %1175 = arith.subf %1174, %810 : vector<2x128xf32>
    %cst_421 = arith.constant 0.833333313 : f32
    %1176 = vector.broadcast %cst_421 : f32 to vector<2x128xf32>
    %1177 = arith.mulf %1175, %1176 : vector<2x128xf32>
    %1178 = arith.mulf %1177, %1091 : vector<2x128xf32>
    %1179 = arith.addf %1173, %1178 : vector<2x128xf32>
    %cst_422 = arith.constant 6.000000e-01 : f32
    %1180 = vector.broadcast %cst_422 : f32 to vector<2x128xf32>
    %1181 = arith.subf %810, %1180 : vector<2x128xf32>
    %cst_423 = arith.constant 0.833333313 : f32
    %1182 = vector.broadcast %cst_423 : f32 to vector<2x128xf32>
    %1183 = arith.mulf %1181, %1182 : vector<2x128xf32>
    %1184 = arith.mulf %1183, %1091 : vector<2x128xf32>
    %cst_424 = arith.constant 2.200000e+00 : f32
    %1185 = vector.broadcast %cst_424 : f32 to vector<2x128xf32>
    %1186 = arith.subf %1185, %810 : vector<2x128xf32>
    %cst_425 = arith.constant 0.833333313 : f32
    %1187 = vector.broadcast %cst_425 : f32 to vector<2x128xf32>
    %1188 = arith.mulf %1186, %1187 : vector<2x128xf32>
    %1189 = arith.mulf %1188, %1102 : vector<2x128xf32>
    %1190 = arith.addf %1184, %1189 : vector<2x128xf32>
    %1191 = tpu.concatenate %816, %1113, %1124, %1135, %1146, %1157, %1168, %1179, %1190 in 1 : vector<2x128xf32>, vector<2x128xf32>, vector<2x128xf32>, vector<2x128xf32>, vector<2x128xf32>, vector<2x128xf32>, vector<2x128xf32>, vector<2x128xf32>, vector<2x128xf32> -> vector<2x1152xf32>
    %1192 = arith.truncf %1191 : vector<2x1152xf32> to vector<2x1152xbf16>
    %c0_426 = arith.constant 0 : index
    %c0_427 = arith.constant 0 : index
    %c0_428 = arith.constant 0 : index
    %1193 = vector.load %arg4[%c0_426, %c0_427, %c0_428] : memref<2x1152x8xbf16, #tpu.memory_space<vmem>>, vector<1x1152x8xbf16>
    %1194 = vector.shape_cast %1193 : vector<1x1152x8xbf16> to vector<1152x8xbf16>
    %cst_429 = arith.constant dense<0.000000e+00> : vector<2x8xf32>
    %1195 = tpu.matmul %1192, %1194, %cst_429 {dimension_numbers = #tpu.dot_dimension_numbers<[1], [0], [0], [1], [0, 0, 1, 1], [], []>} : vector<2x1152xbf16>, vector<1152x8xbf16>, vector<2x8xf32> -> vector<2x8xf32>
    %c0_430 = arith.constant 0 : index
    %c0_431 = arith.constant 0 : index
    %c0_432 = arith.constant 0 : index
    %1196 = vector.load %arg5[%c0_430, %c0_431, %c0_432] : memref<2x2x8xf32, #tpu.memory_space<vmem>>, vector<1x2x8xf32>
    %1197 = vector.shape_cast %1196 : vector<1x2x8xf32> to vector<2x8xf32>
    %1198 = vector.shape_cast %1195 : vector<2x8xf32> to vector<1x2x8xf32>
    tpu.vector_store %arg5[%c0_430, %c0_431, %c0_432], %1198 {strides = array<i32>} : memref<2x2x8xf32, #tpu.memory_space<vmem>>, vector<1x2x8xf32>,
    %c1 = arith.constant 1 : index
    %c0_433 = arith.constant 0 : index
    %c0_434 = arith.constant 0 : index
    %1199 = vector.load %arg1[%c1, %c0_433, %c0_434] : memref<2x2x16xf32, #tpu.memory_space<vmem>>, vector<1x2x16xf32>
    %1200 = vector.shape_cast %1199 : vector<1x2x16xf32> to vector<2x16xf32>
    %1201 = arith.negf %1200 : vector<2x16xf32>
    %1202 = math.exp %1201 : vector<2x16xf32>
    %cst_435 = arith.constant 1.000000e+00 : f32
    %1203 = vector.broadcast %cst_435 : f32 to vector<2x16xf32>
    %1204 = arith.addf %1203, %1202 : vector<2x16xf32>
    %1205 = arith.divf %1203, %1204 : vector<2x16xf32>
    %1206 = arith.mulf %1200, %1205 : vector<2x16xf32>
    %1207 = arith.truncf %1206 : vector<2x16xf32> to vector<2x16xbf16>
    %c1_436 = arith.constant 1 : index
    %c0_437 = arith.constant 0 : index
    %c0_438 = arith.constant 0 : index
    %1208 = vector.load %arg2[%c1_436, %c0_437, %c0_438] : memref<2x144x256xbf16, #tpu.memory_space<vmem>>, vector<1x16x256xbf16>
    %1209 = vector.shape_cast %1208 : vector<1x16x256xbf16> to vector<16x256xbf16>
    %cst_439 = arith.constant dense<0.000000e+00> : vector<2x256xf32>
    %1210 = tpu.matmul %1207, %1209, %cst_439 {dimension_numbers = #tpu.dot_dimension_numbers<[1], [0], [0], [1], [0, 0, 1, 1], [], []>} : vector<2x16xbf16>, vector<16x256xbf16>, vector<2x256xf32> -> vector<2x256xf32>
    %cst_440 = arith.constant -2.200000e+00 : f32
    %1211 = vector.broadcast %cst_440 : f32 to vector<2x16xf32>
    %1212 = arith.cmpf oge, %1200, %1211 : vector<2x16xf32>
    %cst_441 = arith.constant -1.800000e+00 : f32
    %1213 = vector.broadcast %cst_441 : f32 to vector<2x16xf32>
    %1214 = arith.cmpf olt, %1200, %1213 : vector<2x16xf32>
    %1215 = arith.andi %1212, %1214 : vector<2x16xi1>
    %1216 = arith.extui %1215 : vector<2x16xi1> to vector<2x16xi32>
    %1217 = arith.sitofp %1216 : vector<2x16xi32> to vector<2x16xf32>
    %cst_442 = arith.constant -1.800000e+00 : f32
    %1218 = vector.broadcast %cst_442 : f32 to vector<2x16xf32>
    %1219 = arith.cmpf oge, %1200, %1218 : vector<2x16xf32>
    %cst_443 = arith.constant -1.400000e+00 : f32
    %1220 = vector.broadcast %cst_443 : f32 to vector<2x16xf32>
    %1221 = arith.cmpf olt, %1200, %1220 : vector<2x16xf32>
    %1222 = arith.andi %1219, %1221 : vector<2x16xi1>
    %1223 = arith.extui %1222 : vector<2x16xi1> to vector<2x16xi32>
    %1224 = arith.sitofp %1223 : vector<2x16xi32> to vector<2x16xf32>
    %cst_444 = arith.constant -1.400000e+00 : f32
    %1225 = vector.broadcast %cst_444 : f32 to vector<2x16xf32>
    %1226 = arith.cmpf oge, %1200, %1225 : vector<2x16xf32>
    %cst_445 = arith.constant -1.000000e+00 : f32
    %1227 = vector.broadcast %cst_445 : f32 to vector<2x16xf32>
    %1228 = arith.cmpf olt, %1200, %1227 : vector<2x16xf32>
    %1229 = arith.andi %1226, %1228 : vector<2x16xi1>
    %1230 = arith.extui %1229 : vector<2x16xi1> to vector<2x16xi32>
    %1231 = arith.sitofp %1230 : vector<2x16xi32> to vector<2x16xf32>
    %cst_446 = arith.constant -1.000000e+00 : f32
    %1232 = vector.broadcast %cst_446 : f32 to vector<2x16xf32>
    %1233 = arith.cmpf oge, %1200, %1232 : vector<2x16xf32>
    %cst_447 = arith.constant -6.000000e-01 : f32
    %1234 = vector.broadcast %cst_447 : f32 to vector<2x16xf32>
    %1235 = arith.cmpf olt, %1200, %1234 : vector<2x16xf32>
    %1236 = arith.andi %1233, %1235 : vector<2x16xi1>
    %1237 = arith.extui %1236 : vector<2x16xi1> to vector<2x16xi32>
    %1238 = arith.sitofp %1237 : vector<2x16xi32> to vector<2x16xf32>
    %cst_448 = arith.constant -6.000000e-01 : f32
    %1239 = vector.broadcast %cst_448 : f32 to vector<2x16xf32>
    %1240 = arith.cmpf oge, %1200, %1239 : vector<2x16xf32>
    %cst_449 = arith.constant -2.000000e-01 : f32
    %1241 = vector.broadcast %cst_449 : f32 to vector<2x16xf32>
    %1242 = arith.cmpf olt, %1200, %1241 : vector<2x16xf32>
    %1243 = arith.andi %1240, %1242 : vector<2x16xi1>
    %1244 = arith.extui %1243 : vector<2x16xi1> to vector<2x16xi32>
    %1245 = arith.sitofp %1244 : vector<2x16xi32> to vector<2x16xf32>
    %cst_450 = arith.constant -2.000000e-01 : f32
    %1246 = vector.broadcast %cst_450 : f32 to vector<2x16xf32>
    %1247 = arith.cmpf oge, %1200, %1246 : vector<2x16xf32>
    %cst_451 = arith.constant 2.000000e-01 : f32
    %1248 = vector.broadcast %cst_451 : f32 to vector<2x16xf32>
    %1249 = arith.cmpf olt, %1200, %1248 : vector<2x16xf32>
    %1250 = arith.andi %1247, %1249 : vector<2x16xi1>
    %1251 = arith.extui %1250 : vector<2x16xi1> to vector<2x16xi32>
    %1252 = arith.sitofp %1251 : vector<2x16xi32> to vector<2x16xf32>
    %cst_452 = arith.constant 2.000000e-01 : f32
    %1253 = vector.broadcast %cst_452 : f32 to vector<2x16xf32>
    %1254 = arith.cmpf oge, %1200, %1253 : vector<2x16xf32>
    %cst_453 = arith.constant 6.000000e-01 : f32
    %1255 = vector.broadcast %cst_453 : f32 to vector<2x16xf32>
    %1256 = arith.cmpf olt, %1200, %1255 : vector<2x16xf32>
    %1257 = arith.andi %1254, %1256 : vector<2x16xi1>
    %1258 = arith.extui %1257 : vector<2x16xi1> to vector<2x16xi32>
    %1259 = arith.sitofp %1258 : vector<2x16xi32> to vector<2x16xf32>
    %cst_454 = arith.constant 6.000000e-01 : f32
    %1260 = vector.broadcast %cst_454 : f32 to vector<2x16xf32>
    %1261 = arith.cmpf oge, %1200, %1260 : vector<2x16xf32>
    %cst_455 = arith.constant 1.000000e+00 : f32
    %1262 = vector.broadcast %cst_455 : f32 to vector<2x16xf32>
    %1263 = arith.cmpf olt, %1200, %1262 : vector<2x16xf32>
    %1264 = arith.andi %1261, %1263 : vector<2x16xi1>
    %1265 = arith.extui %1264 : vector<2x16xi1> to vector<2x16xi32>
    %1266 = arith.sitofp %1265 : vector<2x16xi32> to vector<2x16xf32>
    %cst_456 = arith.constant 1.000000e+00 : f32
    %1267 = vector.broadcast %cst_456 : f32 to vector<2x16xf32>
    %1268 = arith.cmpf oge, %1200, %1267 : vector<2x16xf32>
    %cst_457 = arith.constant 1.400000e+00 : f32
    %1269 = vector.broadcast %cst_457 : f32 to vector<2x16xf32>
    %1270 = arith.cmpf olt, %1200, %1269 : vector<2x16xf32>
    %1271 = arith.andi %1268, %1270 : vector<2x16xi1>
    %1272 = arith.extui %1271 : vector<2x16xi1> to vector<2x16xi32>
    %1273 = arith.sitofp %1272 : vector<2x16xi32> to vector<2x16xf32>
    %cst_458 = arith.constant 1.400000e+00 : f32
    %1274 = vector.broadcast %cst_458 : f32 to vector<2x16xf32>
    %1275 = arith.cmpf oge, %1200, %1274 : vector<2x16xf32>
    %cst_459 = arith.constant 1.800000e+00 : f32
    %1276 = vector.broadcast %cst_459 : f32 to vector<2x16xf32>
    %1277 = arith.cmpf olt, %1200, %1276 : vector<2x16xf32>
    %1278 = arith.andi %1275, %1277 : vector<2x16xi1>
    %1279 = arith.extui %1278 : vector<2x16xi1> to vector<2x16xi32>
    %1280 = arith.sitofp %1279 : vector<2x16xi32> to vector<2x16xf32>
    %cst_460 = arith.constant 1.800000e+00 : f32
    %1281 = vector.broadcast %cst_460 : f32 to vector<2x16xf32>
    %1282 = arith.cmpf oge, %1200, %1281 : vector<2x16xf32>
    %cst_461 = arith.constant 2.200000e+00 : f32
    %1283 = vector.broadcast %cst_461 : f32 to vector<2x16xf32>
    %1284 = arith.cmpf olt, %1200, %1283 : vector<2x16xf32>
    %1285 = arith.andi %1282, %1284 : vector<2x16xi1>
    %1286 = arith.extui %1285 : vector<2x16xi1> to vector<2x16xi32>
    %1287 = arith.sitofp %1286 : vector<2x16xi32> to vector<2x16xf32>
    %cst_462 = arith.constant -2.200000e+00 : f32
    %1288 = vector.broadcast %cst_462 : f32 to vector<2x16xf32>
    %1289 = arith.subf %1200, %1288 : vector<2x16xf32>
    %cst_463 = arith.constant 2.500000e+00 : f32
    %1290 = vector.broadcast %cst_463 : f32 to vector<2x16xf32>
    %1291 = arith.mulf %1289, %1290 : vector<2x16xf32>
    %1292 = arith.mulf %1291, %1217 : vector<2x16xf32>
    %cst_464 = arith.constant -1.400000e+00 : f32
    %1293 = vector.broadcast %cst_464 : f32 to vector<2x16xf32>
    %1294 = arith.subf %1293, %1200 : vector<2x16xf32>
    %cst_465 = arith.constant 2.500000e+00 : f32
    %1295 = vector.broadcast %cst_465 : f32 to vector<2x16xf32>
    %1296 = arith.mulf %1294, %1295 : vector<2x16xf32>
    %1297 = arith.mulf %1296, %1224 : vector<2x16xf32>
    %1298 = arith.addf %1292, %1297 : vector<2x16xf32>
    %cst_466 = arith.constant -1.800000e+00 : f32
    %1299 = vector.broadcast %cst_466 : f32 to vector<2x16xf32>
    %1300 = arith.subf %1200, %1299 : vector<2x16xf32>
    %cst_467 = arith.constant 2.500000e+00 : f32
    %1301 = vector.broadcast %cst_467 : f32 to vector<2x16xf32>
    %1302 = arith.mulf %1300, %1301 : vector<2x16xf32>
    %1303 = arith.mulf %1302, %1224 : vector<2x16xf32>
    %cst_468 = arith.constant -1.000000e+00 : f32
    %1304 = vector.broadcast %cst_468 : f32 to vector<2x16xf32>
    %1305 = arith.subf %1304, %1200 : vector<2x16xf32>
    %cst_469 = arith.constant 2.500000e+00 : f32
    %1306 = vector.broadcast %cst_469 : f32 to vector<2x16xf32>
    %1307 = arith.mulf %1305, %1306 : vector<2x16xf32>
    %1308 = arith.mulf %1307, %1231 : vector<2x16xf32>
    %1309 = arith.addf %1303, %1308 : vector<2x16xf32>
    %cst_470 = arith.constant -1.400000e+00 : f32
    %1310 = vector.broadcast %cst_470 : f32 to vector<2x16xf32>
    %1311 = arith.subf %1200, %1310 : vector<2x16xf32>
    %cst_471 = arith.constant 2.500000e+00 : f32
    %1312 = vector.broadcast %cst_471 : f32 to vector<2x16xf32>
    %1313 = arith.mulf %1311, %1312 : vector<2x16xf32>
    %1314 = arith.mulf %1313, %1231 : vector<2x16xf32>
    %cst_472 = arith.constant -6.000000e-01 : f32
    %1315 = vector.broadcast %cst_472 : f32 to vector<2x16xf32>
    %1316 = arith.subf %1315, %1200 : vector<2x16xf32>
    %cst_473 = arith.constant 2.500000e+00 : f32
    %1317 = vector.broadcast %cst_473 : f32 to vector<2x16xf32>
    %1318 = arith.mulf %1316, %1317 : vector<2x16xf32>
    %1319 = arith.mulf %1318, %1238 : vector<2x16xf32>
    %1320 = arith.addf %1314, %1319 : vector<2x16xf32>
    %cst_474 = arith.constant -1.000000e+00 : f32
    %1321 = vector.broadcast %cst_474 : f32 to vector<2x16xf32>
    %1322 = arith.subf %1200, %1321 : vector<2x16xf32>
    %cst_475 = arith.constant 2.500000e+00 : f32
    %1323 = vector.broadcast %cst_475 : f32 to vector<2x16xf32>
    %1324 = arith.mulf %1322, %1323 : vector<2x16xf32>
    %1325 = arith.mulf %1324, %1238 : vector<2x16xf32>
    %cst_476 = arith.constant -2.000000e-01 : f32
    %1326 = vector.broadcast %cst_476 : f32 to vector<2x16xf32>
    %1327 = arith.subf %1326, %1200 : vector<2x16xf32>
    %cst_477 = arith.constant 2.500000e+00 : f32
    %1328 = vector.broadcast %cst_477 : f32 to vector<2x16xf32>
    %1329 = arith.mulf %1327, %1328 : vector<2x16xf32>
    %1330 = arith.mulf %1329, %1245 : vector<2x16xf32>
    %1331 = arith.addf %1325, %1330 : vector<2x16xf32>
    %cst_478 = arith.constant -6.000000e-01 : f32
    %1332 = vector.broadcast %cst_478 : f32 to vector<2x16xf32>
    %1333 = arith.subf %1200, %1332 : vector<2x16xf32>
    %cst_479 = arith.constant 2.500000e+00 : f32
    %1334 = vector.broadcast %cst_479 : f32 to vector<2x16xf32>
    %1335 = arith.mulf %1333, %1334 : vector<2x16xf32>
    %1336 = arith.mulf %1335, %1245 : vector<2x16xf32>
    %cst_480 = arith.constant 2.000000e-01 : f32
    %1337 = vector.broadcast %cst_480 : f32 to vector<2x16xf32>
    %1338 = arith.subf %1337, %1200 : vector<2x16xf32>
    %cst_481 = arith.constant 2.500000e+00 : f32
    %1339 = vector.broadcast %cst_481 : f32 to vector<2x16xf32>
    %1340 = arith.mulf %1338, %1339 : vector<2x16xf32>
    %1341 = arith.mulf %1340, %1252 : vector<2x16xf32>
    %1342 = arith.addf %1336, %1341 : vector<2x16xf32>
    %cst_482 = arith.constant -2.000000e-01 : f32
    %1343 = vector.broadcast %cst_482 : f32 to vector<2x16xf32>
    %1344 = arith.subf %1200, %1343 : vector<2x16xf32>
    %cst_483 = arith.constant 2.500000e+00 : f32
    %1345 = vector.broadcast %cst_483 : f32 to vector<2x16xf32>
    %1346 = arith.mulf %1344, %1345 : vector<2x16xf32>
    %1347 = arith.mulf %1346, %1252 : vector<2x16xf32>
    %cst_484 = arith.constant 6.000000e-01 : f32
    %1348 = vector.broadcast %cst_484 : f32 to vector<2x16xf32>
    %1349 = arith.subf %1348, %1200 : vector<2x16xf32>
    %cst_485 = arith.constant 2.500000e+00 : f32
    %1350 = vector.broadcast %cst_485 : f32 to vector<2x16xf32>
    %1351 = arith.mulf %1349, %1350 : vector<2x16xf32>
    %1352 = arith.mulf %1351, %1259 : vector<2x16xf32>
    %1353 = arith.addf %1347, %1352 : vector<2x16xf32>
    %cst_486 = arith.constant 2.000000e-01 : f32
    %1354 = vector.broadcast %cst_486 : f32 to vector<2x16xf32>
    %1355 = arith.subf %1200, %1354 : vector<2x16xf32>
    %cst_487 = arith.constant 2.500000e+00 : f32
    %1356 = vector.broadcast %cst_487 : f32 to vector<2x16xf32>
    %1357 = arith.mulf %1355, %1356 : vector<2x16xf32>
    %1358 = arith.mulf %1357, %1259 : vector<2x16xf32>
    %cst_488 = arith.constant 1.000000e+00 : f32
    %1359 = vector.broadcast %cst_488 : f32 to vector<2x16xf32>
    %1360 = arith.subf %1359, %1200 : vector<2x16xf32>
    %cst_489 = arith.constant 2.500000e+00 : f32
    %1361 = vector.broadcast %cst_489 : f32 to vector<2x16xf32>
    %1362 = arith.mulf %1360, %1361 : vector<2x16xf32>
    %1363 = arith.mulf %1362, %1266 : vector<2x16xf32>
    %1364 = arith.addf %1358, %1363 : vector<2x16xf32>
    %cst_490 = arith.constant 6.000000e-01 : f32
    %1365 = vector.broadcast %cst_490 : f32 to vector<2x16xf32>
    %1366 = arith.subf %1200, %1365 : vector<2x16xf32>
    %cst_491 = arith.constant 2.500000e+00 : f32
    %1367 = vector.broadcast %cst_491 : f32 to vector<2x16xf32>
    %1368 = arith.mulf %1366, %1367 : vector<2x16xf32>
    %1369 = arith.mulf %1368, %1266 : vector<2x16xf32>
    %cst_492 = arith.constant 1.400000e+00 : f32
    %1370 = vector.broadcast %cst_492 : f32 to vector<2x16xf32>
    %1371 = arith.subf %1370, %1200 : vector<2x16xf32>
    %cst_493 = arith.constant 2.500000e+00 : f32
    %1372 = vector.broadcast %cst_493 : f32 to vector<2x16xf32>
    %1373 = arith.mulf %1371, %1372 : vector<2x16xf32>
    %1374 = arith.mulf %1373, %1273 : vector<2x16xf32>
    %1375 = arith.addf %1369, %1374 : vector<2x16xf32>
    %cst_494 = arith.constant 1.000000e+00 : f32
    %1376 = vector.broadcast %cst_494 : f32 to vector<2x16xf32>
    %1377 = arith.subf %1200, %1376 : vector<2x16xf32>
    %cst_495 = arith.constant 2.500000e+00 : f32
    %1378 = vector.broadcast %cst_495 : f32 to vector<2x16xf32>
    %1379 = arith.mulf %1377, %1378 : vector<2x16xf32>
    %1380 = arith.mulf %1379, %1273 : vector<2x16xf32>
    %cst_496 = arith.constant 1.800000e+00 : f32
    %1381 = vector.broadcast %cst_496 : f32 to vector<2x16xf32>
    %1382 = arith.subf %1381, %1200 : vector<2x16xf32>
    %cst_497 = arith.constant 2.500000e+00 : f32
    %1383 = vector.broadcast %cst_497 : f32 to vector<2x16xf32>
    %1384 = arith.mulf %1382, %1383 : vector<2x16xf32>
    %1385 = arith.mulf %1384, %1280 : vector<2x16xf32>
    %1386 = arith.addf %1380, %1385 : vector<2x16xf32>
    %cst_498 = arith.constant 1.400000e+00 : f32
    %1387 = vector.broadcast %cst_498 : f32 to vector<2x16xf32>
    %1388 = arith.subf %1200, %1387 : vector<2x16xf32>
    %cst_499 = arith.constant 2.500000e+00 : f32
    %1389 = vector.broadcast %cst_499 : f32 to vector<2x16xf32>
    %1390 = arith.mulf %1388, %1389 : vector<2x16xf32>
    %1391 = arith.mulf %1390, %1280 : vector<2x16xf32>
    %cst_500 = arith.constant 2.200000e+00 : f32
    %1392 = vector.broadcast %cst_500 : f32 to vector<2x16xf32>
    %1393 = arith.subf %1392, %1200 : vector<2x16xf32>
    %cst_501 = arith.constant 2.500000e+00 : f32
    %1394 = vector.broadcast %cst_501 : f32 to vector<2x16xf32>
    %1395 = arith.mulf %1393, %1394 : vector<2x16xf32>
    %1396 = arith.mulf %1395, %1287 : vector<2x16xf32>
    %1397 = arith.addf %1391, %1396 : vector<2x16xf32>
    %cst_502 = arith.constant -2.200000e+00 : f32
    %1398 = vector.broadcast %cst_502 : f32 to vector<2x16xf32>
    %1399 = arith.subf %1200, %1398 : vector<2x16xf32>
    %cst_503 = arith.constant 1.250000e+00 : f32
    %1400 = vector.broadcast %cst_503 : f32 to vector<2x16xf32>
    %1401 = arith.mulf %1399, %1400 : vector<2x16xf32>
    %1402 = arith.mulf %1401, %1298 : vector<2x16xf32>
    %cst_504 = arith.constant -1.000000e+00 : f32
    %1403 = vector.broadcast %cst_504 : f32 to vector<2x16xf32>
    %1404 = arith.subf %1403, %1200 : vector<2x16xf32>
    %cst_505 = arith.constant 1.250000e+00 : f32
    %1405 = vector.broadcast %cst_505 : f32 to vector<2x16xf32>
    %1406 = arith.mulf %1404, %1405 : vector<2x16xf32>
    %1407 = arith.mulf %1406, %1309 : vector<2x16xf32>
    %1408 = arith.addf %1402, %1407 : vector<2x16xf32>
    %cst_506 = arith.constant -1.800000e+00 : f32
    %1409 = vector.broadcast %cst_506 : f32 to vector<2x16xf32>
    %1410 = arith.subf %1200, %1409 : vector<2x16xf32>
    %cst_507 = arith.constant 1.250000e+00 : f32
    %1411 = vector.broadcast %cst_507 : f32 to vector<2x16xf32>
    %1412 = arith.mulf %1410, %1411 : vector<2x16xf32>
    %1413 = arith.mulf %1412, %1309 : vector<2x16xf32>
    %cst_508 = arith.constant -6.000000e-01 : f32
    %1414 = vector.broadcast %cst_508 : f32 to vector<2x16xf32>
    %1415 = arith.subf %1414, %1200 : vector<2x16xf32>
    %cst_509 = arith.constant 1.250000e+00 : f32
    %1416 = vector.broadcast %cst_509 : f32 to vector<2x16xf32>
    %1417 = arith.mulf %1415, %1416 : vector<2x16xf32>
    %1418 = arith.mulf %1417, %1320 : vector<2x16xf32>
    %1419 = arith.addf %1413, %1418 : vector<2x16xf32>
    %cst_510 = arith.constant -1.400000e+00 : f32
    %1420 = vector.broadcast %cst_510 : f32 to vector<2x16xf32>
    %1421 = arith.subf %1200, %1420 : vector<2x16xf32>
    %cst_511 = arith.constant 1.250000e+00 : f32
    %1422 = vector.broadcast %cst_511 : f32 to vector<2x16xf32>
    %1423 = arith.mulf %1421, %1422 : vector<2x16xf32>
    %1424 = arith.mulf %1423, %1320 : vector<2x16xf32>
    %cst_512 = arith.constant -2.000000e-01 : f32
    %1425 = vector.broadcast %cst_512 : f32 to vector<2x16xf32>
    %1426 = arith.subf %1425, %1200 : vector<2x16xf32>
    %cst_513 = arith.constant 1.250000e+00 : f32
    %1427 = vector.broadcast %cst_513 : f32 to vector<2x16xf32>
    %1428 = arith.mulf %1426, %1427 : vector<2x16xf32>
    %1429 = arith.mulf %1428, %1331 : vector<2x16xf32>
    %1430 = arith.addf %1424, %1429 : vector<2x16xf32>
    %cst_514 = arith.constant -1.000000e+00 : f32
    %1431 = vector.broadcast %cst_514 : f32 to vector<2x16xf32>
    %1432 = arith.subf %1200, %1431 : vector<2x16xf32>
    %cst_515 = arith.constant 1.250000e+00 : f32
    %1433 = vector.broadcast %cst_515 : f32 to vector<2x16xf32>
    %1434 = arith.mulf %1432, %1433 : vector<2x16xf32>
    %1435 = arith.mulf %1434, %1331 : vector<2x16xf32>
    %cst_516 = arith.constant 2.000000e-01 : f32
    %1436 = vector.broadcast %cst_516 : f32 to vector<2x16xf32>
    %1437 = arith.subf %1436, %1200 : vector<2x16xf32>
    %cst_517 = arith.constant 1.250000e+00 : f32
    %1438 = vector.broadcast %cst_517 : f32 to vector<2x16xf32>
    %1439 = arith.mulf %1437, %1438 : vector<2x16xf32>
    %1440 = arith.mulf %1439, %1342 : vector<2x16xf32>
    %1441 = arith.addf %1435, %1440 : vector<2x16xf32>
    %cst_518 = arith.constant -6.000000e-01 : f32
    %1442 = vector.broadcast %cst_518 : f32 to vector<2x16xf32>
    %1443 = arith.subf %1200, %1442 : vector<2x16xf32>
    %cst_519 = arith.constant 1.250000e+00 : f32
    %1444 = vector.broadcast %cst_519 : f32 to vector<2x16xf32>
    %1445 = arith.mulf %1443, %1444 : vector<2x16xf32>
    %1446 = arith.mulf %1445, %1342 : vector<2x16xf32>
    %cst_520 = arith.constant 6.000000e-01 : f32
    %1447 = vector.broadcast %cst_520 : f32 to vector<2x16xf32>
    %1448 = arith.subf %1447, %1200 : vector<2x16xf32>
    %cst_521 = arith.constant 1.250000e+00 : f32
    %1449 = vector.broadcast %cst_521 : f32 to vector<2x16xf32>
    %1450 = arith.mulf %1448, %1449 : vector<2x16xf32>
    %1451 = arith.mulf %1450, %1353 : vector<2x16xf32>
    %1452 = arith.addf %1446, %1451 : vector<2x16xf32>
    %cst_522 = arith.constant -2.000000e-01 : f32
    %1453 = vector.broadcast %cst_522 : f32 to vector<2x16xf32>
    %1454 = arith.subf %1200, %1453 : vector<2x16xf32>
    %cst_523 = arith.constant 1.250000e+00 : f32
    %1455 = vector.broadcast %cst_523 : f32 to vector<2x16xf32>
    %1456 = arith.mulf %1454, %1455 : vector<2x16xf32>
    %1457 = arith.mulf %1456, %1353 : vector<2x16xf32>
    %cst_524 = arith.constant 1.000000e+00 : f32
    %1458 = vector.broadcast %cst_524 : f32 to vector<2x16xf32>
    %1459 = arith.subf %1458, %1200 : vector<2x16xf32>
    %cst_525 = arith.constant 1.250000e+00 : f32
    %1460 = vector.broadcast %cst_525 : f32 to vector<2x16xf32>
    %1461 = arith.mulf %1459, %1460 : vector<2x16xf32>
    %1462 = arith.mulf %1461, %1364 : vector<2x16xf32>
    %1463 = arith.addf %1457, %1462 : vector<2x16xf32>
    %cst_526 = arith.constant 2.000000e-01 : f32
    %1464 = vector.broadcast %cst_526 : f32 to vector<2x16xf32>
    %1465 = arith.subf %1200, %1464 : vector<2x16xf32>
    %cst_527 = arith.constant 1.250000e+00 : f32
    %1466 = vector.broadcast %cst_527 : f32 to vector<2x16xf32>
    %1467 = arith.mulf %1465, %1466 : vector<2x16xf32>
    %1468 = arith.mulf %1467, %1364 : vector<2x16xf32>
    %cst_528 = arith.constant 1.400000e+00 : f32
    %1469 = vector.broadcast %cst_528 : f32 to vector<2x16xf32>
    %1470 = arith.subf %1469, %1200 : vector<2x16xf32>
    %cst_529 = arith.constant 1.250000e+00 : f32
    %1471 = vector.broadcast %cst_529 : f32 to vector<2x16xf32>
    %1472 = arith.mulf %1470, %1471 : vector<2x16xf32>
    %1473 = arith.mulf %1472, %1375 : vector<2x16xf32>
    %1474 = arith.addf %1468, %1473 : vector<2x16xf32>
    %cst_530 = arith.constant 6.000000e-01 : f32
    %1475 = vector.broadcast %cst_530 : f32 to vector<2x16xf32>
    %1476 = arith.subf %1200, %1475 : vector<2x16xf32>
    %cst_531 = arith.constant 1.250000e+00 : f32
    %1477 = vector.broadcast %cst_531 : f32 to vector<2x16xf32>
    %1478 = arith.mulf %1476, %1477 : vector<2x16xf32>
    %1479 = arith.mulf %1478, %1375 : vector<2x16xf32>
    %cst_532 = arith.constant 1.800000e+00 : f32
    %1480 = vector.broadcast %cst_532 : f32 to vector<2x16xf32>
    %1481 = arith.subf %1480, %1200 : vector<2x16xf32>
    %cst_533 = arith.constant 1.250000e+00 : f32
    %1482 = vector.broadcast %cst_533 : f32 to vector<2x16xf32>
    %1483 = arith.mulf %1481, %1482 : vector<2x16xf32>
    %1484 = arith.mulf %1483, %1386 : vector<2x16xf32>
    %1485 = arith.addf %1479, %1484 : vector<2x16xf32>
    %cst_534 = arith.constant 1.000000e+00 : f32
    %1486 = vector.broadcast %cst_534 : f32 to vector<2x16xf32>
    %1487 = arith.subf %1200, %1486 : vector<2x16xf32>
    %cst_535 = arith.constant 1.250000e+00 : f32
    %1488 = vector.broadcast %cst_535 : f32 to vector<2x16xf32>
    %1489 = arith.mulf %1487, %1488 : vector<2x16xf32>
    %1490 = arith.mulf %1489, %1386 : vector<2x16xf32>
    %cst_536 = arith.constant 2.200000e+00 : f32
    %1491 = vector.broadcast %cst_536 : f32 to vector<2x16xf32>
    %1492 = arith.subf %1491, %1200 : vector<2x16xf32>
    %cst_537 = arith.constant 1.250000e+00 : f32
    %1493 = vector.broadcast %cst_537 : f32 to vector<2x16xf32>
    %1494 = arith.mulf %1492, %1493 : vector<2x16xf32>
    %1495 = arith.mulf %1494, %1397 : vector<2x16xf32>
    %1496 = arith.addf %1490, %1495 : vector<2x16xf32>
    %cst_538 = arith.constant -2.200000e+00 : f32
    %1497 = vector.broadcast %cst_538 : f32 to vector<2x16xf32>
    %1498 = arith.subf %1200, %1497 : vector<2x16xf32>
    %cst_539 = arith.constant 0.833333313 : f32
    %1499 = vector.broadcast %cst_539 : f32 to vector<2x16xf32>
    %1500 = arith.mulf %1498, %1499 : vector<2x16xf32>
    %1501 = arith.mulf %1500, %1408 : vector<2x16xf32>
    %cst_540 = arith.constant -6.000000e-01 : f32
    %1502 = vector.broadcast %cst_540 : f32 to vector<2x16xf32>
    %1503 = arith.subf %1502, %1200 : vector<2x16xf32>
    %cst_541 = arith.constant 0.833333313 : f32
    %1504 = vector.broadcast %cst_541 : f32 to vector<2x16xf32>
    %1505 = arith.mulf %1503, %1504 : vector<2x16xf32>
    %1506 = arith.mulf %1505, %1419 : vector<2x16xf32>
    %1507 = arith.addf %1501, %1506 : vector<2x16xf32>
    %cst_542 = arith.constant -1.800000e+00 : f32
    %1508 = vector.broadcast %cst_542 : f32 to vector<2x16xf32>
    %1509 = arith.subf %1200, %1508 : vector<2x16xf32>
    %cst_543 = arith.constant 0.833333313 : f32
    %1510 = vector.broadcast %cst_543 : f32 to vector<2x16xf32>
    %1511 = arith.mulf %1509, %1510 : vector<2x16xf32>
    %1512 = arith.mulf %1511, %1419 : vector<2x16xf32>
    %cst_544 = arith.constant -2.000000e-01 : f32
    %1513 = vector.broadcast %cst_544 : f32 to vector<2x16xf32>
    %1514 = arith.subf %1513, %1200 : vector<2x16xf32>
    %cst_545 = arith.constant 0.833333313 : f32
    %1515 = vector.broadcast %cst_545 : f32 to vector<2x16xf32>
    %1516 = arith.mulf %1514, %1515 : vector<2x16xf32>
    %1517 = arith.mulf %1516, %1430 : vector<2x16xf32>
    %1518 = arith.addf %1512, %1517 : vector<2x16xf32>
    %cst_546 = arith.constant -1.400000e+00 : f32
    %1519 = vector.broadcast %cst_546 : f32 to vector<2x16xf32>
    %1520 = arith.subf %1200, %1519 : vector<2x16xf32>
    %cst_547 = arith.constant 0.833333313 : f32
    %1521 = vector.broadcast %cst_547 : f32 to vector<2x16xf32>
    %1522 = arith.mulf %1520, %1521 : vector<2x16xf32>
    %1523 = arith.mulf %1522, %1430 : vector<2x16xf32>
    %cst_548 = arith.constant 2.000000e-01 : f32
    %1524 = vector.broadcast %cst_548 : f32 to vector<2x16xf32>
    %1525 = arith.subf %1524, %1200 : vector<2x16xf32>
    %cst_549 = arith.constant 0.833333313 : f32
    %1526 = vector.broadcast %cst_549 : f32 to vector<2x16xf32>
    %1527 = arith.mulf %1525, %1526 : vector<2x16xf32>
    %1528 = arith.mulf %1527, %1441 : vector<2x16xf32>
    %1529 = arith.addf %1523, %1528 : vector<2x16xf32>
    %cst_550 = arith.constant -1.000000e+00 : f32
    %1530 = vector.broadcast %cst_550 : f32 to vector<2x16xf32>
    %1531 = arith.subf %1200, %1530 : vector<2x16xf32>
    %cst_551 = arith.constant 0.833333313 : f32
    %1532 = vector.broadcast %cst_551 : f32 to vector<2x16xf32>
    %1533 = arith.mulf %1531, %1532 : vector<2x16xf32>
    %1534 = arith.mulf %1533, %1441 : vector<2x16xf32>
    %cst_552 = arith.constant 6.000000e-01 : f32
    %1535 = vector.broadcast %cst_552 : f32 to vector<2x16xf32>
    %1536 = arith.subf %1535, %1200 : vector<2x16xf32>
    %cst_553 = arith.constant 0.833333313 : f32
    %1537 = vector.broadcast %cst_553 : f32 to vector<2x16xf32>
    %1538 = arith.mulf %1536, %1537 : vector<2x16xf32>
    %1539 = arith.mulf %1538, %1452 : vector<2x16xf32>
    %1540 = arith.addf %1534, %1539 : vector<2x16xf32>
    %cst_554 = arith.constant -6.000000e-01 : f32
    %1541 = vector.broadcast %cst_554 : f32 to vector<2x16xf32>
    %1542 = arith.subf %1200, %1541 : vector<2x16xf32>
    %cst_555 = arith.constant 0.833333313 : f32
    %1543 = vector.broadcast %cst_555 : f32 to vector<2x16xf32>
    %1544 = arith.mulf %1542, %1543 : vector<2x16xf32>
    %1545 = arith.mulf %1544, %1452 : vector<2x16xf32>
    %cst_556 = arith.constant 1.000000e+00 : f32
    %1546 = vector.broadcast %cst_556 : f32 to vector<2x16xf32>
    %1547 = arith.subf %1546, %1200 : vector<2x16xf32>
    %cst_557 = arith.constant 0.833333313 : f32
    %1548 = vector.broadcast %cst_557 : f32 to vector<2x16xf32>
    %1549 = arith.mulf %1547, %1548 : vector<2x16xf32>
    %1550 = arith.mulf %1549, %1463 : vector<2x16xf32>
    %1551 = arith.addf %1545, %1550 : vector<2x16xf32>
    %cst_558 = arith.constant -2.000000e-01 : f32
    %1552 = vector.broadcast %cst_558 : f32 to vector<2x16xf32>
    %1553 = arith.subf %1200, %1552 : vector<2x16xf32>
    %cst_559 = arith.constant 0.833333313 : f32
    %1554 = vector.broadcast %cst_559 : f32 to vector<2x16xf32>
    %1555 = arith.mulf %1553, %1554 : vector<2x16xf32>
    %1556 = arith.mulf %1555, %1463 : vector<2x16xf32>
    %cst_560 = arith.constant 1.400000e+00 : f32
    %1557 = vector.broadcast %cst_560 : f32 to vector<2x16xf32>
    %1558 = arith.subf %1557, %1200 : vector<2x16xf32>
    %cst_561 = arith.constant 0.833333313 : f32
    %1559 = vector.broadcast %cst_561 : f32 to vector<2x16xf32>
    %1560 = arith.mulf %1558, %1559 : vector<2x16xf32>
    %1561 = arith.mulf %1560, %1474 : vector<2x16xf32>
    %1562 = arith.addf %1556, %1561 : vector<2x16xf32>
    %cst_562 = arith.constant 2.000000e-01 : f32
    %1563 = vector.broadcast %cst_562 : f32 to vector<2x16xf32>
    %1564 = arith.subf %1200, %1563 : vector<2x16xf32>
    %cst_563 = arith.constant 0.833333313 : f32
    %1565 = vector.broadcast %cst_563 : f32 to vector<2x16xf32>
    %1566 = arith.mulf %1564, %1565 : vector<2x16xf32>
    %1567 = arith.mulf %1566, %1474 : vector<2x16xf32>
    %cst_564 = arith.constant 1.800000e+00 : f32
    %1568 = vector.broadcast %cst_564 : f32 to vector<2x16xf32>
    %1569 = arith.subf %1568, %1200 : vector<2x16xf32>
    %cst_565 = arith.constant 0.833333313 : f32
    %1570 = vector.broadcast %cst_565 : f32 to vector<2x16xf32>
    %1571 = arith.mulf %1569, %1570 : vector<2x16xf32>
    %1572 = arith.mulf %1571, %1485 : vector<2x16xf32>
    %1573 = arith.addf %1567, %1572 : vector<2x16xf32>
    %cst_566 = arith.constant 6.000000e-01 : f32
    %1574 = vector.broadcast %cst_566 : f32 to vector<2x16xf32>
    %1575 = arith.subf %1200, %1574 : vector<2x16xf32>
    %cst_567 = arith.constant 0.833333313 : f32
    %1576 = vector.broadcast %cst_567 : f32 to vector<2x16xf32>
    %1577 = arith.mulf %1575, %1576 : vector<2x16xf32>
    %1578 = arith.mulf %1577, %1485 : vector<2x16xf32>
    %cst_568 = arith.constant 2.200000e+00 : f32
    %1579 = vector.broadcast %cst_568 : f32 to vector<2x16xf32>
    %1580 = arith.subf %1579, %1200 : vector<2x16xf32>
    %cst_569 = arith.constant 0.833333313 : f32
    %1581 = vector.broadcast %cst_569 : f32 to vector<2x16xf32>
    %1582 = arith.mulf %1580, %1581 : vector<2x16xf32>
    %1583 = arith.mulf %1582, %1496 : vector<2x16xf32>
    %1584 = arith.addf %1578, %1583 : vector<2x16xf32>
    %1585 = arith.truncf %1507 : vector<2x16xf32> to vector<2x16xbf16>
    %c1_570 = arith.constant 1 : index
    %c16_571 = arith.constant 16 : index
    %c0_572 = arith.constant 0 : index
    %1586 = vector.load %arg2[%c1_570, %c16_571, %c0_572] : memref<2x144x256xbf16, #tpu.memory_space<vmem>>, vector<1x16x256xbf16>
    %1587 = vector.shape_cast %1586 : vector<1x16x256xbf16> to vector<16x256xbf16>
    %cst_573 = arith.constant dense<0.000000e+00> : vector<2x256xf32>
    %1588 = tpu.matmul %1585, %1587, %cst_573 {dimension_numbers = #tpu.dot_dimension_numbers<[1], [0], [0], [1], [0, 0, 1, 1], [], []>} : vector<2x16xbf16>, vector<16x256xbf16>, vector<2x256xf32> -> vector<2x256xf32>
    %1589 = arith.addf %1210, %1588 : vector<2x256xf32>
    %1590 = arith.truncf %1518 : vector<2x16xf32> to vector<2x16xbf16>
    %c1_574 = arith.constant 1 : index
    %c32_575 = arith.constant 32 : index
    %c0_576 = arith.constant 0 : index
    %1591 = vector.load %arg2[%c1_574, %c32_575, %c0_576] : memref<2x144x256xbf16, #tpu.memory_space<vmem>>, vector<1x16x256xbf16>
    %1592 = vector.shape_cast %1591 : vector<1x16x256xbf16> to vector<16x256xbf16>
    %cst_577 = arith.constant dense<0.000000e+00> : vector<2x256xf32>
    %1593 = tpu.matmul %1590, %1592, %cst_577 {dimension_numbers = #tpu.dot_dimension_numbers<[1], [0], [0], [1], [0, 0, 1, 1], [], []>} : vector<2x16xbf16>, vector<16x256xbf16>, vector<2x256xf32> -> vector<2x256xf32>
    %1594 = arith.addf %1589, %1593 : vector<2x256xf32>
    %1595 = arith.truncf %1529 : vector<2x16xf32> to vector<2x16xbf16>
    %c1_578 = arith.constant 1 : index
    %c48_579 = arith.constant 48 : index
    %c0_580 = arith.constant 0 : index
    %1596 = vector.load %arg2[%c1_578, %c48_579, %c0_580] : memref<2x144x256xbf16, #tpu.memory_space<vmem>>, vector<1x16x256xbf16>
    %1597 = vector.shape_cast %1596 : vector<1x16x256xbf16> to vector<16x256xbf16>
    %cst_581 = arith.constant dense<0.000000e+00> : vector<2x256xf32>
    %1598 = tpu.matmul %1595, %1597, %cst_581 {dimension_numbers = #tpu.dot_dimension_numbers<[1], [0], [0], [1], [0, 0, 1, 1], [], []>} : vector<2x16xbf16>, vector<16x256xbf16>, vector<2x256xf32> -> vector<2x256xf32>
    %1599 = arith.addf %1594, %1598 : vector<2x256xf32>
    %1600 = arith.truncf %1540 : vector<2x16xf32> to vector<2x16xbf16>
    %c1_582 = arith.constant 1 : index
    %c64_583 = arith.constant 64 : index
    %c0_584 = arith.constant 0 : index
    %1601 = vector.load %arg2[%c1_582, %c64_583, %c0_584] : memref<2x144x256xbf16, #tpu.memory_space<vmem>>, vector<1x16x256xbf16>
    %1602 = vector.shape_cast %1601 : vector<1x16x256xbf16> to vector<16x256xbf16>
    %cst_585 = arith.constant dense<0.000000e+00> : vector<2x256xf32>
    %1603 = tpu.matmul %1600, %1602, %cst_585 {dimension_numbers = #tpu.dot_dimension_numbers<[1], [0], [0], [1], [0, 0, 1, 1], [], []>} : vector<2x16xbf16>, vector<16x256xbf16>, vector<2x256xf32> -> vector<2x256xf32>
    %1604 = arith.addf %1599, %1603 : vector<2x256xf32>
    %1605 = arith.truncf %1551 : vector<2x16xf32> to vector<2x16xbf16>
    %c1_586 = arith.constant 1 : index
    %c80_587 = arith.constant 80 : index
    %c0_588 = arith.constant 0 : index
    %1606 = vector.load %arg2[%c1_586, %c80_587, %c0_588] : memref<2x144x256xbf16, #tpu.memory_space<vmem>>, vector<1x16x256xbf16>
    %1607 = vector.shape_cast %1606 : vector<1x16x256xbf16> to vector<16x256xbf16>
    %cst_589 = arith.constant dense<0.000000e+00> : vector<2x256xf32>
    %1608 = tpu.matmul %1605, %1607, %cst_589 {dimension_numbers = #tpu.dot_dimension_numbers<[1], [0], [0], [1], [0, 0, 1, 1], [], []>} : vector<2x16xbf16>, vector<16x256xbf16>, vector<2x256xf32> -> vector<2x256xf32>
    %1609 = arith.addf %1604, %1608 : vector<2x256xf32>
    %1610 = arith.truncf %1562 : vector<2x16xf32> to vector<2x16xbf16>
    %c1_590 = arith.constant 1 : index
    %c96_591 = arith.constant 96 : index
    %c0_592 = arith.constant 0 : index
    %1611 = vector.load %arg2[%c1_590, %c96_591, %c0_592] : memref<2x144x256xbf16, #tpu.memory_space<vmem>>, vector<1x16x256xbf16>
    %1612 = vector.shape_cast %1611 : vector<1x16x256xbf16> to vector<16x256xbf16>
    %cst_593 = arith.constant dense<0.000000e+00> : vector<2x256xf32>
    %1613 = tpu.matmul %1610, %1612, %cst_593 {dimension_numbers = #tpu.dot_dimension_numbers<[1], [0], [0], [1], [0, 0, 1, 1], [], []>} : vector<2x16xbf16>, vector<16x256xbf16>, vector<2x256xf32> -> vector<2x256xf32>
    %1614 = arith.addf %1609, %1613 : vector<2x256xf32>
    %1615 = arith.truncf %1573 : vector<2x16xf32> to vector<2x16xbf16>
    %c1_594 = arith.constant 1 : index
    %c112_595 = arith.constant 112 : index
    %c0_596 = arith.constant 0 : index
    %1616 = vector.load %arg2[%c1_594, %c112_595, %c0_596] : memref<2x144x256xbf16, #tpu.memory_space<vmem>>, vector<1x16x256xbf16>
    %1617 = vector.shape_cast %1616 : vector<1x16x256xbf16> to vector<16x256xbf16>
    %cst_597 = arith.constant dense<0.000000e+00> : vector<2x256xf32>
    %1618 = tpu.matmul %1615, %1617, %cst_597 {dimension_numbers = #tpu.dot_dimension_numbers<[1], [0], [0], [1], [0, 0, 1, 1], [], []>} : vector<2x16xbf16>, vector<16x256xbf16>, vector<2x256xf32> -> vector<2x256xf32>
    %1619 = arith.addf %1614, %1618 : vector<2x256xf32>
    %1620 = arith.truncf %1584 : vector<2x16xf32> to vector<2x16xbf16>
    %c1_598 = arith.constant 1 : index
    %c128_599 = arith.constant 128 : index
    %c0_600 = arith.constant 0 : index
    %1621 = vector.load %arg2[%c1_598, %c128_599, %c0_600] : memref<2x144x256xbf16, #tpu.memory_space<vmem>>, vector<1x16x256xbf16>
    %1622 = vector.shape_cast %1621 : vector<1x16x256xbf16> to vector<16x256xbf16>
    %cst_601 = arith.constant dense<0.000000e+00> : vector<2x256xf32>
    %1623 = tpu.matmul %1620, %1622, %cst_601 {dimension_numbers = #tpu.dot_dimension_numbers<[1], [0], [0], [1], [0, 0, 1, 1], [], []>} : vector<2x16xbf16>, vector<16x256xbf16>, vector<2x256xf32> -> vector<2x256xf32>
    %1624 = arith.addf %1619, %1623 : vector<2x256xf32>
    %1625 = arith.negf %1624 : vector<2x256xf32>
    %1626 = math.exp %1625 : vector<2x256xf32>
    %cst_602 = arith.constant 1.000000e+00 : f32
    %1627 = vector.broadcast %cst_602 : f32 to vector<2x256xf32>
    %1628 = arith.addf %1627, %1626 : vector<2x256xf32>
    %1629 = arith.divf %1627, %1628 : vector<2x256xf32>
    %1630 = arith.mulf %1624, %1629 : vector<2x256xf32>
    %cst_603 = arith.constant -2.200000e+00 : f32
    %1631 = vector.broadcast %cst_603 : f32 to vector<2x256xf32>
    %1632 = arith.cmpf oge, %1624, %1631 : vector<2x256xf32>
    %cst_604 = arith.constant -1.800000e+00 : f32
    %1633 = vector.broadcast %cst_604 : f32 to vector<2x256xf32>
    %1634 = arith.cmpf olt, %1624, %1633 : vector<2x256xf32>
    %1635 = arith.andi %1632, %1634 : vector<2x256xi1>
    %1636 = arith.extui %1635 : vector<2x256xi1> to vector<2x256xi32>
    %1637 = arith.sitofp %1636 : vector<2x256xi32> to vector<2x256xf32>
    %cst_605 = arith.constant -1.800000e+00 : f32
    %1638 = vector.broadcast %cst_605 : f32 to vector<2x256xf32>
    %1639 = arith.cmpf oge, %1624, %1638 : vector<2x256xf32>
    %cst_606 = arith.constant -1.400000e+00 : f32
    %1640 = vector.broadcast %cst_606 : f32 to vector<2x256xf32>
    %1641 = arith.cmpf olt, %1624, %1640 : vector<2x256xf32>
    %1642 = arith.andi %1639, %1641 : vector<2x256xi1>
    %1643 = arith.extui %1642 : vector<2x256xi1> to vector<2x256xi32>
    %1644 = arith.sitofp %1643 : vector<2x256xi32> to vector<2x256xf32>
    %cst_607 = arith.constant -1.400000e+00 : f32
    %1645 = vector.broadcast %cst_607 : f32 to vector<2x256xf32>
    %1646 = arith.cmpf oge, %1624, %1645 : vector<2x256xf32>
    %cst_608 = arith.constant -1.000000e+00 : f32
    %1647 = vector.broadcast %cst_608 : f32 to vector<2x256xf32>
    %1648 = arith.cmpf olt, %1624, %1647 : vector<2x256xf32>
    %1649 = arith.andi %1646, %1648 : vector<2x256xi1>
    %1650 = arith.extui %1649 : vector<2x256xi1> to vector<2x256xi32>
    %1651 = arith.sitofp %1650 : vector<2x256xi32> to vector<2x256xf32>
    %cst_609 = arith.constant -1.000000e+00 : f32
    %1652 = vector.broadcast %cst_609 : f32 to vector<2x256xf32>
    %1653 = arith.cmpf oge, %1624, %1652 : vector<2x256xf32>
    %cst_610 = arith.constant -6.000000e-01 : f32
    %1654 = vector.broadcast %cst_610 : f32 to vector<2x256xf32>
    %1655 = arith.cmpf olt, %1624, %1654 : vector<2x256xf32>
    %1656 = arith.andi %1653, %1655 : vector<2x256xi1>
    %1657 = arith.extui %1656 : vector<2x256xi1> to vector<2x256xi32>
    %1658 = arith.sitofp %1657 : vector<2x256xi32> to vector<2x256xf32>
    %cst_611 = arith.constant -6.000000e-01 : f32
    %1659 = vector.broadcast %cst_611 : f32 to vector<2x256xf32>
    %1660 = arith.cmpf oge, %1624, %1659 : vector<2x256xf32>
    %cst_612 = arith.constant -2.000000e-01 : f32
    %1661 = vector.broadcast %cst_612 : f32 to vector<2x256xf32>
    %1662 = arith.cmpf olt, %1624, %1661 : vector<2x256xf32>
    %1663 = arith.andi %1660, %1662 : vector<2x256xi1>
    %1664 = arith.extui %1663 : vector<2x256xi1> to vector<2x256xi32>
    %1665 = arith.sitofp %1664 : vector<2x256xi32> to vector<2x256xf32>
    %cst_613 = arith.constant -2.000000e-01 : f32
    %1666 = vector.broadcast %cst_613 : f32 to vector<2x256xf32>
    %1667 = arith.cmpf oge, %1624, %1666 : vector<2x256xf32>
    %cst_614 = arith.constant 2.000000e-01 : f32
    %1668 = vector.broadcast %cst_614 : f32 to vector<2x256xf32>
    %1669 = arith.cmpf olt, %1624, %1668 : vector<2x256xf32>
    %1670 = arith.andi %1667, %1669 : vector<2x256xi1>
    %1671 = arith.extui %1670 : vector<2x256xi1> to vector<2x256xi32>
    %1672 = arith.sitofp %1671 : vector<2x256xi32> to vector<2x256xf32>
    %cst_615 = arith.constant 2.000000e-01 : f32
    %1673 = vector.broadcast %cst_615 : f32 to vector<2x256xf32>
    %1674 = arith.cmpf oge, %1624, %1673 : vector<2x256xf32>
    %cst_616 = arith.constant 6.000000e-01 : f32
    %1675 = vector.broadcast %cst_616 : f32 to vector<2x256xf32>
    %1676 = arith.cmpf olt, %1624, %1675 : vector<2x256xf32>
    %1677 = arith.andi %1674, %1676 : vector<2x256xi1>
    %1678 = arith.extui %1677 : vector<2x256xi1> to vector<2x256xi32>
    %1679 = arith.sitofp %1678 : vector<2x256xi32> to vector<2x256xf32>
    %cst_617 = arith.constant 6.000000e-01 : f32
    %1680 = vector.broadcast %cst_617 : f32 to vector<2x256xf32>
    %1681 = arith.cmpf oge, %1624, %1680 : vector<2x256xf32>
    %cst_618 = arith.constant 1.000000e+00 : f32
    %1682 = vector.broadcast %cst_618 : f32 to vector<2x256xf32>
    %1683 = arith.cmpf olt, %1624, %1682 : vector<2x256xf32>
    %1684 = arith.andi %1681, %1683 : vector<2x256xi1>
    %1685 = arith.extui %1684 : vector<2x256xi1> to vector<2x256xi32>
    %1686 = arith.sitofp %1685 : vector<2x256xi32> to vector<2x256xf32>
    %cst_619 = arith.constant 1.000000e+00 : f32
    %1687 = vector.broadcast %cst_619 : f32 to vector<2x256xf32>
    %1688 = arith.cmpf oge, %1624, %1687 : vector<2x256xf32>
    %cst_620 = arith.constant 1.400000e+00 : f32
    %1689 = vector.broadcast %cst_620 : f32 to vector<2x256xf32>
    %1690 = arith.cmpf olt, %1624, %1689 : vector<2x256xf32>
    %1691 = arith.andi %1688, %1690 : vector<2x256xi1>
    %1692 = arith.extui %1691 : vector<2x256xi1> to vector<2x256xi32>
    %1693 = arith.sitofp %1692 : vector<2x256xi32> to vector<2x256xf32>
    %cst_621 = arith.constant 1.400000e+00 : f32
    %1694 = vector.broadcast %cst_621 : f32 to vector<2x256xf32>
    %1695 = arith.cmpf oge, %1624, %1694 : vector<2x256xf32>
    %cst_622 = arith.constant 1.800000e+00 : f32
    %1696 = vector.broadcast %cst_622 : f32 to vector<2x256xf32>
    %1697 = arith.cmpf olt, %1624, %1696 : vector<2x256xf32>
    %1698 = arith.andi %1695, %1697 : vector<2x256xi1>
    %1699 = arith.extui %1698 : vector<2x256xi1> to vector<2x256xi32>
    %1700 = arith.sitofp %1699 : vector<2x256xi32> to vector<2x256xf32>
    %cst_623 = arith.constant 1.800000e+00 : f32
    %1701 = vector.broadcast %cst_623 : f32 to vector<2x256xf32>
    %1702 = arith.cmpf oge, %1624, %1701 : vector<2x256xf32>
    %cst_624 = arith.constant 2.200000e+00 : f32
    %1703 = vector.broadcast %cst_624 : f32 to vector<2x256xf32>
    %1704 = arith.cmpf olt, %1624, %1703 : vector<2x256xf32>
    %1705 = arith.andi %1702, %1704 : vector<2x256xi1>
    %1706 = arith.extui %1705 : vector<2x256xi1> to vector<2x256xi32>
    %1707 = arith.sitofp %1706 : vector<2x256xi32> to vector<2x256xf32>
    %cst_625 = arith.constant -2.200000e+00 : f32
    %1708 = vector.broadcast %cst_625 : f32 to vector<2x256xf32>
    %1709 = arith.subf %1624, %1708 : vector<2x256xf32>
    %cst_626 = arith.constant 2.500000e+00 : f32
    %1710 = vector.broadcast %cst_626 : f32 to vector<2x256xf32>
    %1711 = arith.mulf %1709, %1710 : vector<2x256xf32>
    %1712 = arith.mulf %1711, %1637 : vector<2x256xf32>
    %cst_627 = arith.constant -1.400000e+00 : f32
    %1713 = vector.broadcast %cst_627 : f32 to vector<2x256xf32>
    %1714 = arith.subf %1713, %1624 : vector<2x256xf32>
    %cst_628 = arith.constant 2.500000e+00 : f32
    %1715 = vector.broadcast %cst_628 : f32 to vector<2x256xf32>
    %1716 = arith.mulf %1714, %1715 : vector<2x256xf32>
    %1717 = arith.mulf %1716, %1644 : vector<2x256xf32>
    %1718 = arith.addf %1712, %1717 : vector<2x256xf32>
    %cst_629 = arith.constant -1.800000e+00 : f32
    %1719 = vector.broadcast %cst_629 : f32 to vector<2x256xf32>
    %1720 = arith.subf %1624, %1719 : vector<2x256xf32>
    %cst_630 = arith.constant 2.500000e+00 : f32
    %1721 = vector.broadcast %cst_630 : f32 to vector<2x256xf32>
    %1722 = arith.mulf %1720, %1721 : vector<2x256xf32>
    %1723 = arith.mulf %1722, %1644 : vector<2x256xf32>
    %cst_631 = arith.constant -1.000000e+00 : f32
    %1724 = vector.broadcast %cst_631 : f32 to vector<2x256xf32>
    %1725 = arith.subf %1724, %1624 : vector<2x256xf32>
    %cst_632 = arith.constant 2.500000e+00 : f32
    %1726 = vector.broadcast %cst_632 : f32 to vector<2x256xf32>
    %1727 = arith.mulf %1725, %1726 : vector<2x256xf32>
    %1728 = arith.mulf %1727, %1651 : vector<2x256xf32>
    %1729 = arith.addf %1723, %1728 : vector<2x256xf32>
    %cst_633 = arith.constant -1.400000e+00 : f32
    %1730 = vector.broadcast %cst_633 : f32 to vector<2x256xf32>
    %1731 = arith.subf %1624, %1730 : vector<2x256xf32>
    %cst_634 = arith.constant 2.500000e+00 : f32
    %1732 = vector.broadcast %cst_634 : f32 to vector<2x256xf32>
    %1733 = arith.mulf %1731, %1732 : vector<2x256xf32>
    %1734 = arith.mulf %1733, %1651 : vector<2x256xf32>
    %cst_635 = arith.constant -6.000000e-01 : f32
    %1735 = vector.broadcast %cst_635 : f32 to vector<2x256xf32>
    %1736 = arith.subf %1735, %1624 : vector<2x256xf32>
    %cst_636 = arith.constant 2.500000e+00 : f32
    %1737 = vector.broadcast %cst_636 : f32 to vector<2x256xf32>
    %1738 = arith.mulf %1736, %1737 : vector<2x256xf32>
    %1739 = arith.mulf %1738, %1658 : vector<2x256xf32>
    %1740 = arith.addf %1734, %1739 : vector<2x256xf32>
    %cst_637 = arith.constant -1.000000e+00 : f32
    %1741 = vector.broadcast %cst_637 : f32 to vector<2x256xf32>
    %1742 = arith.subf %1624, %1741 : vector<2x256xf32>
    %cst_638 = arith.constant 2.500000e+00 : f32
    %1743 = vector.broadcast %cst_638 : f32 to vector<2x256xf32>
    %1744 = arith.mulf %1742, %1743 : vector<2x256xf32>
    %1745 = arith.mulf %1744, %1658 : vector<2x256xf32>
    %cst_639 = arith.constant -2.000000e-01 : f32
    %1746 = vector.broadcast %cst_639 : f32 to vector<2x256xf32>
    %1747 = arith.subf %1746, %1624 : vector<2x256xf32>
    %cst_640 = arith.constant 2.500000e+00 : f32
    %1748 = vector.broadcast %cst_640 : f32 to vector<2x256xf32>
    %1749 = arith.mulf %1747, %1748 : vector<2x256xf32>
    %1750 = arith.mulf %1749, %1665 : vector<2x256xf32>
    %1751 = arith.addf %1745, %1750 : vector<2x256xf32>
    %cst_641 = arith.constant -6.000000e-01 : f32
    %1752 = vector.broadcast %cst_641 : f32 to vector<2x256xf32>
    %1753 = arith.subf %1624, %1752 : vector<2x256xf32>
    %cst_642 = arith.constant 2.500000e+00 : f32
    %1754 = vector.broadcast %cst_642 : f32 to vector<2x256xf32>
    %1755 = arith.mulf %1753, %1754 : vector<2x256xf32>
    %1756 = arith.mulf %1755, %1665 : vector<2x256xf32>
    %cst_643 = arith.constant 2.000000e-01 : f32
    %1757 = vector.broadcast %cst_643 : f32 to vector<2x256xf32>
    %1758 = arith.subf %1757, %1624 : vector<2x256xf32>
    %cst_644 = arith.constant 2.500000e+00 : f32
    %1759 = vector.broadcast %cst_644 : f32 to vector<2x256xf32>
    %1760 = arith.mulf %1758, %1759 : vector<2x256xf32>
    %1761 = arith.mulf %1760, %1672 : vector<2x256xf32>
    %1762 = arith.addf %1756, %1761 : vector<2x256xf32>
    %cst_645 = arith.constant -2.000000e-01 : f32
    %1763 = vector.broadcast %cst_645 : f32 to vector<2x256xf32>
    %1764 = arith.subf %1624, %1763 : vector<2x256xf32>
    %cst_646 = arith.constant 2.500000e+00 : f32
    %1765 = vector.broadcast %cst_646 : f32 to vector<2x256xf32>
    %1766 = arith.mulf %1764, %1765 : vector<2x256xf32>
    %1767 = arith.mulf %1766, %1672 : vector<2x256xf32>
    %cst_647 = arith.constant 6.000000e-01 : f32
    %1768 = vector.broadcast %cst_647 : f32 to vector<2x256xf32>
    %1769 = arith.subf %1768, %1624 : vector<2x256xf32>
    %cst_648 = arith.constant 2.500000e+00 : f32
    %1770 = vector.broadcast %cst_648 : f32 to vector<2x256xf32>
    %1771 = arith.mulf %1769, %1770 : vector<2x256xf32>
    %1772 = arith.mulf %1771, %1679 : vector<2x256xf32>
    %1773 = arith.addf %1767, %1772 : vector<2x256xf32>
    %cst_649 = arith.constant 2.000000e-01 : f32
    %1774 = vector.broadcast %cst_649 : f32 to vector<2x256xf32>
    %1775 = arith.subf %1624, %1774 : vector<2x256xf32>
    %cst_650 = arith.constant 2.500000e+00 : f32
    %1776 = vector.broadcast %cst_650 : f32 to vector<2x256xf32>
    %1777 = arith.mulf %1775, %1776 : vector<2x256xf32>
    %1778 = arith.mulf %1777, %1679 : vector<2x256xf32>
    %cst_651 = arith.constant 1.000000e+00 : f32
    %1779 = vector.broadcast %cst_651 : f32 to vector<2x256xf32>
    %1780 = arith.subf %1779, %1624 : vector<2x256xf32>
    %cst_652 = arith.constant 2.500000e+00 : f32
    %1781 = vector.broadcast %cst_652 : f32 to vector<2x256xf32>
    %1782 = arith.mulf %1780, %1781 : vector<2x256xf32>
    %1783 = arith.mulf %1782, %1686 : vector<2x256xf32>
    %1784 = arith.addf %1778, %1783 : vector<2x256xf32>
    %cst_653 = arith.constant 6.000000e-01 : f32
    %1785 = vector.broadcast %cst_653 : f32 to vector<2x256xf32>
    %1786 = arith.subf %1624, %1785 : vector<2x256xf32>
    %cst_654 = arith.constant 2.500000e+00 : f32
    %1787 = vector.broadcast %cst_654 : f32 to vector<2x256xf32>
    %1788 = arith.mulf %1786, %1787 : vector<2x256xf32>
    %1789 = arith.mulf %1788, %1686 : vector<2x256xf32>
    %cst_655 = arith.constant 1.400000e+00 : f32
    %1790 = vector.broadcast %cst_655 : f32 to vector<2x256xf32>
    %1791 = arith.subf %1790, %1624 : vector<2x256xf32>
    %cst_656 = arith.constant 2.500000e+00 : f32
    %1792 = vector.broadcast %cst_656 : f32 to vector<2x256xf32>
    %1793 = arith.mulf %1791, %1792 : vector<2x256xf32>
    %1794 = arith.mulf %1793, %1693 : vector<2x256xf32>
    %1795 = arith.addf %1789, %1794 : vector<2x256xf32>
    %cst_657 = arith.constant 1.000000e+00 : f32
    %1796 = vector.broadcast %cst_657 : f32 to vector<2x256xf32>
    %1797 = arith.subf %1624, %1796 : vector<2x256xf32>
    %cst_658 = arith.constant 2.500000e+00 : f32
    %1798 = vector.broadcast %cst_658 : f32 to vector<2x256xf32>
    %1799 = arith.mulf %1797, %1798 : vector<2x256xf32>
    %1800 = arith.mulf %1799, %1693 : vector<2x256xf32>
    %cst_659 = arith.constant 1.800000e+00 : f32
    %1801 = vector.broadcast %cst_659 : f32 to vector<2x256xf32>
    %1802 = arith.subf %1801, %1624 : vector<2x256xf32>
    %cst_660 = arith.constant 2.500000e+00 : f32
    %1803 = vector.broadcast %cst_660 : f32 to vector<2x256xf32>
    %1804 = arith.mulf %1802, %1803 : vector<2x256xf32>
    %1805 = arith.mulf %1804, %1700 : vector<2x256xf32>
    %1806 = arith.addf %1800, %1805 : vector<2x256xf32>
    %cst_661 = arith.constant 1.400000e+00 : f32
    %1807 = vector.broadcast %cst_661 : f32 to vector<2x256xf32>
    %1808 = arith.subf %1624, %1807 : vector<2x256xf32>
    %cst_662 = arith.constant 2.500000e+00 : f32
    %1809 = vector.broadcast %cst_662 : f32 to vector<2x256xf32>
    %1810 = arith.mulf %1808, %1809 : vector<2x256xf32>
    %1811 = arith.mulf %1810, %1700 : vector<2x256xf32>
    %cst_663 = arith.constant 2.200000e+00 : f32
    %1812 = vector.broadcast %cst_663 : f32 to vector<2x256xf32>
    %1813 = arith.subf %1812, %1624 : vector<2x256xf32>
    %cst_664 = arith.constant 2.500000e+00 : f32
    %1814 = vector.broadcast %cst_664 : f32 to vector<2x256xf32>
    %1815 = arith.mulf %1813, %1814 : vector<2x256xf32>
    %1816 = arith.mulf %1815, %1707 : vector<2x256xf32>
    %1817 = arith.addf %1811, %1816 : vector<2x256xf32>
    %cst_665 = arith.constant -2.200000e+00 : f32
    %1818 = vector.broadcast %cst_665 : f32 to vector<2x256xf32>
    %1819 = arith.subf %1624, %1818 : vector<2x256xf32>
    %cst_666 = arith.constant 1.250000e+00 : f32
    %1820 = vector.broadcast %cst_666 : f32 to vector<2x256xf32>
    %1821 = arith.mulf %1819, %1820 : vector<2x256xf32>
    %1822 = arith.mulf %1821, %1718 : vector<2x256xf32>
    %cst_667 = arith.constant -1.000000e+00 : f32
    %1823 = vector.broadcast %cst_667 : f32 to vector<2x256xf32>
    %1824 = arith.subf %1823, %1624 : vector<2x256xf32>
    %cst_668 = arith.constant 1.250000e+00 : f32
    %1825 = vector.broadcast %cst_668 : f32 to vector<2x256xf32>
    %1826 = arith.mulf %1824, %1825 : vector<2x256xf32>
    %1827 = arith.mulf %1826, %1729 : vector<2x256xf32>
    %1828 = arith.addf %1822, %1827 : vector<2x256xf32>
    %cst_669 = arith.constant -1.800000e+00 : f32
    %1829 = vector.broadcast %cst_669 : f32 to vector<2x256xf32>
    %1830 = arith.subf %1624, %1829 : vector<2x256xf32>
    %cst_670 = arith.constant 1.250000e+00 : f32
    %1831 = vector.broadcast %cst_670 : f32 to vector<2x256xf32>
    %1832 = arith.mulf %1830, %1831 : vector<2x256xf32>
    %1833 = arith.mulf %1832, %1729 : vector<2x256xf32>
    %cst_671 = arith.constant -6.000000e-01 : f32
    %1834 = vector.broadcast %cst_671 : f32 to vector<2x256xf32>
    %1835 = arith.subf %1834, %1624 : vector<2x256xf32>
    %cst_672 = arith.constant 1.250000e+00 : f32
    %1836 = vector.broadcast %cst_672 : f32 to vector<2x256xf32>
    %1837 = arith.mulf %1835, %1836 : vector<2x256xf32>
    %1838 = arith.mulf %1837, %1740 : vector<2x256xf32>
    %1839 = arith.addf %1833, %1838 : vector<2x256xf32>
    %cst_673 = arith.constant -1.400000e+00 : f32
    %1840 = vector.broadcast %cst_673 : f32 to vector<2x256xf32>
    %1841 = arith.subf %1624, %1840 : vector<2x256xf32>
    %cst_674 = arith.constant 1.250000e+00 : f32
    %1842 = vector.broadcast %cst_674 : f32 to vector<2x256xf32>
    %1843 = arith.mulf %1841, %1842 : vector<2x256xf32>
    %1844 = arith.mulf %1843, %1740 : vector<2x256xf32>
    %cst_675 = arith.constant -2.000000e-01 : f32
    %1845 = vector.broadcast %cst_675 : f32 to vector<2x256xf32>
    %1846 = arith.subf %1845, %1624 : vector<2x256xf32>
    %cst_676 = arith.constant 1.250000e+00 : f32
    %1847 = vector.broadcast %cst_676 : f32 to vector<2x256xf32>
    %1848 = arith.mulf %1846, %1847 : vector<2x256xf32>
    %1849 = arith.mulf %1848, %1751 : vector<2x256xf32>
    %1850 = arith.addf %1844, %1849 : vector<2x256xf32>
    %cst_677 = arith.constant -1.000000e+00 : f32
    %1851 = vector.broadcast %cst_677 : f32 to vector<2x256xf32>
    %1852 = arith.subf %1624, %1851 : vector<2x256xf32>
    %cst_678 = arith.constant 1.250000e+00 : f32
    %1853 = vector.broadcast %cst_678 : f32 to vector<2x256xf32>
    %1854 = arith.mulf %1852, %1853 : vector<2x256xf32>
    %1855 = arith.mulf %1854, %1751 : vector<2x256xf32>
    %cst_679 = arith.constant 2.000000e-01 : f32
    %1856 = vector.broadcast %cst_679 : f32 to vector<2x256xf32>
    %1857 = arith.subf %1856, %1624 : vector<2x256xf32>
    %cst_680 = arith.constant 1.250000e+00 : f32
    %1858 = vector.broadcast %cst_680 : f32 to vector<2x256xf32>
    %1859 = arith.mulf %1857, %1858 : vector<2x256xf32>
    %1860 = arith.mulf %1859, %1762 : vector<2x256xf32>
    %1861 = arith.addf %1855, %1860 : vector<2x256xf32>
    %cst_681 = arith.constant -6.000000e-01 : f32
    %1862 = vector.broadcast %cst_681 : f32 to vector<2x256xf32>
    %1863 = arith.subf %1624, %1862 : vector<2x256xf32>
    %cst_682 = arith.constant 1.250000e+00 : f32
    %1864 = vector.broadcast %cst_682 : f32 to vector<2x256xf32>
    %1865 = arith.mulf %1863, %1864 : vector<2x256xf32>
    %1866 = arith.mulf %1865, %1762 : vector<2x256xf32>
    %cst_683 = arith.constant 6.000000e-01 : f32
    %1867 = vector.broadcast %cst_683 : f32 to vector<2x256xf32>
    %1868 = arith.subf %1867, %1624 : vector<2x256xf32>
    %cst_684 = arith.constant 1.250000e+00 : f32
    %1869 = vector.broadcast %cst_684 : f32 to vector<2x256xf32>
    %1870 = arith.mulf %1868, %1869 : vector<2x256xf32>
    %1871 = arith.mulf %1870, %1773 : vector<2x256xf32>
    %1872 = arith.addf %1866, %1871 : vector<2x256xf32>
    %cst_685 = arith.constant -2.000000e-01 : f32
    %1873 = vector.broadcast %cst_685 : f32 to vector<2x256xf32>
    %1874 = arith.subf %1624, %1873 : vector<2x256xf32>
    %cst_686 = arith.constant 1.250000e+00 : f32
    %1875 = vector.broadcast %cst_686 : f32 to vector<2x256xf32>
    %1876 = arith.mulf %1874, %1875 : vector<2x256xf32>
    %1877 = arith.mulf %1876, %1773 : vector<2x256xf32>
    %cst_687 = arith.constant 1.000000e+00 : f32
    %1878 = vector.broadcast %cst_687 : f32 to vector<2x256xf32>
    %1879 = arith.subf %1878, %1624 : vector<2x256xf32>
    %cst_688 = arith.constant 1.250000e+00 : f32
    %1880 = vector.broadcast %cst_688 : f32 to vector<2x256xf32>
    %1881 = arith.mulf %1879, %1880 : vector<2x256xf32>
    %1882 = arith.mulf %1881, %1784 : vector<2x256xf32>
    %1883 = arith.addf %1877, %1882 : vector<2x256xf32>
    %cst_689 = arith.constant 2.000000e-01 : f32
    %1884 = vector.broadcast %cst_689 : f32 to vector<2x256xf32>
    %1885 = arith.subf %1624, %1884 : vector<2x256xf32>
    %cst_690 = arith.constant 1.250000e+00 : f32
    %1886 = vector.broadcast %cst_690 : f32 to vector<2x256xf32>
    %1887 = arith.mulf %1885, %1886 : vector<2x256xf32>
    %1888 = arith.mulf %1887, %1784 : vector<2x256xf32>
    %cst_691 = arith.constant 1.400000e+00 : f32
    %1889 = vector.broadcast %cst_691 : f32 to vector<2x256xf32>
    %1890 = arith.subf %1889, %1624 : vector<2x256xf32>
    %cst_692 = arith.constant 1.250000e+00 : f32
    %1891 = vector.broadcast %cst_692 : f32 to vector<2x256xf32>
    %1892 = arith.mulf %1890, %1891 : vector<2x256xf32>
    %1893 = arith.mulf %1892, %1795 : vector<2x256xf32>
    %1894 = arith.addf %1888, %1893 : vector<2x256xf32>
    %cst_693 = arith.constant 6.000000e-01 : f32
    %1895 = vector.broadcast %cst_693 : f32 to vector<2x256xf32>
    %1896 = arith.subf %1624, %1895 : vector<2x256xf32>
    %cst_694 = arith.constant 1.250000e+00 : f32
    %1897 = vector.broadcast %cst_694 : f32 to vector<2x256xf32>
    %1898 = arith.mulf %1896, %1897 : vector<2x256xf32>
    %1899 = arith.mulf %1898, %1795 : vector<2x256xf32>
    %cst_695 = arith.constant 1.800000e+00 : f32
    %1900 = vector.broadcast %cst_695 : f32 to vector<2x256xf32>
    %1901 = arith.subf %1900, %1624 : vector<2x256xf32>
    %cst_696 = arith.constant 1.250000e+00 : f32
    %1902 = vector.broadcast %cst_696 : f32 to vector<2x256xf32>
    %1903 = arith.mulf %1901, %1902 : vector<2x256xf32>
    %1904 = arith.mulf %1903, %1806 : vector<2x256xf32>
    %1905 = arith.addf %1899, %1904 : vector<2x256xf32>
    %cst_697 = arith.constant 1.000000e+00 : f32
    %1906 = vector.broadcast %cst_697 : f32 to vector<2x256xf32>
    %1907 = arith.subf %1624, %1906 : vector<2x256xf32>
    %cst_698 = arith.constant 1.250000e+00 : f32
    %1908 = vector.broadcast %cst_698 : f32 to vector<2x256xf32>
    %1909 = arith.mulf %1907, %1908 : vector<2x256xf32>
    %1910 = arith.mulf %1909, %1806 : vector<2x256xf32>
    %cst_699 = arith.constant 2.200000e+00 : f32
    %1911 = vector.broadcast %cst_699 : f32 to vector<2x256xf32>
    %1912 = arith.subf %1911, %1624 : vector<2x256xf32>
    %cst_700 = arith.constant 1.250000e+00 : f32
    %1913 = vector.broadcast %cst_700 : f32 to vector<2x256xf32>
    %1914 = arith.mulf %1912, %1913 : vector<2x256xf32>
    %1915 = arith.mulf %1914, %1817 : vector<2x256xf32>
    %1916 = arith.addf %1910, %1915 : vector<2x256xf32>
    %cst_701 = arith.constant -2.200000e+00 : f32
    %1917 = vector.broadcast %cst_701 : f32 to vector<2x256xf32>
    %1918 = arith.subf %1624, %1917 : vector<2x256xf32>
    %cst_702 = arith.constant 0.833333313 : f32
    %1919 = vector.broadcast %cst_702 : f32 to vector<2x256xf32>
    %1920 = arith.mulf %1918, %1919 : vector<2x256xf32>
    %1921 = arith.mulf %1920, %1828 : vector<2x256xf32>
    %cst_703 = arith.constant -6.000000e-01 : f32
    %1922 = vector.broadcast %cst_703 : f32 to vector<2x256xf32>
    %1923 = arith.subf %1922, %1624 : vector<2x256xf32>
    %cst_704 = arith.constant 0.833333313 : f32
    %1924 = vector.broadcast %cst_704 : f32 to vector<2x256xf32>
    %1925 = arith.mulf %1923, %1924 : vector<2x256xf32>
    %1926 = arith.mulf %1925, %1839 : vector<2x256xf32>
    %1927 = arith.addf %1921, %1926 : vector<2x256xf32>
    %cst_705 = arith.constant -1.800000e+00 : f32
    %1928 = vector.broadcast %cst_705 : f32 to vector<2x256xf32>
    %1929 = arith.subf %1624, %1928 : vector<2x256xf32>
    %cst_706 = arith.constant 0.833333313 : f32
    %1930 = vector.broadcast %cst_706 : f32 to vector<2x256xf32>
    %1931 = arith.mulf %1929, %1930 : vector<2x256xf32>
    %1932 = arith.mulf %1931, %1839 : vector<2x256xf32>
    %cst_707 = arith.constant -2.000000e-01 : f32
    %1933 = vector.broadcast %cst_707 : f32 to vector<2x256xf32>
    %1934 = arith.subf %1933, %1624 : vector<2x256xf32>
    %cst_708 = arith.constant 0.833333313 : f32
    %1935 = vector.broadcast %cst_708 : f32 to vector<2x256xf32>
    %1936 = arith.mulf %1934, %1935 : vector<2x256xf32>
    %1937 = arith.mulf %1936, %1850 : vector<2x256xf32>
    %1938 = arith.addf %1932, %1937 : vector<2x256xf32>
    %cst_709 = arith.constant -1.400000e+00 : f32
    %1939 = vector.broadcast %cst_709 : f32 to vector<2x256xf32>
    %1940 = arith.subf %1624, %1939 : vector<2x256xf32>
    %cst_710 = arith.constant 0.833333313 : f32
    %1941 = vector.broadcast %cst_710 : f32 to vector<2x256xf32>
    %1942 = arith.mulf %1940, %1941 : vector<2x256xf32>
    %1943 = arith.mulf %1942, %1850 : vector<2x256xf32>
    %cst_711 = arith.constant 2.000000e-01 : f32
    %1944 = vector.broadcast %cst_711 : f32 to vector<2x256xf32>
    %1945 = arith.subf %1944, %1624 : vector<2x256xf32>
    %cst_712 = arith.constant 0.833333313 : f32
    %1946 = vector.broadcast %cst_712 : f32 to vector<2x256xf32>
    %1947 = arith.mulf %1945, %1946 : vector<2x256xf32>
    %1948 = arith.mulf %1947, %1861 : vector<2x256xf32>
    %1949 = arith.addf %1943, %1948 : vector<2x256xf32>
    %cst_713 = arith.constant -1.000000e+00 : f32
    %1950 = vector.broadcast %cst_713 : f32 to vector<2x256xf32>
    %1951 = arith.subf %1624, %1950 : vector<2x256xf32>
    %cst_714 = arith.constant 0.833333313 : f32
    %1952 = vector.broadcast %cst_714 : f32 to vector<2x256xf32>
    %1953 = arith.mulf %1951, %1952 : vector<2x256xf32>
    %1954 = arith.mulf %1953, %1861 : vector<2x256xf32>
    %cst_715 = arith.constant 6.000000e-01 : f32
    %1955 = vector.broadcast %cst_715 : f32 to vector<2x256xf32>
    %1956 = arith.subf %1955, %1624 : vector<2x256xf32>
    %cst_716 = arith.constant 0.833333313 : f32
    %1957 = vector.broadcast %cst_716 : f32 to vector<2x256xf32>
    %1958 = arith.mulf %1956, %1957 : vector<2x256xf32>
    %1959 = arith.mulf %1958, %1872 : vector<2x256xf32>
    %1960 = arith.addf %1954, %1959 : vector<2x256xf32>
    %cst_717 = arith.constant -6.000000e-01 : f32
    %1961 = vector.broadcast %cst_717 : f32 to vector<2x256xf32>
    %1962 = arith.subf %1624, %1961 : vector<2x256xf32>
    %cst_718 = arith.constant 0.833333313 : f32
    %1963 = vector.broadcast %cst_718 : f32 to vector<2x256xf32>
    %1964 = arith.mulf %1962, %1963 : vector<2x256xf32>
    %1965 = arith.mulf %1964, %1872 : vector<2x256xf32>
    %cst_719 = arith.constant 1.000000e+00 : f32
    %1966 = vector.broadcast %cst_719 : f32 to vector<2x256xf32>
    %1967 = arith.subf %1966, %1624 : vector<2x256xf32>
    %cst_720 = arith.constant 0.833333313 : f32
    %1968 = vector.broadcast %cst_720 : f32 to vector<2x256xf32>
    %1969 = arith.mulf %1967, %1968 : vector<2x256xf32>
    %1970 = arith.mulf %1969, %1883 : vector<2x256xf32>
    %1971 = arith.addf %1965, %1970 : vector<2x256xf32>
    %cst_721 = arith.constant -2.000000e-01 : f32
    %1972 = vector.broadcast %cst_721 : f32 to vector<2x256xf32>
    %1973 = arith.subf %1624, %1972 : vector<2x256xf32>
    %cst_722 = arith.constant 0.833333313 : f32
    %1974 = vector.broadcast %cst_722 : f32 to vector<2x256xf32>
    %1975 = arith.mulf %1973, %1974 : vector<2x256xf32>
    %1976 = arith.mulf %1975, %1883 : vector<2x256xf32>
    %cst_723 = arith.constant 1.400000e+00 : f32
    %1977 = vector.broadcast %cst_723 : f32 to vector<2x256xf32>
    %1978 = arith.subf %1977, %1624 : vector<2x256xf32>
    %cst_724 = arith.constant 0.833333313 : f32
    %1979 = vector.broadcast %cst_724 : f32 to vector<2x256xf32>
    %1980 = arith.mulf %1978, %1979 : vector<2x256xf32>
    %1981 = arith.mulf %1980, %1894 : vector<2x256xf32>
    %1982 = arith.addf %1976, %1981 : vector<2x256xf32>
    %cst_725 = arith.constant 2.000000e-01 : f32
    %1983 = vector.broadcast %cst_725 : f32 to vector<2x256xf32>
    %1984 = arith.subf %1624, %1983 : vector<2x256xf32>
    %cst_726 = arith.constant 0.833333313 : f32
    %1985 = vector.broadcast %cst_726 : f32 to vector<2x256xf32>
    %1986 = arith.mulf %1984, %1985 : vector<2x256xf32>
    %1987 = arith.mulf %1986, %1894 : vector<2x256xf32>
    %cst_727 = arith.constant 1.800000e+00 : f32
    %1988 = vector.broadcast %cst_727 : f32 to vector<2x256xf32>
    %1989 = arith.subf %1988, %1624 : vector<2x256xf32>
    %cst_728 = arith.constant 0.833333313 : f32
    %1990 = vector.broadcast %cst_728 : f32 to vector<2x256xf32>
    %1991 = arith.mulf %1989, %1990 : vector<2x256xf32>
    %1992 = arith.mulf %1991, %1905 : vector<2x256xf32>
    %1993 = arith.addf %1987, %1992 : vector<2x256xf32>
    %cst_729 = arith.constant 6.000000e-01 : f32
    %1994 = vector.broadcast %cst_729 : f32 to vector<2x256xf32>
    %1995 = arith.subf %1624, %1994 : vector<2x256xf32>
    %cst_730 = arith.constant 0.833333313 : f32
    %1996 = vector.broadcast %cst_730 : f32 to vector<2x256xf32>
    %1997 = arith.mulf %1995, %1996 : vector<2x256xf32>
    %1998 = arith.mulf %1997, %1905 : vector<2x256xf32>
    %cst_731 = arith.constant 2.200000e+00 : f32
    %1999 = vector.broadcast %cst_731 : f32 to vector<2x256xf32>
    %2000 = arith.subf %1999, %1624 : vector<2x256xf32>
    %cst_732 = arith.constant 0.833333313 : f32
    %2001 = vector.broadcast %cst_732 : f32 to vector<2x256xf32>
    %2002 = arith.mulf %2000, %2001 : vector<2x256xf32>
    %2003 = arith.mulf %2002, %1916 : vector<2x256xf32>
    %2004 = arith.addf %1998, %2003 : vector<2x256xf32>
    %2005 = tpu.concatenate %1630, %1927, %1938, %1949, %1960, %1971, %1982, %1993, %2004 in 1 : vector<2x256xf32>, vector<2x256xf32>, vector<2x256xf32>, vector<2x256xf32>, vector<2x256xf32>, vector<2x256xf32>, vector<2x256xf32>, vector<2x256xf32>, vector<2x256xf32> -> vector<2x2304xf32>
    %2006 = arith.truncf %2005 : vector<2x2304xf32> to vector<2x2304xbf16>
    %c1_733 = arith.constant 1 : index
    %c0_734 = arith.constant 0 : index
    %c0_735 = arith.constant 0 : index
    %2007 = vector.load %arg3[%c1_733, %c0_734, %c0_735] : memref<2x2304x128xbf16, #tpu.memory_space<vmem>>, vector<1x2304x128xbf16>
    %2008 = vector.shape_cast %2007 : vector<1x2304x128xbf16> to vector<2304x128xbf16>
    %cst_736 = arith.constant dense<0.000000e+00> : vector<2x128xf32>
    %2009 = tpu.matmul %2006, %2008, %cst_736 {dimension_numbers = #tpu.dot_dimension_numbers<[1], [0], [0], [1], [0, 0, 1, 1], [], []>} : vector<2x2304xbf16>, vector<2304x128xbf16>, vector<2x128xf32> -> vector<2x128xf32>
    %2010 = arith.negf %2009 : vector<2x128xf32>
    %2011 = math.exp %2010 : vector<2x128xf32>
    %cst_737 = arith.constant 1.000000e+00 : f32
    %2012 = vector.broadcast %cst_737 : f32 to vector<2x128xf32>
    %2013 = arith.addf %2012, %2011 : vector<2x128xf32>
    %2014 = arith.divf %2012, %2013 : vector<2x128xf32>
    %2015 = arith.mulf %2009, %2014 : vector<2x128xf32>
    %cst_738 = arith.constant -2.200000e+00 : f32
    %2016 = vector.broadcast %cst_738 : f32 to vector<2x128xf32>
    %2017 = arith.cmpf oge, %2009, %2016 : vector<2x128xf32>
    %cst_739 = arith.constant -1.800000e+00 : f32
    %2018 = vector.broadcast %cst_739 : f32 to vector<2x128xf32>
    %2019 = arith.cmpf olt, %2009, %2018 : vector<2x128xf32>
    %2020 = arith.andi %2017, %2019 : vector<2x128xi1>
    %2021 = arith.extui %2020 : vector<2x128xi1> to vector<2x128xi32>
    %2022 = arith.sitofp %2021 : vector<2x128xi32> to vector<2x128xf32>
    %cst_740 = arith.constant -1.800000e+00 : f32
    %2023 = vector.broadcast %cst_740 : f32 to vector<2x128xf32>
    %2024 = arith.cmpf oge, %2009, %2023 : vector<2x128xf32>
    %cst_741 = arith.constant -1.400000e+00 : f32
    %2025 = vector.broadcast %cst_741 : f32 to vector<2x128xf32>
    %2026 = arith.cmpf olt, %2009, %2025 : vector<2x128xf32>
    %2027 = arith.andi %2024, %2026 : vector<2x128xi1>
    %2028 = arith.extui %2027 : vector<2x128xi1> to vector<2x128xi32>
    %2029 = arith.sitofp %2028 : vector<2x128xi32> to vector<2x128xf32>
    %cst_742 = arith.constant -1.400000e+00 : f32
    %2030 = vector.broadcast %cst_742 : f32 to vector<2x128xf32>
    %2031 = arith.cmpf oge, %2009, %2030 : vector<2x128xf32>
    %cst_743 = arith.constant -1.000000e+00 : f32
    %2032 = vector.broadcast %cst_743 : f32 to vector<2x128xf32>
    %2033 = arith.cmpf olt, %2009, %2032 : vector<2x128xf32>
    %2034 = arith.andi %2031, %2033 : vector<2x128xi1>
    %2035 = arith.extui %2034 : vector<2x128xi1> to vector<2x128xi32>
    %2036 = arith.sitofp %2035 : vector<2x128xi32> to vector<2x128xf32>
    %cst_744 = arith.constant -1.000000e+00 : f32
    %2037 = vector.broadcast %cst_744 : f32 to vector<2x128xf32>
    %2038 = arith.cmpf oge, %2009, %2037 : vector<2x128xf32>
    %cst_745 = arith.constant -6.000000e-01 : f32
    %2039 = vector.broadcast %cst_745 : f32 to vector<2x128xf32>
    %2040 = arith.cmpf olt, %2009, %2039 : vector<2x128xf32>
    %2041 = arith.andi %2038, %2040 : vector<2x128xi1>
    %2042 = arith.extui %2041 : vector<2x128xi1> to vector<2x128xi32>
    %2043 = arith.sitofp %2042 : vector<2x128xi32> to vector<2x128xf32>
    %cst_746 = arith.constant -6.000000e-01 : f32
    %2044 = vector.broadcast %cst_746 : f32 to vector<2x128xf32>
    %2045 = arith.cmpf oge, %2009, %2044 : vector<2x128xf32>
    %cst_747 = arith.constant -2.000000e-01 : f32
    %2046 = vector.broadcast %cst_747 : f32 to vector<2x128xf32>
    %2047 = arith.cmpf olt, %2009, %2046 : vector<2x128xf32>
    %2048 = arith.andi %2045, %2047 : vector<2x128xi1>
    %2049 = arith.extui %2048 : vector<2x128xi1> to vector<2x128xi32>
    %2050 = arith.sitofp %2049 : vector<2x128xi32> to vector<2x128xf32>
    %cst_748 = arith.constant -2.000000e-01 : f32
    %2051 = vector.broadcast %cst_748 : f32 to vector<2x128xf32>
    %2052 = arith.cmpf oge, %2009, %2051 : vector<2x128xf32>
    %cst_749 = arith.constant 2.000000e-01 : f32
    %2053 = vector.broadcast %cst_749 : f32 to vector<2x128xf32>
    %2054 = arith.cmpf olt, %2009, %2053 : vector<2x128xf32>
    %2055 = arith.andi %2052, %2054 : vector<2x128xi1>
    %2056 = arith.extui %2055 : vector<2x128xi1> to vector<2x128xi32>
    %2057 = arith.sitofp %2056 : vector<2x128xi32> to vector<2x128xf32>
    %cst_750 = arith.constant 2.000000e-01 : f32
    %2058 = vector.broadcast %cst_750 : f32 to vector<2x128xf32>
    %2059 = arith.cmpf oge, %2009, %2058 : vector<2x128xf32>
    %cst_751 = arith.constant 6.000000e-01 : f32
    %2060 = vector.broadcast %cst_751 : f32 to vector<2x128xf32>
    %2061 = arith.cmpf olt, %2009, %2060 : vector<2x128xf32>
    %2062 = arith.andi %2059, %2061 : vector<2x128xi1>
    %2063 = arith.extui %2062 : vector<2x128xi1> to vector<2x128xi32>
    %2064 = arith.sitofp %2063 : vector<2x128xi32> to vector<2x128xf32>
    %cst_752 = arith.constant 6.000000e-01 : f32
    %2065 = vector.broadcast %cst_752 : f32 to vector<2x128xf32>
    %2066 = arith.cmpf oge, %2009, %2065 : vector<2x128xf32>
    %cst_753 = arith.constant 1.000000e+00 : f32
    %2067 = vector.broadcast %cst_753 : f32 to vector<2x128xf32>
    %2068 = arith.cmpf olt, %2009, %2067 : vector<2x128xf32>
    %2069 = arith.andi %2066, %2068 : vector<2x128xi1>
    %2070 = arith.extui %2069 : vector<2x128xi1> to vector<2x128xi32>
    %2071 = arith.sitofp %2070 : vector<2x128xi32> to vector<2x128xf32>
    %cst_754 = arith.constant 1.000000e+00 : f32
    %2072 = vector.broadcast %cst_754 : f32 to vector<2x128xf32>
    %2073 = arith.cmpf oge, %2009, %2072 : vector<2x128xf32>
    %cst_755 = arith.constant 1.400000e+00 : f32
    %2074 = vector.broadcast %cst_755 : f32 to vector<2x128xf32>
    %2075 = arith.cmpf olt, %2009, %2074 : vector<2x128xf32>
    %2076 = arith.andi %2073, %2075 : vector<2x128xi1>
    %2077 = arith.extui %2076 : vector<2x128xi1> to vector<2x128xi32>
    %2078 = arith.sitofp %2077 : vector<2x128xi32> to vector<2x128xf32>
    %cst_756 = arith.constant 1.400000e+00 : f32
    %2079 = vector.broadcast %cst_756 : f32 to vector<2x128xf32>
    %2080 = arith.cmpf oge, %2009, %2079 : vector<2x128xf32>
    %cst_757 = arith.constant 1.800000e+00 : f32
    %2081 = vector.broadcast %cst_757 : f32 to vector<2x128xf32>
    %2082 = arith.cmpf olt, %2009, %2081 : vector<2x128xf32>
    %2083 = arith.andi %2080, %2082 : vector<2x128xi1>
    %2084 = arith.extui %2083 : vector<2x128xi1> to vector<2x128xi32>
    %2085 = arith.sitofp %2084 : vector<2x128xi32> to vector<2x128xf32>
    %cst_758 = arith.constant 1.800000e+00 : f32
    %2086 = vector.broadcast %cst_758 : f32 to vector<2x128xf32>
    %2087 = arith.cmpf oge, %2009, %2086 : vector<2x128xf32>
    %cst_759 = arith.constant 2.200000e+00 : f32
    %2088 = vector.broadcast %cst_759 : f32 to vector<2x128xf32>
    %2089 = arith.cmpf olt, %2009, %2088 : vector<2x128xf32>
    %2090 = arith.andi %2087, %2089 : vector<2x128xi1>
    %2091 = arith.extui %2090 : vector<2x128xi1> to vector<2x128xi32>
    %2092 = arith.sitofp %2091 : vector<2x128xi32> to vector<2x128xf32>
    %cst_760 = arith.constant -2.200000e+00 : f32
    %2093 = vector.broadcast %cst_760 : f32 to vector<2x128xf32>
    %2094 = arith.subf %2009, %2093 : vector<2x128xf32>
    %cst_761 = arith.constant 2.500000e+00 : f32
    %2095 = vector.broadcast %cst_761 : f32 to vector<2x128xf32>
    %2096 = arith.mulf %2094, %2095 : vector<2x128xf32>
    %2097 = arith.mulf %2096, %2022 : vector<2x128xf32>
    %cst_762 = arith.constant -1.400000e+00 : f32
    %2098 = vector.broadcast %cst_762 : f32 to vector<2x128xf32>
    %2099 = arith.subf %2098, %2009 : vector<2x128xf32>
    %cst_763 = arith.constant 2.500000e+00 : f32
    %2100 = vector.broadcast %cst_763 : f32 to vector<2x128xf32>
    %2101 = arith.mulf %2099, %2100 : vector<2x128xf32>
    %2102 = arith.mulf %2101, %2029 : vector<2x128xf32>
    %2103 = arith.addf %2097, %2102 : vector<2x128xf32>
    %cst_764 = arith.constant -1.800000e+00 : f32
    %2104 = vector.broadcast %cst_764 : f32 to vector<2x128xf32>
    %2105 = arith.subf %2009, %2104 : vector<2x128xf32>
    %cst_765 = arith.constant 2.500000e+00 : f32
    %2106 = vector.broadcast %cst_765 : f32 to vector<2x128xf32>
    %2107 = arith.mulf %2105, %2106 : vector<2x128xf32>
    %2108 = arith.mulf %2107, %2029 : vector<2x128xf32>
    %cst_766 = arith.constant -1.000000e+00 : f32
    %2109 = vector.broadcast %cst_766 : f32 to vector<2x128xf32>
    %2110 = arith.subf %2109, %2009 : vector<2x128xf32>
    %cst_767 = arith.constant 2.500000e+00 : f32
    %2111 = vector.broadcast %cst_767 : f32 to vector<2x128xf32>
    %2112 = arith.mulf %2110, %2111 : vector<2x128xf32>
    %2113 = arith.mulf %2112, %2036 : vector<2x128xf32>
    %2114 = arith.addf %2108, %2113 : vector<2x128xf32>
    %cst_768 = arith.constant -1.400000e+00 : f32
    %2115 = vector.broadcast %cst_768 : f32 to vector<2x128xf32>
    %2116 = arith.subf %2009, %2115 : vector<2x128xf32>
    %cst_769 = arith.constant 2.500000e+00 : f32
    %2117 = vector.broadcast %cst_769 : f32 to vector<2x128xf32>
    %2118 = arith.mulf %2116, %2117 : vector<2x128xf32>
    %2119 = arith.mulf %2118, %2036 : vector<2x128xf32>
    %cst_770 = arith.constant -6.000000e-01 : f32
    %2120 = vector.broadcast %cst_770 : f32 to vector<2x128xf32>
    %2121 = arith.subf %2120, %2009 : vector<2x128xf32>
    %cst_771 = arith.constant 2.500000e+00 : f32
    %2122 = vector.broadcast %cst_771 : f32 to vector<2x128xf32>
    %2123 = arith.mulf %2121, %2122 : vector<2x128xf32>
    %2124 = arith.mulf %2123, %2043 : vector<2x128xf32>
    %2125 = arith.addf %2119, %2124 : vector<2x128xf32>
    %cst_772 = arith.constant -1.000000e+00 : f32
    %2126 = vector.broadcast %cst_772 : f32 to vector<2x128xf32>
    %2127 = arith.subf %2009, %2126 : vector<2x128xf32>
    %cst_773 = arith.constant 2.500000e+00 : f32
    %2128 = vector.broadcast %cst_773 : f32 to vector<2x128xf32>
    %2129 = arith.mulf %2127, %2128 : vector<2x128xf32>
    %2130 = arith.mulf %2129, %2043 : vector<2x128xf32>
    %cst_774 = arith.constant -2.000000e-01 : f32
    %2131 = vector.broadcast %cst_774 : f32 to vector<2x128xf32>
    %2132 = arith.subf %2131, %2009 : vector<2x128xf32>
    %cst_775 = arith.constant 2.500000e+00 : f32
    %2133 = vector.broadcast %cst_775 : f32 to vector<2x128xf32>
    %2134 = arith.mulf %2132, %2133 : vector<2x128xf32>
    %2135 = arith.mulf %2134, %2050 : vector<2x128xf32>
    %2136 = arith.addf %2130, %2135 : vector<2x128xf32>
    %cst_776 = arith.constant -6.000000e-01 : f32
    %2137 = vector.broadcast %cst_776 : f32 to vector<2x128xf32>
    %2138 = arith.subf %2009, %2137 : vector<2x128xf32>
    %cst_777 = arith.constant 2.500000e+00 : f32
    %2139 = vector.broadcast %cst_777 : f32 to vector<2x128xf32>
    %2140 = arith.mulf %2138, %2139 : vector<2x128xf32>
    %2141 = arith.mulf %2140, %2050 : vector<2x128xf32>
    %cst_778 = arith.constant 2.000000e-01 : f32
    %2142 = vector.broadcast %cst_778 : f32 to vector<2x128xf32>
    %2143 = arith.subf %2142, %2009 : vector<2x128xf32>
    %cst_779 = arith.constant 2.500000e+00 : f32
    %2144 = vector.broadcast %cst_779 : f32 to vector<2x128xf32>
    %2145 = arith.mulf %2143, %2144 : vector<2x128xf32>
    %2146 = arith.mulf %2145, %2057 : vector<2x128xf32>
    %2147 = arith.addf %2141, %2146 : vector<2x128xf32>
    %cst_780 = arith.constant -2.000000e-01 : f32
    %2148 = vector.broadcast %cst_780 : f32 to vector<2x128xf32>
    %2149 = arith.subf %2009, %2148 : vector<2x128xf32>
    %cst_781 = arith.constant 2.500000e+00 : f32
    %2150 = vector.broadcast %cst_781 : f32 to vector<2x128xf32>
    %2151 = arith.mulf %2149, %2150 : vector<2x128xf32>
    %2152 = arith.mulf %2151, %2057 : vector<2x128xf32>
    %cst_782 = arith.constant 6.000000e-01 : f32
    %2153 = vector.broadcast %cst_782 : f32 to vector<2x128xf32>
    %2154 = arith.subf %2153, %2009 : vector<2x128xf32>
    %cst_783 = arith.constant 2.500000e+00 : f32
    %2155 = vector.broadcast %cst_783 : f32 to vector<2x128xf32>
    %2156 = arith.mulf %2154, %2155 : vector<2x128xf32>
    %2157 = arith.mulf %2156, %2064 : vector<2x128xf32>
    %2158 = arith.addf %2152, %2157 : vector<2x128xf32>
    %cst_784 = arith.constant 2.000000e-01 : f32
    %2159 = vector.broadcast %cst_784 : f32 to vector<2x128xf32>
    %2160 = arith.subf %2009, %2159 : vector<2x128xf32>
    %cst_785 = arith.constant 2.500000e+00 : f32
    %2161 = vector.broadcast %cst_785 : f32 to vector<2x128xf32>
    %2162 = arith.mulf %2160, %2161 : vector<2x128xf32>
    %2163 = arith.mulf %2162, %2064 : vector<2x128xf32>
    %cst_786 = arith.constant 1.000000e+00 : f32
    %2164 = vector.broadcast %cst_786 : f32 to vector<2x128xf32>
    %2165 = arith.subf %2164, %2009 : vector<2x128xf32>
    %cst_787 = arith.constant 2.500000e+00 : f32
    %2166 = vector.broadcast %cst_787 : f32 to vector<2x128xf32>
    %2167 = arith.mulf %2165, %2166 : vector<2x128xf32>
    %2168 = arith.mulf %2167, %2071 : vector<2x128xf32>
    %2169 = arith.addf %2163, %2168 : vector<2x128xf32>
    %cst_788 = arith.constant 6.000000e-01 : f32
    %2170 = vector.broadcast %cst_788 : f32 to vector<2x128xf32>
    %2171 = arith.subf %2009, %2170 : vector<2x128xf32>
    %cst_789 = arith.constant 2.500000e+00 : f32
    %2172 = vector.broadcast %cst_789 : f32 to vector<2x128xf32>
    %2173 = arith.mulf %2171, %2172 : vector<2x128xf32>
    %2174 = arith.mulf %2173, %2071 : vector<2x128xf32>
    %cst_790 = arith.constant 1.400000e+00 : f32
    %2175 = vector.broadcast %cst_790 : f32 to vector<2x128xf32>
    %2176 = arith.subf %2175, %2009 : vector<2x128xf32>
    %cst_791 = arith.constant 2.500000e+00 : f32
    %2177 = vector.broadcast %cst_791 : f32 to vector<2x128xf32>
    %2178 = arith.mulf %2176, %2177 : vector<2x128xf32>
    %2179 = arith.mulf %2178, %2078 : vector<2x128xf32>
    %2180 = arith.addf %2174, %2179 : vector<2x128xf32>
    %cst_792 = arith.constant 1.000000e+00 : f32
    %2181 = vector.broadcast %cst_792 : f32 to vector<2x128xf32>
    %2182 = arith.subf %2009, %2181 : vector<2x128xf32>
    %cst_793 = arith.constant 2.500000e+00 : f32
    %2183 = vector.broadcast %cst_793 : f32 to vector<2x128xf32>
    %2184 = arith.mulf %2182, %2183 : vector<2x128xf32>
    %2185 = arith.mulf %2184, %2078 : vector<2x128xf32>
    %cst_794 = arith.constant 1.800000e+00 : f32
    %2186 = vector.broadcast %cst_794 : f32 to vector<2x128xf32>
    %2187 = arith.subf %2186, %2009 : vector<2x128xf32>
    %cst_795 = arith.constant 2.500000e+00 : f32
    %2188 = vector.broadcast %cst_795 : f32 to vector<2x128xf32>
    %2189 = arith.mulf %2187, %2188 : vector<2x128xf32>
    %2190 = arith.mulf %2189, %2085 : vector<2x128xf32>
    %2191 = arith.addf %2185, %2190 : vector<2x128xf32>
    %cst_796 = arith.constant 1.400000e+00 : f32
    %2192 = vector.broadcast %cst_796 : f32 to vector<2x128xf32>
    %2193 = arith.subf %2009, %2192 : vector<2x128xf32>
    %cst_797 = arith.constant 2.500000e+00 : f32
    %2194 = vector.broadcast %cst_797 : f32 to vector<2x128xf32>
    %2195 = arith.mulf %2193, %2194 : vector<2x128xf32>
    %2196 = arith.mulf %2195, %2085 : vector<2x128xf32>
    %cst_798 = arith.constant 2.200000e+00 : f32
    %2197 = vector.broadcast %cst_798 : f32 to vector<2x128xf32>
    %2198 = arith.subf %2197, %2009 : vector<2x128xf32>
    %cst_799 = arith.constant 2.500000e+00 : f32
    %2199 = vector.broadcast %cst_799 : f32 to vector<2x128xf32>
    %2200 = arith.mulf %2198, %2199 : vector<2x128xf32>
    %2201 = arith.mulf %2200, %2092 : vector<2x128xf32>
    %2202 = arith.addf %2196, %2201 : vector<2x128xf32>
    %cst_800 = arith.constant -2.200000e+00 : f32
    %2203 = vector.broadcast %cst_800 : f32 to vector<2x128xf32>
    %2204 = arith.subf %2009, %2203 : vector<2x128xf32>
    %cst_801 = arith.constant 1.250000e+00 : f32
    %2205 = vector.broadcast %cst_801 : f32 to vector<2x128xf32>
    %2206 = arith.mulf %2204, %2205 : vector<2x128xf32>
    %2207 = arith.mulf %2206, %2103 : vector<2x128xf32>
    %cst_802 = arith.constant -1.000000e+00 : f32
    %2208 = vector.broadcast %cst_802 : f32 to vector<2x128xf32>
    %2209 = arith.subf %2208, %2009 : vector<2x128xf32>
    %cst_803 = arith.constant 1.250000e+00 : f32
    %2210 = vector.broadcast %cst_803 : f32 to vector<2x128xf32>
    %2211 = arith.mulf %2209, %2210 : vector<2x128xf32>
    %2212 = arith.mulf %2211, %2114 : vector<2x128xf32>
    %2213 = arith.addf %2207, %2212 : vector<2x128xf32>
    %cst_804 = arith.constant -1.800000e+00 : f32
    %2214 = vector.broadcast %cst_804 : f32 to vector<2x128xf32>
    %2215 = arith.subf %2009, %2214 : vector<2x128xf32>
    %cst_805 = arith.constant 1.250000e+00 : f32
    %2216 = vector.broadcast %cst_805 : f32 to vector<2x128xf32>
    %2217 = arith.mulf %2215, %2216 : vector<2x128xf32>
    %2218 = arith.mulf %2217, %2114 : vector<2x128xf32>
    %cst_806 = arith.constant -6.000000e-01 : f32
    %2219 = vector.broadcast %cst_806 : f32 to vector<2x128xf32>
    %2220 = arith.subf %2219, %2009 : vector<2x128xf32>
    %cst_807 = arith.constant 1.250000e+00 : f32
    %2221 = vector.broadcast %cst_807 : f32 to vector<2x128xf32>
    %2222 = arith.mulf %2220, %2221 : vector<2x128xf32>
    %2223 = arith.mulf %2222, %2125 : vector<2x128xf32>
    %2224 = arith.addf %2218, %2223 : vector<2x128xf32>
    %cst_808 = arith.constant -1.400000e+00 : f32
    %2225 = vector.broadcast %cst_808 : f32 to vector<2x128xf32>
    %2226 = arith.subf %2009, %2225 : vector<2x128xf32>
    %cst_809 = arith.constant 1.250000e+00 : f32
    %2227 = vector.broadcast %cst_809 : f32 to vector<2x128xf32>
    %2228 = arith.mulf %2226, %2227 : vector<2x128xf32>
    %2229 = arith.mulf %2228, %2125 : vector<2x128xf32>
    %cst_810 = arith.constant -2.000000e-01 : f32
    %2230 = vector.broadcast %cst_810 : f32 to vector<2x128xf32>
    %2231 = arith.subf %2230, %2009 : vector<2x128xf32>
    %cst_811 = arith.constant 1.250000e+00 : f32
    %2232 = vector.broadcast %cst_811 : f32 to vector<2x128xf32>
    %2233 = arith.mulf %2231, %2232 : vector<2x128xf32>
    %2234 = arith.mulf %2233, %2136 : vector<2x128xf32>
    %2235 = arith.addf %2229, %2234 : vector<2x128xf32>
    %cst_812 = arith.constant -1.000000e+00 : f32
    %2236 = vector.broadcast %cst_812 : f32 to vector<2x128xf32>
    %2237 = arith.subf %2009, %2236 : vector<2x128xf32>
    %cst_813 = arith.constant 1.250000e+00 : f32
    %2238 = vector.broadcast %cst_813 : f32 to vector<2x128xf32>
    %2239 = arith.mulf %2237, %2238 : vector<2x128xf32>
    %2240 = arith.mulf %2239, %2136 : vector<2x128xf32>
    %cst_814 = arith.constant 2.000000e-01 : f32
    %2241 = vector.broadcast %cst_814 : f32 to vector<2x128xf32>
    %2242 = arith.subf %2241, %2009 : vector<2x128xf32>
    %cst_815 = arith.constant 1.250000e+00 : f32
    %2243 = vector.broadcast %cst_815 : f32 to vector<2x128xf32>
    %2244 = arith.mulf %2242, %2243 : vector<2x128xf32>
    %2245 = arith.mulf %2244, %2147 : vector<2x128xf32>
    %2246 = arith.addf %2240, %2245 : vector<2x128xf32>
    %cst_816 = arith.constant -6.000000e-01 : f32
    %2247 = vector.broadcast %cst_816 : f32 to vector<2x128xf32>
    %2248 = arith.subf %2009, %2247 : vector<2x128xf32>
    %cst_817 = arith.constant 1.250000e+00 : f32
    %2249 = vector.broadcast %cst_817 : f32 to vector<2x128xf32>
    %2250 = arith.mulf %2248, %2249 : vector<2x128xf32>
    %2251 = arith.mulf %2250, %2147 : vector<2x128xf32>
    %cst_818 = arith.constant 6.000000e-01 : f32
    %2252 = vector.broadcast %cst_818 : f32 to vector<2x128xf32>
    %2253 = arith.subf %2252, %2009 : vector<2x128xf32>
    %cst_819 = arith.constant 1.250000e+00 : f32
    %2254 = vector.broadcast %cst_819 : f32 to vector<2x128xf32>
    %2255 = arith.mulf %2253, %2254 : vector<2x128xf32>
    %2256 = arith.mulf %2255, %2158 : vector<2x128xf32>
    %2257 = arith.addf %2251, %2256 : vector<2x128xf32>
    %cst_820 = arith.constant -2.000000e-01 : f32
    %2258 = vector.broadcast %cst_820 : f32 to vector<2x128xf32>
    %2259 = arith.subf %2009, %2258 : vector<2x128xf32>
    %cst_821 = arith.constant 1.250000e+00 : f32
    %2260 = vector.broadcast %cst_821 : f32 to vector<2x128xf32>
    %2261 = arith.mulf %2259, %2260 : vector<2x128xf32>
    %2262 = arith.mulf %2261, %2158 : vector<2x128xf32>
    %cst_822 = arith.constant 1.000000e+00 : f32
    %2263 = vector.broadcast %cst_822 : f32 to vector<2x128xf32>
    %2264 = arith.subf %2263, %2009 : vector<2x128xf32>
    %cst_823 = arith.constant 1.250000e+00 : f32
    %2265 = vector.broadcast %cst_823 : f32 to vector<2x128xf32>
    %2266 = arith.mulf %2264, %2265 : vector<2x128xf32>
    %2267 = arith.mulf %2266, %2169 : vector<2x128xf32>
    %2268 = arith.addf %2262, %2267 : vector<2x128xf32>
    %cst_824 = arith.constant 2.000000e-01 : f32
    %2269 = vector.broadcast %cst_824 : f32 to vector<2x128xf32>
    %2270 = arith.subf %2009, %2269 : vector<2x128xf32>
    %cst_825 = arith.constant 1.250000e+00 : f32
    %2271 = vector.broadcast %cst_825 : f32 to vector<2x128xf32>
    %2272 = arith.mulf %2270, %2271 : vector<2x128xf32>
    %2273 = arith.mulf %2272, %2169 : vector<2x128xf32>
    %cst_826 = arith.constant 1.400000e+00 : f32
    %2274 = vector.broadcast %cst_826 : f32 to vector<2x128xf32>
    %2275 = arith.subf %2274, %2009 : vector<2x128xf32>
    %cst_827 = arith.constant 1.250000e+00 : f32
    %2276 = vector.broadcast %cst_827 : f32 to vector<2x128xf32>
    %2277 = arith.mulf %2275, %2276 : vector<2x128xf32>
    %2278 = arith.mulf %2277, %2180 : vector<2x128xf32>
    %2279 = arith.addf %2273, %2278 : vector<2x128xf32>
    %cst_828 = arith.constant 6.000000e-01 : f32
    %2280 = vector.broadcast %cst_828 : f32 to vector<2x128xf32>
    %2281 = arith.subf %2009, %2280 : vector<2x128xf32>
    %cst_829 = arith.constant 1.250000e+00 : f32
    %2282 = vector.broadcast %cst_829 : f32 to vector<2x128xf32>
    %2283 = arith.mulf %2281, %2282 : vector<2x128xf32>
    %2284 = arith.mulf %2283, %2180 : vector<2x128xf32>
    %cst_830 = arith.constant 1.800000e+00 : f32
    %2285 = vector.broadcast %cst_830 : f32 to vector<2x128xf32>
    %2286 = arith.subf %2285, %2009 : vector<2x128xf32>
    %cst_831 = arith.constant 1.250000e+00 : f32
    %2287 = vector.broadcast %cst_831 : f32 to vector<2x128xf32>
    %2288 = arith.mulf %2286, %2287 : vector<2x128xf32>
    %2289 = arith.mulf %2288, %2191 : vector<2x128xf32>
    %2290 = arith.addf %2284, %2289 : vector<2x128xf32>
    %cst_832 = arith.constant 1.000000e+00 : f32
    %2291 = vector.broadcast %cst_832 : f32 to vector<2x128xf32>
    %2292 = arith.subf %2009, %2291 : vector<2x128xf32>
    %cst_833 = arith.constant 1.250000e+00 : f32
    %2293 = vector.broadcast %cst_833 : f32 to vector<2x128xf32>
    %2294 = arith.mulf %2292, %2293 : vector<2x128xf32>
    %2295 = arith.mulf %2294, %2191 : vector<2x128xf32>
    %cst_834 = arith.constant 2.200000e+00 : f32
    %2296 = vector.broadcast %cst_834 : f32 to vector<2x128xf32>
    %2297 = arith.subf %2296, %2009 : vector<2x128xf32>
    %cst_835 = arith.constant 1.250000e+00 : f32
    %2298 = vector.broadcast %cst_835 : f32 to vector<2x128xf32>
    %2299 = arith.mulf %2297, %2298 : vector<2x128xf32>
    %2300 = arith.mulf %2299, %2202 : vector<2x128xf32>
    %2301 = arith.addf %2295, %2300 : vector<2x128xf32>
    %cst_836 = arith.constant -2.200000e+00 : f32
    %2302 = vector.broadcast %cst_836 : f32 to vector<2x128xf32>
    %2303 = arith.subf %2009, %2302 : vector<2x128xf32>
    %cst_837 = arith.constant 0.833333313 : f32
    %2304 = vector.broadcast %cst_837 : f32 to vector<2x128xf32>
    %2305 = arith.mulf %2303, %2304 : vector<2x128xf32>
    %2306 = arith.mulf %2305, %2213 : vector<2x128xf32>
    %cst_838 = arith.constant -6.000000e-01 : f32
    %2307 = vector.broadcast %cst_838 : f32 to vector<2x128xf32>
    %2308 = arith.subf %2307, %2009 : vector<2x128xf32>
    %cst_839 = arith.constant 0.833333313 : f32
    %2309 = vector.broadcast %cst_839 : f32 to vector<2x128xf32>
    %2310 = arith.mulf %2308, %2309 : vector<2x128xf32>
    %2311 = arith.mulf %2310, %2224 : vector<2x128xf32>
    %2312 = arith.addf %2306, %2311 : vector<2x128xf32>
    %cst_840 = arith.constant -1.800000e+00 : f32
    %2313 = vector.broadcast %cst_840 : f32 to vector<2x128xf32>
    %2314 = arith.subf %2009, %2313 : vector<2x128xf32>
    %cst_841 = arith.constant 0.833333313 : f32
    %2315 = vector.broadcast %cst_841 : f32 to vector<2x128xf32>
    %2316 = arith.mulf %2314, %2315 : vector<2x128xf32>
    %2317 = arith.mulf %2316, %2224 : vector<2x128xf32>
    %cst_842 = arith.constant -2.000000e-01 : f32
    %2318 = vector.broadcast %cst_842 : f32 to vector<2x128xf32>
    %2319 = arith.subf %2318, %2009 : vector<2x128xf32>
    %cst_843 = arith.constant 0.833333313 : f32
    %2320 = vector.broadcast %cst_843 : f32 to vector<2x128xf32>
    %2321 = arith.mulf %2319, %2320 : vector<2x128xf32>
    %2322 = arith.mulf %2321, %2235 : vector<2x128xf32>
    %2323 = arith.addf %2317, %2322 : vector<2x128xf32>
    %cst_844 = arith.constant -1.400000e+00 : f32
    %2324 = vector.broadcast %cst_844 : f32 to vector<2x128xf32>
    %2325 = arith.subf %2009, %2324 : vector<2x128xf32>
    %cst_845 = arith.constant 0.833333313 : f32
    %2326 = vector.broadcast %cst_845 : f32 to vector<2x128xf32>
    %2327 = arith.mulf %2325, %2326 : vector<2x128xf32>
    %2328 = arith.mulf %2327, %2235 : vector<2x128xf32>
    %cst_846 = arith.constant 2.000000e-01 : f32
    %2329 = vector.broadcast %cst_846 : f32 to vector<2x128xf32>
    %2330 = arith.subf %2329, %2009 : vector<2x128xf32>
    %cst_847 = arith.constant 0.833333313 : f32
    %2331 = vector.broadcast %cst_847 : f32 to vector<2x128xf32>
    %2332 = arith.mulf %2330, %2331 : vector<2x128xf32>
    %2333 = arith.mulf %2332, %2246 : vector<2x128xf32>
    %2334 = arith.addf %2328, %2333 : vector<2x128xf32>
    %cst_848 = arith.constant -1.000000e+00 : f32
    %2335 = vector.broadcast %cst_848 : f32 to vector<2x128xf32>
    %2336 = arith.subf %2009, %2335 : vector<2x128xf32>
    %cst_849 = arith.constant 0.833333313 : f32
    %2337 = vector.broadcast %cst_849 : f32 to vector<2x128xf32>
    %2338 = arith.mulf %2336, %2337 : vector<2x128xf32>
    %2339 = arith.mulf %2338, %2246 : vector<2x128xf32>
    %cst_850 = arith.constant 6.000000e-01 : f32
    %2340 = vector.broadcast %cst_850 : f32 to vector<2x128xf32>
    %2341 = arith.subf %2340, %2009 : vector<2x128xf32>
    %cst_851 = arith.constant 0.833333313 : f32
    %2342 = vector.broadcast %cst_851 : f32 to vector<2x128xf32>
    %2343 = arith.mulf %2341, %2342 : vector<2x128xf32>
    %2344 = arith.mulf %2343, %2257 : vector<2x128xf32>
    %2345 = arith.addf %2339, %2344 : vector<2x128xf32>
    %cst_852 = arith.constant -6.000000e-01 : f32
    %2346 = vector.broadcast %cst_852 : f32 to vector<2x128xf32>
    %2347 = arith.subf %2009, %2346 : vector<2x128xf32>
    %cst_853 = arith.constant 0.833333313 : f32
    %2348 = vector.broadcast %cst_853 : f32 to vector<2x128xf32>
    %2349 = arith.mulf %2347, %2348 : vector<2x128xf32>
    %2350 = arith.mulf %2349, %2257 : vector<2x128xf32>
    %cst_854 = arith.constant 1.000000e+00 : f32
    %2351 = vector.broadcast %cst_854 : f32 to vector<2x128xf32>
    %2352 = arith.subf %2351, %2009 : vector<2x128xf32>
    %cst_855 = arith.constant 0.833333313 : f32
    %2353 = vector.broadcast %cst_855 : f32 to vector<2x128xf32>
    %2354 = arith.mulf %2352, %2353 : vector<2x128xf32>
    %2355 = arith.mulf %2354, %2268 : vector<2x128xf32>
    %2356 = arith.addf %2350, %2355 : vector<2x128xf32>
    %cst_856 = arith.constant -2.000000e-01 : f32
    %2357 = vector.broadcast %cst_856 : f32 to vector<2x128xf32>
    %2358 = arith.subf %2009, %2357 : vector<2x128xf32>
    %cst_857 = arith.constant 0.833333313 : f32
    %2359 = vector.broadcast %cst_857 : f32 to vector<2x128xf32>
    %2360 = arith.mulf %2358, %2359 : vector<2x128xf32>
    %2361 = arith.mulf %2360, %2268 : vector<2x128xf32>
    %cst_858 = arith.constant 1.400000e+00 : f32
    %2362 = vector.broadcast %cst_858 : f32 to vector<2x128xf32>
    %2363 = arith.subf %2362, %2009 : vector<2x128xf32>
    %cst_859 = arith.constant 0.833333313 : f32
    %2364 = vector.broadcast %cst_859 : f32 to vector<2x128xf32>
    %2365 = arith.mulf %2363, %2364 : vector<2x128xf32>
    %2366 = arith.mulf %2365, %2279 : vector<2x128xf32>
    %2367 = arith.addf %2361, %2366 : vector<2x128xf32>
    %cst_860 = arith.constant 2.000000e-01 : f32
    %2368 = vector.broadcast %cst_860 : f32 to vector<2x128xf32>
    %2369 = arith.subf %2009, %2368 : vector<2x128xf32>
    %cst_861 = arith.constant 0.833333313 : f32
    %2370 = vector.broadcast %cst_861 : f32 to vector<2x128xf32>
    %2371 = arith.mulf %2369, %2370 : vector<2x128xf32>
    %2372 = arith.mulf %2371, %2279 : vector<2x128xf32>
    %cst_862 = arith.constant 1.800000e+00 : f32
    %2373 = vector.broadcast %cst_862 : f32 to vector<2x128xf32>
    %2374 = arith.subf %2373, %2009 : vector<2x128xf32>
    %cst_863 = arith.constant 0.833333313 : f32
    %2375 = vector.broadcast %cst_863 : f32 to vector<2x128xf32>
    %2376 = arith.mulf %2374, %2375 : vector<2x128xf32>
    %2377 = arith.mulf %2376, %2290 : vector<2x128xf32>
    %2378 = arith.addf %2372, %2377 : vector<2x128xf32>
    %cst_864 = arith.constant 6.000000e-01 : f32
    %2379 = vector.broadcast %cst_864 : f32 to vector<2x128xf32>
    %2380 = arith.subf %2009, %2379 : vector<2x128xf32>
    %cst_865 = arith.constant 0.833333313 : f32
    %2381 = vector.broadcast %cst_865 : f32 to vector<2x128xf32>
    %2382 = arith.mulf %2380, %2381 : vector<2x128xf32>
    %2383 = arith.mulf %2382, %2290 : vector<2x128xf32>
    %cst_866 = arith.constant 2.200000e+00 : f32
    %2384 = vector.broadcast %cst_866 : f32 to vector<2x128xf32>
    %2385 = arith.subf %2384, %2009 : vector<2x128xf32>
    %cst_867 = arith.constant 0.833333313 : f32
    %2386 = vector.broadcast %cst_867 : f32 to vector<2x128xf32>
    %2387 = arith.mulf %2385, %2386 : vector<2x128xf32>
    %2388 = arith.mulf %2387, %2301 : vector<2x128xf32>
    %2389 = arith.addf %2383, %2388 : vector<2x128xf32>
    %2390 = tpu.concatenate %2015, %2312, %2323, %2334, %2345, %2356, %2367, %2378, %2389 in 1 : vector<2x128xf32>, vector<2x128xf32>, vector<2x128xf32>, vector<2x128xf32>, vector<2x128xf32>, vector<2x128xf32>, vector<2x128xf32>, vector<2x128xf32>, vector<2x128xf32> -> vector<2x1152xf32>
    %2391 = arith.truncf %2390 : vector<2x1152xf32> to vector<2x1152xbf16>
    %c1_868 = arith.constant 1 : index
    %c0_869 = arith.constant 0 : index
    %c0_870 = arith.constant 0 : index
    %2392 = vector.load %arg4[%c1_868, %c0_869, %c0_870] : memref<2x1152x8xbf16, #tpu.memory_space<vmem>>, vector<1x1152x8xbf16>
    %2393 = vector.shape_cast %2392 : vector<1x1152x8xbf16> to vector<1152x8xbf16>
    %cst_871 = arith.constant dense<0.000000e+00> : vector<2x8xf32>
    %2394 = tpu.matmul %2391, %2393, %cst_871 {dimension_numbers = #tpu.dot_dimension_numbers<[1], [0], [0], [1], [0, 0, 1, 1], [], []>} : vector<2x1152xbf16>, vector<1152x8xbf16>, vector<2x8xf32> -> vector<2x8xf32>
    %c1_872 = arith.constant 1 : index
    %c0_873 = arith.constant 0 : index
    %c0_874 = arith.constant 0 : index
    %2395 = vector.load %arg5[%c1_872, %c0_873, %c0_874] : memref<2x2x8xf32, #tpu.memory_space<vmem>>, vector<1x2x8xf32>
    %2396 = vector.shape_cast %2395 : vector<1x2x8xf32> to vector<2x8xf32>
    %2397 = vector.shape_cast %2394 : vector<2x8xf32> to vector<1x2x8xf32>
    tpu.vector_store %arg5[%c1_872, %c0_873, %c0_874], %2397 {strides = array<i32>} : memref<2x2x8xf32, #tpu.memory_space<vmem>>, vector<1x2x8xf32>,
    return
  }
  func.func @transform_0(%arg0: i32) -> (i32, i32, i32) {
    %c0_i32 = arith.constant 0 : i32
    %c0_i32_0 = arith.constant 0 : i32
    %c0_i32_1 = arith.constant 0 : i32
    return %arg0, %c0_i32, %c0_i32_0 : i32, i32, i32
  }
  func.func @transform_1(%arg0: i32) -> (i32, i32, i32) {
    %c0_i32 = arith.constant 0 : i32
    %c0_i32_0 = arith.constant 0 : i32
    %c0_i32_1 = arith.constant 0 : i32
    return %arg0, %c0_i32, %c0_i32_0 : i32, i32, i32
  }
  func.func @transform_2(%arg0: i32) -> (i32, i32, i32) {
    %c0_i32 = arith.constant 0 : i32
    %c0_i32_0 = arith.constant 0 : i32
    %c0_i32_1 = arith.constant 0 : i32
    return %arg0, %c0_i32, %c0_i32_0 : i32, i32, i32
  }
  func.func @transform_3(%arg0: i32) -> (i32, i32, i32) {
    %c0_i32 = arith.constant 0 : i32
    %c0_i32_0 = arith.constant 0 : i32
    %c0_i32_1 = arith.constant 0 : i32
    return %arg0, %c0_i32, %c0_i32_0 : i32, i32, i32
  }
  func.func @transform_4(%arg0: i32) -> (i32, i32, i32) {
    %c0_i32 = arith.constant 0 : i32
    %c0_i32_0 = arith.constant 0 : i32
    %c0_i32_1 = arith.constant 0 : i32
    return %arg0, %c0_i32, %c0_i32_0 : i32, i32, i32
  }
}

</mosaic_0001>

<llo_original>
// kernel: model_forward.1
$region0: #{model_forward.1}
  #allocation0 [shape = 'u32[]', space=smem, size = 0x4, offset = 0x4, fixed_abs, tag = 'smem constant byte address 0x4 - core index']
  #allocation1 [shape = 'u32[144,128]{1,0:T(1,128)}', space=vmem, size = 0x12000, scoped, tag = 'internal scratch']
  %s0 = inlined_call_operand.vmem [shape: f32[4,2,16], index: 0, kind: input, shape index: {}]
  %s1 = inlined_call_operand.hbm [shape: bf16[4,144,256], index: 1, kind: input, shape index: {}]
  %s2 = inlined_call_operand.hbm [shape: bf16[4,2304,128], index: 2, kind: input, shape index: {}]
  %s3 = inlined_call_operand.vmem [shape: bf16[4,1152,8], index: 3, kind: input, shape index: {}]
  %s4 = inlined_call_operand.vmem [shape: f32[4,2,8], index: 4, kind: output, shape index: {}]
  %s5 = sld [smem:[#allocation0]]
  $region57: #{model_forward.1} parent=0
    _
  %s7 = ssub.s32 1, %s5
  %s8 = scalar_select 0, %s7, %s5
  $region1: #{model_forward.1} parent=0
    #allocation2 [shape = 'u8[294912]{0}', space=vmem, size = 0x48000, scoped, tag = 'input window, operand 1']
    #allocation3 [shape = 's32[2]{0}', space=sflag, size = 0x8, scoped, tag = 'scoped memory for model_forward.1']
    #allocation4 [shape = 'u8[2359296]{0}', space=vmem, size = 0x240000, scoped, tag = 'input window, operand 2']
    #allocation5 [shape = 's32[2]{0}', space=sflag, size = 0x8, scoped, tag = 'scoped memory for model_forward.1']
    %9 = vsyncpa [#allocation3], 0
    %s10 = scalar_lea.sflag [#allocation3], 1
    %11 = vsyncpa %s10, 0
    %12 = vsyncpa [#allocation5], 0
    %s13 = scalar_lea.sflag [#allocation5], 1
    %14 = vsyncpa %s13, 0
    loop: start=0, step=1, limit=4
    $region2: #{model_forward.1} parent=1 // loop_pre_header
      _
    $region3: #{model_forward.1} parent=1 // loop_header
      %s16 = sphi 0, %s20
      %p17 = scmp.ge.s32.totalorder %s16, 4
      %s26 = sphi 0, %s28
      %s29 = sphi 0, %s26
      %s30 = sphi 0, %s29
      %s46 = sphi 0, %s30
      %s52 = sphi 0, %s54
      %s55 = sphi 0, %s52
      %s56 = sphi 0, %s55
      %s72 = sphi 0, %s56
      %s78 = sphi 0, %s80
      %s81 = sphi 0, %s78
      %s82 = sphi 0, %s81
      %s98 = sphi 0, %s82
      %s104 = sphi 0, %s106
      %s107 = sphi 0, %s104
      %s108 = sphi 0, %s107
      %s124 = sphi 0, %s108
      %s130 = sphi 0, %s132
      %s133 = sphi 0, %s130
      %s134 = sphi 0, %s133
      %s150 = sphi 0, %s134
    $region4: #{model_forward.1} parent=1 // loop_header_branch
      %19 = sbr.rel (%p17) target = $region8
    $region5: #{model_forward.1} parent=1 // loop_body
      %s21 = ssub.s32 %s16, 1
      %s22 = ssub.s32 %s16, 2
      %s23 = sadd.s32 %s16, 1
      %s24 = ssub.s32 %s16, %s23
      %p25 = scmp.eq.s32.totalorder %s24, 0
      %s27 = sadd.s32 %s26, 1
      %s28 = scalar_select %p25, %s26, %s27
      %p31 = pneg %p25
      %p32 = scmp.eq.s32.totalorder %s16, 1
      %p33 = por %p31, %p32
      %p34 = scmp.ne.s32.totalorder %s26, %s29
      %p35 = scmp.eq.s32.totalorder %s16, 0
      %p36 = por %p34, %p35
      %p37 = scmp.ne.s32.totalorder %s26, %s29
      %p38 = scmp.eq.s32.totalorder %s21, 1
      %p39 = por %p37, %p38
      %p40 = scmp.ne.s32.totalorder %s29, %s30
      %p41 = scmp.eq.s32.totalorder %s21, 0
      %p42 = por %p40, %p41
      %p43 = scmp.ne.s32.totalorder %s29, %s30
      %p44 = scmp.eq.s32.totalorder %s22, 1
      %p45 = por %p43, %p44
      %p47 = scmp.ne.s32.totalorder %s30, %s46
      %p48 = scmp.eq.s32.totalorder %s22, 0
      %p49 = por %p47, %p48
      %s50 = ssub.s32 %s16, %s23
      %p51 = scmp.eq.s32.totalorder %s50, 0
      %s53 = sadd.s32 %s52, 1
      %s54 = scalar_select %p51, %s52, %s53
      %p57 = pneg %p51
      %p58 = scmp.eq.s32.totalorder %s16, 1
      %p59 = por %p57, %p58
      %p60 = scmp.ne.s32.totalorder %s52, %s55
      %p61 = scmp.eq.s32.totalorder %s16, 0
      %p62 = por %p60, %p61
      %p63 = scmp.ne.s32.totalorder %s52, %s55
      %p64 = scmp.eq.s32.totalorder %s21, 1
      %p65 = por %p63, %p64
      %p66 = scmp.ne.s32.totalorder %s55, %s56
      %p67 = scmp.eq.s32.totalorder %s21, 0
      %p68 = por %p66, %p67
      %p69 = scmp.ne.s32.totalorder %s55, %s56
      %p70 = scmp.eq.s32.totalorder %s22, 1
      %p71 = por %p69, %p70
      %p73 = scmp.ne.s32.totalorder %s56, %s72
      %p74 = scmp.eq.s32.totalorder %s22, 0
      %p75 = por %p73, %p74
      %s76 = ssub.s32 %s16, %s23
      %p77 = scmp.eq.s32.totalorder %s76, 0
      %s79 = sadd.s32 %s78, 1
      %s80 = scalar_select %p77, %s78, %s79
      %p83 = pneg %p77
      %p84 = scmp.eq.s32.totalorder %s16, 1
      %p85 = por %p83, %p84
      %p86 = scmp.ne.s32.totalorder %s78, %s81
      %p87 = scmp.eq.s32.totalorder %s16, 0
      %p88 = por %p86, %p87
      %p89 = scmp.ne.s32.totalorder %s78, %s81
      %p90 = scmp.eq.s32.totalorder %s21, 1
      %p91 = por %p89, %p90
      %p92 = scmp.ne.s32.totalorder %s81, %s82
      %p93 = scmp.eq.s32.totalorder %s21, 0
      %p94 = por %p92, %p93
      %p95 = scmp.ne.s32.totalorder %s81, %s82
      %p96 = scmp.eq.s32.totalorder %s22, 1
      %p97 = por %p95, %p96
      %p99 = scmp.ne.s32.totalorder %s82, %s98
      %p100 = scmp.eq.s32.totalorder %s22, 0
      %p101 = por %p99, %p100
      %s102 = ssub.s32 %s16, %s23
      %p103 = scmp.eq.s32.totalorder %s102, 0
      %s105 = sadd.s32 %s104, 1
      %s106 = scalar_select %p103, %s104, %s105
      %p109 = pneg %p103
      %p110 = scmp.eq.s32.totalorder %s16, 1
      %p111 = por %p109, %p110
      %p112 = scmp.ne.s32.totalorder %s104, %s107
      %p113 = scmp.eq.s32.totalorder %s16, 0
      %p114 = por %p112, %p113
      %p115 = scmp.ne.s32.totalorder %s104, %s107
      %p116 = scmp.eq.s32.totalorder %s21, 1
      %p117 = por %p115, %p116
      %p118 = scmp.ne.s32.totalorder %s107, %s108
      %p119 = scmp.eq.s32.totalorder %s21, 0
      %p120 = por %p118, %p119
      %p121 = scmp.ne.s32.totalorder %s107, %s108
      %p122 = scmp.eq.s32.totalorder %s22, 1
      %p123 = por %p121, %p122
      %p125 = scmp.ne.s32.totalorder %s108, %s124
      %p126 = scmp.eq.s32.totalorder %s22, 0
      %p127 = por %p125, %p126
      %s128 = ssub.s32 %s16, %s23
      %p129 = scmp.eq.s32.totalorder %s128, 0
      %s131 = sadd.s32 %s130, 1
      %s132 = scalar_select %p129, %s130, %s131
      %p135 = pneg %p129
      %p136 = scmp.eq.s32.totalorder %s16, 1
      %p137 = por %p135, %p136
      %p138 = scmp.ne.s32.totalorder %s130, %s133
      %p139 = scmp.eq.s32.totalorder %s16, 0
      %p140 = por %p138, %p139
      %p141 = scmp.ne.s32.totalorder %s130, %s133
      %p142 = scmp.eq.s32.totalorder %s21, 1
      %p143 = por %p141, %p142
      %p144 = scmp.ne.s32.totalorder %s133, %s134
      %p145 = scmp.eq.s32.totalorder %s21, 0
      %p146 = por %p144, %p145
      %p147 = scmp.ne.s32.totalorder %s133, %s134
      %p148 = scmp.eq.s32.totalorder %s22, 1
      %p149 = por %p147, %p148
      %p151 = scmp.ne.s32.totalorder %s134, %s150
      %p152 = scmp.eq.s32.totalorder %s22, 0
      %p153 = por %p151, %p152
      %p154 = scmp.le.s32.totalorder 1, %s16
      %p155 = scmp.lt.s32.totalorder %s16, 3
      %p156 = pnand %p154, %p155
      %p157 = pneg %p156
      // Predicated region
      $region9: #{model_forward.1} parent=5 // pred_check
        _
      $region10: #{model_forward.1} parent=5 // pred_check_branch
        %159 = sbr.rel (%p156) target = $region12
      $region11: #{model_forward.1} parent=5 // pred_region
        %s160 = ssub.s32 %s16, 1
      $region12: #{model_forward.1} parent=5 // pred_fallthru
        _
      %p161 = scmp.lt.s32.totalorder %s16, 2
      // Predicated region
      $region13: #{model_forward.1} parent=5 // pred_check
        %p162 = pneg %p161
      $region14: #{model_forward.1} parent=5 // pred_check_branch
        %164 = sbr.rel (%p162) target = $region16
      $region15: #{model_forward.1} parent=5 // pred_region
        // Predicated region
        $region17: #{model_forward.1} parent=15 // pred_check
          %p165 = pneg %p36
        $region18: #{model_forward.1} parent=15 // pred_check_branch
          %167 = sbr.rel (%p165) target = $region20
        $region19: #{model_forward.1} parent=15 // pred_region
          %s168 = smul.u32 2, %s16
          %p169 = scmp.lt.s32.totalorder %s168, 3
          %s170 = scalar_select %p169, %s168, 3
          %s171 = smul.addr %s170, 2
          %s172 = scalar_lea.vmem %s0, %s171
          %s173 = smul.u32 2, %s16
        $region20: #{model_forward.1} parent=15 // pred_fallthru
          _
        // Predicated region
        $region21: #{model_forward.1} parent=15 // pred_check
          %p174 = pneg %p62
        $region22: #{model_forward.1} parent=15 // pred_check_branch
          %176 = sbr.rel (%p174) target = $region24
        $region23: #{model_forward.1} parent=15 // pred_region
          %s177 = sand.u32 %s52, 1
          %s178 = scalar_lea.sflag [#allocation3], %s177
          %s179 = sand.u32 %s52, 1
          %s180 = smul.addr %s179, 288
          %s181 = scalar_lea.vmem [#allocation2], %s180
          %s182 = smul.u32 2, %s16
          %s184 = ssub.s32 4608, 4608
          %185 = vsyncadd %s178, %s184
          %s186 = smul.addr %s182, 36
          %s187 = smul.addr %s186, 64
          %s188 = scalar_lea.hbm %s1, %s187
          %s189 = sshll.u32 %s181, 4
          %s190 = int_to_ptr.vmem [resolvable:$true] %s189
          %195 = dma.hbm_to_vmem [thread:$0]  %s188, 4608, %s190, %s178, 128, 128, 8
        $region24: #{model_forward.1} parent=15 // pred_fallthru
          _
        // Predicated region
        $region25: #{model_forward.1} parent=15 // pred_check
          %p196 = pneg %p88
        $region26: #{model_forward.1} parent=15 // pred_check_branch
          %198 = sbr.rel (%p196) target = $region28
        $region27: #{model_forward.1} parent=15 // pred_region
          %s199 = sand.u32 %s78, 1
          %s200 = scalar_lea.sflag [#allocation5], %s199
          %s201 = sand.u32 %s78, 1
          %s202 = smul.addr %s201, 2304
          %s203 = scalar_lea.vmem [#allocation4], %s202
          %s204 = smul.u32 2, %s16
          %s206 = ssub.s32 36864, 36864
          %207 = vsyncadd %s200, %s206
          %s208 = smul.addr %s204, 288
          %s209 = smul.addr %s208, 64
          %s210 = scalar_lea.hbm %s2, %s209
          %s211 = sshll.u32 %s203, 4
          %s212 = int_to_ptr.vmem [resolvable:$true] %s211
          %217 = dma.hbm_to_vmem [thread:$0]  %s210, 36864, %s212, %s200, 64, 64, 4
        $region28: #{model_forward.1} parent=15 // pred_fallthru
          _
        // Predicated region
        $region29: #{model_forward.1} parent=15 // pred_check
          %p218 = pneg %p114
        $region30: #{model_forward.1} parent=15 // pred_check_branch
          %220 = sbr.rel (%p218) target = $region32
        $region31: #{model_forward.1} parent=15 // pred_region
          %s221 = smul.u32 2, %s16
          %p222 = scmp.lt.s32.totalorder %s221, 3
          %s223 = scalar_select %p222, %s221, 3
          %s224 = smul.addr %s223, 144
          %s225 = smul.addr %s224, 4
          %s226 = scalar_lea.vmem %s3, %s225
          %s227 = smul.u32 2, %s16
        $region32: #{model_forward.1} parent=15 // pred_fallthru
          _
      $region16: #{model_forward.1} parent=5 // pred_fallthru
        _
      %p228 = scmp.le.s32.totalorder 1, %s16
      %p229 = scmp.lt.s32.totalorder %s16, 3
      %p230 = pnand %p228, %p229
      %p231 = pneg %p230
      // Predicated region
      $region33: #{model_forward.1} parent=5 // pred_check
        _
      $region34: #{model_forward.1} parent=5 // pred_check_branch
        %233 = sbr.rel (%p230) target = $region36
      $region35: #{model_forward.1} parent=5 // pred_region
        %s234 = ssub.s32 %s16, 1
        %s235 = sand.u32 %s55, 1
        %s236 = scalar_lea.sflag [#allocation3], %s235
        %s237 = sand.u32 %s55, 1
        %s238 = smul.addr %s237, 288
        %s239 = scalar_lea.vmem [#allocation2], %s238
        // Predicated region
        $region37: #{model_forward.1} parent=35 // pred_check
          %p240 = pneg %p68
        $region38: #{model_forward.1} parent=35 // pred_check_branch
          %242 = sbr.rel (%p240) target = $region40
        $region39: #{model_forward.1} parent=35 // pred_region
          %243 = dma.done %s236, 4608
        $region40: #{model_forward.1} parent=35 // pred_fallthru
          _
        %s244 = sand.u32 %s81, 1
        %s245 = scalar_lea.sflag [#allocation5], %s244
        %s246 = sand.u32 %s81, 1
        %s247 = smul.addr %s246, 2304
        %s248 = scalar_lea.vmem [#allocation4], %s247
        // Predicated region
        $region41: #{model_forward.1} parent=35 // pred_check
          %p249 = pneg %p94
        $region42: #{model_forward.1} parent=35 // pred_check_branch
          %251 = sbr.rel (%p249) target = $region44
        $region43: #{model_forward.1} parent=35 // pred_region
          %252 = dma.done %s245, 36864
        $region44: #{model_forward.1} parent=35 // pred_fallthru
          _
        %s253 = smul.u32 2, %s21
        %p254 = scmp.lt.s32.totalorder %s253, 3
        %s255 = scalar_select %p254, %s253, 3
        %s256 = smul.addr %s255, 2
        %s257 = scalar_lea.vmem %s0, %s256
        %p258 = pneg %p42
        %p259 = pneg %p39
        %s260 = sand.u32 %s55, 1
        %s261 = scalar_lea.sflag [#allocation3], %s260
        %s262 = sand.u32 %s55, 1
        %s263 = smul.addr %s262, 288
        %s264 = scalar_lea.vmem [#allocation2], %s263
        %p265 = pneg %p68
        %p266 = pneg %p65
        %s267 = sand.u32 %s81, 1
        %s268 = scalar_lea.sflag [#allocation5], %s267
        %s269 = sand.u32 %s81, 1
        %s270 = smul.addr %s269, 2304
        %s271 = scalar_lea.vmem [#allocation4], %s270
        %p272 = pneg %p94
        %p273 = pneg %p91
        %s274 = smul.u32 2, %s21
        %p275 = scmp.lt.s32.totalorder %s274, 3
        %s276 = scalar_select %p275, %s274, 3
        %s277 = smul.addr %s276, 144
        %s278 = smul.addr %s277, 4
        %s279 = scalar_lea.vmem %s3, %s278
        %p280 = pneg %p120
        %p281 = pneg %p117
        %p282 = pneg %p146
        %p283 = pneg %p143
        %s284 = smul.u32 2, %s21
        %p285 = scmp.lt.s32.totalorder %s284, 3
        %s286 = scalar_select %p285, %s284, 3
        %s287 = smul.addr %s286, 2
        %s288 = scalar_lea.vmem %s4, %s287
        %s289 = smul.u32 2, %s21
        %p290 = scmp.lt.s32.totalorder %s289, 3
        %s291 = scalar_select %p290, %s289, 3
        %s292 = smul.addr %s291, 2
        %s293 = scalar_lea.vmem %s0, %s292
        %s294 = smul.u32 2, %s21
        %s295 = smul.u32 2, %s21
        %s296 = smul.u32 2, %s21
        %s297 = smul.u32 2, %s21
        %p298 = scmp.lt.s32.totalorder %s297, 3
        %s299 = scalar_select %p298, %s297, 3
        %s300 = smul.addr %s299, 144
        %s301 = smul.addr %s300, 4
        %s302 = scalar_lea.vmem %s3, %s301
        %s303 = smul.u32 2, %s21
        %s304 = smul.u32 2, %s21
        %p305 = scmp.lt.s32.totalorder %s304, 3
        %s306 = scalar_select %p305, %s304, 3
        %s307 = smul.addr %s306, 2
        %s308 = scalar_lea.vmem %s4, %s307
        %s309 = smul.u32 2, %s21
        %v311 = vld [vmem:[%s293] sm:$0x3]
        %v312 = vxor.u32 %v311, 2147483648
        %v313 = vmul.f32 %v312, 1.442695
        %v314 = vpow.pop %v313
        %v315 = vadd.f32 %v314, 1.0
        %v316 = vrcp.pop %v315
        %v317 = vmul.f32 1.0, %v316
        %v318 = vmul.f32 %v311, %v317
        %v319 = vpack.c.bf16 %v318, %v318
        %v320 = vld [vmem:[%s239] sm:$0xff]
        %v321 = vld [vmem:[%s239 + $0x8] sm:$0xff]
        %vm322 = vcmp.ge.f32.partialorder %v311, -2.2
        %vm323 = vcmp.lt.f32.partialorder %v311, -1.8
        %vm324 = vmand %vm322, %vm323
        %v325 = vsel %vm324, 1, 0
        %v326 = vcvt.s32.f32 %v325
        %vm327 = vcmp.ge.f32.partialorder %v311, -1.8
        %vm328 = vcmp.lt.f32.partialorder %v311, -1.4
        %vm329 = vmand %vm327, %vm328
        %v330 = vsel %vm329, 1, 0
        %v331 = vcvt.s32.f32 %v330
        %vm332 = vcmp.ge.f32.partialorder %v311, -1.4
        %vm333 = vcmp.lt.f32.partialorder %v311, -1.0
        %vm334 = vmand %vm332, %vm333
        %v335 = vsel %vm334, 1, 0
        %v336 = vcvt.s32.f32 %v335
        %vm337 = vcmp.ge.f32.partialorder %v311, -1.0
        %vm338 = vcmp.lt.f32.partialorder %v311, -0.6
        %vm339 = vmand %vm337, %vm338
        %v340 = vsel %vm339, 1, 0
        %v341 = vcvt.s32.f32 %v340
        %vm342 = vcmp.ge.f32.partialorder %v311, -0.6
        %vm343 = vcmp.lt.f32.partialorder %v311, -0.2
        %vm344 = vmand %vm342, %vm343
        %v345 = vsel %vm344, 1, 0
        %v346 = vcvt.s32.f32 %v345
        %vm347 = vcmp.ge.f32.partialorder %v311, -0.2
        %vm348 = vcmp.lt.f32.partialorder %v311, 0.2
        %vm349 = vmand %vm347, %vm348
        %v350 = vsel %vm349, 1, 0
        %v351 = vcvt.s32.f32 %v350
        %vm352 = vcmp.ge.f32.partialorder %v311, 0.2
        %vm353 = vcmp.lt.f32.partialorder %v311, 0.6
        %vm354 = vmand %vm352, %vm353
        %v355 = vsel %vm354, 1, 0
        %v356 = vcvt.s32.f32 %v355
        %vm357 = vcmp.ge.f32.partialorder %v311, 0.6
        %vm358 = vcmp.lt.f32.partialorder %v311, 1.0
        %vm359 = vmand %vm357, %vm358
        %v360 = vsel %vm359, 1, 0
        %v361 = vcvt.s32.f32 %v360
        %vm362 = vcmp.ge.f32.partialorder %v311, 1.0
        %vm363 = vcmp.lt.f32.partialorder %v311, 1.4
        %vm364 = vmand %vm362, %vm363
        %v365 = vsel %vm364, 1, 0
        %v366 = vcvt.s32.f32 %v365
        %vm367 = vcmp.ge.f32.partialorder %v311, 1.4
        %vm368 = vcmp.lt.f32.partialorder %v311, 1.8
        %vm369 = vmand %vm367, %vm368
        %v370 = vsel %vm369, 1, 0
        %v371 = vcvt.s32.f32 %v370
        %vm372 = vcmp.ge.f32.partialorder %v311, 1.8
        %vm373 = vcmp.lt.f32.partialorder %v311, 2.2
        %vm374 = vmand %vm372, %vm373
        %v375 = vsel %vm374, 1, 0
        %v376 = vcvt.s32.f32 %v375
        %v377 = vsub.f32 %v311, -2.2
        %v378 = vmul.f32 %v377, 2.5
        %v379 = vmul.f32 %v378, %v326
        %v380 = vsub.f32 -1.4, %v311
        %v381 = vmul.f32 %v380, 2.5
        %v382 = vmul.f32 %v381, %v331
        %v383 = vadd.f32 %v379, %v382
        %v384 = vsub.f32 %v311, -1.8
        %v385 = vmul.f32 %v384, 2.5
        %v386 = vmul.f32 %v385, %v331
        %v387 = vsub.f32 -1.0, %v311
        %v388 = vmul.f32 %v387, 2.5
        %v389 = vmul.f32 %v388, %v336
        %v390 = vadd.f32 %v386, %v389
        %v391 = vsub.f32 %v311, -1.4
        %v392 = vmul.f32 %v391, 2.5
        %v393 = vmul.f32 %v392, %v336
        %v394 = vsub.f32 -0.6, %v311
        %v395 = vmul.f32 %v394, 2.5
        %v396 = vmul.f32 %v395, %v341
        %v397 = vadd.f32 %v393, %v396
        %v398 = vsub.f32 %v311, -1.0
        %v399 = vmul.f32 %v398, 2.5
        %v400 = vmul.f32 %v399, %v341
        %v401 = vsub.f32 -0.2, %v311
        %v402 = vmul.f32 %v401, 2.5
        %v403 = vmul.f32 %v402, %v346
        %v404 = vadd.f32 %v400, %v403
        %v405 = vsub.f32 %v311, -0.6
        %v406 = vmul.f32 %v405, 2.5
        %v407 = vmul.f32 %v406, %v346
        %v408 = vsub.f32 0.2, %v311
        %v409 = vmul.f32 %v408, 2.5
        %v410 = vmul.f32 %v409, %v351
        %v411 = vadd.f32 %v407, %v410
        %v412 = vsub.f32 %v311, -0.2
        %v413 = vmul.f32 %v412, 2.5
        %v414 = vmul.f32 %v413, %v351
        %v415 = vsub.f32 0.6, %v311
        %v416 = vmul.f32 %v415, 2.5
        %v417 = vmul.f32 %v416, %v356
        %v418 = vadd.f32 %v414, %v417
        %v419 = vsub.f32 %v311, 0.2
        %v420 = vmul.f32 %v419, 2.5
        %v421 = vmul.f32 %v420, %v356
        %v422 = vsub.f32 1.0, %v311
        %v423 = vmul.f32 %v422, 2.5
        %v424 = vmul.f32 %v423, %v361
        %v425 = vadd.f32 %v421, %v424
        %v426 = vsub.f32 %v311, 0.6
        %v427 = vmul.f32 %v426, 2.5
        %v428 = vmul.f32 %v427, %v361
        %v429 = vsub.f32 1.4, %v311
        %v430 = vmul.f32 %v429, 2.5
        %v431 = vmul.f32 %v430, %v366
        %v432 = vadd.f32 %v428, %v431
        %v433 = vsub.f32 %v311, 1.0
        %v434 = vmul.f32 %v433, 2.5
        %v435 = vmul.f32 %v434, %v366
        %v436 = vsub.f32 1.8, %v311
        %v437 = vmul.f32 %v436, 2.5
        %v438 = vmul.f32 %v437, %v371
        %v439 = vadd.f32 %v435, %v438
        %v440 = vsub.f32 %v311, 1.4
        %v441 = vmul.f32 %v440, 2.5
        %v442 = vmul.f32 %v441, %v371
        %v443 = vsub.f32 2.2, %v311
        %v444 = vmul.f32 %v443, 2.5
        %v445 = vmul.f32 %v444, %v376
        %v446 = vadd.f32 %v442, %v445
        %v447 = vmul.f32 %v377, 1.25
        %v448 = vmul.f32 %v447, %v383
        %v449 = vmul.f32 %v387, 1.25
        %v450 = vmul.f32 %v449, %v390
        %v451 = vadd.f32 %v448, %v450
        %v452 = vmul.f32 %v384, 1.25
        %v453 = vmul.f32 %v452, %v390
        %v454 = vmul.f32 %v394, 1.25
        %v455 = vmul.f32 %v454, %v397
        %v456 = vadd.f32 %v453, %v455
        %v457 = vmul.f32 %v391, 1.25
        %v458 = vmul.f32 %v457, %v397
        %v459 = vmul.f32 %v401, 1.25
        %v460 = vmul.f32 %v459, %v404
        %v461 = vadd.f32 %v458, %v460
        %v462 = vmul.f32 %v398, 1.25
        %v463 = vmul.f32 %v462, %v404
        %v464 = vmul.f32 %v408, 1.25
        %v465 = vmul.f32 %v464, %v411
        %v466 = vadd.f32 %v463, %v465
        %v467 = vmul.f32 %v405, 1.25
        %v468 = vmul.f32 %v467, %v411
        %v469 = vmul.f32 %v415, 1.25
        %v470 = vmul.f32 %v469, %v418
        %v471 = vadd.f32 %v468, %v470
        %v472 = vmul.f32 %v412, 1.25
        %v473 = vmul.f32 %v472, %v418
        %v474 = vmul.f32 %v422, 1.25
        %v475 = vmul.f32 %v474, %v425
        %v476 = vadd.f32 %v473, %v475
        %v477 = vmul.f32 %v419, 1.25
        %v478 = vmul.f32 %v477, %v425
        %v479 = vmul.f32 %v429, 1.25
        %v480 = vmul.f32 %v479, %v432
        %v481 = vadd.f32 %v478, %v480
        %v482 = vmul.f32 %v426, 1.25
        %v483 = vmul.f32 %v482, %v432
        %v484 = vmul.f32 %v436, 1.25
        %v485 = vmul.f32 %v484, %v439
        %v486 = vadd.f32 %v483, %v485
        %v487 = vmul.f32 %v433, 1.25
        %v488 = vmul.f32 %v487, %v439
        %v489 = vmul.f32 %v443, 1.25
        %v490 = vmul.f32 %v489, %v446
        %v491 = vadd.f32 %v488, %v490
        %v492 = vmul.f32 %v377, 0.8333333
        %v493 = vmul.f32 %v492, %v451
        %v494 = vmul.f32 %v394, 0.8333333
        %v495 = vmul.f32 %v494, %v456
        %v496 = vadd.f32 %v493, %v495
        %v497 = vmul.f32 %v384, 0.8333333
        %v498 = vmul.f32 %v497, %v456
        %v499 = vmul.f32 %v401, 0.8333333
        %v500 = vmul.f32 %v499, %v461
        %v501 = vadd.f32 %v498, %v500
        %v502 = vmul.f32 %v391, 0.8333333
        %v503 = vmul.f32 %v502, %v461
        %v504 = vmul.f32 %v408, 0.8333333
        %v505 = vmul.f32 %v504, %v466
        %v506 = vadd.f32 %v503, %v505
        %v507 = vmul.f32 %v398, 0.8333333
        %v508 = vmul.f32 %v507, %v466
        %v509 = vmul.f32 %v415, 0.8333333
        %v510 = vmul.f32 %v509, %v471
        %v511 = vadd.f32 %v508, %v510
        %v512 = vmul.f32 %v405, 0.8333333
        %v513 = vmul.f32 %v512, %v471
        %v514 = vmul.f32 %v422, 0.8333333
        %v515 = vmul.f32 %v514, %v476
        %v516 = vadd.f32 %v513, %v515
        %v517 = vmul.f32 %v412, 0.8333333
        %v518 = vmul.f32 %v517, %v476
        %v519 = vmul.f32 %v429, 0.8333333
        %v520 = vmul.f32 %v519, %v481
        %v521 = vadd.f32 %v518, %v520
        %v522 = vmul.f32 %v419, 0.8333333
        %v523 = vmul.f32 %v522, %v481
        %v524 = vmul.f32 %v436, 0.8333333
        %v525 = vmul.f32 %v524, %v486
        %v526 = vadd.f32 %v523, %v525
        %v527 = vmul.f32 %v426, 0.8333333
        %v528 = vmul.f32 %v527, %v486
        %v529 = vmul.f32 %v443, 0.8333333
        %v530 = vmul.f32 %v529, %v491
        %v531 = vadd.f32 %v528, %v530
        %v532 = vpack.c.bf16 %v496, %v496
        %v533 = vld [vmem:[%s239 + $0x10] sm:$0xff]
        %v534 = vld [vmem:[%s239 + $0x18] sm:$0xff]
        %v537 = vunpack.c.l.b16 %v533
        %v538 = vunpack.c.h.b16 %v533
        %v539 = vunpack.c.l.b16 %v534
        %v540 = vunpack.c.h.b16 %v534
        %v541 = vpack.c.b16 %v539, %v537
        %v542 = vpack.c.b16 %v540, %v538
        %vm545 = vcmask 130048
        %v547 = vsel %vm545, %v532, 0
        %549 = vmatprep.subr.bf16.mxu0 0
        %550 = vmatpush1.bf16.msra.mxu0 0
        %551 = vmatprep.subr.bf16.mxu0 0
        %552 = vmatpush1.bf16.msra.mxu0 0
        %553 = vmatprep.subr.bf16.mxu0 0
        %554 = vmatpush1.bf16.msra.mxu0 0
        %555 = vmatprep.subr.bf16.mxu0 0
        %556 = vmatpush1.bf16.msra.mxu0 0
        %557 = vmatprep.subr.bf16.mxu0 0
        %558 = vmatpush1.bf16.msra.mxu0 0
        %559 = vmatprep.subr.bf16.mxu0 0
        %560 = vmatpush1.bf16.msra.mxu0 0
        %561 = vmatprep.subr.bf16.mxu0 0
        %562 = vmatpush1.bf16.msra.mxu0 0
        %563 = vmatprep.subr.bf16.mxu0 %v542
        %564 = vmatpush1.bf16.msra.mxu0 %v541
        %565 = vmatprep.subr.bf16.mxu0 0
        %566 = vmatpush2.bf16.msra.mxu0 0
        %567 = vmatprep.subr.bf16.mxu0 0
        %568 = vmatpush2.bf16.msra.mxu0 0
        %569 = vmatprep.subr.bf16.mxu0 0
        %570 = vmatpush2.bf16.msra.mxu0 0
        %571 = vmatprep.subr.bf16.mxu0 0
        %572 = vmatpush2.bf16.msra.mxu0 0
        %573 = vmatprep.subr.bf16.mxu0 0
        %574 = vmatpush2.bf16.msra.mxu0 0
        %575 = vmatprep.subr.bf16.mxu0 0
        %576 = vmatpush2.bf16.msra.mxu0 0
        %577 = vmatprep.subr.bf16.mxu0 0
        %578 = vmatpush2.bf16.msra.mxu0 0
        %579 = vmatprep.subr.bf16.mxu0 0
        %580 = vmatpush2.bf16.msra.mxu0 0
        %581 = vmatprep.mubr.bf16.mxu0 0
        %582 = vmatmul.mubr.bf16.gmra.mxu0 %v547
        %v583 = vpop.f32.mrf.mxu0
        %v584 = vadd.f32 0.0, %v583
        %v585 = vpop.f32.mrf.mxu0
        %v586 = vadd.f32 0.0, %v585
        %v587 = vpop.f32.mrf.mxu0
        %v588 = vpop.f32.mrf.mxu0
        %589 = vdwg.mxu0
        %v592 = vunpack.c.l.b16 %v320
        %v593 = vunpack.c.h.b16 %v320
        %v594 = vunpack.c.l.b16 %v321
        %v595 = vunpack.c.h.b16 %v321
        %v596 = vpack.c.b16 %v594, %v592
        %v597 = vpack.c.b16 %v595, %v593
        %v601 = vsel %vm545, %v319, 0
        %603 = vmatprep.subr.bf16.mxu0 0
        %604 = vmatpush1.bf16.msra.mxu0 0
        %605 = vmatprep.subr.bf16.mxu0 0
        %606 = vmatpush1.bf16.msra.mxu0 0
        %607 = vmatprep.subr.bf16.mxu0 0
        %608 = vmatpush1.bf16.msra.mxu0 0
        %609 = vmatprep.subr.bf16.mxu0 0
        %610 = vmatpush1.bf16.msra.mxu0 0
        %611 = vmatprep.subr.bf16.mxu0 0
        %612 = vmatpush1.bf16.msra.mxu0 0
        %613 = vmatprep.subr.bf16.mxu0 0
        %614 = vmatpush1.bf16.msra.mxu0 0
        %615 = vmatprep.subr.bf16.mxu0 0
        %616 = vmatpush1.bf16.msra.mxu0 0
        %617 = vmatprep.subr.bf16.mxu0 %v597
        %618 = vmatpush1.bf16.msra.mxu0 %v596
        %619 = vmatprep.subr.bf16.mxu0 0
        %620 = vmatpush2.bf16.msra.mxu0 0
        %621 = vmatprep.subr.bf16.mxu0 0
        %622 = vmatpush2.bf16.msra.mxu0 0
        %623 = vmatprep.subr.bf16.mxu0 0
        %624 = vmatpush2.bf16.msra.mxu0 0
        %625 = vmatprep.subr.bf16.mxu0 0
        %626 = vmatpush2.bf16.msra.mxu0 0
        %627 = vmatprep.subr.bf16.mxu0 0
        %628 = vmatpush2.bf16.msra.mxu0 0
        %629 = vmatprep.subr.bf16.mxu0 0
        %630 = vmatpush2.bf16.msra.mxu0 0
        %631 = vmatprep.subr.bf16.mxu0 0
        %632 = vmatpush2.bf16.msra.mxu0 0
        %633 = vmatprep.subr.bf16.mxu0 0
        %634 = vmatpush2.bf16.msra.mxu0 0
        %635 = vmatprep.mubr.bf16.mxu0 0
        %636 = vmatmul.mubr.bf16.gmra.mxu0 %v601
        %v637 = vpop.f32.mrf.mxu0
        %v638 = vadd.f32 %v584, %v637
        %v639 = vpop.f32.mrf.mxu0
        %v640 = vadd.f32 %v586, %v639
        %v641 = vpop.f32.mrf.mxu0
        %v642 = vpop.f32.mrf.mxu0
        %643 = vdwg.mxu0
        %v644 = vpack.c.bf16 %v501, %v501
        %v645 = vld [vmem:[%s239 + $0x20] sm:$0xff]
        %v646 = vld [vmem:[%s239 + $0x28] sm:$0xff]
        %v649 = vunpack.c.l.b16 %v645
        %v650 = vunpack.c.h.b16 %v645
        %v651 = vunpack.c.l.b16 %v646
        %v652 = vunpack.c.h.b16 %v646
        %v653 = vpack.c.b16 %v651, %v649
        %v654 = vpack.c.b16 %v652, %v650
        %v658 = vsel %vm545, %v644, 0
        %660 = vmatprep.subr.bf16.mxu0 0
        %661 = vmatpush1.bf16.msra.mxu0 0
        %662 = vmatprep.subr.bf16.mxu0 0
        %663 = vmatpush1.bf16.msra.mxu0 0
        %664 = vmatprep.subr.bf16.mxu0 0
        %665 = vmatpush1.bf16.msra.mxu0 0
        %666 = vmatprep.subr.bf16.mxu0 0
        %667 = vmatpush1.bf16.msra.mxu0 0
        %668 = vmatprep.subr.bf16.mxu0 0
        %669 = vmatpush1.bf16.msra.mxu0 0
        %670 = vmatprep.subr.bf16.mxu0 0
        %671 = vmatpush1.bf16.msra.mxu0 0
        %672 = vmatprep.subr.bf16.mxu0 0
        %673 = vmatpush1.bf16.msra.mxu0 0
        %674 = vmatprep.subr.bf16.mxu0 %v654
        %675 = vmatpush1.bf16.msra.mxu0 %v653
        %676 = vmatprep.subr.bf16.mxu0 0
        %677 = vmatpush2.bf16.msra.mxu0 0
        %678 = vmatprep.subr.bf16.mxu0 0
        %679 = vmatpush2.bf16.msra.mxu0 0
        %680 = vmatprep.subr.bf16.mxu0 0
        %681 = vmatpush2.bf16.msra.mxu0 0
        %682 = vmatprep.subr.bf16.mxu0 0
        %683 = vmatpush2.bf16.msra.mxu0 0
        %684 = vmatprep.subr.bf16.mxu0 0
        %685 = vmatpush2.bf16.msra.mxu0 0
        %686 = vmatprep.subr.bf16.mxu0 0
        %687 = vmatpush2.bf16.msra.mxu0 0
        %688 = vmatprep.subr.bf16.mxu0 0
        %689 = vmatpush2.bf16.msra.mxu0 0
        %690 = vmatprep.subr.bf16.mxu0 0
        %691 = vmatpush2.bf16.msra.mxu0 0
        %692 = vmatprep.mubr.bf16.mxu0 0
        %693 = vmatmul.mubr.bf16.gmra.mxu0 %v658
        %v694 = vpop.f32.mrf.mxu0
        %v695 = vadd.f32 0.0, %v694
        %v696 = vpop.f32.mrf.mxu0
        %v697 = vadd.f32 0.0, %v696
        %v698 = vpop.f32.mrf.mxu0
        %v699 = vpop.f32.mrf.mxu0
        %700 = vdwg.mxu0
        %v701 = vadd.f32 %v638, %v695
        %v702 = vadd.f32 %v640, %v697
        %v703 = vpack.c.bf16 %v506, %v506
        %v704 = vld [vmem:[%s239 + $0x30] sm:$0xff]
        %v705 = vld [vmem:[%s239 + $0x38] sm:$0xff]
        %v708 = vunpack.c.l.b16 %v704
        %v709 = vunpack.c.h.b16 %v704
        %v710 = vunpack.c.l.b16 %v705
        %v711 = vunpack.c.h.b16 %v705
        %v712 = vpack.c.b16 %v710, %v708
        %v713 = vpack.c.b16 %v711, %v709
        %v717 = vsel %vm545, %v703, 0
        %719 = vmatprep.subr.bf16.mxu0 0
        %720 = vmatpush1.bf16.msra.mxu0 0
        %721 = vmatprep.subr.bf16.mxu0 0
        %722 = vmatpush1.bf16.msra.mxu0 0
        %723 = vmatprep.subr.bf16.mxu0 0
        %724 = vmatpush1.bf16.msra.mxu0 0
        %725 = vmatprep.subr.bf16.mxu0 0
        %726 = vmatpush1.bf16.msra.mxu0 0
        %727 = vmatprep.subr.bf16.mxu0 0
        %728 = vmatpush1.bf16.msra.mxu0 0
        %729 = vmatprep.subr.bf16.mxu0 0
        %730 = vmatpush1.bf16.msra.mxu0 0
        %731 = vmatprep.subr.bf16.mxu0 0
        %732 = vmatpush1.bf16.msra.mxu0 0
        %733 = vmatprep.subr.bf16.mxu0 %v713
        %734 = vmatpush1.bf16.msra.mxu0 %v712
        %735 = vmatprep.subr.bf16.mxu0 0
        %736 = vmatpush2.bf16.msra.mxu0 0
        %737 = vmatprep.subr.bf16.mxu0 0
        %738 = vmatpush2.bf16.msra.mxu0 0
        %739 = vmatprep.subr.bf16.mxu0 0
        %740 = vmatpush2.bf16.msra.mxu0 0
        %741 = vmatprep.subr.bf16.mxu0 0
        %742 = vmatpush2.bf16.msra.mxu0 0
        %743 = vmatprep.subr.bf16.mxu0 0
        %744 = vmatpush2.bf16.msra.mxu0 0
        %745 = vmatprep.subr.bf16.mxu0 0
        %746 = vmatpush2.bf16.msra.mxu0 0
        %747 = vmatprep.subr.bf16.mxu0 0
        %748 = vmatpush2.bf16.msra.mxu0 0
        %749 = vmatprep.subr.bf16.mxu0 0
        %750 = vmatpush2.bf16.msra.mxu0 0
        %751 = vmatprep.mubr.bf16.mxu0 0
        %752 = vmatmul.mubr.bf16.gmra.mxu0 %v717
        %v753 = vpop.f32.mrf.mxu0
        %v754 = vadd.f32 0.0, %v753
        %v755 = vpop.f32.mrf.mxu0
        %v756 = vadd.f32 0.0, %v755
        %v757 = vpop.f32.mrf.mxu0
        %v758 = vpop.f32.mrf.mxu0
        %759 = vdwg.mxu0
        %v760 = vadd.f32 %v701, %v754
        %v761 = vadd.f32 %v702, %v756
        %v762 = vpack.c.bf16 %v511, %v511
        %v763 = vld [vmem:[%s239 + $0x40] sm:$0xff]
        %v764 = vld [vmem:[%s239 + $0x48] sm:$0xff]
        %v767 = vunpack.c.l.b16 %v763
        %v768 = vunpack.c.h.b16 %v763
        %v769 = vunpack.c.l.b16 %v764
        %v770 = vunpack.c.h.b16 %v764
        %v771 = vpack.c.b16 %v769, %v767
        %v772 = vpack.c.b16 %v770, %v768
        %v776 = vsel %vm545, %v762, 0
        %778 = vmatprep.subr.bf16.mxu0 0
        %779 = vmatpush1.bf16.msra.mxu0 0
        %780 = vmatprep.subr.bf16.mxu0 0
        %781 = vmatpush1.bf16.msra.mxu0 0
        %782 = vmatprep.subr.bf16.mxu0 0
        %783 = vmatpush1.bf16.msra.mxu0 0
        %784 = vmatprep.subr.bf16.mxu0 0
        %785 = vmatpush1.bf16.msra.mxu0 0
        %786 = vmatprep.subr.bf16.mxu0 0
        %787 = vmatpush1.bf16.msra.mxu0 0
        %788 = vmatprep.subr.bf16.mxu0 0
        %789 = vmatpush1.bf16.msra.mxu0 0
        %790 = vmatprep.subr.bf16.mxu0 0
        %791 = vmatpush1.bf16.msra.mxu0 0
        %792 = vmatprep.subr.bf16.mxu0 %v772
        %793 = vmatpush1.bf16.msra.mxu0 %v771
        %794 = vmatprep.subr.bf16.mxu0 0
        %795 = vmatpush2.bf16.msra.mxu0 0
        %796 = vmatprep.subr.bf16.mxu0 0
        %797 = vmatpush2.bf16.msra.mxu0 0
        %798 = vmatprep.subr.bf16.mxu0 0
        %799 = vmatpush2.bf16.msra.mxu0 0
        %800 = vmatprep.subr.bf16.mxu0 0
        %801 = vmatpush2.bf16.msra.mxu0 0
        %802 = vmatprep.subr.bf16.mxu0 0
        %803 = vmatpush2.bf16.msra.mxu0 0
        %804 = vmatprep.subr.bf16.mxu0 0
        %805 = vmatpush2.bf16.msra.mxu0 0
        %806 = vmatprep.subr.bf16.mxu0 0
        %807 = vmatpush2.bf16.msra.mxu0 0
        %808 = vmatprep.subr.bf16.mxu0 0
        %809 = vmatpush2.bf16.msra.mxu0 0
        %810 = vmatprep.mubr.bf16.mxu0 0
        %811 = vmatmul.mubr.bf16.gmra.mxu0 %v776
        %v812 = vpop.f32.mrf.mxu0
        %v813 = vadd.f32 0.0, %v812
        %v814 = vpop.f32.mrf.mxu0
        %v815 = vadd.f32 0.0, %v814
        %v816 = vpop.f32.mrf.mxu0
        %v817 = vpop.f32.mrf.mxu0
        %818 = vdwg.mxu0
        %v819 = vadd.f32 %v760, %v813
        %v820 = vadd.f32 %v761, %v815
        %v821 = vpack.c.bf16 %v516, %v516
        %v822 = vld [vmem:[%s239 + $0x50] sm:$0xff]
        %v823 = vld [vmem:[%s239 + $0x58] sm:$0xff]
        %v826 = vunpack.c.l.b16 %v822
        %v827 = vunpack.c.h.b16 %v822
        %v828 = vunpack.c.l.b16 %v823
        %v829 = vunpack.c.h.b16 %v823
        %v830 = vpack.c.b16 %v828, %v826
        %v831 = vpack.c.b16 %v829, %v827
        %v835 = vsel %vm545, %v821, 0
        %837 = vmatprep.subr.bf16.mxu0 0
        %838 = vmatpush1.bf16.msra.mxu0 0
        %839 = vmatprep.subr.bf16.mxu0 0
        %840 = vmatpush1.bf16.msra.mxu0 0
        %841 = vmatprep.subr.bf16.mxu0 0
        %842 = vmatpush1.bf16.msra.mxu0 0
        %843 = vmatprep.subr.bf16.mxu0 0
        %844 = vmatpush1.bf16.msra.mxu0 0
        %845 = vmatprep.subr.bf16.mxu0 0
        %846 = vmatpush1.bf16.msra.mxu0 0
        %847 = vmatprep.subr.bf16.mxu0 0
        %848 = vmatpush1.bf16.msra.mxu0 0
        %849 = vmatprep.subr.bf16.mxu0 0
        %850 = vmatpush1.bf16.msra.mxu0 0
        %851 = vmatprep.subr.bf16.mxu0 %v831
        %852 = vmatpush1.bf16.msra.mxu0 %v830
        %853 = vmatprep.subr.bf16.mxu0 0
        %854 = vmatpush2.bf16.msra.mxu0 0
        %855 = vmatprep.subr.bf16.mxu0 0
        %856 = vmatpush2.bf16.msra.mxu0 0
        %857 = vmatprep.subr.bf16.mxu0 0
        %858 = vmatpush2.bf16.msra.mxu0 0
        %859 = vmatprep.subr.bf16.mxu0 0
        %860 = vmatpush2.bf16.msra.mxu0 0
        %861 = vmatprep.subr.bf16.mxu0 0
        %862 = vmatpush2.bf16.msra.mxu0 0
        %863 = vmatprep.subr.bf16.mxu0 0
        %864 = vmatpush2.bf16.msra.mxu0 0
        %865 = vmatprep.subr.bf16.mxu0 0
        %866 = vmatpush2.bf16.msra.mxu0 0
        %867 = vmatprep.subr.bf16.mxu0 0
        %868 = vmatpush2.bf16.msra.mxu0 0
        %869 = vmatprep.mubr.bf16.mxu0 0
        %870 = vmatmul.mubr.bf16.gmra.mxu0 %v835
        %v871 = vpop.f32.mrf.mxu0
        %v872 = vadd.f32 0.0, %v871
        %v873 = vpop.f32.mrf.mxu0
        %v874 = vadd.f32 0.0, %v873
        %v875 = vpop.f32.mrf.mxu0
        %v876 = vpop.f32.mrf.mxu0
        %877 = vdwg.mxu0
        %v878 = vadd.f32 %v819, %v872
        %v879 = vadd.f32 %v820, %v874
        %v880 = vpack.c.bf16 %v521, %v521
        %v881 = vld [vmem:[%s239 + $0x60] sm:$0xff]
        %v882 = vld [vmem:[%s239 + $0x68] sm:$0xff]
        %v885 = vunpack.c.l.b16 %v881
        %v886 = vunpack.c.h.b16 %v881
        %v887 = vunpack.c.l.b16 %v882
        %v888 = vunpack.c.h.b16 %v882
        %v889 = vpack.c.b16 %v887, %v885
        %v890 = vpack.c.b16 %v888, %v886
        %v894 = vsel %vm545, %v880, 0
        %896 = vmatprep.subr.bf16.mxu0 0
        %897 = vmatpush1.bf16.msra.mxu0 0
        %898 = vmatprep.subr.bf16.mxu0 0
        %899 = vmatpush1.bf16.msra.mxu0 0
        %900 = vmatprep.subr.bf16.mxu0 0
        %901 = vmatpush1.bf16.msra.mxu0 0
        %902 = vmatprep.subr.bf16.mxu0 0
        %903 = vmatpush1.bf16.msra.mxu0 0
        %904 = vmatprep.subr.bf16.mxu0 0
        %905 = vmatpush1.bf16.msra.mxu0 0
        %906 = vmatprep.subr.bf16.mxu0 0
        %907 = vmatpush1.bf16.msra.mxu0 0
        %908 = vmatprep.subr.bf16.mxu0 0
        %909 = vmatpush1.bf16.msra.mxu0 0
        %910 = vmatprep.subr.bf16.mxu0 %v890
        %911 = vmatpush1.bf16.msra.mxu0 %v889
        %912 = vmatprep.subr.bf16.mxu0 0
        %913 = vmatpush2.bf16.msra.mxu0 0
        %914 = vmatprep.subr.bf16.mxu0 0
        %915 = vmatpush2.bf16.msra.mxu0 0
        %916 = vmatprep.subr.bf16.mxu0 0
        %917 = vmatpush2.bf16.msra.mxu0 0
        %918 = vmatprep.subr.bf16.mxu0 0
        %919 = vmatpush2.bf16.msra.mxu0 0
        %920 = vmatprep.subr.bf16.mxu0 0
        %921 = vmatpush2.bf16.msra.mxu0 0
        %922 = vmatprep.subr.bf16.mxu0 0
        %923 = vmatpush2.bf16.msra.mxu0 0
        %924 = vmatprep.subr.bf16.mxu0 0
        %925 = vmatpush2.bf16.msra.mxu0 0
        %926 = vmatprep.subr.bf16.mxu0 0
        %927 = vmatpush2.bf16.msra.mxu0 0
        %928 = vmatprep.mubr.bf16.mxu0 0
        %929 = vmatmul.mubr.bf16.gmra.mxu0 %v894
        %v930 = vpop.f32.mrf.mxu0
        %v931 = vadd.f32 0.0, %v930
        %v932 = vpop.f32.mrf.mxu0
        %v933 = vadd.f32 0.0, %v932
        %v934 = vpop.f32.mrf.mxu0
        %v935 = vpop.f32.mrf.mxu0
        %936 = vdwg.mxu0
        %v937 = vadd.f32 %v878, %v931
        %v938 = vadd.f32 %v879, %v933
        %v939 = vpack.c.bf16 %v526, %v526
        %v940 = vld [vmem:[%s239 + $0x70] sm:$0xff]
        %v941 = vld [vmem:[%s239 + $0x78] sm:$0xff]
        %v944 = vunpack.c.l.b16 %v940
        %v945 = vunpack.c.h.b16 %v940
        %v946 = vunpack.c.l.b16 %v941
        %v947 = vunpack.c.h.b16 %v941
        %v948 = vpack.c.b16 %v946, %v944
        %v949 = vpack.c.b16 %v947, %v945
        %v953 = vsel %vm545, %v939, 0
        %955 = vmatprep.subr.bf16.mxu0 0
        %956 = vmatpush1.bf16.msra.mxu0 0
        %957 = vmatprep.subr.bf16.mxu0 0
        %958 = vmatpush1.bf16.msra.mxu0 0
        %959 = vmatprep.subr.bf16.mxu0 0
        %960 = vmatpush1.bf16.msra.mxu0 0
        %961 = vmatprep.subr.bf16.mxu0 0
        %962 = vmatpush1.bf16.msra.mxu0 0
        %963 = vmatprep.subr.bf16.mxu0 0
        %964 = vmatpush1.bf16.msra.mxu0 0
        %965 = vmatprep.subr.bf16.mxu0 0
        %966 = vmatpush1.bf16.msra.mxu0 0
        %967 = vmatprep.subr.bf16.mxu0 0
        %968 = vmatpush1.bf16.msra.mxu0 0
        %969 = vmatprep.subr.bf16.mxu0 %v949
        %970 = vmatpush1.bf16.msra.mxu0 %v948
        %971 = vmatprep.subr.bf16.mxu0 0
        %972 = vmatpush2.bf16.msra.mxu0 0
        %973 = vmatprep.subr.bf16.mxu0 0
        %974 = vmatpush2.bf16.msra.mxu0 0
        %975 = vmatprep.subr.bf16.mxu0 0
        %976 = vmatpush2.bf16.msra.mxu0 0
        %977 = vmatprep.subr.bf16.mxu0 0
        %978 = vmatpush2.bf16.msra.mxu0 0
        %979 = vmatprep.subr.bf16.mxu0 0
        %980 = vmatpush2.bf16.msra.mxu0 0
        %981 = vmatprep.subr.bf16.mxu0 0
        %982 = vmatpush2.bf16.msra.mxu0 0
        %983 = vmatprep.subr.bf16.mxu0 0
        %984 = vmatpush2.bf16.msra.mxu0 0
        %985 = vmatprep.subr.bf16.mxu0 0
        %986 = vmatpush2.bf16.msra.mxu0 0
        %987 = vmatprep.mubr.bf16.mxu0 0
        %988 = vmatmul.mubr.bf16.gmra.mxu0 %v953
        %v989 = vpop.f32.mrf.mxu0
        %v990 = vadd.f32 0.0, %v989
        %v991 = vpop.f32.mrf.mxu0
        %v992 = vadd.f32 0.0, %v991
        %v993 = vpop.f32.mrf.mxu0
        %v994 = vpop.f32.mrf.mxu0
        %995 = vdwg.mxu0
        %v996 = vadd.f32 %v937, %v990
        %v997 = vadd.f32 %v938, %v992
        %v998 = vpack.c.bf16 %v531, %v531
        %v999 = vld [vmem:[%s239 + $0x80] sm:$0xff]
        %v1000 = vld [vmem:[%s239 + $0x88] sm:$0xff]
        %v1003 = vunpack.c.l.b16 %v999
        %v1004 = vunpack.c.h.b16 %v999
        %v1005 = vunpack.c.l.b16 %v1000
        %v1006 = vunpack.c.h.b16 %v1000
        %v1007 = vpack.c.b16 %v1005, %v1003
        %v1008 = vpack.c.b16 %v1006, %v1004
        %v1012 = vsel %vm545, %v998, 0
        %1014 = vmatprep.subr.bf16.mxu0 0
        %1015 = vmatpush1.bf16.msra.mxu0 0
        %1016 = vmatprep.subr.bf16.mxu0 0
        %1017 = vmatpush1.bf16.msra.mxu0 0
        %1018 = vmatprep.subr.bf16.mxu0 0
        %1019 = vmatpush1.bf16.msra.mxu0 0
        %1020 = vmatprep.subr.bf16.mxu0 0
        %1021 = vmatpush1.bf16.msra.mxu0 0
        %1022 = vmatprep.subr.bf16.mxu0 0
        %1023 = vmatpush1.bf16.msra.mxu0 0
        %1024 = vmatprep.subr.bf16.mxu0 0
        %1025 = vmatpush1.bf16.msra.mxu0 0
        %1026 = vmatprep.subr.bf16.mxu0 0
        %1027 = vmatpush1.bf16.msra.mxu0 0
        %1028 = vmatprep.subr.bf16.mxu0 %v1008
        %1029 = vmatpush1.bf16.msra.mxu0 %v1007
        %1030 = vmatprep.subr.bf16.mxu0 0
        %1031 = vmatpush2.bf16.msra.mxu0 0
        %1032 = vmatprep.subr.bf16.mxu0 0
        %1033 = vmatpush2.bf16.msra.mxu0 0
        %1034 = vmatprep.subr.bf16.mxu0 0
        %1035 = vmatpush2.bf16.msra.mxu0 0
        %1036 = vmatprep.subr.bf16.mxu0 0
        %1037 = vmatpush2.bf16.msra.mxu0 0
        %1038 = vmatprep.subr.bf16.mxu0 0
        %1039 = vmatpush2.bf16.msra.mxu0 0
        %1040 = vmatprep.subr.bf16.mxu0 0
        %1041 = vmatpush2.bf16.msra.mxu0 0
        %1042 = vmatprep.subr.bf16.mxu0 0
        %1043 = vmatpush2.bf16.msra.mxu0 0
        %1044 = vmatprep.subr.bf16.mxu0 0
        %1045 = vmatpush2.bf16.msra.mxu0 0
        %1046 = vmatprep.mubr.bf16.mxu0 0
        %1047 = vmatmul.mubr.bf16.gmra.mxu0 %v1012
        %v1048 = vpop.f32.mrf.mxu0
        %v1049 = vadd.f32 0.0, %v1048
        %v1050 = vpop.f32.mrf.mxu0
        %v1051 = vadd.f32 0.0, %v1050
        %v1052 = vpop.f32.mrf.mxu0
        %v1053 = vpop.f32.mrf.mxu0
        %1054 = vdwg.mxu0
        %v1055 = vadd.f32 %v996, %v1049
        %v1056 = vadd.f32 %v997, %v1051
        %v1057 = vxor.u32 %v1055, 2147483648
        %v1058 = vxor.u32 %v1056, 2147483648
        %v1059 = vmul.f32 %v1057, 1.442695
        %v1060 = vpow.pop %v1059
        %v1061 = vmul.f32 %v1058, 1.442695
        %v1062 = vpow.pop %v1061
        %v1063 = vadd.f32 %v1060, 1.0
        %v1064 = vadd.f32 %v1062, 1.0
        %v1065 = vrcp.pop %v1063
        %v1066 = vmul.f32 1.0, %v1065
        %v1067 = vrcp.pop %v1064
        %v1068 = vmul.f32 1.0, %v1067
        %v1069 = vmul.f32 %v1055, %v1066
        %v1070 = vmul.f32 %v1056, %v1068
        %vm1071 = vcmp.ge.f32.partialorder %v1055, -2.2
        %vm1072 = vcmp.ge.f32.partialorder %v1056, -2.2
        %vm1073 = vcmp.lt.f32.partialorder %v1055, -1.8
        %vm1074 = vcmp.lt.f32.partialorder %v1056, -1.8
        %vm1075 = vmand %vm1071, %vm1073
        %vm1076 = vmand %vm1072, %vm1074
        %v1077 = vsel %vm1075, 1, 0
        %v1078 = vsel %vm1076, 1, 0
        %v1079 = vcvt.s32.f32 %v1077
        %v1080 = vcvt.s32.f32 %v1078
        %vm1081 = vcmp.ge.f32.partialorder %v1055, -1.8
        %vm1082 = vcmp.ge.f32.partialorder %v1056, -1.8
        %vm1083 = vcmp.lt.f32.partialorder %v1055, -1.4
        %vm1084 = vcmp.lt.f32.partialorder %v1056, -1.4
        %vm1085 = vmand %vm1081, %vm1083
        %vm1086 = vmand %vm1082, %vm1084
        %v1087 = vsel %vm1085, 1, 0
        %v1088 = vsel %vm1086, 1, 0
        %v1089 = vcvt.s32.f32 %v1087
        %v1090 = vcvt.s32.f32 %v1088
        %vm1091 = vcmp.ge.f32.partialorder %v1055, -1.4
        %vm1092 = vcmp.ge.f32.partialorder %v1056, -1.4
        %vm1093 = vcmp.lt.f32.partialorder %v1055, -1.0
        %vm1094 = vcmp.lt.f32.partialorder %v1056, -1.0
        %vm1095 = vmand %vm1091, %vm1093
        %vm1096 = vmand %vm1092, %vm1094
        %v1097 = vsel %vm1095, 1, 0
        %v1098 = vsel %vm1096, 1, 0
        %v1099 = vcvt.s32.f32 %v1097
        %v1100 = vcvt.s32.f32 %v1098
        %vm1101 = vcmp.ge.f32.partialorder %v1055, -1.0
        %vm1102 = vcmp.ge.f32.partialorder %v1056, -1.0
        %vm1103 = vcmp.lt.f32.partialorder %v1055, -0.6
        %vm1104 = vcmp.lt.f32.partialorder %v1056, -0.6
        %vm1105 = vmand %vm1101, %vm1103
        %vm1106 = vmand %vm1102, %vm1104
        %v1107 = vsel %vm1105, 1, 0
        %v1108 = vsel %vm1106, 1, 0
        %v1109 = vcvt.s32.f32 %v1107
        %v1110 = vcvt.s32.f32 %v1108
        %vm1111 = vcmp.ge.f32.partialorder %v1055, -0.6
        %vm1112 = vcmp.ge.f32.partialorder %v1056, -0.6
        %vm1113 = vcmp.lt.f32.partialorder %v1055, -0.2
        %vm1114 = vcmp.lt.f32.partialorder %v1056, -0.2
        %vm1115 = vmand %vm1111, %vm1113
        %vm1116 = vmand %vm1112, %vm1114
        %v1117 = vsel %vm1115, 1, 0
        %v1118 = vsel %vm1116, 1, 0
        %v1119 = vcvt.s32.f32 %v1117
        %v1120 = vcvt.s32.f32 %v1118
        %vm1121 = vcmp.ge.f32.partialorder %v1055, -0.2
        %vm1122 = vcmp.ge.f32.partialorder %v1056, -0.2
        %vm1123 = vcmp.lt.f32.partialorder %v1055, 0.2
        %vm1124 = vcmp.lt.f32.partialorder %v1056, 0.2
        %vm1125 = vmand %vm1121, %vm1123
        %vm1126 = vmand %vm1122, %vm1124
        %v1127 = vsel %vm1125, 1, 0
        %v1128 = vsel %vm1126, 1, 0
        %v1129 = vcvt.s32.f32 %v1127
        %v1130 = vcvt.s32.f32 %v1128
        %vm1131 = vcmp.ge.f32.partialorder %v1055, 0.2
        %vm1132 = vcmp.ge.f32.partialorder %v1056, 0.2
        %vm1133 = vcmp.lt.f32.partialorder %v1055, 0.6
        %vm1134 = vcmp.lt.f32.partialorder %v1056, 0.6
        %vm1135 = vmand %vm1131, %vm1133
        %vm1136 = vmand %vm1132, %vm1134
        %v1137 = vsel %vm1135, 1, 0
        %v1138 = vsel %vm1136, 1, 0
        %v1139 = vcvt.s32.f32 %v1137
        %v1140 = vcvt.s32.f32 %v1138
        %vm1141 = vcmp.ge.f32.partialorder %v1055, 0.6
        %vm1142 = vcmp.ge.f32.partialorder %v1056, 0.6
        %vm1143 = vcmp.lt.f32.partialorder %v1055, 1.0
        %vm1144 = vcmp.lt.f32.partialorder %v1056, 1.0
        %vm1145 = vmand %vm1141, %vm1143
        %vm1146 = vmand %vm1142, %vm1144
        %v1147 = vsel %vm1145, 1, 0
        %v1148 = vsel %vm1146, 1, 0
        %v1149 = vcvt.s32.f32 %v1147
        %v1150 = vcvt.s32.f32 %v1148
        %vm1151 = vcmp.ge.f32.partialorder %v1055, 1.0
        %vm1152 = vcmp.ge.f32.partialorder %v1056, 1.0
        %vm1153 = vcmp.lt.f32.partialorder %v1055, 1.4
        %vm1154 = vcmp.lt.f32.partialorder %v1056, 1.4
        %vm1155 = vmand %vm1151, %vm1153
        %vm1156 = vmand %vm1152, %vm1154
        %v1157 = vsel %vm1155, 1, 0
        %v1158 = vsel %vm1156, 1, 0
        %v1159 = vcvt.s32.f32 %v1157
        %v1160 = vcvt.s32.f32 %v1158
        %vm1161 = vcmp.ge.f32.partialorder %v1055, 1.4
        %vm1162 = vcmp.ge.f32.partialorder %v1056, 1.4
        %vm1163 = vcmp.lt.f32.partialorder %v1055, 1.8
        %vm1164 = vcmp.lt.f32.partialorder %v1056, 1.8
        %vm1165 = vmand %vm1161, %vm1163
        %vm1166 = vmand %vm1162, %vm1164
        %v1167 = vsel %vm1165, 1, 0
        %v1168 = vsel %vm1166, 1, 0
        %v1169 = vcvt.s32.f32 %v1167
        %v1170 = vcvt.s32.f32 %v1168
        %vm1171 = vcmp.ge.f32.partialorder %v1055, 1.8
        %vm1172 = vcmp.ge.f32.partialorder %v1056, 1.8
        %vm1173 = vcmp.lt.f32.partialorder %v1055, 2.2
        %vm1174 = vcmp.lt.f32.partialorder %v1056, 2.2
        %vm1175 = vmand %vm1171, %vm1173
        %vm1176 = vmand %vm1172, %vm1174
        %v1177 = vsel %vm1175, 1, 0
        %v1178 = vsel %vm1176, 1, 0
        %v1179 = vcvt.s32.f32 %v1177
        %v1180 = vcvt.s32.f32 %v1178
        %v1181 = vsub.f32 %v1055, -2.2
        %v1182 = vsub.f32 %v1056, -2.2
        %v1183 = vmul.f32 %v1181, 2.5
        %v1184 = vmul.f32 %v1182, 2.5
        %v1185 = vmul.f32 %v1183, %v1079
        %v1186 = vmul.f32 %v1184, %v1080
        %v1187 = vsub.f32 -1.4, %v1055
        %v1188 = vsub.f32 -1.4, %v1056
        %v1189 = vmul.f32 %v1187, 2.5
        %v1190 = vmul.f32 %v1188, 2.5
        %v1191 = vmul.f32 %v1189, %v1089
        %v1192 = vmul.f32 %v1190, %v1090
        %v1193 = vadd.f32 %v1185, %v1191
        %v1194 = vadd.f32 %v1186, %v1192
        %v1195 = vsub.f32 %v1055, -1.8
        %v1196 = vsub.f32 %v1056, -1.8
        %v1197 = vmul.f32 %v1195, 2.5
        %v1198 = vmul.f32 %v1196, 2.5
        %v1199 = vmul.f32 %v1197, %v1089
        %v1200 = vmul.f32 %v1198, %v1090
        %v1201 = vsub.f32 -1.0, %v1055
        %v1202 = vsub.f32 -1.0, %v1056
        %v1203 = vmul.f32 %v1201, 2.5
        %v1204 = vmul.f32 %v1202, 2.5
        %v1205 = vmul.f32 %v1203, %v1099
        %v1206 = vmul.f32 %v1204, %v1100
        %v1207 = vadd.f32 %v1199, %v1205
        %v1208 = vadd.f32 %v1200, %v1206
        %v1209 = vsub.f32 %v1055, -1.4
        %v1210 = vsub.f32 %v1056, -1.4
        %v1211 = vmul.f32 %v1209, 2.5
        %v1212 = vmul.f32 %v1210, 2.5
        %v1213 = vmul.f32 %v1211, %v1099
        %v1214 = vmul.f32 %v1212, %v1100
        %v1215 = vsub.f32 -0.6, %v1055
        %v1216 = vsub.f32 -0.6, %v1056
        %v1217 = vmul.f32 %v1215, 2.5
        %v1218 = vmul.f32 %v1216, 2.5
        %v1219 = vmul.f32 %v1217, %v1109
        %v1220 = vmul.f32 %v1218, %v1110
        %v1221 = vadd.f32 %v1213, %v1219
        %v1222 = vadd.f32 %v1214, %v1220
        %v1223 = vsub.f32 %v1055, -1.0
        %v1224 = vsub.f32 %v1056, -1.0
        %v1225 = vmul.f32 %v1223, 2.5
        %v1226 = vmul.f32 %v1224, 2.5
        %v1227 = vmul.f32 %v1225, %v1109
        %v1228 = vmul.f32 %v1226, %v1110
        %v1229 = vsub.f32 -0.2, %v1055
        %v1230 = vsub.f32 -0.2, %v1056
        %v1231 = vmul.f32 %v1229, 2.5
        %v1232 = vmul.f32 %v1230, 2.5
        %v1233 = vmul.f32 %v1231, %v1119
        %v1234 = vmul.f32 %v1232, %v1120
        %v1235 = vadd.f32 %v1227, %v1233
        %v1236 = vadd.f32 %v1228, %v1234
        %v1237 = vsub.f32 %v1055, -0.6
        %v1238 = vsub.f32 %v1056, -0.6
        %v1239 = vmul.f32 %v1237, 2.5
        %v1240 = vmul.f32 %v1238, 2.5
        %v1241 = vmul.f32 %v1239, %v1119
        %v1242 = vmul.f32 %v1240, %v1120
        %v1243 = vsub.f32 0.2, %v1055
        %v1244 = vsub.f32 0.2, %v1056
        %v1245 = vmul.f32 %v1243, 2.5
        %v1246 = vmul.f32 %v1244, 2.5
        %v1247 = vmul.f32 %v1245, %v1129
        %v1248 = vmul.f32 %v1246, %v1130
        %v1249 = vadd.f32 %v1241, %v1247
        %v1250 = vadd.f32 %v1242, %v1248
        %v1251 = vsub.f32 %v1055, -0.2
        %v1252 = vsub.f32 %v1056, -0.2
        %v1253 = vmul.f32 %v1251, 2.5
        %v1254 = vmul.f32 %v1252, 2.5
        %v1255 = vmul.f32 %v1253, %v1129
        %v1256 = vmul.f32 %v1254, %v1130
        %v1257 = vsub.f32 0.6, %v1055
        %v1258 = vsub.f32 0.6, %v1056
        %v1259 = vmul.f32 %v1257, 2.5
        %v1260 = vmul.f32 %v1258, 2.5
        %v1261 = vmul.f32 %v1259, %v1139
        %v1262 = vmul.f32 %v1260, %v1140
        %v1263 = vadd.f32 %v1255, %v1261
        %v1264 = vadd.f32 %v1256, %v1262
        %v1265 = vsub.f32 %v1055, 0.2
        %v1266 = vsub.f32 %v1056, 0.2
        %v1267 = vmul.f32 %v1265, 2.5
        %v1268 = vmul.f32 %v1266, 2.5
        %v1269 = vmul.f32 %v1267, %v1139
        %v1270 = vmul.f32 %v1268, %v1140
        %v1271 = vsub.f32 1.0, %v1055
        %v1272 = vsub.f32 1.0, %v1056
        %v1273 = vmul.f32 %v1271, 2.5
        %v1274 = vmul.f32 %v1272, 2.5
        %v1275 = vmul.f32 %v1273, %v1149
        %v1276 = vmul.f32 %v1274, %v1150
        %v1277 = vadd.f32 %v1269, %v1275
        %v1278 = vadd.f32 %v1270, %v1276
        %v1279 = vsub.f32 %v1055, 0.6
        %v1280 = vsub.f32 %v1056, 0.6
        %v1281 = vmul.f32 %v1279, 2.5
        %v1282 = vmul.f32 %v1280, 2.5
        %v1283 = vmul.f32 %v1281, %v1149
        %v1284 = vmul.f32 %v1282, %v1150
        %v1285 = vsub.f32 1.4, %v1055
        %v1286 = vsub.f32 1.4, %v1056
        %v1287 = vmul.f32 %v1285, 2.5
        %v1288 = vmul.f32 %v1286, 2.5
        %v1289 = vmul.f32 %v1287, %v1159
        %v1290 = vmul.f32 %v1288, %v1160
        %v1291 = vadd.f32 %v1283, %v1289
        %v1292 = vadd.f32 %v1284, %v1290
        %v1293 = vsub.f32 %v1055, 1.0
        %v1294 = vsub.f32 %v1056, 1.0
        %v1295 = vmul.f32 %v1293, 2.5
        %v1296 = vmul.f32 %v1294, 2.5
        %v1297 = vmul.f32 %v1295, %v1159
        %v1298 = vmul.f32 %v1296, %v1160
        %v1299 = vsub.f32 1.8, %v1055
        %v1300 = vsub.f32 1.8, %v1056
        %v1301 = vmul.f32 %v1299, 2.5
        %v1302 = vmul.f32 %v1300, 2.5
        %v1303 = vmul.f32 %v1301, %v1169
        %v1304 = vmul.f32 %v1302, %v1170
        %v1305 = vadd.f32 %v1297, %v1303
        %v1306 = vadd.f32 %v1298, %v1304
        %v1307 = vsub.f32 %v1055, 1.4
        %v1308 = vsub.f32 %v1056, 1.4
        %v1309 = vmul.f32 %v1307, 2.5
        %v1310 = vmul.f32 %v1308, 2.5
        %v1311 = vmul.f32 %v1309, %v1169
        %v1312 = vmul.f32 %v1310, %v1170
        %v1313 = vsub.f32 2.2, %v1055
        %v1314 = vsub.f32 2.2, %v1056
        %v1315 = vmul.f32 %v1313, 2.5
        %v1316 = vmul.f32 %v1314, 2.5
        %v1317 = vmul.f32 %v1315, %v1179
        %v1318 = vmul.f32 %v1316, %v1180
        %v1319 = vadd.f32 %v1311, %v1317
        %v1320 = vadd.f32 %v1312, %v1318
        %v1321 = vmul.f32 %v1181, 1.25
        %v1322 = vmul.f32 %v1182, 1.25
        %v1323 = vmul.f32 %v1321, %v1193
        %v1324 = vmul.f32 %v1322, %v1194
        %v1325 = vmul.f32 %v1201, 1.25
        %v1326 = vmul.f32 %v1202, 1.25
        %v1327 = vmul.f32 %v1325, %v1207
        %v1328 = vmul.f32 %v1326, %v1208
        %v1329 = vadd.f32 %v1323, %v1327
        %v1330 = vadd.f32 %v1324, %v1328
        %v1331 = vmul.f32 %v1195, 1.25
        %v1332 = vmul.f32 %v1196, 1.25
        %v1333 = vmul.f32 %v1331, %v1207
        %v1334 = vmul.f32 %v1332, %v1208
        %v1335 = vmul.f32 %v1215, 1.25
        %v1336 = vmul.f32 %v1216, 1.25
        %v1337 = vmul.f32 %v1335, %v1221
        %v1338 = vmul.f32 %v1336, %v1222
        %v1339 = vadd.f32 %v1333, %v1337
        %v1340 = vadd.f32 %v1334, %v1338
        %v1341 = vmul.f32 %v1209, 1.25
        %v1342 = vmul.f32 %v1210, 1.25
        %v1343 = vmul.f32 %v1341, %v1221
        %v1344 = vmul.f32 %v1342, %v1222
        %v1345 = vmul.f32 %v1229, 1.25
        %v1346 = vmul.f32 %v1230, 1.25
        %v1347 = vmul.f32 %v1345, %v1235
        %v1348 = vmul.f32 %v1346, %v1236
        %v1349 = vadd.f32 %v1343, %v1347
        %v1350 = vadd.f32 %v1344, %v1348
        %v1351 = vmul.f32 %v1223, 1.25
        %v1352 = vmul.f32 %v1224, 1.25
        %v1353 = vmul.f32 %v1351, %v1235
        %v1354 = vmul.f32 %v1352, %v1236
        %v1355 = vmul.f32 %v1243, 1.25
        %v1356 = vmul.f32 %v1244, 1.25
        %v1357 = vmul.f32 %v1355, %v1249
        %v1358 = vmul.f32 %v1356, %v1250
        %v1359 = vadd.f32 %v1353, %v1357
        %v1360 = vadd.f32 %v1354, %v1358
        %v1361 = vmul.f32 %v1237, 1.25
        %v1362 = vmul.f32 %v1238, 1.25
        %v1363 = vmul.f32 %v1361, %v1249
        %v1364 = vmul.f32 %v1362, %v1250
        %v1365 = vmul.f32 %v1257, 1.25
        %v1366 = vmul.f32 %v1258, 1.25
        %v1367 = vmul.f32 %v1365, %v1263
        %v1368 = vmul.f32 %v1366, %v1264
        %v1369 = vadd.f32 %v1363, %v1367
        %v1370 = vadd.f32 %v1364, %v1368
        %v1371 = vmul.f32 %v1251, 1.25
        %v1372 = vmul.f32 %v1252, 1.25
        %v1373 = vmul.f32 %v1371, %v1263
        %v1374 = vmul.f32 %v1372, %v1264
        %v1375 = vmul.f32 %v1271, 1.25
        %v1376 = vmul.f32 %v1272, 1.25
        %v1377 = vmul.f32 %v1375, %v1277
        %v1378 = vmul.f32 %v1376, %v1278
        %v1379 = vadd.f32 %v1373, %v1377
        %v1380 = vadd.f32 %v1374, %v1378
        %v1381 = vmul.f32 %v1265, 1.25
        %v1382 = vmul.f32 %v1266, 1.25
        %v1383 = vmul.f32 %v1381, %v1277
        %v1384 = vmul.f32 %v1382, %v1278
        %v1385 = vmul.f32 %v1285, 1.25
        %v1386 = vmul.f32 %v1286, 1.25
        %v1387 = vmul.f32 %v1385, %v1291
        %v1388 = vmul.f32 %v1386, %v1292
        %v1389 = vadd.f32 %v1383, %v1387
        %v1390 = vadd.f32 %v1384, %v1388
        %v1391 = vmul.f32 %v1279, 1.25
        %v1392 = vmul.f32 %v1280, 1.25
        %v1393 = vmul.f32 %v1391, %v1291
        %v1394 = vmul.f32 %v1392, %v1292
        %v1395 = vmul.f32 %v1299, 1.25
        %v1396 = vmul.f32 %v1300, 1.25
        %v1397 = vmul.f32 %v1395, %v1305
        %v1398 = vmul.f32 %v1396, %v1306
        %v1399 = vadd.f32 %v1393, %v1397
        %v1400 = vadd.f32 %v1394, %v1398
        %v1401 = vmul.f32 %v1293, 1.25
        %v1402 = vmul.f32 %v1294, 1.25
        %v1403 = vmul.f32 %v1401, %v1305
        %v1404 = vmul.f32 %v1402, %v1306
        %v1405 = vmul.f32 %v1313, 1.25
        %v1406 = vmul.f32 %v1314, 1.25
        %v1407 = vmul.f32 %v1405, %v1319
        %v1408 = vmul.f32 %v1406, %v1320
        %v1409 = vadd.f32 %v1403, %v1407
        %v1410 = vadd.f32 %v1404, %v1408
        %v1411 = vmul.f32 %v1181, 0.8333333
        %v1412 = vmul.f32 %v1182, 0.8333333
        %v1413 = vmul.f32 %v1411, %v1329
        %v1414 = vmul.f32 %v1412, %v1330
        %v1415 = vmul.f32 %v1215, 0.8333333
        %v1416 = vmul.f32 %v1216, 0.8333333
        %v1417 = vmul.f32 %v1415, %v1339
        %v1418 = vmul.f32 %v1416, %v1340
        %v1419 = vadd.f32 %v1413, %v1417
        %v1420 = vadd.f32 %v1414, %v1418
        %v1421 = vmul.f32 %v1195, 0.8333333
        %v1422 = vmul.f32 %v1196, 0.8333333
        %v1423 = vmul.f32 %v1421, %v1339
        %v1424 = vmul.f32 %v1422, %v1340
        %v1425 = vmul.f32 %v1229, 0.8333333
        %v1426 = vmul.f32 %v1230, 0.8333333
        %v1427 = vmul.f32 %v1425, %v1349
        %v1428 = vmul.f32 %v1426, %v1350
        %v1429 = vadd.f32 %v1423, %v1427
        %v1430 = vadd.f32 %v1424, %v1428
        %v1431 = vmul.f32 %v1209, 0.8333333
        %v1432 = vmul.f32 %v1210, 0.8333333
        %v1433 = vmul.f32 %v1431, %v1349
        %v1434 = vmul.f32 %v1432, %v1350
        %v1435 = vmul.f32 %v1243, 0.8333333
        %v1436 = vmul.f32 %v1244, 0.8333333
        %v1437 = vmul.f32 %v1435, %v1359
        %v1438 = vmul.f32 %v1436, %v1360
        %v1439 = vadd.f32 %v1433, %v1437
        %v1440 = vadd.f32 %v1434, %v1438
        %v1441 = vmul.f32 %v1223, 0.8333333
        %v1442 = vmul.f32 %v1224, 0.8333333
        %v1443 = vmul.f32 %v1441, %v1359
        %v1444 = vmul.f32 %v1442, %v1360
        %v1445 = vmul.f32 %v1257, 0.8333333
        %v1446 = vmul.f32 %v1258, 0.8333333
        %v1447 = vmul.f32 %v1445, %v1369
        %v1448 = vmul.f32 %v1446, %v1370
        %v1449 = vadd.f32 %v1443, %v1447
        %v1450 = vadd.f32 %v1444, %v1448
        %v1451 = vmul.f32 %v1237, 0.8333333
        %v1452 = vmul.f32 %v1238, 0.8333333
        %v1453 = vmul.f32 %v1451, %v1369
        %v1454 = vmul.f32 %v1452, %v1370
        %v1455 = vmul.f32 %v1271, 0.8333333
        %v1456 = vmul.f32 %v1272, 0.8333333
        %v1457 = vmul.f32 %v1455, %v1379
        %v1458 = vmul.f32 %v1456, %v1380
        %v1459 = vadd.f32 %v1453, %v1457
        %v1460 = vadd.f32 %v1454, %v1458
        %v1461 = vmul.f32 %v1251, 0.8333333
        %v1462 = vmul.f32 %v1252, 0.8333333
        %v1463 = vmul.f32 %v1461, %v1379
        %v1464 = vmul.f32 %v1462, %v1380
        %v1465 = vmul.f32 %v1285, 0.8333333
        %v1466 = vmul.f32 %v1286, 0.8333333
        %v1467 = vmul.f32 %v1465, %v1389
        %v1468 = vmul.f32 %v1466, %v1390
        %v1469 = vadd.f32 %v1463, %v1467
        %v1470 = vadd.f32 %v1464, %v1468
        %v1471 = vmul.f32 %v1265, 0.8333333
        %v1472 = vmul.f32 %v1266, 0.8333333
        %v1473 = vmul.f32 %v1471, %v1389
        %v1474 = vmul.f32 %v1472, %v1390
        %v1475 = vmul.f32 %v1299, 0.8333333
        %v1476 = vmul.f32 %v1300, 0.8333333
        %v1477 = vmul.f32 %v1475, %v1399
        %v1478 = vmul.f32 %v1476, %v1400
        %v1479 = vadd.f32 %v1473, %v1477
        %v1480 = vadd.f32 %v1474, %v1478
        %v1481 = vmul.f32 %v1279, 0.8333333
        %v1482 = vmul.f32 %v1280, 0.8333333
        %v1483 = vmul.f32 %v1481, %v1399
        %v1484 = vmul.f32 %v1482, %v1400
        %v1485 = vmul.f32 %v1313, 0.8333333
        %v1486 = vmul.f32 %v1314, 0.8333333
        %v1487 = vmul.f32 %v1485, %v1409
        %v1488 = vmul.f32 %v1486, %v1410
        %v1489 = vadd.f32 %v1483, %v1487
        %v1490 = vadd.f32 %v1484, %v1488
        %v1491 = vpack.c.bf16 %v1069, %v1069
        %v1492 = vpack.c.bf16 %v1070, %v1070
        %v1493 = vpack.c.bf16 %v1419, %v1419
        %v1494 = vpack.c.bf16 %v1420, %v1420
        %v1495 = vpack.c.bf16 %v1429, %v1429
        %v1496 = vpack.c.bf16 %v1430, %v1430
        %v1497 = vpack.c.bf16 %v1439, %v1439
        %v1498 = vpack.c.bf16 %v1440, %v1440
        %v1499 = vpack.c.bf16 %v1449, %v1449
        %v1500 = vpack.c.bf16 %v1450, %v1450
        %v1501 = vpack.c.bf16 %v1459, %v1459
        %v1502 = vpack.c.bf16 %v1460, %v1460
        %v1503 = vpack.c.bf16 %v1469, %v1469
        %v1504 = vpack.c.bf16 %v1470, %v1470
        %v1505 = vpack.c.bf16 %v1479, %v1479
        %v1506 = vpack.c.bf16 %v1480, %v1480
        %v1507 = vpack.c.bf16 %v1489, %v1489
        %v1508 = vpack.c.bf16 %v1490, %v1490
        %v1509 = vld [vmem:[%s248] sm:$0xf]
        %v1510 = vld [vmem:[%s248 + $0x4] sm:$0xf]
        %v1511 = vld [vmem:[%s248 + $0x8] sm:$0xf]
        %v1512 = vld [vmem:[%s248 + $0xc] sm:$0xf]
        %v1513 = vld [vmem:[%s248 + $0x10] sm:$0xf]
        %v1514 = vld [vmem:[%s248 + $0x14] sm:$0xf]
        %v1515 = vld [vmem:[%s248 + $0x18] sm:$0xf]
        %v1516 = vld [vmem:[%s248 + $0x1c] sm:$0xf]
        %v1517 = vld [vmem:[%s248 + $0x20] sm:$0xf]
        %v1518 = vld [vmem:[%s248 + $0x24] sm:$0xf]
        %v1519 = vld [vmem:[%s248 + $0x28] sm:$0xf]
        %v1520 = vld [vmem:[%s248 + $0x2c] sm:$0xf]
        %v1521 = vld [vmem:[%s248 + $0x30] sm:$0xf]
        %v1522 = vld [vmem:[%s248 + $0x34] sm:$0xf]
        %v1523 = vld [vmem:[%s248 + $0x38] sm:$0xf]
        %v1524 = vld [vmem:[%s248 + $0x3c] sm:$0xf]
        %v1525 = vld [vmem:[%s248 + $0x40] sm:$0xf]
        %v1526 = vld [vmem:[%s248 + $0x44] sm:$0xf]
        %v1527 = vld [vmem:[%s248 + $0x48] sm:$0xf]
        %v1528 = vld [vmem:[%s248 + $0x4c] sm:$0xf]
        %v1529 = vld [vmem:[%s248 + $0x50] sm:$0xf]
        %v1530 = vld [vmem:[%s248 + $0x54] sm:$0xf]
        %v1531 = vld [vmem:[%s248 + $0x58] sm:$0xf]
        %v1532 = vld [vmem:[%s248 + $0x5c] sm:$0xf]
        %v1533 = vld [vmem:[%s248 + $0x60] sm:$0xf]
        %v1534 = vld [vmem:[%s248 + $0x64] sm:$0xf]
        %v1535 = vld [vmem:[%s248 + $0x68] sm:$0xf]
        %v1536 = vld [vmem:[%s248 + $0x6c] sm:$0xf]
        %v1537 = vld [vmem:[%s248 + $0x70] sm:$0xf]
        %v1538 = vld [vmem:[%s248 + $0x74] sm:$0xf]
        %v1539 = vld [vmem:[%s248 + $0x78] sm:$0xf]
        %v1540 = vld [vmem:[%s248 + $0x7c] sm:$0xf]
        %v1541 = vld [vmem:[%s248 + $0x80] sm:$0xf]
        %v1542 = vld [vmem:[%s248 + $0x84] sm:$0xf]
        %v1543 = vld [vmem:[%s248 + $0x88] sm:$0xf]
        %v1544 = vld [vmem:[%s248 + $0x8c] sm:$0xf]
        %v1545 = vld [vmem:[%s248 + $0x90] sm:$0xf]
        %v1546 = vld [vmem:[%s248 + $0x94] sm:$0xf]
        %v1547 = vld [vmem:[%s248 + $0x98] sm:$0xf]
        %v1548 = vld [vmem:[%s248 + $0x9c] sm:$0xf]
        %v1549 = vld [vmem:[%s248 + $0xa0] sm:$0xf]
        %v1550 = vld [vmem:[%s248 + $0xa4] sm:$0xf]
        %v1551 = vld [vmem:[%s248 + $0xa8] sm:$0xf]
        %v1552 = vld [vmem:[%s248 + $0xac] sm:$0xf]
        %v1553 = vld [vmem:[%s248 + $0xb0] sm:$0xf]
        %v1554 = vld [vmem:[%s248 + $0xb4] sm:$0xf]
        %v1555 = vld [vmem:[%s248 + $0xb8] sm:$0xf]
        %v1556 = vld [vmem:[%s248 + $0xbc] sm:$0xf]
        %v1557 = vld [vmem:[%s248 + $0xc0] sm:$0xf]
        %v1558 = vld [vmem:[%s248 + $0xc4] sm:$0xf]
        %v1559 = vld [vmem:[%s248 + $0xc8] sm:$0xf]
        %v1560 = vld [vmem:[%s248 + $0xcc] sm:$0xf]
        %v1561 = vld [vmem:[%s248 + $0xd0] sm:$0xf]
        %v1562 = vld [vmem:[%s248 + $0xd4] sm:$0xf]
        %v1563 = vld [vmem:[%s248 + $0xd8] sm:$0xf]
        %v1564 = vld [vmem:[%s248 + $0xdc] sm:$0xf]
        %v1565 = vld [vmem:[%s248 + $0xe0] sm:$0xf]
        %v1566 = vld [vmem:[%s248 + $0xe4] sm:$0xf]
        %v1567 = vld [vmem:[%s248 + $0xe8] sm:$0xf]
        %v1568 = vld [vmem:[%s248 + $0xec] sm:$0xf]
        %v1569 = vld [vmem:[%s248 + $0xf0] sm:$0xf]
        %v1570 = vld [vmem:[%s248 + $0xf4] sm:$0xf]
        %v1571 = vld [vmem:[%s248 + $0xf8] sm:$0xf]
        %v1572 = vld [vmem:[%s248 + $0xfc] sm:$0xf]
        %v1573 = vld [vmem:[%s248 + $0x100] sm:$0xf]
        %v1574 = vld [vmem:[%s248 + $0x104] sm:$0xf]
        %v1575 = vld [vmem:[%s248 + $0x108] sm:$0xf]
        %v1576 = vld [vmem:[%s248 + $0x10c] sm:$0xf]
        %v1577 = vld [vmem:[%s248 + $0x110] sm:$0xf]
        %v1578 = vld [vmem:[%s248 + $0x114] sm:$0xf]
        %v1579 = vld [vmem:[%s248 + $0x118] sm:$0xf]
        %v1580 = vld [vmem:[%s248 + $0x11c] sm:$0xf]
        %v1581 = vld [vmem:[%s248 + $0x120] sm:$0xf]
        %v1582 = vld [vmem:[%s248 + $0x124] sm:$0xf]
        %v1583 = vld [vmem:[%s248 + $0x128] sm:$0xf]
        %v1584 = vld [vmem:[%s248 + $0x12c] sm:$0xf]
        %v1585 = vld [vmem:[%s248 + $0x130] sm:$0xf]
        %v1586 = vld [vmem:[%s248 + $0x134] sm:$0xf]
        %v1587 = vld [vmem:[%s248 + $0x138] sm:$0xf]
        %v1588 = vld [vmem:[%s248 + $0x13c] sm:$0xf]
        %v1589 = vld [vmem:[%s248 + $0x140] sm:$0xf]
        %v1590 = vld [vmem:[%s248 + $0x144] sm:$0xf]
        %v1591 = vld [vmem:[%s248 + $0x148] sm:$0xf]
        %v1592 = vld [vmem:[%s248 + $0x14c] sm:$0xf]
        %v1593 = vld [vmem:[%s248 + $0x150] sm:$0xf]
        %v1594 = vld [vmem:[%s248 + $0x154] sm:$0xf]
        %v1595 = vld [vmem:[%s248 + $0x158] sm:$0xf]
        %v1596 = vld [vmem:[%s248 + $0x15c] sm:$0xf]
        %v1597 = vld [vmem:[%s248 + $0x160] sm:$0xf]
        %v1598 = vld [vmem:[%s248 + $0x164] sm:$0xf]
        %v1599 = vld [vmem:[%s248 + $0x168] sm:$0xf]
        %v1600 = vld [vmem:[%s248 + $0x16c] sm:$0xf]
        %v1601 = vld [vmem:[%s248 + $0x170] sm:$0xf]
        %v1602 = vld [vmem:[%s248 + $0x174] sm:$0xf]
        %v1603 = vld [vmem:[%s248 + $0x178] sm:$0xf]
        %v1604 = vld [vmem:[%s248 + $0x17c] sm:$0xf]
        %v1605 = vld [vmem:[%s248 + $0x180] sm:$0xf]
        %v1606 = vld [vmem:[%s248 + $0x184] sm:$0xf]
        %v1607 = vld [vmem:[%s248 + $0x188] sm:$0xf]
        %v1608 = vld [vmem:[%s248 + $0x18c] sm:$0xf]
        %v1609 = vld [vmem:[%s248 + $0x190] sm:$0xf]
        %v1610 = vld [vmem:[%s248 + $0x194] sm:$0xf]
        %v1611 = vld [vmem:[%s248 + $0x198] sm:$0xf]
        %v1612 = vld [vmem:[%s248 + $0x19c] sm:$0xf]
        %v1613 = vld [vmem:[%s248 + $0x1a0] sm:$0xf]
        %v1614 = vld [vmem:[%s248 + $0x1a4] sm:$0xf]
        %v1615 = vld [vmem:[%s248 + $0x1a8] sm:$0xf]
        %v1616 = vld [vmem:[%s248 + $0x1ac] sm:$0xf]
        %v1617 = vld [vmem:[%s248 + $0x1b0] sm:$0xf]
        %v1618 = vld [vmem:[%s248 + $0x1b4] sm:$0xf]
        %v1619 = vld [vmem:[%s248 + $0x1b8] sm:$0xf]
        %v1620 = vld [vmem:[%s248 + $0x1bc] sm:$0xf]
        %v1621 = vld [vmem:[%s248 + $0x1c0] sm:$0xf]
        %v1622 = vld [vmem:[%s248 + $0x1c4] sm:$0xf]
        %v1623 = vld [vmem:[%s248 + $0x1c8] sm:$0xf]
        %v1624 = vld [vmem:[%s248 + $0x1cc] sm:$0xf]
        %v1625 = vld [vmem:[%s248 + $0x1d0] sm:$0xf]
        %v1626 = vld [vmem:[%s248 + $0x1d4] sm:$0xf]
        %v1627 = vld [vmem:[%s248 + $0x1d8] sm:$0xf]
        %v1628 = vld [vmem:[%s248 + $0x1dc] sm:$0xf]
        %v1629 = vld [vmem:[%s248 + $0x1e0] sm:$0xf]
        %v1630 = vld [vmem:[%s248 + $0x1e4] sm:$0xf]
        %v1631 = vld [vmem:[%s248 + $0x1e8] sm:$0xf]
        %v1632 = vld [vmem:[%s248 + $0x1ec] sm:$0xf]
        %v1633 = vld [vmem:[%s248 + $0x1f0] sm:$0xf]
        %v1634 = vld [vmem:[%s248 + $0x1f4] sm:$0xf]
        %v1635 = vld [vmem:[%s248 + $0x1f8] sm:$0xf]
        %v1636 = vld [vmem:[%s248 + $0x1fc] sm:$0xf]
        %v1637 = vld [vmem:[%s248 + $0x200] sm:$0xf]
        %v1638 = vld [vmem:[%s248 + $0x204] sm:$0xf]
        %v1639 = vld [vmem:[%s248 + $0x208] sm:$0xf]
        %v1640 = vld [vmem:[%s248 + $0x20c] sm:$0xf]
        %v1641 = vld [vmem:[%s248 + $0x210] sm:$0xf]
        %v1642 = vld [vmem:[%s248 + $0x214] sm:$0xf]
        %v1643 = vld [vmem:[%s248 + $0x218] sm:$0xf]
        %v1644 = vld [vmem:[%s248 + $0x21c] sm:$0xf]
        %v1645 = vld [vmem:[%s248 + $0x220] sm:$0xf]
        %v1646 = vld [vmem:[%s248 + $0x224] sm:$0xf]
        %v1647 = vld [vmem:[%s248 + $0x228] sm:$0xf]
        %v1648 = vld [vmem:[%s248 + $0x22c] sm:$0xf]
        %v1649 = vld [vmem:[%s248 + $0x230] sm:$0xf]
        %v1650 = vld [vmem:[%s248 + $0x234] sm:$0xf]
        %v1651 = vld [vmem:[%s248 + $0x238] sm:$0xf]
        %v1652 = vld [vmem:[%s248 + $0x23c] sm:$0xf]
        %v1653 = vld [vmem:[%s248 + $0x240] sm:$0xf]
        %v1654 = vld [vmem:[%s248 + $0x244] sm:$0xf]
        %v1655 = vld [vmem:[%s248 + $0x248] sm:$0xf]
        %v1656 = vld [vmem:[%s248 + $0x24c] sm:$0xf]
        %v1657 = vld [vmem:[%s248 + $0x250] sm:$0xf]
        %v1658 = vld [vmem:[%s248 + $0x254] sm:$0xf]
        %v1659 = vld [vmem:[%s248 + $0x258] sm:$0xf]
        %v1660 = vld [vmem:[%s248 + $0x25c] sm:$0xf]
        %v1661 = vld [vmem:[%s248 + $0x260] sm:$0xf]
        %v1662 = vld [vmem:[%s248 + $0x264] sm:$0xf]
        %v1663 = vld [vmem:[%s248 + $0x268] sm:$0xf]
        %v1664 = vld [vmem:[%s248 + $0x26c] sm:$0xf]
        %v1665 = vld [vmem:[%s248 + $0x270] sm:$0xf]
        %v1666 = vld [vmem:[%s248 + $0x274] sm:$0xf]
        %v1667 = vld [vmem:[%s248 + $0x278] sm:$0xf]
        %v1668 = vld [vmem:[%s248 + $0x27c] sm:$0xf]
        %v1669 = vld [vmem:[%s248 + $0x280] sm:$0xf]
        %v1670 = vld [vmem:[%s248 + $0x284] sm:$0xf]
        %v1671 = vld [vmem:[%s248 + $0x288] sm:$0xf]
        %v1672 = vld [vmem:[%s248 + $0x28c] sm:$0xf]
        %v1673 = vld [vmem:[%s248 + $0x290] sm:$0xf]
        %v1674 = vld [vmem:[%s248 + $0x294] sm:$0xf]
        %v1675 = vld [vmem:[%s248 + $0x298] sm:$0xf]
        %v1676 = vld [vmem:[%s248 + $0x29c] sm:$0xf]
        %v1677 = vld [vmem:[%s248 + $0x2a0] sm:$0xf]
        %v1678 = vld [vmem:[%s248 + $0x2a4] sm:$0xf]
        %v1679 = vld [vmem:[%s248 + $0x2a8] sm:$0xf]
        %v1680 = vld [vmem:[%s248 + $0x2ac] sm:$0xf]
        %v1681 = vld [vmem:[%s248 + $0x2b0] sm:$0xf]
        %v1682 = vld [vmem:[%s248 + $0x2b4] sm:$0xf]
        %v1683 = vld [vmem:[%s248 + $0x2b8] sm:$0xf]
        %v1684 = vld [vmem:[%s248 + $0x2bc] sm:$0xf]
        %v1685 = vld [vmem:[%s248 + $0x2c0] sm:$0xf]
        %v1686 = vld [vmem:[%s248 + $0x2c4] sm:$0xf]
        %v1687 = vld [vmem:[%s248 + $0x2c8] sm:$0xf]
        %v1688 = vld [vmem:[%s248 + $0x2cc] sm:$0xf]
        %v1689 = vld [vmem:[%s248 + $0x2d0] sm:$0xf]
        %v1690 = vld [vmem:[%s248 + $0x2d4] sm:$0xf]
        %v1691 = vld [vmem:[%s248 + $0x2d8] sm:$0xf]
        %v1692 = vld [vmem:[%s248 + $0x2dc] sm:$0xf]
        %v1693 = vld [vmem:[%s248 + $0x2e0] sm:$0xf]
        %v1694 = vld [vmem:[%s248 + $0x2e4] sm:$0xf]
        %v1695 = vld [vmem:[%s248 + $0x2e8] sm:$0xf]
        %v1696 = vld [vmem:[%s248 + $0x2ec] sm:$0xf]
        %v1697 = vld [vmem:[%s248 + $0x2f0] sm:$0xf]
        %v1698 = vld [vmem:[%s248 + $0x2f4] sm:$0xf]
        %v1699 = vld [vmem:[%s248 + $0x2f8] sm:$0xf]
        %v1700 = vld [vmem:[%s248 + $0x2fc] sm:$0xf]
        %v1701 = vld [vmem:[%s248 + $0x300] sm:$0xf]
        %v1702 = vld [vmem:[%s248 + $0x304] sm:$0xf]
        %v1703 = vld [vmem:[%s248 + $0x308] sm:$0xf]
        %v1704 = vld [vmem:[%s248 + $0x30c] sm:$0xf]
        %v1705 = vld [vmem:[%s248 + $0x310] sm:$0xf]
        %v1706 = vld [vmem:[%s248 + $0x314] sm:$0xf]
        %v1707 = vld [vmem:[%s248 + $0x318] sm:$0xf]
        %v1708 = vld [vmem:[%s248 + $0x31c] sm:$0xf]
        %v1709 = vld [vmem:[%s248 + $0x320] sm:$0xf]
        %v1710 = vld [vmem:[%s248 + $0x324] sm:$0xf]
        %v1711 = vld [vmem:[%s248 + $0x328] sm:$0xf]
        %v1712 = vld [vmem:[%s248 + $0x32c] sm:$0xf]
        %v1713 = vld [vmem:[%s248 + $0x330] sm:$0xf]
        %v1714 = vld [vmem:[%s248 + $0x334] sm:$0xf]
        %v1715 = vld [vmem:[%s248 + $0x338] sm:$0xf]
        %v1716 = vld [vmem:[%s248 + $0x33c] sm:$0xf]
        %v1717 = vld [vmem:[%s248 + $0x340] sm:$0xf]
        %v1718 = vld [vmem:[%s248 + $0x344] sm:$0xf]
        %v1719 = vld [vmem:[%s248 + $0x348] sm:$0xf]
        %v1720 = vld [vmem:[%s248 + $0x34c] sm:$0xf]
        %v1721 = vld [vmem:[%s248 + $0x350] sm:$0xf]
        %v1722 = vld [vmem:[%s248 + $0x354] sm:$0xf]
        %v1723 = vld [vmem:[%s248 + $0x358] sm:$0xf]
        %v1724 = vld [vmem:[%s248 + $0x35c] sm:$0xf]
        %v1725 = vld [vmem:[%s248 + $0x360] sm:$0xf]
        %v1726 = vld [vmem:[%s248 + $0x364] sm:$0xf]
        %v1727 = vld [vmem:[%s248 + $0x368] sm:$0xf]
        %v1728 = vld [vmem:[%s248 + $0x36c] sm:$0xf]
        %v1729 = vld [vmem:[%s248 + $0x370] sm:$0xf]
        %v1730 = vld [vmem:[%s248 + $0x374] sm:$0xf]
        %v1731 = vld [vmem:[%s248 + $0x378] sm:$0xf]
        %v1732 = vld [vmem:[%s248 + $0x37c] sm:$0xf]
        %v1733 = vld [vmem:[%s248 + $0x380] sm:$0xf]
        %v1734 = vld [vmem:[%s248 + $0x384] sm:$0xf]
        %v1735 = vld [vmem:[%s248 + $0x388] sm:$0xf]
        %v1736 = vld [vmem:[%s248 + $0x38c] sm:$0xf]
        %v1737 = vld [vmem:[%s248 + $0x390] sm:$0xf]
        %v1738 = vld [vmem:[%s248 + $0x394] sm:$0xf]
        %v1739 = vld [vmem:[%s248 + $0x398] sm:$0xf]
        %v1740 = vld [vmem:[%s248 + $0x39c] sm:$0xf]
        %v1741 = vld [vmem:[%s248 + $0x3a0] sm:$0xf]
        %v1742 = vld [vmem:[%s248 + $0x3a4] sm:$0xf]
        %v1743 = vld [vmem:[%s248 + $0x3a8] sm:$0xf]
        %v1744 = vld [vmem:[%s248 + $0x3ac] sm:$0xf]
        %v1745 = vld [vmem:[%s248 + $0x3b0] sm:$0xf]
        %v1746 = vld [vmem:[%s248 + $0x3b4] sm:$0xf]
        %v1747 = vld [vmem:[%s248 + $0x3b8] sm:$0xf]
        %v1748 = vld [vmem:[%s248 + $0x3bc] sm:$0xf]
        %v1749 = vld [vmem:[%s248 + $0x3c0] sm:$0xf]
        %v1750 = vld [vmem:[%s248 + $0x3c4] sm:$0xf]
        %v1751 = vld [vmem:[%s248 + $0x3c8] sm:$0xf]
        %v1752 = vld [vmem:[%s248 + $0x3cc] sm:$0xf]
        %v1753 = vld [vmem:[%s248 + $0x3d0] sm:$0xf]
        %v1754 = vld [vmem:[%s248 + $0x3d4] sm:$0xf]
        %v1755 = vld [vmem:[%s248 + $0x3d8] sm:$0xf]
        %v1756 = vld [vmem:[%s248 + $0x3dc] sm:$0xf]
        %v1757 = vld [vmem:[%s248 + $0x3e0] sm:$0xf]
        %v1758 = vld [vmem:[%s248 + $0x3e4] sm:$0xf]
        %v1759 = vld [vmem:[%s248 + $0x3e8] sm:$0xf]
        %v1760 = vld [vmem:[%s248 + $0x3ec] sm:$0xf]
        %v1761 = vld [vmem:[%s248 + $0x3f0] sm:$0xf]
        %v1762 = vld [vmem:[%s248 + $0x3f4] sm:$0xf]
        %v1763 = vld [vmem:[%s248 + $0x3f8] sm:$0xf]
        %v1764 = vld [vmem:[%s248 + $0x3fc] sm:$0xf]
        %v1765 = vld [vmem:[%s248 + $0x400] sm:$0xf]
        %v1766 = vld [vmem:[%s248 + $0x404] sm:$0xf]
        %v1767 = vld [vmem:[%s248 + $0x408] sm:$0xf]
        %v1768 = vld [vmem:[%s248 + $0x40c] sm:$0xf]
        %v1769 = vld [vmem:[%s248 + $0x410] sm:$0xf]
        %v1770 = vld [vmem:[%s248 + $0x414] sm:$0xf]
        %v1771 = vld [vmem:[%s248 + $0x418] sm:$0xf]
        %v1772 = vld [vmem:[%s248 + $0x41c] sm:$0xf]
        %v1773 = vld [vmem:[%s248 + $0x420] sm:$0xf]
        %v1774 = vld [vmem:[%s248 + $0x424] sm:$0xf]
        %v1775 = vld [vmem:[%s248 + $0x428] sm:$0xf]
        %v1776 = vld [vmem:[%s248 + $0x42c] sm:$0xf]
        %v1777 = vld [vmem:[%s248 + $0x430] sm:$0xf]
        %v1778 = vld [vmem:[%s248 + $0x434] sm:$0xf]
        %v1779 = vld [vmem:[%s248 + $0x438] sm:$0xf]
        %v1780 = vld [vmem:[%s248 + $0x43c] sm:$0xf]
        %v1781 = vld [vmem:[%s248 + $0x440] sm:$0xf]
        %v1782 = vld [vmem:[%s248 + $0x444] sm:$0xf]
        %v1783 = vld [vmem:[%s248 + $0x448] sm:$0xf]
        %v1784 = vld [vmem:[%s248 + $0x44c] sm:$0xf]
        %v1785 = vld [vmem:[%s248 + $0x450] sm:$0xf]
        %v1786 = vld [vmem:[%s248 + $0x454] sm:$0xf]
        %v1787 = vld [vmem:[%s248 + $0x458] sm:$0xf]
        %v1788 = vld [vmem:[%s248 + $0x45c] sm:$0xf]
        %v1789 = vld [vmem:[%s248 + $0x460] sm:$0xf]
        %v1790 = vld [vmem:[%s248 + $0x464] sm:$0xf]
        %v1791 = vld [vmem:[%s248 + $0x468] sm:$0xf]
        %v1792 = vld [vmem:[%s248 + $0x46c] sm:$0xf]
        %v1793 = vld [vmem:[%s248 + $0x470] sm:$0xf]
        %v1794 = vld [vmem:[%s248 + $0x474] sm:$0xf]
        %v1795 = vld [vmem:[%s248 + $0x478] sm:$0xf]
        %v1796 = vld [vmem:[%s248 + $0x47c] sm:$0xf]
        %v2085 = vunpack.c.l.b16 %v1509
        %v2086 = vunpack.c.l.b16 %v1510
        %v2087 = vunpack.c.l.b16 %v1511
        %v2088 = vunpack.c.l.b16 %v1512
        %v2089 = vunpack.c.l.b16 %v1513
        %v2090 = vunpack.c.l.b16 %v1514
        %v2091 = vunpack.c.l.b16 %v1515
        %v2092 = vunpack.c.l.b16 %v1516
        %v2093 = vunpack.c.l.b16 %v1517
        %v2094 = vunpack.c.l.b16 %v1518
        %v2095 = vunpack.c.l.b16 %v1519
        %v2096 = vunpack.c.l.b16 %v1520
        %v2097 = vunpack.c.l.b16 %v1521
        %v2098 = vunpack.c.l.b16 %v1522
        %v2099 = vunpack.c.l.b16 %v1523
        %v2100 = vunpack.c.l.b16 %v1524
        %v2101 = vunpack.c.l.b16 %v1525
        %v2102 = vunpack.c.l.b16 %v1526
        %v2103 = vunpack.c.l.b16 %v1527
        %v2104 = vunpack.c.l.b16 %v1528
        %v2105 = vunpack.c.l.b16 %v1529
        %v2106 = vunpack.c.l.b16 %v1530
        %v2107 = vunpack.c.l.b16 %v1531
        %v2108 = vunpack.c.l.b16 %v1532
        %v2109 = vunpack.c.l.b16 %v1533
        %v2110 = vunpack.c.l.b16 %v1534
        %v2111 = vunpack.c.l.b16 %v1535
        %v2112 = vunpack.c.l.b16 %v1536
        %v2113 = vunpack.c.l.b16 %v1537
        %v2114 = vunpack.c.l.b16 %v1538
        %v2115 = vunpack.c.l.b16 %v1539
        %v2116 = vunpack.c.l.b16 %v1540
        %v2117 = vunpack.c.l.b16 %v1541
        %v2118 = vunpack.c.l.b16 %v1542
        %v2119 = vunpack.c.l.b16 %v1543
        %v2120 = vunpack.c.l.b16 %v1544
        %v2121 = vunpack.c.l.b16 %v1545
        %v2122 = vunpack.c.l.b16 %v1546
        %v2123 = vunpack.c.l.b16 %v1547
        %v2124 = vunpack.c.l.b16 %v1548
        %v2125 = vunpack.c.l.b16 %v1549
        %v2126 = vunpack.c.l.b16 %v1550
        %v2127 = vunpack.c.l.b16 %v1551
        %v2128 = vunpack.c.l.b16 %v1552
        %v2129 = vunpack.c.l.b16 %v1553
        %v2130 = vunpack.c.l.b16 %v1554
        %v2131 = vunpack.c.l.b16 %v1555
        %v2132 = vunpack.c.l.b16 %v1556
        %v2133 = vunpack.c.l.b16 %v1557
        %v2134 = vunpack.c.l.b16 %v1558
        %v2135 = vunpack.c.l.b16 %v1559
        %v2136 = vunpack.c.l.b16 %v1560
        %v2137 = vunpack.c.l.b16 %v1561
        %v2138 = vunpack.c.l.b16 %v1562
        %v2139 = vunpack.c.l.b16 %v1563
        %v2140 = vunpack.c.l.b16 %v1564
        %v2141 = vunpack.c.l.b16 %v1565
        %v2142 = vunpack.c.l.b16 %v1566
        %v2143 = vunpack.c.l.b16 %v1567
        %v2144 = vunpack.c.l.b16 %v1568
        %v2145 = vunpack.c.l.b16 %v1569
        %v2146 = vunpack.c.l.b16 %v1570
        %v2147 = vunpack.c.l.b16 %v1571
        %v2148 = vunpack.c.l.b16 %v1572
        %v2149 = vunpack.c.l.b16 %v1573
        %v2150 = vunpack.c.l.b16 %v1574
        %v2151 = vunpack.c.l.b16 %v1575
        %v2152 = vunpack.c.l.b16 %v1576
        %v2153 = vunpack.c.l.b16 %v1577
        %v2154 = vunpack.c.l.b16 %v1578
        %v2155 = vunpack.c.l.b16 %v1579
        %v2156 = vunpack.c.l.b16 %v1580
        %v2157 = vunpack.c.l.b16 %v1581
        %v2158 = vunpack.c.l.b16 %v1582
        %v2159 = vunpack.c.l.b16 %v1583
        %v2160 = vunpack.c.l.b16 %v1584
        %v2161 = vunpack.c.l.b16 %v1585
        %v2162 = vunpack.c.l.b16 %v1586
        %v2163 = vunpack.c.l.b16 %v1587
        %v2164 = vunpack.c.l.b16 %v1588
        %v2165 = vunpack.c.l.b16 %v1589
        %v2166 = vunpack.c.l.b16 %v1590
        %v2167 = vunpack.c.l.b16 %v1591
        %v2168 = vunpack.c.l.b16 %v1592
        %v2169 = vunpack.c.l.b16 %v1593
        %v2170 = vunpack.c.l.b16 %v1594
        %v2171 = vunpack.c.l.b16 %v1595
        %v2172 = vunpack.c.l.b16 %v1596
        %v2173 = vunpack.c.l.b16 %v1597
        %v2174 = vunpack.c.l.b16 %v1598
        %v2175 = vunpack.c.l.b16 %v1599
        %v2176 = vunpack.c.l.b16 %v1600
        %v2177 = vunpack.c.l.b16 %v1601
        %v2178 = vunpack.c.l.b16 %v1602
        %v2179 = vunpack.c.l.b16 %v1603
        %v2180 = vunpack.c.l.b16 %v1604
        %v2181 = vunpack.c.l.b16 %v1605
        %v2182 = vunpack.c.l.b16 %v1606
        %v2183 = vunpack.c.l.b16 %v1607
        %v2184 = vunpack.c.l.b16 %v1608
        %v2185 = vunpack.c.l.b16 %v1609
        %v2186 = vunpack.c.l.b16 %v1610
        %v2187 = vunpack.c.l.b16 %v1611
        %v2188 = vunpack.c.l.b16 %v1612
        %v2189 = vunpack.c.l.b16 %v1613
        %v2190 = vunpack.c.l.b16 %v1614
        %v2191 = vunpack.c.l.b16 %v1615
        %v2192 = vunpack.c.l.b16 %v1616
        %v2193 = vunpack.c.l.b16 %v1617
        %v2194 = vunpack.c.l.b16 %v1618
        %v2195 = vunpack.c.l.b16 %v1619
        %v2196 = vunpack.c.l.b16 %v1620
        %v2197 = vunpack.c.l.b16 %v1621
        %v2198 = vunpack.c.l.b16 %v1622
        %v2199 = vunpack.c.l.b16 %v1623
        %v2200 = vunpack.c.l.b16 %v1624
        %v2201 = vunpack.c.l.b16 %v1625
        %v2202 = vunpack.c.l.b16 %v1626
        %v2203 = vunpack.c.l.b16 %v1627
        %v2204 = vunpack.c.l.b16 %v1628
        %v2205 = vunpack.c.l.b16 %v1629
        %v2206 = vunpack.c.l.b16 %v1630
        %v2207 = vunpack.c.l.b16 %v1631
        %v2208 = vunpack.c.l.b16 %v1632
        %v2209 = vunpack.c.l.b16 %v1633
        %v2210 = vunpack.c.l.b16 %v1634
        %v2211 = vunpack.c.l.b16 %v1635
        %v2212 = vunpack.c.l.b16 %v1636
        %v2213 = vunpack.c.l.b16 %v1637
        %v2214 = vunpack.c.l.b16 %v1638
        %v2215 = vunpack.c.l.b16 %v1639
        %v2216 = vunpack.c.l.b16 %v1640
        %v2217 = vunpack.c.l.b16 %v1641
        %v2218 = vunpack.c.l.b16 %v1642
        %v2219 = vunpack.c.l.b16 %v1643
        %v2220 = vunpack.c.l.b16 %v1644
        %v2221 = vunpack.c.l.b16 %v1645
        %v2222 = vunpack.c.l.b16 %v1646
        %v2223 = vunpack.c.l.b16 %v1647
        %v2224 = vunpack.c.l.b16 %v1648
        %v2225 = vunpack.c.l.b16 %v1649
        %v2226 = vunpack.c.l.b16 %v1650
        %v2227 = vunpack.c.l.b16 %v1651
        %v2228 = vunpack.c.l.b16 %v1652
        %v2229 = vunpack.c.l.b16 %v1653
        %v2230 = vunpack.c.l.b16 %v1654
        %v2231 = vunpack.c.l.b16 %v1655
        %v2232 = vunpack.c.l.b16 %v1656
        %v2233 = vunpack.c.l.b16 %v1657
        %v2234 = vunpack.c.l.b16 %v1658
        %v2235 = vunpack.c.l.b16 %v1659
        %v2236 = vunpack.c.l.b16 %v1660
        %v2237 = vunpack.c.l.b16 %v1661
        %v2238 = vunpack.c.l.b16 %v1662
        %v2239 = vunpack.c.l.b16 %v1663
        %v2240 = vunpack.c.l.b16 %v1664
        %v2241 = vunpack.c.l.b16 %v1665
        %v2242 = vunpack.c.l.b16 %v1666
        %v2243 = vunpack.c.l.b16 %v1667
        %v2244 = vunpack.c.l.b16 %v1668
        %v2245 = vunpack.c.l.b16 %v1669
        %v2246 = vunpack.c.l.b16 %v1670
        %v2247 = vunpack.c.l.b16 %v1671
        %v2248 = vunpack.c.l.b16 %v1672
        %v2249 = vunpack.c.l.b16 %v1673
        %v2250 = vunpack.c.l.b16 %v1674
        %v2251 = vunpack.c.l.b16 %v1675
        %v2252 = vunpack.c.l.b16 %v1676
        %v2253 = vunpack.c.l.b16 %v1677
        %v2254 = vunpack.c.l.b16 %v1678
        %v2255 = vunpack.c.l.b16 %v1679
        %v2256 = vunpack.c.l.b16 %v1680
        %v2257 = vunpack.c.l.b16 %v1681
        %v2258 = vunpack.c.l.b16 %v1682
        %v2259 = vunpack.c.l.b16 %v1683
        %v2260 = vunpack.c.l.b16 %v1684
        %v2261 = vunpack.c.l.b16 %v1685
        %v2262 = vunpack.c.l.b16 %v1686
        %v2263 = vunpack.c.l.b16 %v1687
        %v2264 = vunpack.c.l.b16 %v1688
        %v2265 = vunpack.c.l.b16 %v1689
        %v2266 = vunpack.c.l.b16 %v1690
        %v2267 = vunpack.c.l.b16 %v1691
        %v2268 = vunpack.c.l.b16 %v1692
        %v2269 = vunpack.c.l.b16 %v1693
        %v2270 = vunpack.c.l.b16 %v1694
        %v2271 = vunpack.c.l.b16 %v1695
        %v2272 = vunpack.c.l.b16 %v1696
        %v2273 = vunpack.c.l.b16 %v1697
        %v2274 = vunpack.c.l.b16 %v1698
        %v2275 = vunpack.c.l.b16 %v1699
        %v2276 = vunpack.c.l.b16 %v1700
        %v2277 = vunpack.c.l.b16 %v1701
        %v2278 = vunpack.c.l.b16 %v1702
        %v2279 = vunpack.c.l.b16 %v1703
        %v2280 = vunpack.c.l.b16 %v1704
        %v2281 = vunpack.c.l.b16 %v1705
        %v2282 = vunpack.c.l.b16 %v1706
        %v2283 = vunpack.c.l.b16 %v1707
        %v2284 = vunpack.c.l.b16 %v1708
        %v2285 = vunpack.c.l.b16 %v1709
        %v2286 = vunpack.c.l.b16 %v1710
        %v2287 = vunpack.c.l.b16 %v1711
        %v2288 = vunpack.c.l.b16 %v1712
        %v2289 = vunpack.c.l.b16 %v1713
        %v2290 = vunpack.c.l.b16 %v1714
        %v2291 = vunpack.c.l.b16 %v1715
        %v2292 = vunpack.c.l.b16 %v1716
        %v2293 = vunpack.c.l.b16 %v1717
        %v2294 = vunpack.c.l.b16 %v1718
        %v2295 = vunpack.c.l.b16 %v1719
        %v2296 = vunpack.c.l.b16 %v1720
        %v2297 = vunpack.c.l.b16 %v1721
        %v2298 = vunpack.c.l.b16 %v1722
        %v2299 = vunpack.c.l.b16 %v1723
        %v2300 = vunpack.c.l.b16 %v1724
        %v2301 = vunpack.c.l.b16 %v1725
        %v2302 = vunpack.c.l.b16 %v1726
        %v2303 = vunpack.c.l.b16 %v1727
        %v2304 = vunpack.c.l.b16 %v1728
        %v2305 = vunpack.c.l.b16 %v1729
        %v2306 = vunpack.c.l.b16 %v1730
        %v2307 = vunpack.c.l.b16 %v1731
        %v2308 = vunpack.c.l.b16 %v1732
        %v2309 = vunpack.c.l.b16 %v1733
        %v2310 = vunpack.c.l.b16 %v1734
        %v2311 = vunpack.c.l.b16 %v1735
        %v2312 = vunpack.c.l.b16 %v1736
        %v2313 = vunpack.c.l.b16 %v1737
        %v2314 = vunpack.c.l.b16 %v1738
        %v2315 = vunpack.c.l.b16 %v1739
        %v2316 = vunpack.c.l.b16 %v1740
        %v2317 = vunpack.c.l.b16 %v1741
        %v2318 = vunpack.c.l.b16 %v1742
        %v2319 = vunpack.c.l.b16 %v1743
        %v2320 = vunpack.c.l.b16 %v1744
        %v2321 = vunpack.c.l.b16 %v1745
        %v2322 = vunpack.c.l.b16 %v1746
        %v2323 = vunpack.c.l.b16 %v1747
        %v2324 = vunpack.c.l.b16 %v1748
        %v2325 = vunpack.c.l.b16 %v1749
        %v2326 = vunpack.c.l.b16 %v1750
        %v2327 = vunpack.c.l.b16 %v1751
        %v2328 = vunpack.c.l.b16 %v1752
        %v2329 = vunpack.c.l.b16 %v1753
        %v2330 = vunpack.c.l.b16 %v1754
        %v2331 = vunpack.c.l.b16 %v1755
        %v2332 = vunpack.c.l.b16 %v1756
        %v2333 = vunpack.c.l.b16 %v1757
        %v2334 = vunpack.c.l.b16 %v1758
        %v2335 = vunpack.c.l.b16 %v1759
        %v2336 = vunpack.c.l.b16 %v1760
        %v2337 = vunpack.c.l.b16 %v1761
        %v2338 = vunpack.c.l.b16 %v1762
        %v2339 = vunpack.c.l.b16 %v1763
        %v2340 = vunpack.c.l.b16 %v1764
        %v2341 = vunpack.c.l.b16 %v1765
        %v2342 = vunpack.c.l.b16 %v1766
        %v2343 = vunpack.c.l.b16 %v1767
        %v2344 = vunpack.c.l.b16 %v1768
        %v2345 = vunpack.c.l.b16 %v1769
        %v2346 = vunpack.c.l.b16 %v1770
        %v2347 = vunpack.c.l.b16 %v1771
        %v2348 = vunpack.c.l.b16 %v1772
        %v2349 = vunpack.c.l.b16 %v1773
        %v2350 = vunpack.c.l.b16 %v1774
        %v2351 = vunpack.c.l.b16 %v1775
        %v2352 = vunpack.c.l.b16 %v1776
        %v2353 = vunpack.c.l.b16 %v1777
        %v2354 = vunpack.c.l.b16 %v1778
        %v2355 = vunpack.c.l.b16 %v1779
        %v2356 = vunpack.c.l.b16 %v1780
        %v2357 = vunpack.c.l.b16 %v1781
        %v2358 = vunpack.c.l.b16 %v1782
        %v2359 = vunpack.c.l.b16 %v1783
        %v2360 = vunpack.c.l.b16 %v1784
        %v2361 = vunpack.c.l.b16 %v1785
        %v2362 = vunpack.c.l.b16 %v1786
        %v2363 = vunpack.c.l.b16 %v1787
        %v2364 = vunpack.c.l.b16 %v1788
        %v2365 = vunpack.c.l.b16 %v1789
        %v2366 = vunpack.c.l.b16 %v1790
        %v2367 = vunpack.c.l.b16 %v1791
        %v2368 = vunpack.c.l.b16 %v1792
        %v2369 = vunpack.c.l.b16 %v1793
        %v2370 = vunpack.c.l.b16 %v1794
        %v2371 = vunpack.c.l.b16 %v1795
        %v2372 = vunpack.c.l.b16 %v1796
        %v2373 = vpack.c.b16 %v2086, %v2085
        %v2374 = vpack.c.b16 %v2088, %v2087
        %v2375 = vpack.c.b16 %v2090, %v2089
        %v2376 = vpack.c.b16 %v2092, %v2091
        %v2377 = vpack.c.b16 %v2094, %v2093
        %v2378 = vpack.c.b16 %v2096, %v2095
        %v2379 = vpack.c.b16 %v2098, %v2097
        %v2380 = vpack.c.b16 %v2100, %v2099
        %v2381 = vpack.c.b16 %v2102, %v2101
        %v2382 = vpack.c.b16 %v2104, %v2103
        %v2383 = vpack.c.b16 %v2106, %v2105
        %v2384 = vpack.c.b16 %v2108, %v2107
        %v2385 = vpack.c.b16 %v2110, %v2109
        %v2386 = vpack.c.b16 %v2112, %v2111
        %v2387 = vpack.c.b16 %v2114, %v2113
        %v2388 = vpack.c.b16 %v2116, %v2115
        %v2389 = vpack.c.b16 %v2118, %v2117
        %v2390 = vpack.c.b16 %v2120, %v2119
        %v2391 = vpack.c.b16 %v2122, %v2121
        %v2392 = vpack.c.b16 %v2124, %v2123
        %v2393 = vpack.c.b16 %v2126, %v2125
        %v2394 = vpack.c.b16 %v2128, %v2127
        %v2395 = vpack.c.b16 %v2130, %v2129
        %v2396 = vpack.c.b16 %v2132, %v2131
        %v2397 = vpack.c.b16 %v2134, %v2133
        %v2398 = vpack.c.b16 %v2136, %v2135
        %v2399 = vpack.c.b16 %v2138, %v2137
        %v2400 = vpack.c.b16 %v2140, %v2139
        %v2401 = vpack.c.b16 %v2142, %v2141
        %v2402 = vpack.c.b16 %v2144, %v2143
        %v2403 = vpack.c.b16 %v2146, %v2145
        %v2404 = vpack.c.b16 %v2148, %v2147
        %v2405 = vpack.c.b16 %v2150, %v2149
        %v2406 = vpack.c.b16 %v2152, %v2151
        %v2407 = vpack.c.b16 %v2154, %v2153
        %v2408 = vpack.c.b16 %v2156, %v2155
        %v2409 = vpack.c.b16 %v2158, %v2157
        %v2410 = vpack.c.b16 %v2160, %v2159
        %v2411 = vpack.c.b16 %v2162, %v2161
        %v2412 = vpack.c.b16 %v2164, %v2163
        %v2413 = vpack.c.b16 %v2166, %v2165
        %v2414 = vpack.c.b16 %v2168, %v2167
        %v2415 = vpack.c.b16 %v2170, %v2169
        %v2416 = vpack.c.b16 %v2172, %v2171
        %v2417 = vpack.c.b16 %v2174, %v2173
        %v2418 = vpack.c.b16 %v2176, %v2175
        %v2419 = vpack.c.b16 %v2178, %v2177
        %v2420 = vpack.c.b16 %v2180, %v2179
        %v2421 = vpack.c.b16 %v2182, %v2181
        %v2422 = vpack.c.b16 %v2184, %v2183
        %v2423 = vpack.c.b16 %v2186, %v2185
        %v2424 = vpack.c.b16 %v2188, %v2187
        %v2425 = vpack.c.b16 %v2190, %v2189
        %v2426 = vpack.c.b16 %v2192, %v2191
        %v2427 = vpack.c.b16 %v2194, %v2193
        %v2428 = vpack.c.b16 %v2196, %v2195
        %v2429 = vpack.c.b16 %v2198, %v2197
        %v2430 = vpack.c.b16 %v2200, %v2199
        %v2431 = vpack.c.b16 %v2202, %v2201
        %v2432 = vpack.c.b16 %v2204, %v2203
        %v2433 = vpack.c.b16 %v2206, %v2205
        %v2434 = vpack.c.b16 %v2208, %v2207
        %v2435 = vpack.c.b16 %v2210, %v2209
        %v2436 = vpack.c.b16 %v2212, %v2211
        %v2437 = vpack.c.b16 %v2214, %v2213
        %v2438 = vpack.c.b16 %v2216, %v2215
        %v2439 = vpack.c.b16 %v2218, %v2217
        %v2440 = vpack.c.b16 %v2220, %v2219
        %v2441 = vpack.c.b16 %v2222, %v2221
        %v2442 = vpack.c.b16 %v2224, %v2223
        %v2443 = vpack.c.b16 %v2226, %v2225
        %v2444 = vpack.c.b16 %v2228, %v2227
        %v2445 = vpack.c.b16 %v2230, %v2229
        %v2446 = vpack.c.b16 %v2232, %v2231
        %v2447 = vpack.c.b16 %v2234, %v2233
        %v2448 = vpack.c.b16 %v2236, %v2235
        %v2449 = vpack.c.b16 %v2238, %v2237
        %v2450 = vpack.c.b16 %v2240, %v2239
        %v2451 = vpack.c.b16 %v2242, %v2241
        %v2452 = vpack.c.b16 %v2244, %v2243
        %v2453 = vpack.c.b16 %v2246, %v2245
        %v2454 = vpack.c.b16 %v2248, %v2247
        %v2455 = vpack.c.b16 %v2250, %v2249
        %v2456 = vpack.c.b16 %v2252, %v2251
        %v2457 = vpack.c.b16 %v2254, %v2253
        %v2458 = vpack.c.b16 %v2256, %v2255
        %v2459 = vpack.c.b16 %v2258, %v2257
        %v2460 = vpack.c.b16 %v2260, %v2259
        %v2461 = vpack.c.b16 %v2262, %v2261
        %v2462 = vpack.c.b16 %v2264, %v2263
        %v2463 = vpack.c.b16 %v2266, %v2265
        %v2464 = vpack.c.b16 %v2268, %v2267
        %v2465 = vpack.c.b16 %v2270, %v2269
        %v2466 = vpack.c.b16 %v2272, %v2271
        %v2467 = vpack.c.b16 %v2274, %v2273
        %v2468 = vpack.c.b16 %v2276, %v2275
        %v2469 = vpack.c.b16 %v2278, %v2277
        %v2470 = vpack.c.b16 %v2280, %v2279
        %v2471 = vpack.c.b16 %v2282, %v2281
        %v2472 = vpack.c.b16 %v2284, %v2283
        %v2473 = vpack.c.b16 %v2286, %v2285
        %v2474 = vpack.c.b16 %v2288, %v2287
        %v2475 = vpack.c.b16 %v2290, %v2289
        %v2476 = vpack.c.b16 %v2292, %v2291
        %v2477 = vpack.c.b16 %v2294, %v2293
        %v2478 = vpack.c.b16 %v2296, %v2295
        %v2479 = vpack.c.b16 %v2298, %v2297
        %v2480 = vpack.c.b16 %v2300, %v2299
        %v2481 = vpack.c.b16 %v2302, %v2301
        %v2482 = vpack.c.b16 %v2304, %v2303
        %v2483 = vpack.c.b16 %v2306, %v2305
        %v2484 = vpack.c.b16 %v2308, %v2307
        %v2485 = vpack.c.b16 %v2310, %v2309
        %v2486 = vpack.c.b16 %v2312, %v2311
        %v2487 = vpack.c.b16 %v2314, %v2313
        %v2488 = vpack.c.b16 %v2316, %v2315
        %v2489 = vpack.c.b16 %v2318, %v2317
        %v2490 = vpack.c.b16 %v2320, %v2319
        %v2491 = vpack.c.b16 %v2322, %v2321
        %v2492 = vpack.c.b16 %v2324, %v2323
        %v2493 = vpack.c.b16 %v2326, %v2325
        %v2494 = vpack.c.b16 %v2328, %v2327
        %v2495 = vpack.c.b16 %v2330, %v2329
        %v2496 = vpack.c.b16 %v2332, %v2331
        %v2497 = vpack.c.b16 %v2334, %v2333
        %v2498 = vpack.c.b16 %v2336, %v2335
        %v2499 = vpack.c.b16 %v2338, %v2337
        %v2500 = vpack.c.b16 %v2340, %v2339
        %v2501 = vpack.c.b16 %v2342, %v2341
        %v2502 = vpack.c.b16 %v2344, %v2343
        %v2503 = vpack.c.b16 %v2346, %v2345
        %v2504 = vpack.c.b16 %v2348, %v2347
        %v2505 = vpack.c.b16 %v2350, %v2349
        %v2506 = vpack.c.b16 %v2352, %v2351
        %v2507 = vpack.c.b16 %v2354, %v2353
        %v2508 = vpack.c.b16 %v2356, %v2355
        %v2509 = vpack.c.b16 %v2358, %v2357
        %v2510 = vpack.c.b16 %v2360, %v2359
        %v2511 = vpack.c.b16 %v2362, %v2361
        %v2512 = vpack.c.b16 %v2364, %v2363
        %v2513 = vpack.c.b16 %v2366, %v2365
        %v2514 = vpack.c.b16 %v2368, %v2367
        %v2515 = vpack.c.b16 %v2370, %v2369
        %v2516 = vpack.c.b16 %v2372, %v2371
        %2661 = vmatprep.subr.bf16.mxu0 0
        %2662 = vmatpush1.bf16.msra.mxu0 %v2380
        %2663 = vmatprep.subr.bf16.mxu0 0
        %2664 = vmatpush1.bf16.msra.mxu0 %v2379
        %2665 = vmatprep.subr.bf16.mxu0 0
        %2666 = vmatpush1.bf16.msra.mxu0 %v2378
        %2667 = vmatprep.subr.bf16.mxu0 0
        %2668 = vmatpush1.bf16.msra.mxu0 %v2377
        %2669 = vmatprep.subr.bf16.mxu0 0
        %2670 = vmatpush1.bf16.msra.mxu0 %v2376
        %2671 = vmatprep.subr.bf16.mxu0 0
        %2672 = vmatpush1.bf16.msra.mxu0 %v2375
        %2673 = vmatprep.subr.bf16.mxu0 0
        %2674 = vmatpush1.bf16.msra.mxu0 %v2374
        %2675 = vmatprep.subr.bf16.mxu0 0
        %2676 = vmatpush1.bf16.msra.mxu0 %v2373
        %2677 = vmatprep.subr.bf16.mxu0 0
        %2678 = vmatpush2.bf16.msra.mxu0 %v2388
        %2679 = vmatprep.subr.bf16.mxu0 0
        %2680 = vmatpush2.bf16.msra.mxu0 %v2387
        %2681 = vmatprep.subr.bf16.mxu0 0
        %2682 = vmatpush2.bf16.msra.mxu0 %v2386
        %2683 = vmatprep.subr.bf16.mxu0 0
        %2684 = vmatpush2.bf16.msra.mxu0 %v2385
        %2685 = vmatprep.subr.bf16.mxu0 0
        %2686 = vmatpush2.bf16.msra.mxu0 %v2384
        %2687 = vmatprep.subr.bf16.mxu0 0
        %2688 = vmatpush2.bf16.msra.mxu0 %v2383
        %2689 = vmatprep.subr.bf16.mxu0 0
        %2690 = vmatpush2.bf16.msra.mxu0 %v2382
        %2691 = vmatprep.subr.bf16.mxu0 0
        %2692 = vmatpush2.bf16.msra.mxu0 %v2381
        %2693 = vmatprep.mubr.bf16.mxu0 %v1492
        %2694 = vmatmul.mubr.bf16.gmra.mxu0 %v1491
        %v2695 = vpop.f32.mrf.mxu0
        %v2696 = vadd.f32 0.0, %v2695
        %v2697 = vpop.f32.mrf.mxu0
        %v2698 = vpop.f32.mrf.mxu0
        %v2699 = vpop.f32.mrf.mxu0
        %2700 = vdwg.mxu0
        %2701 = vmatprep.subr.bf16.mxu0 0
        %2702 = vmatpush1.bf16.msra.mxu0 %v2396
        %2703 = vmatprep.subr.bf16.mxu0 0
        %2704 = vmatpush1.bf16.msra.mxu0 %v2395
        %2705 = vmatprep.subr.bf16.mxu0 0
        %2706 = vmatpush1.bf16.msra.mxu0 %v2394
        %2707 = vmatprep.subr.bf16.mxu0 0
        %2708 = vmatpush1.bf16.msra.mxu0 %v2393
        %2709 = vmatprep.subr.bf16.mxu0 0
        %2710 = vmatpush1.bf16.msra.mxu0 %v2392
        %2711 = vmatprep.subr.bf16.mxu0 0
        %2712 = vmatpush1.bf16.msra.mxu0 %v2391
        %2713 = vmatprep.subr.bf16.mxu0 0
        %2714 = vmatpush1.bf16.msra.mxu0 %v2390
        %2715 = vmatprep.subr.bf16.mxu0 0
        %2716 = vmatpush1.bf16.msra.mxu0 %v2389
        %2717 = vmatprep.subr.bf16.mxu0 0
        %2718 = vmatpush2.bf16.msra.mxu0 %v2404
        %2719 = vmatprep.subr.bf16.mxu0 0
        %2720 = vmatpush2.bf16.msra.mxu0 %v2403
        %2721 = vmatprep.subr.bf16.mxu0 0
        %2722 = vmatpush2.bf16.msra.mxu0 %v2402
        %2723 = vmatprep.subr.bf16.mxu0 0
        %2724 = vmatpush2.bf16.msra.mxu0 %v2401
        %2725 = vmatprep.subr.bf16.mxu0 0
        %2726 = vmatpush2.bf16.msra.mxu0 %v2400
        %2727 = vmatprep.subr.bf16.mxu0 0
        %2728 = vmatpush2.bf16.msra.mxu0 %v2399
        %2729 = vmatprep.subr.bf16.mxu0 0
        %2730 = vmatpush2.bf16.msra.mxu0 %v2398
        %2731 = vmatprep.subr.bf16.mxu0 0
        %2732 = vmatpush2.bf16.msra.mxu0 %v2397
        %2733 = vmatprep.mubr.bf16.mxu0 %v1494
        %2734 = vmatmul.mubr.bf16.gmra.mxu0 %v1493
        %v2735 = vpop.f32.mrf.mxu0
        %v2736 = vadd.f32 %v2696, %v2735
        %v2737 = vpop.f32.mrf.mxu0
        %v2738 = vpop.f32.mrf.mxu0
        %v2739 = vpop.f32.mrf.mxu0
        %2740 = vdwg.mxu0
        %2741 = vmatprep.subr.bf16.mxu0 0
        %2742 = vmatpush1.bf16.msra.mxu0 %v2412
        %2743 = vmatprep.subr.bf16.mxu0 0
        %2744 = vmatpush1.bf16.msra.mxu0 %v2411
        %2745 = vmatprep.subr.bf16.mxu0 0
        %2746 = vmatpush1.bf16.msra.mxu0 %v2410
        %2747 = vmatprep.subr.bf16.mxu0 0
        %2748 = vmatpush1.bf16.msra.mxu0 %v2409
        %2749 = vmatprep.subr.bf16.mxu0 0
        %2750 = vmatpush1.bf16.msra.mxu0 %v2408
        %2751 = vmatprep.subr.bf16.mxu0 0
        %2752 = vmatpush1.bf16.msra.mxu0 %v2407
        %2753 = vmatprep.subr.bf16.mxu0 0
        %2754 = vmatpush1.bf16.msra.mxu0 %v2406
        %2755 = vmatprep.subr.bf16.mxu0 0
        %2756 = vmatpush1.bf16.msra.mxu0 %v2405
        %2757 = vmatprep.subr.bf16.mxu0 0
        %2758 = vmatpush2.bf16.msra.mxu0 %v2420
        %2759 = vmatprep.subr.bf16.mxu0 0
        %2760 = vmatpush2.bf16.msra.mxu0 %v2419
        %2761 = vmatprep.subr.bf16.mxu0 0
        %2762 = vmatpush2.bf16.msra.mxu0 %v2418
        %2763 = vmatprep.subr.bf16.mxu0 0
        %2764 = vmatpush2.bf16.msra.mxu0 %v2417
        %2765 = vmatprep.subr.bf16.mxu0 0
        %2766 = vmatpush2.bf16.msra.mxu0 %v2416
        %2767 = vmatprep.subr.bf16.mxu0 0
        %2768 = vmatpush2.bf16.msra.mxu0 %v2415
        %2769 = vmatprep.subr.bf16.mxu0 0
        %2770 = vmatpush2.bf16.msra.mxu0 %v2414
        %2771 = vmatprep.subr.bf16.mxu0 0
        %2772 = vmatpush2.bf16.msra.mxu0 %v2413
        %2773 = vmatprep.mubr.bf16.mxu0 %v1496
        %2774 = vmatmul.mubr.bf16.gmra.mxu0 %v1495
        %v2775 = vpop.f32.mrf.mxu0
        %v2776 = vadd.f32 %v2736, %v2775
        %v2777 = vpop.f32.mrf.mxu0
        %v2778 = vpop.f32.mrf.mxu0
        %v2779 = vpop.f32.mrf.mxu0
        %2780 = vdwg.mxu0
        %2781 = vmatprep.subr.bf16.mxu0 0
        %2782 = vmatpush1.bf16.msra.mxu0 %v2428
        %2783 = vmatprep.subr.bf16.mxu0 0
        %2784 = vmatpush1.bf16.msra.mxu0 %v2427
        %2785 = vmatprep.subr.bf16.mxu0 0
        %2786 = vmatpush1.bf16.msra.mxu0 %v2426
        %2787 = vmatprep.subr.bf16.mxu0 0
        %2788 = vmatpush1.bf16.msra.mxu0 %v2425
        %2789 = vmatprep.subr.bf16.mxu0 0
        %2790 = vmatpush1.bf16.msra.mxu0 %v2424
        %2791 = vmatprep.subr.bf16.mxu0 0
        %2792 = vmatpush1.bf16.msra.mxu0 %v2423
        %2793 = vmatprep.subr.bf16.mxu0 0
        %2794 = vmatpush1.bf16.msra.mxu0 %v2422
        %2795 = vmatprep.subr.bf16.mxu0 0
        %2796 = vmatpush1.bf16.msra.mxu0 %v2421
        %2797 = vmatprep.subr.bf16.mxu0 0
        %2798 = vmatpush2.bf16.msra.mxu0 %v2436
        %2799 = vmatprep.subr.bf16.mxu0 0
        %2800 = vmatpush2.bf16.msra.mxu0 %v2435
        %2801 = vmatprep.subr.bf16.mxu0 0
        %2802 = vmatpush2.bf16.msra.mxu0 %v2434
        %2803 = vmatprep.subr.bf16.mxu0 0
        %2804 = vmatpush2.bf16.msra.mxu0 %v2433
        %2805 = vmatprep.subr.bf16.mxu0 0
        %2806 = vmatpush2.bf16.msra.mxu0 %v2432
        %2807 = vmatprep.subr.bf16.mxu0 0
        %2808 = vmatpush2.bf16.msra.mxu0 %v2431
        %2809 = vmatprep.subr.bf16.mxu0 0
        %2810 = vmatpush2.bf16.msra.mxu0 %v2430
        %2811 = vmatprep.subr.bf16.mxu0 0
        %2812 = vmatpush2.bf16.msra.mxu0 %v2429
        %2813 = vmatprep.mubr.bf16.mxu0 %v1498
        %2814 = vmatmul.mubr.bf16.gmra.mxu0 %v1497
        %v2815 = vpop.f32.mrf.mxu0
        %v2816 = vadd.f32 %v2776, %v2815
        %v2817 = vpop.f32.mrf.mxu0
        %v2818 = vpop.f32.mrf.mxu0
        %v2819 = vpop.f32.mrf.mxu0
        %2820 = vdwg.mxu0
        %2821 = vmatprep.subr.bf16.mxu0 0
        %2822 = vmatpush1.bf16.msra.mxu0 %v2444
        %2823 = vmatprep.subr.bf16.mxu0 0
        %2824 = vmatpush1.bf16.msra.mxu0 %v2443
        %2825 = vmatprep.subr.bf16.mxu0 0
        %2826 = vmatpush1.bf16.msra.mxu0 %v2442
        %2827 = vmatprep.subr.bf16.mxu0 0
        %2828 = vmatpush1.bf16.msra.mxu0 %v2441
        %2829 = vmatprep.subr.bf16.mxu0 0
        %2830 = vmatpush1.bf16.msra.mxu0 %v2440
        %2831 = vmatprep.subr.bf16.mxu0 0
        %2832 = vmatpush1.bf16.msra.mxu0 %v2439
        %2833 = vmatprep.subr.bf16.mxu0 0
        %2834 = vmatpush1.bf16.msra.mxu0 %v2438
        %2835 = vmatprep.subr.bf16.mxu0 0
        %2836 = vmatpush1.bf16.msra.mxu0 %v2437
        %2837 = vmatprep.subr.bf16.mxu0 0
        %2838 = vmatpush2.bf16.msra.mxu0 %v2452
        %2839 = vmatprep.subr.bf16.mxu0 0
        %2840 = vmatpush2.bf16.msra.mxu0 %v2451
        %2841 = vmatprep.subr.bf16.mxu0 0
        %2842 = vmatpush2.bf16.msra.mxu0 %v2450
        %2843 = vmatprep.subr.bf16.mxu0 0
        %2844 = vmatpush2.bf16.msra.mxu0 %v2449
        %2845 = vmatprep.subr.bf16.mxu0 0
        %2846 = vmatpush2.bf16.msra.mxu0 %v2448
        %2847 = vmatprep.subr.bf16.mxu0 0
        %2848 = vmatpush2.bf16.msra.mxu0 %v2447
        %2849 = vmatprep.subr.bf16.mxu0 0
        %2850 = vmatpush2.bf16.msra.mxu0 %v2446
        %2851 = vmatprep.subr.bf16.mxu0 0
        %2852 = vmatpush2.bf16.msra.mxu0 %v2445
        %2853 = vmatprep.mubr.bf16.mxu0 %v1500
        %2854 = vmatmul.mubr.bf16.gmra.mxu0 %v1499
        %v2855 = vpop.f32.mrf.mxu0
        %v2856 = vadd.f32 %v2816, %v2855
        %v2857 = vpop.f32.mrf.mxu0
        %v2858 = vpop.f32.mrf.mxu0
        %v2859 = vpop.f32.mrf.mxu0
        %2860 = vdwg.mxu0
        %2861 = vmatprep.subr.bf16.mxu0 0
        %2862 = vmatpush1.bf16.msra.mxu0 %v2460
        %2863 = vmatprep.subr.bf16.mxu0 0
        %2864 = vmatpush1.bf16.msra.mxu0 %v2459
        %2865 = vmatprep.subr.bf16.mxu0 0
        %2866 = vmatpush1.bf16.msra.mxu0 %v2458
        %2867 = vmatprep.subr.bf16.mxu0 0
        %2868 = vmatpush1.bf16.msra.mxu0 %v2457
        %2869 = vmatprep.subr.bf16.mxu0 0
        %2870 = vmatpush1.bf16.msra.mxu0 %v2456
        %2871 = vmatprep.subr.bf16.mxu0 0
        %2872 = vmatpush1.bf16.msra.mxu0 %v2455
        %2873 = vmatprep.subr.bf16.mxu0 0
        %2874 = vmatpush1.bf16.msra.mxu0 %v2454
        %2875 = vmatprep.subr.bf16.mxu0 0
        %2876 = vmatpush1.bf16.msra.mxu0 %v2453
        %2877 = vmatprep.subr.bf16.mxu0 0
        %2878 = vmatpush2.bf16.msra.mxu0 %v2468
        %2879 = vmatprep.subr.bf16.mxu0 0
        %2880 = vmatpush2.bf16.msra.mxu0 %v2467
        %2881 = vmatprep.subr.bf16.mxu0 0
        %2882 = vmatpush2.bf16.msra.mxu0 %v2466
        %2883 = vmatprep.subr.bf16.mxu0 0
        %2884 = vmatpush2.bf16.msra.mxu0 %v2465
        %2885 = vmatprep.subr.bf16.mxu0 0
        %2886 = vmatpush2.bf16.msra.mxu0 %v2464
        %2887 = vmatprep.subr.bf16.mxu0 0
        %2888 = vmatpush2.bf16.msra.mxu0 %v2463
        %2889 = vmatprep.subr.bf16.mxu0 0
        %2890 = vmatpush2.bf16.msra.mxu0 %v2462
        %2891 = vmatprep.subr.bf16.mxu0 0
        %2892 = vmatpush2.bf16.msra.mxu0 %v2461
        %2893 = vmatprep.mubr.bf16.mxu0 %v1502
        %2894 = vmatmul.mubr.bf16.gmra.mxu0 %v1501
        %v2895 = vpop.f32.mrf.mxu0
        %v2896 = vadd.f32 %v2856, %v2895
        %v2897 = vpop.f32.mrf.mxu0
        %v2898 = vpop.f32.mrf.mxu0
        %v2899 = vpop.f32.mrf.mxu0
        %2900 = vdwg.mxu0
        %2901 = vmatprep.subr.bf16.mxu0 0
        %2902 = vmatpush1.bf16.msra.mxu0 %v2476
        %2903 = vmatprep.subr.bf16.mxu0 0
        %2904 = vmatpush1.bf16.msra.mxu0 %v2475
        %2905 = vmatprep.subr.bf16.mxu0 0
        %2906 = vmatpush1.bf16.msra.mxu0 %v2474
        %2907 = vmatprep.subr.bf16.mxu0 0
        %2908 = vmatpush1.bf16.msra.mxu0 %v2473
        %2909 = vmatprep.subr.bf16.mxu0 0
        %2910 = vmatpush1.bf16.msra.mxu0 %v2472
        %2911 = vmatprep.subr.bf16.mxu0 0
        %2912 = vmatpush1.bf16.msra.mxu0 %v2471
        %2913 = vmatprep.subr.bf16.mxu0 0
        %2914 = vmatpush1.bf16.msra.mxu0 %v2470
        %2915 = vmatprep.subr.bf16.mxu0 0
        %2916 = vmatpush1.bf16.msra.mxu0 %v2469
        %2917 = vmatprep.subr.bf16.mxu0 0
        %2918 = vmatpush2.bf16.msra.mxu0 %v2484
        %2919 = vmatprep.subr.bf16.mxu0 0
        %2920 = vmatpush2.bf16.msra.mxu0 %v2483
        %2921 = vmatprep.subr.bf16.mxu0 0
        %2922 = vmatpush2.bf16.msra.mxu0 %v2482
        %2923 = vmatprep.subr.bf16.mxu0 0
        %2924 = vmatpush2.bf16.msra.mxu0 %v2481
        %2925 = vmatprep.subr.bf16.mxu0 0
        %2926 = vmatpush2.bf16.msra.mxu0 %v2480
        %2927 = vmatprep.subr.bf16.mxu0 0
        %2928 = vmatpush2.bf16.msra.mxu0 %v2479
        %2929 = vmatprep.subr.bf16.mxu0 0
        %2930 = vmatpush2.bf16.msra.mxu0 %v2478
        %2931 = vmatprep.subr.bf16.mxu0 0
        %2932 = vmatpush2.bf16.msra.mxu0 %v2477
        %2933 = vmatprep.mubr.bf16.mxu0 %v1504
        %2934 = vmatmul.mubr.bf16.gmra.mxu0 %v1503
        %v2935 = vpop.f32.mrf.mxu0
        %v2936 = vadd.f32 %v2896, %v2935
        %v2937 = vpop.f32.mrf.mxu0
        %v2938 = vpop.f32.mrf.mxu0
        %v2939 = vpop.f32.mrf.mxu0
        %2940 = vdwg.mxu0
        %2941 = vmatprep.subr.bf16.mxu0 0
        %2942 = vmatpush1.bf16.msra.mxu0 %v2492
        %2943 = vmatprep.subr.bf16.mxu0 0
        %2944 = vmatpush1.bf16.msra.mxu0 %v2491
        %2945 = vmatprep.subr.bf16.mxu0 0
        %2946 = vmatpush1.bf16.msra.mxu0 %v2490
        %2947 = vmatprep.subr.bf16.mxu0 0
        %2948 = vmatpush1.bf16.msra.mxu0 %v2489
        %2949 = vmatprep.subr.bf16.mxu0 0
        %2950 = vmatpush1.bf16.msra.mxu0 %v2488
        %2951 = vmatprep.subr.bf16.mxu0 0
        %2952 = vmatpush1.bf16.msra.mxu0 %v2487
        %2953 = vmatprep.subr.bf16.mxu0 0
        %2954 = vmatpush1.bf16.msra.mxu0 %v2486
        %2955 = vmatprep.subr.bf16.mxu0 0
        %2956 = vmatpush1.bf16.msra.mxu0 %v2485
        %2957 = vmatprep.subr.bf16.mxu0 0
        %2958 = vmatpush2.bf16.msra.mxu0 %v2500
        %2959 = vmatprep.subr.bf16.mxu0 0
        %2960 = vmatpush2.bf16.msra.mxu0 %v2499
        %2961 = vmatprep.subr.bf16.mxu0 0
        %2962 = vmatpush2.bf16.msra.mxu0 %v2498
        %2963 = vmatprep.subr.bf16.mxu0 0
        %2964 = vmatpush2.bf16.msra.mxu0 %v2497
        %2965 = vmatprep.subr.bf16.mxu0 0
        %2966 = vmatpush2.bf16.msra.mxu0 %v2496
        %2967 = vmatprep.subr.bf16.mxu0 0
        %2968 = vmatpush2.bf16.msra.mxu0 %v2495
        %2969 = vmatprep.subr.bf16.mxu0 0
        %2970 = vmatpush2.bf16.msra.mxu0 %v2494
        %2971 = vmatprep.subr.bf16.mxu0 0
        %2972 = vmatpush2.bf16.msra.mxu0 %v2493
        %2973 = vmatprep.mubr.bf16.mxu0 %v1506
        %2974 = vmatmul.mubr.bf16.gmra.mxu0 %v1505
        %v2975 = vpop.f32.mrf.mxu0
        %v2976 = vadd.f32 %v2936, %v2975
        %v2977 = vpop.f32.mrf.mxu0
        %v2978 = vpop.f32.mrf.mxu0
        %v2979 = vpop.f32.mrf.mxu0
        %2980 = vdwg.mxu0
        %2981 = vmatprep.subr.bf16.mxu0 0
        %2982 = vmatpush1.bf16.msra.mxu0 %v2508
        %2983 = vmatprep.subr.bf16.mxu0 0
        %2984 = vmatpush1.bf16.msra.mxu0 %v2507
        %2985 = vmatprep.subr.bf16.mxu0 0
        %2986 = vmatpush1.bf16.msra.mxu0 %v2506
        %2987 = vmatprep.subr.bf16.mxu0 0
        %2988 = vmatpush1.bf16.msra.mxu0 %v2505
        %2989 = vmatprep.subr.bf16.mxu0 0
        %2990 = vmatpush1.bf16.msra.mxu0 %v2504
        %2991 = vmatprep.subr.bf16.mxu0 0
        %2992 = vmatpush1.bf16.msra.mxu0 %v2503
        %2993 = vmatprep.subr.bf16.mxu0 0
        %2994 = vmatpush1.bf16.msra.mxu0 %v2502
        %2995 = vmatprep.subr.bf16.mxu0 0
        %2996 = vmatpush1.bf16.msra.mxu0 %v2501
        %2997 = vmatprep.subr.bf16.mxu0 0
        %2998 = vmatpush2.bf16.msra.mxu0 %v2516
        %2999 = vmatprep.subr.bf16.mxu0 0
        %3000 = vmatpush2.bf16.msra.mxu0 %v2515
        %3001 = vmatprep.subr.bf16.mxu0 0
        %3002 = vmatpush2.bf16.msra.mxu0 %v2514
        %3003 = vmatprep.subr.bf16.mxu0 0
        %3004 = vmatpush2.bf16.msra.mxu0 %v2513
        %3005 = vmatprep.subr.bf16.mxu0 0
        %3006 = vmatpush2.bf16.msra.mxu0 %v2512
        %3007 = vmatprep.subr.bf16.mxu0 0
        %3008 = vmatpush2.bf16.msra.mxu0 %v2511
        %3009 = vmatprep.subr.bf16.mxu0 0
        %3010 = vmatpush2.bf16.msra.mxu0 %v2510
        %3011 = vmatprep.subr.bf16.mxu0 0
        %3012 = vmatpush2.bf16.msra.mxu0 %v2509
        %3013 = vmatprep.mubr.bf16.mxu0 %v1508
        %3014 = vmatmul.mubr.bf16.gmra.mxu0 %v1507
        %v3015 = vpop.f32.mrf.mxu0
        %v3016 = vadd.f32 %v2976, %v3015
        %v3017 = vpop.f32.mrf.mxu0
        %v3018 = vpop.f32.mrf.mxu0
        %v3019 = vpop.f32.mrf.mxu0
        %3020 = vdwg.mxu0
        %v3021 = vxor.u32 %v3016, 2147483648
        %v3022 = vmul.f32 %v3021, 1.442695
        %v3023 = vpow.pop %v3022
        %v3024 = vadd.f32 %v3023, 1.0
        %v3025 = vrcp.pop %v3024
        %v3026 = vmul.f32 1.0, %v3025
        %v3027 = vmul.f32 %v3016, %v3026
        %vm3028 = vcmp.ge.f32.partialorder %v3016, -2.2
        %vm3029 = vcmp.lt.f32.partialorder %v3016, -1.8
        %vm3030 = vmand %vm3028, %vm3029
        %v3031 = vsel %vm3030, 1, 0
        %v3032 = vcvt.s32.f32 %v3031
        %vm3033 = vcmp.ge.f32.partialorder %v3016, -1.8
        %vm3034 = vcmp.lt.f32.partialorder %v3016, -1.4
        %vm3035 = vmand %vm3033, %vm3034
        %v3036 = vsel %vm3035, 1, 0
        %v3037 = vcvt.s32.f32 %v3036
        %vm3038 = vcmp.ge.f32.partialorder %v3016, -1.4
        %vm3039 = vcmp.lt.f32.partialorder %v3016, -1.0
        %vm3040 = vmand %vm3038, %vm3039
        %v3041 = vsel %vm3040, 1, 0
        %v3042 = vcvt.s32.f32 %v3041
        %vm3043 = vcmp.ge.f32.partialorder %v3016, -1.0
        %vm3044 = vcmp.lt.f32.partialorder %v3016, -0.6
        %vm3045 = vmand %vm3043, %vm3044
        %v3046 = vsel %vm3045, 1, 0
        %v3047 = vcvt.s32.f32 %v3046
        %vm3048 = vcmp.ge.f32.partialorder %v3016, -0.6
        %vm3049 = vcmp.lt.f32.partialorder %v3016, -0.2
        %vm3050 = vmand %vm3048, %vm3049
        %v3051 = vsel %vm3050, 1, 0
        %v3052 = vcvt.s32.f32 %v3051
        %vm3053 = vcmp.ge.f32.partialorder %v3016, -0.2
        %vm3054 = vcmp.lt.f32.partialorder %v3016, 0.2
        %vm3055 = vmand %vm3053, %vm3054
        %v3056 = vsel %vm3055, 1, 0
        %v3057 = vcvt.s32.f32 %v3056
        %vm3058 = vcmp.ge.f32.partialorder %v3016, 0.2
        %vm3059 = vcmp.lt.f32.partialorder %v3016, 0.6
        %vm3060 = vmand %vm3058, %vm3059
        %v3061 = vsel %vm3060, 1, 0
        %v3062 = vcvt.s32.f32 %v3061
        %vm3063 = vcmp.ge.f32.partialorder %v3016, 0.6
        %vm3064 = vcmp.lt.f32.partialorder %v3016, 1.0
        %vm3065 = vmand %vm3063, %vm3064
        %v3066 = vsel %vm3065, 1, 0
        %v3067 = vcvt.s32.f32 %v3066
        %vm3068 = vcmp.ge.f32.partialorder %v3016, 1.0
        %vm3069 = vcmp.lt.f32.partialorder %v3016, 1.4
        %vm3070 = vmand %vm3068, %vm3069
        %v3071 = vsel %vm3070, 1, 0
        %v3072 = vcvt.s32.f32 %v3071
        %vm3073 = vcmp.ge.f32.partialorder %v3016, 1.4
        %vm3074 = vcmp.lt.f32.partialorder %v3016, 1.8
        %vm3075 = vmand %vm3073, %vm3074
        %v3076 = vsel %vm3075, 1, 0
        %v3077 = vcvt.s32.f32 %v3076
        %vm3078 = vcmp.ge.f32.partialorder %v3016, 1.8
        %vm3079 = vcmp.lt.f32.partialorder %v3016, 2.2
        %vm3080 = vmand %vm3078, %vm3079
        %v3081 = vsel %vm3080, 1, 0
        %v3082 = vcvt.s32.f32 %v3081
        %v3083 = vsub.f32 %v3016, -2.2
        %v3084 = vmul.f32 %v3083, 2.5
        %v3085 = vmul.f32 %v3084, %v3032
        %v3086 = vsub.f32 -1.4, %v3016
        %v3087 = vmul.f32 %v3086, 2.5
        %v3088 = vmul.f32 %v3087, %v3037
        %v3089 = vadd.f32 %v3085, %v3088
        %v3090 = vsub.f32 %v3016, -1.8
        %v3091 = vmul.f32 %v3090, 2.5
        %v3092 = vmul.f32 %v3091, %v3037
        %v3093 = vsub.f32 -1.0, %v3016
        %v3094 = vmul.f32 %v3093, 2.5
        %v3095 = vmul.f32 %v3094, %v3042
        %v3096 = vadd.f32 %v3092, %v3095
        %v3097 = vsub.f32 %v3016, -1.4
        %v3098 = vmul.f32 %v3097, 2.5
        %v3099 = vmul.f32 %v3098, %v3042
        %v3100 = vsub.f32 -0.6, %v3016
        %v3101 = vmul.f32 %v3100, 2.5
        %v3102 = vmul.f32 %v3101, %v3047
        %v3103 = vadd.f32 %v3099, %v3102
        %v3104 = vsub.f32 %v3016, -1.0
        %v3105 = vmul.f32 %v3104, 2.5
        %v3106 = vmul.f32 %v3105, %v3047
        %v3107 = vsub.f32 -0.2, %v3016
        %v3108 = vmul.f32 %v3107, 2.5
        %v3109 = vmul.f32 %v3108, %v3052
        %v3110 = vadd.f32 %v3106, %v3109
        %v3111 = vsub.f32 %v3016, -0.6
        %v3112 = vmul.f32 %v3111, 2.5
        %v3113 = vmul.f32 %v3112, %v3052
        %v3114 = vsub.f32 0.2, %v3016
        %v3115 = vmul.f32 %v3114, 2.5
        %v3116 = vmul.f32 %v3115, %v3057
        %v3117 = vadd.f32 %v3113, %v3116
        %v3118 = vsub.f32 %v3016, -0.2
        %v3119 = vmul.f32 %v3118, 2.5
        %v3120 = vmul.f32 %v3119, %v3057
        %v3121 = vsub.f32 0.6, %v3016
        %v3122 = vmul.f32 %v3121, 2.5
        %v3123 = vmul.f32 %v3122, %v3062
        %v3124 = vadd.f32 %v3120, %v3123
        %v3125 = vsub.f32 %v3016, 0.2
        %v3126 = vmul.f32 %v3125, 2.5
        %v3127 = vmul.f32 %v3126, %v3062
        %v3128 = vsub.f32 1.0, %v3016
        %v3129 = vmul.f32 %v3128, 2.5
        %v3130 = vmul.f32 %v3129, %v3067
        %v3131 = vadd.f32 %v3127, %v3130
        %v3132 = vsub.f32 %v3016, 0.6
        %v3133 = vmul.f32 %v3132, 2.5
        %v3134 = vmul.f32 %v3133, %v3067
        %v3135 = vsub.f32 1.4, %v3016
        %v3136 = vmul.f32 %v3135, 2.5
        %v3137 = vmul.f32 %v3136, %v3072
        %v3138 = vadd.f32 %v3134, %v3137
        %v3139 = vsub.f32 %v3016, 1.0
        %v3140 = vmul.f32 %v3139, 2.5
        %v3141 = vmul.f32 %v3140, %v3072
        %v3142 = vsub.f32 1.8, %v3016
        %v3143 = vmul.f32 %v3142, 2.5
        %v3144 = vmul.f32 %v3143, %v3077
        %v3145 = vadd.f32 %v3141, %v3144
        %v3146 = vsub.f32 %v3016, 1.4
        %v3147 = vmul.f32 %v3146, 2.5
        %v3148 = vmul.f32 %v3147, %v3077
        %v3149 = vsub.f32 2.2, %v3016
        %v3150 = vmul.f32 %v3149, 2.5
        %v3151 = vmul.f32 %v3150, %v3082
        %v3152 = vadd.f32 %v3148, %v3151
        %v3153 = vmul.f32 %v3083, 1.25
        %v3154 = vmul.f32 %v3153, %v3089
        %v3155 = vmul.f32 %v3093, 1.25
        %v3156 = vmul.f32 %v3155, %v3096
        %v3157 = vadd.f32 %v3154, %v3156
        %v3158 = vmul.f32 %v3090, 1.25
        %v3159 = vmul.f32 %v3158, %v3096
        %v3160 = vmul.f32 %v3100, 1.25
        %v3161 = vmul.f32 %v3160, %v3103
        %v3162 = vadd.f32 %v3159, %v3161
        %v3163 = vmul.f32 %v3097, 1.25
        %v3164 = vmul.f32 %v3163, %v3103
        %v3165 = vmul.f32 %v3107, 1.25
        %v3166 = vmul.f32 %v3165, %v3110
        %v3167 = vadd.f32 %v3164, %v3166
        %v3168 = vmul.f32 %v3104, 1.25
        %v3169 = vmul.f32 %v3168, %v3110
        %v3170 = vmul.f32 %v3114, 1.25
        %v3171 = vmul.f32 %v3170, %v3117
        %v3172 = vadd.f32 %v3169, %v3171
        %v3173 = vmul.f32 %v3111, 1.25
        %v3174 = vmul.f32 %v3173, %v3117
        %v3175 = vmul.f32 %v3121, 1.25
        %v3176 = vmul.f32 %v3175, %v3124
        %v3177 = vadd.f32 %v3174, %v3176
        %v3178 = vmul.f32 %v3118, 1.25
        %v3179 = vmul.f32 %v3178, %v3124
        %v3180 = vmul.f32 %v3128, 1.25
        %v3181 = vmul.f32 %v3180, %v3131
        %v3182 = vadd.f32 %v3179, %v3181
        %v3183 = vmul.f32 %v3125, 1.25
        %v3184 = vmul.f32 %v3183, %v3131
        %v3185 = vmul.f32 %v3135, 1.25
        %v3186 = vmul.f32 %v3185, %v3138
        %v3187 = vadd.f32 %v3184, %v3186
        %v3188 = vmul.f32 %v3132, 1.25
        %v3189 = vmul.f32 %v3188, %v3138
        %v3190 = vmul.f32 %v3142, 1.25
        %v3191 = vmul.f32 %v3190, %v3145
        %v3192 = vadd.f32 %v3189, %v3191
        %v3193 = vmul.f32 %v3139, 1.25
        %v3194 = vmul.f32 %v3193, %v3145
        %v3195 = vmul.f32 %v3149, 1.25
        %v3196 = vmul.f32 %v3195, %v3152
        %v3197 = vadd.f32 %v3194, %v3196
        %v3198 = vmul.f32 %v3083, 0.8333333
        %v3199 = vmul.f32 %v3198, %v3157
        %v3200 = vmul.f32 %v3100, 0.8333333
        %v3201 = vmul.f32 %v3200, %v3162
        %v3202 = vadd.f32 %v3199, %v3201
        %v3203 = vmul.f32 %v3090, 0.8333333
        %v3204 = vmul.f32 %v3203, %v3162
        %v3205 = vmul.f32 %v3107, 0.8333333
        %v3206 = vmul.f32 %v3205, %v3167
        %v3207 = vadd.f32 %v3204, %v3206
        %v3208 = vmul.f32 %v3097, 0.8333333
        %v3209 = vmul.f32 %v3208, %v3167
        %v3210 = vmul.f32 %v3114, 0.8333333
        %v3211 = vmul.f32 %v3210, %v3172
        %v3212 = vadd.f32 %v3209, %v3211
        %v3213 = vmul.f32 %v3104, 0.8333333
        %v3214 = vmul.f32 %v3213, %v3172
        %v3215 = vmul.f32 %v3121, 0.8333333
        %v3216 = vmul.f32 %v3215, %v3177
        %v3217 = vadd.f32 %v3214, %v3216
        %v3218 = vmul.f32 %v3111, 0.8333333
        %v3219 = vmul.f32 %v3218, %v3177
        %v3220 = vmul.f32 %v3128, 0.8333333
        %v3221 = vmul.f32 %v3220, %v3182
        %v3222 = vadd.f32 %v3219, %v3221
        %v3223 = vmul.f32 %v3118, 0.8333333
        %v3224 = vmul.f32 %v3223, %v3182
        %v3225 = vmul.f32 %v3135, 0.8333333
        %v3226 = vmul.f32 %v3225, %v3187
        %v3227 = vadd.f32 %v3224, %v3226
        %v3228 = vmul.f32 %v3125, 0.8333333
        %v3229 = vmul.f32 %v3228, %v3187
        %v3230 = vmul.f32 %v3142, 0.8333333
        %v3231 = vmul.f32 %v3230, %v3192
        %v3232 = vadd.f32 %v3229, %v3231
        %v3233 = vmul.f32 %v3132, 0.8333333
        %v3234 = vmul.f32 %v3233, %v3192
        %v3235 = vmul.f32 %v3149, 0.8333333
        %v3236 = vmul.f32 %v3235, %v3197
        %v3237 = vadd.f32 %v3234, %v3236
        %v3238 = vpack.c.bf16 %v3027, %v3027
        %v3239 = vpack.c.bf16 %v3202, %v3202
        %v3240 = vpack.c.bf16 %v3207, %v3207
        %v3241 = vpack.c.bf16 %v3212, %v3212
        %v3242 = vpack.c.bf16 %v3217, %v3217
        %v3243 = vpack.c.bf16 %v3222, %v3222
        %v3244 = vpack.c.bf16 %v3227, %v3227
        %v3245 = vpack.c.bf16 %v3232, %v3232
        %v3246 = vpack.c.bf16 %v3237, %v3237
        %v3247 = vld [vmem:[%s302] sm:$0xf]
        %v3248 = vld [vmem:[%s302 + $0x4] sm:$0xf]
        %v3249 = vld [vmem:[%s302 + $0x8] sm:$0xf]
        %v3250 = vld [vmem:[%s302 + $0xc] sm:$0xf]
        %v3251 = vld [vmem:[%s302 + $0x10] sm:$0xf]
        %v3252 = vld [vmem:[%s302 + $0x14] sm:$0xf]
        %v3253 = vld [vmem:[%s302 + $0x18] sm:$0xf]
        %v3254 = vld [vmem:[%s302 + $0x1c] sm:$0xf]
        %v3255 = vld [vmem:[%s302 + $0x20] sm:$0xf]
        %v3256 = vld [vmem:[%s302 + $0x24] sm:$0xf]
        %v3257 = vld [vmem:[%s302 + $0x28] sm:$0xf]
        %v3258 = vld [vmem:[%s302 + $0x2c] sm:$0xf]
        %v3259 = vld [vmem:[%s302 + $0x30] sm:$0xf]
        %v3260 = vld [vmem:[%s302 + $0x34] sm:$0xf]
        %v3261 = vld [vmem:[%s302 + $0x38] sm:$0xf]
        %v3262 = vld [vmem:[%s302 + $0x3c] sm:$0xf]
        %v3263 = vld [vmem:[%s302 + $0x40] sm:$0xf]
        %v3264 = vld [vmem:[%s302 + $0x44] sm:$0xf]
        %v3265 = vld [vmem:[%s302 + $0x48] sm:$0xf]
        %v3266 = vld [vmem:[%s302 + $0x4c] sm:$0xf]
        %v3267 = vld [vmem:[%s302 + $0x50] sm:$0xf]
        %v3268 = vld [vmem:[%s302 + $0x54] sm:$0xf]
        %v3269 = vld [vmem:[%s302 + $0x58] sm:$0xf]
        %v3270 = vld [vmem:[%s302 + $0x5c] sm:$0xf]
        %v3271 = vld [vmem:[%s302 + $0x60] sm:$0xf]
        %v3272 = vld [vmem:[%s302 + $0x64] sm:$0xf]
        %v3273 = vld [vmem:[%s302 + $0x68] sm:$0xf]
        %v3274 = vld [vmem:[%s302 + $0x6c] sm:$0xf]
        %v3275 = vld [vmem:[%s302 + $0x70] sm:$0xf]
        %v3276 = vld [vmem:[%s302 + $0x74] sm:$0xf]
        %v3277 = vld [vmem:[%s302 + $0x78] sm:$0xf]
        %v3278 = vld [vmem:[%s302 + $0x7c] sm:$0xf]
        %v3279 = vld [vmem:[%s302 + $0x80] sm:$0xf]
        %v3280 = vld [vmem:[%s302 + $0x84] sm:$0xf]
        %v3281 = vld [vmem:[%s302 + $0x88] sm:$0xf]
        %v3282 = vld [vmem:[%s302 + $0x8c] sm:$0xf]
        %v3283 = vld [vmem:[%s302 + $0x90] sm:$0xf]
        %v3284 = vld [vmem:[%s302 + $0x94] sm:$0xf]
        %v3285 = vld [vmem:[%s302 + $0x98] sm:$0xf]
        %v3286 = vld [vmem:[%s302 + $0x9c] sm:$0xf]
        %v3287 = vld [vmem:[%s302 + $0xa0] sm:$0xf]
        %v3288 = vld [vmem:[%s302 + $0xa4] sm:$0xf]
        %v3289 = vld [vmem:[%s302 + $0xa8] sm:$0xf]
        %v3290 = vld [vmem:[%s302 + $0xac] sm:$0xf]
        %v3291 = vld [vmem:[%s302 + $0xb0] sm:$0xf]
        %v3292 = vld [vmem:[%s302 + $0xb4] sm:$0xf]
        %v3293 = vld [vmem:[%s302 + $0xb8] sm:$0xf]
        %v3294 = vld [vmem:[%s302 + $0xbc] sm:$0xf]
        %v3295 = vld [vmem:[%s302 + $0xc0] sm:$0xf]
        %v3296 = vld [vmem:[%s302 + $0xc4] sm:$0xf]
        %v3297 = vld [vmem:[%s302 + $0xc8] sm:$0xf]
        %v3298 = vld [vmem:[%s302 + $0xcc] sm:$0xf]
        %v3299 = vld [vmem:[%s302 + $0xd0] sm:$0xf]
        %v3300 = vld [vmem:[%s302 + $0xd4] sm:$0xf]
        %v3301 = vld [vmem:[%s302 + $0xd8] sm:$0xf]
        %v3302 = vld [vmem:[%s302 + $0xdc] sm:$0xf]
        %v3303 = vld [vmem:[%s302 + $0xe0] sm:$0xf]
        %v3304 = vld [vmem:[%s302 + $0xe4] sm:$0xf]
        %v3305 = vld [vmem:[%s302 + $0xe8] sm:$0xf]
        %v3306 = vld [vmem:[%s302 + $0xec] sm:$0xf]
        %v3307 = vld [vmem:[%s302 + $0xf0] sm:$0xf]
        %v3308 = vld [vmem:[%s302 + $0xf4] sm:$0xf]
        %v3309 = vld [vmem:[%s302 + $0xf8] sm:$0xf]
        %v3310 = vld [vmem:[%s302 + $0xfc] sm:$0xf]
        %v3311 = vld [vmem:[%s302 + $0x100] sm:$0xf]
        %v3312 = vld [vmem:[%s302 + $0x104] sm:$0xf]
        %v3313 = vld [vmem:[%s302 + $0x108] sm:$0xf]
        %v3314 = vld [vmem:[%s302 + $0x10c] sm:$0xf]
        %v3315 = vld [vmem:[%s302 + $0x110] sm:$0xf]
        %v3316 = vld [vmem:[%s302 + $0x114] sm:$0xf]
        %v3317 = vld [vmem:[%s302 + $0x118] sm:$0xf]
        %v3318 = vld [vmem:[%s302 + $0x11c] sm:$0xf]
        %v3319 = vld [vmem:[%s302 + $0x120] sm:$0xf]
        %v3320 = vld [vmem:[%s302 + $0x124] sm:$0xf]
        %v3321 = vld [vmem:[%s302 + $0x128] sm:$0xf]
        %v3322 = vld [vmem:[%s302 + $0x12c] sm:$0xf]
        %v3323 = vld [vmem:[%s302 + $0x130] sm:$0xf]
        %v3324 = vld [vmem:[%s302 + $0x134] sm:$0xf]
        %v3325 = vld [vmem:[%s302 + $0x138] sm:$0xf]
        %v3326 = vld [vmem:[%s302 + $0x13c] sm:$0xf]
        %v3327 = vld [vmem:[%s302 + $0x140] sm:$0xf]
        %v3328 = vld [vmem:[%s302 + $0x144] sm:$0xf]
        %v3329 = vld [vmem:[%s302 + $0x148] sm:$0xf]
        %v3330 = vld [vmem:[%s302 + $0x14c] sm:$0xf]
        %v3331 = vld [vmem:[%s302 + $0x150] sm:$0xf]
        %v3332 = vld [vmem:[%s302 + $0x154] sm:$0xf]
        %v3333 = vld [vmem:[%s302 + $0x158] sm:$0xf]
        %v3334 = vld [vmem:[%s302 + $0x15c] sm:$0xf]
        %v3335 = vld [vmem:[%s302 + $0x160] sm:$0xf]
        %v3336 = vld [vmem:[%s302 + $0x164] sm:$0xf]
        %v3337 = vld [vmem:[%s302 + $0x168] sm:$0xf]
        %v3338 = vld [vmem:[%s302 + $0x16c] sm:$0xf]
        %v3339 = vld [vmem:[%s302 + $0x170] sm:$0xf]
        %v3340 = vld [vmem:[%s302 + $0x174] sm:$0xf]
        %v3341 = vld [vmem:[%s302 + $0x178] sm:$0xf]
        %v3342 = vld [vmem:[%s302 + $0x17c] sm:$0xf]
        %v3343 = vld [vmem:[%s302 + $0x180] sm:$0xf]
        %v3344 = vld [vmem:[%s302 + $0x184] sm:$0xf]
        %v3345 = vld [vmem:[%s302 + $0x188] sm:$0xf]
        %v3346 = vld [vmem:[%s302 + $0x18c] sm:$0xf]
        %v3347 = vld [vmem:[%s302 + $0x190] sm:$0xf]
        %v3348 = vld [vmem:[%s302 + $0x194] sm:$0xf]
        %v3349 = vld [vmem:[%s302 + $0x198] sm:$0xf]
        %v3350 = vld [vmem:[%s302 + $0x19c] sm:$0xf]
        %v3351 = vld [vmem:[%s302 + $0x1a0] sm:$0xf]
        %v3352 = vld [vmem:[%s302 + $0x1a4] sm:$0xf]
        %v3353 = vld [vmem:[%s302 + $0x1a8] sm:$0xf]
        %v3354 = vld [vmem:[%s302 + $0x1ac] sm:$0xf]
        %v3355 = vld [vmem:[%s302 + $0x1b0] sm:$0xf]
        %v3356 = vld [vmem:[%s302 + $0x1b4] sm:$0xf]
        %v3357 = vld [vmem:[%s302 + $0x1b8] sm:$0xf]
        %v3358 = vld [vmem:[%s302 + $0x1bc] sm:$0xf]
        %v3359 = vld [vmem:[%s302 + $0x1c0] sm:$0xf]
        %v3360 = vld [vmem:[%s302 + $0x1c4] sm:$0xf]
        %v3361 = vld [vmem:[%s302 + $0x1c8] sm:$0xf]
        %v3362 = vld [vmem:[%s302 + $0x1cc] sm:$0xf]
        %v3363 = vld [vmem:[%s302 + $0x1d0] sm:$0xf]
        %v3364 = vld [vmem:[%s302 + $0x1d4] sm:$0xf]
        %v3365 = vld [vmem:[%s302 + $0x1d8] sm:$0xf]
        %v3366 = vld [vmem:[%s302 + $0x1dc] sm:$0xf]
        %v3367 = vld [vmem:[%s302 + $0x1e0] sm:$0xf]
        %v3368 = vld [vmem:[%s302 + $0x1e4] sm:$0xf]
        %v3369 = vld [vmem:[%s302 + $0x1e8] sm:$0xf]
        %v3370 = vld [vmem:[%s302 + $0x1ec] sm:$0xf]
        %v3371 = vld [vmem:[%s302 + $0x1f0] sm:$0xf]
        %v3372 = vld [vmem:[%s302 + $0x1f4] sm:$0xf]
        %v3373 = vld [vmem:[%s302 + $0x1f8] sm:$0xf]
        %v3374 = vld [vmem:[%s302 + $0x1fc] sm:$0xf]
        %v3375 = vld [vmem:[%s302 + $0x200] sm:$0xf]
        %v3376 = vld [vmem:[%s302 + $0x204] sm:$0xf]
        %v3377 = vld [vmem:[%s302 + $0x208] sm:$0xf]
        %v3378 = vld [vmem:[%s302 + $0x20c] sm:$0xf]
        %v3379 = vld [vmem:[%s302 + $0x210] sm:$0xf]
        %v3380 = vld [vmem:[%s302 + $0x214] sm:$0xf]
        %v3381 = vld [vmem:[%s302 + $0x218] sm:$0xf]
        %v3382 = vld [vmem:[%s302 + $0x21c] sm:$0xf]
        %v3383 = vld [vmem:[%s302 + $0x220] sm:$0xf]
        %v3384 = vld [vmem:[%s302 + $0x224] sm:$0xf]
        %v3385 = vld [vmem:[%s302 + $0x228] sm:$0xf]
        %v3386 = vld [vmem:[%s302 + $0x22c] sm:$0xf]
        %v3387 = vld [vmem:[%s302 + $0x230] sm:$0xf]
        %v3388 = vld [vmem:[%s302 + $0x234] sm:$0xf]
        %v3389 = vld [vmem:[%s302 + $0x238] sm:$0xf]
        %v3390 = vld [vmem:[%s302 + $0x23c] sm:$0xf]
        %v3535 = vunpack.c.l.b16 %v3247
        %v3536 = vunpack.c.l.b16 %v3248
        %v3537 = vunpack.c.l.b16 %v3249
        %v3538 = vunpack.c.l.b16 %v3250
        %v3539 = vunpack.c.l.b16 %v3251
        %v3540 = vunpack.c.l.b16 %v3252
        %v3541 = vunpack.c.l.b16 %v3253
        %v3542 = vunpack.c.l.b16 %v3254
        %v3543 = vunpack.c.l.b16 %v3255
        %v3544 = vunpack.c.l.b16 %v3256
        %v3545 = vunpack.c.l.b16 %v3257
        %v3546 = vunpack.c.l.b16 %v3258
        %v3547 = vunpack.c.l.b16 %v3259
        %v3548 = vunpack.c.l.b16 %v3260
        %v3549 = vunpack.c.l.b16 %v3261
        %v3550 = vunpack.c.l.b16 %v3262
        %v3551 = vunpack.c.l.b16 %v3263
        %v3552 = vunpack.c.l.b16 %v3264
        %v3553 = vunpack.c.l.b16 %v3265
        %v3554 = vunpack.c.l.b16 %v3266
        %v3555 = vunpack.c.l.b16 %v3267
        %v3556 = vunpack.c.l.b16 %v3268
        %v3557 = vunpack.c.l.b16 %v3269
        %v3558 = vunpack.c.l.b16 %v3270
        %v3559 = vunpack.c.l.b16 %v3271
        %v3560 = vunpack.c.l.b16 %v3272
        %v3561 = vunpack.c.l.b16 %v3273
        %v3562 = vunpack.c.l.b16 %v3274
        %v3563 = vunpack.c.l.b16 %v3275
        %v3564 = vunpack.c.l.b16 %v3276
        %v3565 = vunpack.c.l.b16 %v3277
        %v3566 = vunpack.c.l.b16 %v3278
        %v3567 = vunpack.c.l.b16 %v3279
        %v3568 = vunpack.c.l.b16 %v3280
        %v3569 = vunpack.c.l.b16 %v3281
        %v3570 = vunpack.c.l.b16 %v3282
        %v3571 = vunpack.c.l.b16 %v3283
        %v3572 = vunpack.c.l.b16 %v3284
        %v3573 = vunpack.c.l.b16 %v3285
        %v3574 = vunpack.c.l.b16 %v3286
        %v3575 = vunpack.c.l.b16 %v3287
        %v3576 = vunpack.c.l.b16 %v3288
        %v3577 = vunpack.c.l.b16 %v3289
        %v3578 = vunpack.c.l.b16 %v3290
        %v3579 = vunpack.c.l.b16 %v3291
        %v3580 = vunpack.c.l.b16 %v3292
        %v3581 = vunpack.c.l.b16 %v3293
        %v3582 = vunpack.c.l.b16 %v3294
        %v3583 = vunpack.c.l.b16 %v3295
        %v3584 = vunpack.c.l.b16 %v3296
        %v3585 = vunpack.c.l.b16 %v3297
        %v3586 = vunpack.c.l.b16 %v3298
        %v3587 = vunpack.c.l.b16 %v3299
        %v3588 = vunpack.c.l.b16 %v3300
        %v3589 = vunpack.c.l.b16 %v3301
        %v3590 = vunpack.c.l.b16 %v3302
        %v3591 = vunpack.c.l.b16 %v3303
        %v3592 = vunpack.c.l.b16 %v3304
        %v3593 = vunpack.c.l.b16 %v3305
        %v3594 = vunpack.c.l.b16 %v3306
        %v3595 = vunpack.c.l.b16 %v3307
        %v3596 = vunpack.c.l.b16 %v3308
        %v3597 = vunpack.c.l.b16 %v3309
        %v3598 = vunpack.c.l.b16 %v3310
        %v3599 = vunpack.c.l.b16 %v3311
        %v3600 = vunpack.c.l.b16 %v3312
        %v3601 = vunpack.c.l.b16 %v3313
        %v3602 = vunpack.c.l.b16 %v3314
        %v3603 = vunpack.c.l.b16 %v3315
        %v3604 = vunpack.c.l.b16 %v3316
        %v3605 = vunpack.c.l.b16 %v3317
        %v3606 = vunpack.c.l.b16 %v3318
        %v3607 = vunpack.c.l.b16 %v3319
        %v3608 = vunpack.c.l.b16 %v3320
        %v3609 = vunpack.c.l.b16 %v3321
        %v3610 = vunpack.c.l.b16 %v3322
        %v3611 = vunpack.c.l.b16 %v3323
        %v3612 = vunpack.c.l.b16 %v3324
        %v3613 = vunpack.c.l.b16 %v3325
        %v3614 = vunpack.c.l.b16 %v3326
        %v3615 = vunpack.c.l.b16 %v3327
        %v3616 = vunpack.c.l.b16 %v3328
        %v3617 = vunpack.c.l.b16 %v3329
        %v3618 = vunpack.c.l.b16 %v3330
        %v3619 = vunpack.c.l.b16 %v3331
        %v3620 = vunpack.c.l.b16 %v3332
        %v3621 = vunpack.c.l.b16 %v3333
        %v3622 = vunpack.c.l.b16 %v3334
        %v3623 = vunpack.c.l.b16 %v3335
        %v3624 = vunpack.c.l.b16 %v3336
        %v3625 = vunpack.c.l.b16 %v3337
        %v3626 = vunpack.c.l.b16 %v3338
        %v3627 = vunpack.c.l.b16 %v3339
        %v3628 = vunpack.c.l.b16 %v3340
        %v3629 = vunpack.c.l.b16 %v3341
        %v3630 = vunpack.c.l.b16 %v3342
        %v3631 = vunpack.c.l.b16 %v3343
        %v3632 = vunpack.c.l.b16 %v3344
        %v3633 = vunpack.c.l.b16 %v3345
        %v3634 = vunpack.c.l.b16 %v3346
        %v3635 = vunpack.c.l.b16 %v3347
        %v3636 = vunpack.c.l.b16 %v3348
        %v3637 = vunpack.c.l.b16 %v3349
        %v3638 = vunpack.c.l.b16 %v3350
        %v3639 = vunpack.c.l.b16 %v3351
        %v3640 = vunpack.c.l.b16 %v3352
        %v3641 = vunpack.c.l.b16 %v3353
        %v3642 = vunpack.c.l.b16 %v3354
        %v3643 = vunpack.c.l.b16 %v3355
        %v3644 = vunpack.c.l.b16 %v3356
        %v3645 = vunpack.c.l.b16 %v3357
        %v3646 = vunpack.c.l.b16 %v3358
        %v3647 = vunpack.c.l.b16 %v3359
        %v3648 = vunpack.c.l.b16 %v3360
        %v3649 = vunpack.c.l.b16 %v3361
        %v3650 = vunpack.c.l.b16 %v3362
        %v3651 = vunpack.c.l.b16 %v3363
        %v3652 = vunpack.c.l.b16 %v3364
        %v3653 = vunpack.c.l.b16 %v3365
        %v3654 = vunpack.c.l.b16 %v3366
        %v3655 = vunpack.c.l.b16 %v3367
        %v3656 = vunpack.c.l.b16 %v3368
        %v3657 = vunpack.c.l.b16 %v3369
        %v3658 = vunpack.c.l.b16 %v3370
        %v3659 = vunpack.c.l.b16 %v3371
        %v3660 = vunpack.c.l.b16 %v3372
        %v3661 = vunpack.c.l.b16 %v3373
        %v3662 = vunpack.c.l.b16 %v3374
        %v3663 = vunpack.c.l.b16 %v3375
        %v3664 = vunpack.c.l.b16 %v3376
        %v3665 = vunpack.c.l.b16 %v3377
        %v3666 = vunpack.c.l.b16 %v3378
        %v3667 = vunpack.c.l.b16 %v3379
        %v3668 = vunpack.c.l.b16 %v3380
        %v3669 = vunpack.c.l.b16 %v3381
        %v3670 = vunpack.c.l.b16 %v3382
        %v3671 = vunpack.c.l.b16 %v3383
        %v3672 = vunpack.c.l.b16 %v3384
        %v3673 = vunpack.c.l.b16 %v3385
        %v3674 = vunpack.c.l.b16 %v3386
        %v3675 = vunpack.c.l.b16 %v3387
        %v3676 = vunpack.c.l.b16 %v3388
        %v3677 = vunpack.c.l.b16 %v3389
        %v3678 = vunpack.c.l.b16 %v3390
        %v3679 = vpack.c.b16 %v3536, %v3535
        %v3680 = vpack.c.b16 %v3538, %v3537
        %v3681 = vpack.c.b16 %v3540, %v3539
        %v3682 = vpack.c.b16 %v3542, %v3541
        %v3683 = vpack.c.b16 %v3544, %v3543
        %v3684 = vpack.c.b16 %v3546, %v3545
        %v3685 = vpack.c.b16 %v3548, %v3547
        %v3686 = vpack.c.b16 %v3550, %v3549
        %v3687 = vpack.c.b16 %v3552, %v3551
        %v3688 = vpack.c.b16 %v3554, %v3553
        %v3689 = vpack.c.b16 %v3556, %v3555
        %v3690 = vpack.c.b16 %v3558, %v3557
        %v3691 = vpack.c.b16 %v3560, %v3559
        %v3692 = vpack.c.b16 %v3562, %v3561
        %v3693 = vpack.c.b16 %v3564, %v3563
        %v3694 = vpack.c.b16 %v3566, %v3565
        %v3695 = vpack.c.b16 %v3568, %v3567
        %v3696 = vpack.c.b16 %v3570, %v3569
        %v3697 = vpack.c.b16 %v3572, %v3571
        %v3698 = vpack.c.b16 %v3574, %v3573
        %v3699 = vpack.c.b16 %v3576, %v3575
        %v3700 = vpack.c.b16 %v3578, %v3577
        %v3701 = vpack.c.b16 %v3580, %v3579
        %v3702 = vpack.c.b16 %v3582, %v3581
        %v3703 = vpack.c.b16 %v3584, %v3583
        %v3704 = vpack.c.b16 %v3586, %v3585
        %v3705 = vpack.c.b16 %v3588, %v3587
        %v3706 = vpack.c.b16 %v3590, %v3589
        %v3707 = vpack.c.b16 %v3592, %v3591
        %v3708 = vpack.c.b16 %v3594, %v3593
        %v3709 = vpack.c.b16 %v3596, %v3595
        %v3710 = vpack.c.b16 %v3598, %v3597
        %v3711 = vpack.c.b16 %v3600, %v3599
        %v3712 = vpack.c.b16 %v3602, %v3601
        %v3713 = vpack.c.b16 %v3604, %v3603
        %v3714 = vpack.c.b16 %v3606, %v3605
        %v3715 = vpack.c.b16 %v3608, %v3607
        %v3716 = vpack.c.b16 %v3610, %v3609
        %v3717 = vpack.c.b16 %v3612, %v3611
        %v3718 = vpack.c.b16 %v3614, %v3613
        %v3719 = vpack.c.b16 %v3616, %v3615
        %v3720 = vpack.c.b16 %v3618, %v3617
        %v3721 = vpack.c.b16 %v3620, %v3619
        %v3722 = vpack.c.b16 %v3622, %v3621
        %v3723 = vpack.c.b16 %v3624, %v3623
        %v3724 = vpack.c.b16 %v3626, %v3625
        %v3725 = vpack.c.b16 %v3628, %v3627
        %v3726 = vpack.c.b16 %v3630, %v3629
        %v3727 = vpack.c.b16 %v3632, %v3631
        %v3728 = vpack.c.b16 %v3634, %v3633
        %v3729 = vpack.c.b16 %v3636, %v3635
        %v3730 = vpack.c.b16 %v3638, %v3637
        %v3731 = vpack.c.b16 %v3640, %v3639
        %v3732 = vpack.c.b16 %v3642, %v3641
        %v3733 = vpack.c.b16 %v3644, %v3643
        %v3734 = vpack.c.b16 %v3646, %v3645
        %v3735 = vpack.c.b16 %v3648, %v3647
        %v3736 = vpack.c.b16 %v3650, %v3649
        %v3737 = vpack.c.b16 %v3652, %v3651
        %v3738 = vpack.c.b16 %v3654, %v3653
        %v3739 = vpack.c.b16 %v3656, %v3655
        %v3740 = vpack.c.b16 %v3658, %v3657
        %v3741 = vpack.c.b16 %v3660, %v3659
        %v3742 = vpack.c.b16 %v3662, %v3661
        %v3743 = vpack.c.b16 %v3664, %v3663
        %v3744 = vpack.c.b16 %v3666, %v3665
        %v3745 = vpack.c.b16 %v3668, %v3667
        %v3746 = vpack.c.b16 %v3670, %v3669
        %v3747 = vpack.c.b16 %v3672, %v3671
        %v3748 = vpack.c.b16 %v3674, %v3673
        %v3749 = vpack.c.b16 %v3676, %v3675
        %v3750 = vpack.c.b16 %v3678, %v3677
        %3823 = vmatprep.subr.bf16.mxu0 0
        %3824 = vmatpush1.bf16.msra.mxu0 %v3686
        %3825 = vmatprep.subr.bf16.mxu0 0
        %3826 = vmatpush1.bf16.msra.mxu0 %v3685
        %3827 = vmatprep.subr.bf16.mxu0 0
        %3828 = vmatpush1.bf16.msra.mxu0 %v3684
        %3829 = vmatprep.subr.bf16.mxu0 0
        %3830 = vmatpush1.bf16.msra.mxu0 %v3683
        %3831 = vmatprep.subr.bf16.mxu0 0
        %3832 = vmatpush1.bf16.msra.mxu0 %v3682
        %3833 = vmatprep.subr.bf16.mxu0 0
        %3834 = vmatpush1.bf16.msra.mxu0 %v3681
        %3835 = vmatprep.subr.bf16.mxu0 0
        %3836 = vmatpush1.bf16.msra.mxu0 %v3680
        %3837 = vmatprep.subr.bf16.mxu0 0
        %3838 = vmatpush1.bf16.msra.mxu0 %v3679
        %3839 = vmatprep.subr.bf16.mxu0 0
        %3840 = vmatpush2.bf16.msra.mxu0 %v3694
        %3841 = vmatprep.subr.bf16.mxu0 0
        %3842 = vmatpush2.bf16.msra.mxu0 %v3693
        %3843 = vmatprep.subr.bf16.mxu0 0
        %3844 = vmatpush2.bf16.msra.mxu0 %v3692
        %3845 = vmatprep.subr.bf16.mxu0 0
        %3846 = vmatpush2.bf16.msra.mxu0 %v3691
        %3847 = vmatprep.subr.bf16.mxu0 0
        %3848 = vmatpush2.bf16.msra.mxu0 %v3690
        %3849 = vmatprep.subr.bf16.mxu0 0
        %3850 = vmatpush2.bf16.msra.mxu0 %v3689
        %3851 = vmatprep.subr.bf16.mxu0 0
        %3852 = vmatpush2.bf16.msra.mxu0 %v3688
        %3853 = vmatprep.subr.bf16.mxu0 0
        %3854 = vmatpush2.bf16.msra.mxu0 %v3687
        %3855 = vmatprep.mubr.bf16.mxu0 %v3239
        %3856 = vmatmul.mubr.bf16.gmra.mxu0 %v3238
        %v3857 = vpop.f32.mrf.mxu0
        %v3858 = vadd.f32 0.0, %v3857
        %v3859 = vpop.f32.mrf.mxu0
        %v3860 = vpop.f32.mrf.mxu0
        %v3861 = vpop.f32.mrf.mxu0
        %3862 = vdwg.mxu0
        %3863 = vmatprep.subr.bf16.mxu0 0
        %3864 = vmatpush1.bf16.msra.mxu0 %v3702
        %3865 = vmatprep.subr.bf16.mxu0 0
        %3866 = vmatpush1.bf16.msra.mxu0 %v3701
        %3867 = vmatprep.subr.bf16.mxu0 0
        %3868 = vmatpush1.bf16.msra.mxu0 %v3700
        %3869 = vmatprep.subr.bf16.mxu0 0
        %3870 = vmatpush1.bf16.msra.mxu0 %v3699
        %3871 = vmatprep.subr.bf16.mxu0 0
        %3872 = vmatpush1.bf16.msra.mxu0 %v3698
        %3873 = vmatprep.subr.bf16.mxu0 0
        %3874 = vmatpush1.bf16.msra.mxu0 %v3697
        %3875 = vmatprep.subr.bf16.mxu0 0
        %3876 = vmatpush1.bf16.msra.mxu0 %v3696
        %3877 = vmatprep.subr.bf16.mxu0 0
        %3878 = vmatpush1.bf16.msra.mxu0 %v3695
        %3879 = vmatprep.subr.bf16.mxu0 0
        %3880 = vmatpush2.bf16.msra.mxu0 %v3710
        %3881 = vmatprep.subr.bf16.mxu0 0
        %3882 = vmatpush2.bf16.msra.mxu0 %v3709
        %3883 = vmatprep.subr.bf16.mxu0 0
        %3884 = vmatpush2.bf16.msra.mxu0 %v3708
        %3885 = vmatprep.subr.bf16.mxu0 0
        %3886 = vmatpush2.bf16.msra.mxu0 %v3707
        %3887 = vmatprep.subr.bf16.mxu0 0
        %3888 = vmatpush2.bf16.msra.mxu0 %v3706
        %3889 = vmatprep.subr.bf16.mxu0 0
        %3890 = vmatpush2.bf16.msra.mxu0 %v3705
        %3891 = vmatprep.subr.bf16.mxu0 0
        %3892 = vmatpush2.bf16.msra.mxu0 %v3704
        %3893 = vmatprep.subr.bf16.mxu0 0
        %3894 = vmatpush2.bf16.msra.mxu0 %v3703
        %3895 = vmatprep.mubr.bf16.mxu0 %v3241
        %3896 = vmatmul.mubr.bf16.gmra.mxu0 %v3240
        %v3897 = vpop.f32.mrf.mxu0
        %v3898 = vadd.f32 %v3858, %v3897
        %v3899 = vpop.f32.mrf.mxu0
        %v3900 = vpop.f32.mrf.mxu0
        %v3901 = vpop.f32.mrf.mxu0
        %3902 = vdwg.mxu0
        %3903 = vmatprep.subr.bf16.mxu0 0
        %3904 = vmatpush1.bf16.msra.mxu0 %v3718
        %3905 = vmatprep.subr.bf16.mxu0 0
        %3906 = vmatpush1.bf16.msra.mxu0 %v3717
        %3907 = vmatprep.subr.bf16.mxu0 0
        %3908 = vmatpush1.bf16.msra.mxu0 %v3716
        %3909 = vmatprep.subr.bf16.mxu0 0
        %3910 = vmatpush1.bf16.msra.mxu0 %v3715
        %3911 = vmatprep.subr.bf16.mxu0 0
        %3912 = vmatpush1.bf16.msra.mxu0 %v3714
        %3913 = vmatprep.subr.bf16.mxu0 0
        %3914 = vmatpush1.bf16.msra.mxu0 %v3713
        %3915 = vmatprep.subr.bf16.mxu0 0
        %3916 = vmatpush1.bf16.msra.mxu0 %v3712
        %3917 = vmatprep.subr.bf16.mxu0 0
        %3918 = vmatpush1.bf16.msra.mxu0 %v3711
        %3919 = vmatprep.subr.bf16.mxu0 0
        %3920 = vmatpush2.bf16.msra.mxu0 %v3726
        %3921 = vmatprep.subr.bf16.mxu0 0
        %3922 = vmatpush2.bf16.msra.mxu0 %v3725
        %3923 = vmatprep.subr.bf16.mxu0 0
        %3924 = vmatpush2.bf16.msra.mxu0 %v3724
        %3925 = vmatprep.subr.bf16.mxu0 0
        %3926 = vmatpush2.bf16.msra.mxu0 %v3723
        %3927 = vmatprep.subr.bf16.mxu0 0
        %3928 = vmatpush2.bf16.msra.mxu0 %v3722
        %3929 = vmatprep.subr.bf16.mxu0 0
        %3930 = vmatpush2.bf16.msra.mxu0 %v3721
        %3931 = vmatprep.subr.bf16.mxu0 0
        %3932 = vmatpush2.bf16.msra.mxu0 %v3720
        %3933 = vmatprep.subr.bf16.mxu0 0
        %3934 = vmatpush2.bf16.msra.mxu0 %v3719
        %3935 = vmatprep.mubr.bf16.mxu0 %v3243
        %3936 = vmatmul.mubr.bf16.gmra.mxu0 %v3242
        %v3937 = vpop.f32.mrf.mxu0
        %v3938 = vadd.f32 %v3898, %v3937
        %v3939 = vpop.f32.mrf.mxu0
        %v3940 = vpop.f32.mrf.mxu0
        %v3941 = vpop.f32.mrf.mxu0
        %3942 = vdwg.mxu0
        %3943 = vmatprep.subr.bf16.mxu0 0
        %3944 = vmatpush1.bf16.msra.mxu0 %v3734
        %3945 = vmatprep.subr.bf16.mxu0 0
        %3946 = vmatpush1.bf16.msra.mxu0 %v3733
        %3947 = vmatprep.subr.bf16.mxu0 0
        %3948 = vmatpush1.bf16.msra.mxu0 %v3732
        %3949 = vmatprep.subr.bf16.mxu0 0
        %3950 = vmatpush1.bf16.msra.mxu0 %v3731
        %3951 = vmatprep.subr.bf16.mxu0 0
        %3952 = vmatpush1.bf16.msra.mxu0 %v3730
        %3953 = vmatprep.subr.bf16.mxu0 0
        %3954 = vmatpush1.bf16.msra.mxu0 %v3729
        %3955 = vmatprep.subr.bf16.mxu0 0
        %3956 = vmatpush1.bf16.msra.mxu0 %v3728
        %3957 = vmatprep.subr.bf16.mxu0 0
        %3958 = vmatpush1.bf16.msra.mxu0 %v3727
        %3959 = vmatprep.subr.bf16.mxu0 0
        %3960 = vmatpush2.bf16.msra.mxu0 %v3742
        %3961 = vmatprep.subr.bf16.mxu0 0
        %3962 = vmatpush2.bf16.msra.mxu0 %v3741
        %3963 = vmatprep.subr.bf16.mxu0 0
        %3964 = vmatpush2.bf16.msra.mxu0 %v3740
        %3965 = vmatprep.subr.bf16.mxu0 0
        %3966 = vmatpush2.bf16.msra.mxu0 %v3739
        %3967 = vmatprep.subr.bf16.mxu0 0
        %3968 = vmatpush2.bf16.msra.mxu0 %v3738
        %3969 = vmatprep.subr.bf16.mxu0 0
        %3970 = vmatpush2.bf16.msra.mxu0 %v3737
        %3971 = vmatprep.subr.bf16.mxu0 0
        %3972 = vmatpush2.bf16.msra.mxu0 %v3736
        %3973 = vmatprep.subr.bf16.mxu0 0
        %3974 = vmatpush2.bf16.msra.mxu0 %v3735
        %3975 = vmatprep.mubr.bf16.mxu0 %v3245
        %3976 = vmatmul.mubr.bf16.gmra.mxu0 %v3244
        %v3977 = vpop.f32.mrf.mxu0
        %v3978 = vadd.f32 %v3938, %v3977
        %v3979 = vpop.f32.mrf.mxu0
        %v3980 = vpop.f32.mrf.mxu0
        %v3981 = vpop.f32.mrf.mxu0
        %3982 = vdwg.mxu0
        %3983 = vmatprep.subr.bf16.mxu0 0
        %3984 = vmatpush1.bf16.msra.mxu0 %v3750
        %3985 = vmatprep.subr.bf16.mxu0 0
        %3986 = vmatpush1.bf16.msra.mxu0 %v3749
        %3987 = vmatprep.subr.bf16.mxu0 0
        %3988 = vmatpush1.bf16.msra.mxu0 %v3748
        %3989 = vmatprep.subr.bf16.mxu0 0
        %3990 = vmatpush1.bf16.msra.mxu0 %v3747
        %3991 = vmatprep.subr.bf16.mxu0 0
        %3992 = vmatpush1.bf16.msra.mxu0 %v3746
        %3993 = vmatprep.subr.bf16.mxu0 0
        %3994 = vmatpush1.bf16.msra.mxu0 %v3745
        %3995 = vmatprep.subr.bf16.mxu0 0
        %3996 = vmatpush1.bf16.msra.mxu0 %v3744
        %3997 = vmatprep.subr.bf16.mxu0 0
        %3998 = vmatpush1.bf16.msra.mxu0 %v3743
        %3999 = vmatprep.subr.bf16.mxu0 0
        %4000 = vmatpush2.bf16.msra.mxu0 0
        %4001 = vmatprep.subr.bf16.mxu0 0
        %4002 = vmatpush2.bf16.msra.mxu0 0
        %4003 = vmatprep.subr.bf16.mxu0 0
        %4004 = vmatpush2.bf16.msra.mxu0 0
        %4005 = vmatprep.subr.bf16.mxu0 0
        %4006 = vmatpush2.bf16.msra.mxu0 0
        %4007 = vmatprep.subr.bf16.mxu0 0
        %4008 = vmatpush2.bf16.msra.mxu0 0
        %4009 = vmatprep.subr.bf16.mxu0 0
        %4010 = vmatpush2.bf16.msra.mxu0 0
        %4011 = vmatprep.subr.bf16.mxu0 0
        %4012 = vmatpush2.bf16.msra.mxu0 0
        %4013 = vmatprep.subr.bf16.mxu0 0
        %4014 = vmatpush2.bf16.msra.mxu0 0
        %4015 = vmatprep.mubr.bf16.mxu0 0
        %4016 = vmatmul.mubr.bf16.gmra.mxu0 %v3246
        %v4017 = vpop.f32.mrf.mxu0
        %v4018 = vadd.f32 %v3978, %v4017
        %v4019 = vpop.f32.mrf.mxu0
        %v4020 = vpop.f32.mrf.mxu0
        %v4021 = vpop.f32.mrf.mxu0
        %4022 = vdwg.mxu0
        %vm4023 = vcmask 58368
        %4024 = vst.msk [vmem:[%s308] sm:$0x3] %vm4023, %v4018
        %s4025 = scalar_lea.vmem %s293, 2
        %v4026 = vld [vmem:[%s4025] sm:$0x3]
        %v4027 = vxor.u32 %v4026, 2147483648
        %v4028 = vmul.f32 %v4027, 1.442695
        %v4029 = vpow.pop %v4028
        %v4030 = vadd.f32 %v4029, 1.0
        %v4031 = vrcp.pop %v4030
        %v4032 = vmul.f32 1.0, %v4031
        %v4033 = vmul.f32 %v4026, %v4032
        %v4034 = vpack.c.bf16 %v4033, %v4033
        %s4035 = scalar_lea.vmem %s239, 144 [#allocation2]
        %v4036 = vld [vmem:[%s4035] sm:$0xff]
        %v4037 = vld [vmem:[%s4035 + $0x8] sm:$0xff]
        %vm4038 = vcmp.ge.f32.partialorder %v4026, -2.2
        %vm4039 = vcmp.lt.f32.partialorder %v4026, -1.8
        %vm4040 = vmand %vm4038, %vm4039
        %v4041 = vsel %vm4040, 1, 0
        %v4042 = vcvt.s32.f32 %v4041
        %vm4043 = vcmp.ge.f32.partialorder %v4026, -1.8
        %vm4044 = vcmp.lt.f32.partialorder %v4026, -1.4
        %vm4045 = vmand %vm4043, %vm4044
        %v4046 = vsel %vm4045, 1, 0
        %v4047 = vcvt.s32.f32 %v4046
        %vm4048 = vcmp.ge.f32.partialorder %v4026, -1.4
        %vm4049 = vcmp.lt.f32.partialorder %v4026, -1.0
        %vm4050 = vmand %vm4048, %vm4049
        %v4051 = vsel %vm4050, 1, 0
        %v4052 = vcvt.s32.f32 %v4051
        %vm4053 = vcmp.ge.f32.partialorder %v4026, -1.0
        %vm4054 = vcmp.lt.f32.partialorder %v4026, -0.6
        %vm4055 = vmand %vm4053, %vm4054
        %v4056 = vsel %vm4055, 1, 0
        %v4057 = vcvt.s32.f32 %v4056
        %vm4058 = vcmp.ge.f32.partialorder %v4026, -0.6
        %vm4059 = vcmp.lt.f32.partialorder %v4026, -0.2
        %vm4060 = vmand %vm4058, %vm4059
        %v4061 = vsel %vm4060, 1, 0
        %v4062 = vcvt.s32.f32 %v4061
        %vm4063 = vcmp.ge.f32.partialorder %v4026, -0.2
        %vm4064 = vcmp.lt.f32.partialorder %v4026, 0.2
        %vm4065 = vmand %vm4063, %vm4064
        %v4066 = vsel %vm4065, 1, 0
        %v4067 = vcvt.s32.f32 %v4066
        %vm4068 = vcmp.ge.f32.partialorder %v4026, 0.2
        %vm4069 = vcmp.lt.f32.partialorder %v4026, 0.6
        %vm4070 = vmand %vm4068, %vm4069
        %v4071 = vsel %vm4070, 1, 0
        %v4072 = vcvt.s32.f32 %v4071
        %vm4073 = vcmp.ge.f32.partialorder %v4026, 0.6
        %vm4074 = vcmp.lt.f32.partialorder %v4026, 1.0
        %vm4075 = vmand %vm4073, %vm4074
        %v4076 = vsel %vm4075, 1, 0
        %v4077 = vcvt.s32.f32 %v4076
        %vm4078 = vcmp.ge.f32.partialorder %v4026, 1.0
        %vm4079 = vcmp.lt.f32.partialorder %v4026, 1.4
        %vm4080 = vmand %vm4078, %vm4079
        %v4081 = vsel %vm4080, 1, 0
        %v4082 = vcvt.s32.f32 %v4081
        %vm4083 = vcmp.ge.f32.partialorder %v4026, 1.4
        %vm4084 = vcmp.lt.f32.partialorder %v4026, 1.8
        %vm4085 = vmand %vm4083, %vm4084
        %v4086 = vsel %vm4085, 1, 0
        %v4087 = vcvt.s32.f32 %v4086
        %vm4088 = vcmp.ge.f32.partialorder %v4026, 1.8
        %vm4089 = vcmp.lt.f32.partialorder %v4026, 2.2
        %vm4090 = vmand %vm4088, %vm4089
        %v4091 = vsel %vm4090, 1, 0
        %v4092 = vcvt.s32.f32 %v4091
        %v4093 = vsub.f32 %v4026, -2.2
        %v4094 = vmul.f32 %v4093, 2.5
        %v4095 = vmul.f32 %v4094, %v4042
        %v4096 = vsub.f32 -1.4, %v4026
        %v4097 = vmul.f32 %v4096, 2.5
        %v4098 = vmul.f32 %v4097, %v4047
        %v4099 = vadd.f32 %v4095, %v4098
        %v4100 = vsub.f32 %v4026, -1.8
        %v4101 = vmul.f32 %v4100, 2.5
        %v4102 = vmul.f32 %v4101, %v4047
        %v4103 = vsub.f32 -1.0, %v4026
        %v4104 = vmul.f32 %v4103, 2.5
        %v4105 = vmul.f32 %v4104, %v4052
        %v4106 = vadd.f32 %v4102, %v4105
        %v4107 = vsub.f32 %v4026, -1.4
        %v4108 = vmul.f32 %v4107, 2.5
        %v4109 = vmul.f32 %v4108, %v4052
        %v4110 = vsub.f32 -0.6, %v4026
        %v4111 = vmul.f32 %v4110, 2.5
        %v4112 = vmul.f32 %v4111, %v4057
        %v4113 = vadd.f32 %v4109, %v4112
        %v4114 = vsub.f32 %v4026, -1.0
        %v4115 = vmul.f32 %v4114, 2.5
        %v4116 = vmul.f32 %v4115, %v4057
        %v4117 = vsub.f32 -0.2, %v4026
        %v4118 = vmul.f32 %v4117, 2.5
        %v4119 = vmul.f32 %v4118, %v4062
        %v4120 = vadd.f32 %v4116, %v4119
        %v4121 = vsub.f32 %v4026, -0.6
        %v4122 = vmul.f32 %v4121, 2.5
        %v4123 = vmul.f32 %v4122, %v4062
        %v4124 = vsub.f32 0.2, %v4026
        %v4125 = vmul.f32 %v4124, 2.5
        %v4126 = vmul.f32 %v4125, %v4067
        %v4127 = vadd.f32 %v4123, %v4126
        %v4128 = vsub.f32 %v4026, -0.2
        %v4129 = vmul.f32 %v4128, 2.5
        %v4130 = vmul.f32 %v4129, %v4067
        %v4131 = vsub.f32 0.6, %v4026
        %v4132 = vmul.f32 %v4131, 2.5
        %v4133 = vmul.f32 %v4132, %v4072
        %v4134 = vadd.f32 %v4130, %v4133
        %v4135 = vsub.f32 %v4026, 0.2
        %v4136 = vmul.f32 %v4135, 2.5
        %v4137 = vmul.f32 %v4136, %v4072
        %v4138 = vsub.f32 1.0, %v4026
        %v4139 = vmul.f32 %v4138, 2.5
        %v4140 = vmul.f32 %v4139, %v4077
        %v4141 = vadd.f32 %v4137, %v4140
        %v4142 = vsub.f32 %v4026, 0.6
        %v4143 = vmul.f32 %v4142, 2.5
        %v4144 = vmul.f32 %v4143, %v4077
        %v4145 = vsub.f32 1.4, %v4026
        %v4146 = vmul.f32 %v4145, 2.5
        %v4147 = vmul.f32 %v4146, %v4082
        %v4148 = vadd.f32 %v4144, %v4147
        %v4149 = vsub.f32 %v4026, 1.0
        %v4150 = vmul.f32 %v4149, 2.5
        %v4151 = vmul.f32 %v4150, %v4082
        %v4152 = vsub.f32 1.8, %v4026
        %v4153 = vmul.f32 %v4152, 2.5
        %v4154 = vmul.f32 %v4153, %v4087
        %v4155 = vadd.f32 %v4151, %v4154
        %v4156 = vsub.f32 %v4026, 1.4
        %v4157 = vmul.f32 %v4156, 2.5
        %v4158 = vmul.f32 %v4157, %v4087
        %v4159 = vsub.f32 2.2, %v4026
        %v4160 = vmul.f32 %v4159, 2.5
        %v4161 = vmul.f32 %v4160, %v4092
        %v4162 = vadd.f32 %v4158, %v4161
        %v4163 = vmul.f32 %v4093, 1.25
        %v4164 = vmul.f32 %v4163, %v4099
        %v4165 = vmul.f32 %v4103, 1.25
        %v4166 = vmul.f32 %v4165, %v4106
        %v4167 = vadd.f32 %v4164, %v4166
        %v4168 = vmul.f32 %v4100, 1.25
        %v4169 = vmul.f32 %v4168, %v4106
        %v4170 = vmul.f32 %v4110, 1.25
        %v4171 = vmul.f32 %v4170, %v4113
        %v4172 = vadd.f32 %v4169, %v4171
        %v4173 = vmul.f32 %v4107, 1.25
        %v4174 = vmul.f32 %v4173, %v4113
        %v4175 = vmul.f32 %v4117, 1.25
        %v4176 = vmul.f32 %v4175, %v4120
        %v4177 = vadd.f32 %v4174, %v4176
        %v4178 = vmul.f32 %v4114, 1.25
        %v4179 = vmul.f32 %v4178, %v4120
        %v4180 = vmul.f32 %v4124, 1.25
        %v4181 = vmul.f32 %v4180, %v4127
        %v4182 = vadd.f32 %v4179, %v4181
        %v4183 = vmul.f32 %v4121, 1.25
        %v4184 = vmul.f32 %v4183, %v4127
        %v4185 = vmul.f32 %v4131, 1.25
        %v4186 = vmul.f32 %v4185, %v4134
        %v4187 = vadd.f32 %v4184, %v4186
        %v4188 = vmul.f32 %v4128, 1.25
        %v4189 = vmul.f32 %v4188, %v4134
        %v4190 = vmul.f32 %v4138, 1.25
        %v4191 = vmul.f32 %v4190, %v4141
        %v4192 = vadd.f32 %v4189, %v4191
        %v4193 = vmul.f32 %v4135, 1.25
        %v4194 = vmul.f32 %v4193, %v4141
        %v4195 = vmul.f32 %v4145, 1.25
        %v4196 = vmul.f32 %v4195, %v4148
        %v4197 = vadd.f32 %v4194, %v4196
        %v4198 = vmul.f32 %v4142, 1.25
        %v4199 = vmul.f32 %v4198, %v4148
        %v4200 = vmul.f32 %v4152, 1.25
        %v4201 = vmul.f32 %v4200, %v4155
        %v4202 = vadd.f32 %v4199, %v4201
        %v4203 = vmul.f32 %v4149, 1.25
        %v4204 = vmul.f32 %v4203, %v4155
        %v4205 = vmul.f32 %v4159, 1.25
        %v4206 = vmul.f32 %v4205, %v4162
        %v4207 = vadd.f32 %v4204, %v4206
        %v4208 = vmul.f32 %v4093, 0.8333333
        %v4209 = vmul.f32 %v4208, %v4167
        %v4210 = vmul.f32 %v4110, 0.8333333
        %v4211 = vmul.f32 %v4210, %v4172
        %v4212 = vadd.f32 %v4209, %v4211
        %v4213 = vmul.f32 %v4100, 0.8333333
        %v4214 = vmul.f32 %v4213, %v4172
        %v4215 = vmul.f32 %v4117, 0.8333333
        %v4216 = vmul.f32 %v4215, %v4177
        %v4217 = vadd.f32 %v4214, %v4216
        %v4218 = vmul.f32 %v4107, 0.8333333
        %v4219 = vmul.f32 %v4218, %v4177
        %v4220 = vmul.f32 %v4124, 0.8333333
        %v4221 = vmul.f32 %v4220, %v4182
        %v4222 = vadd.f32 %v4219, %v4221
        %v4223 = vmul.f32 %v4114, 0.8333333
        %v4224 = vmul.f32 %v4223, %v4182
        %v4225 = vmul.f32 %v4131, 0.8333333
        %v4226 = vmul.f32 %v4225, %v4187
        %v4227 = vadd.f32 %v4224, %v4226
        %v4228 = vmul.f32 %v4121, 0.8333333
        %v4229 = vmul.f32 %v4228, %v4187
        %v4230 = vmul.f32 %v4138, 0.8333333
        %v4231 = vmul.f32 %v4230, %v4192
        %v4232 = vadd.f32 %v4229, %v4231
        %v4233 = vmul.f32 %v4128, 0.8333333
        %v4234 = vmul.f32 %v4233, %v4192
        %v4235 = vmul.f32 %v4145, 0.8333333
        %v4236 = vmul.f32 %v4235, %v4197
        %v4237 = vadd.f32 %v4234, %v4236
        %v4238 = vmul.f32 %v4135, 0.8333333
        %v4239 = vmul.f32 %v4238, %v4197
        %v4240 = vmul.f32 %v4152, 0.8333333
        %v4241 = vmul.f32 %v4240, %v4202
        %v4242 = vadd.f32 %v4239, %v4241
        %v4243 = vmul.f32 %v4142, 0.8333333
        %v4244 = vmul.f32 %v4243, %v4202
        %v4245 = vmul.f32 %v4159, 0.8333333
        %v4246 = vmul.f32 %v4245, %v4207
        %v4247 = vadd.f32 %v4244, %v4246
        %v4248 = vpack.c.bf16 %v4212, %v4212
        %v4249 = vld [vmem:[%s4035 + $0x10] sm:$0xff]
        %v4250 = vld [vmem:[%s4035 + $0x18] sm:$0xff]
        %v4253 = vunpack.c.l.b16 %v4249
        %v4254 = vunpack.c.h.b16 %v4249
        %v4255 = vunpack.c.l.b16 %v4250
        %v4256 = vunpack.c.h.b16 %v4250
        %v4257 = vpack.c.b16 %v4255, %v4253
        %v4258 = vpack.c.b16 %v4256, %v4254
        %v4262 = vsel %vm545, %v4248, 0
        %4264 = vmatprep.subr.bf16.mxu0 0
        %4265 = vmatpush1.bf16.msra.mxu0 0
        %4266 = vmatprep.subr.bf16.mxu0 0
        %4267 = vmatpush1.bf16.msra.mxu0 0
        %4268 = vmatprep.subr.bf16.mxu0 0
        %4269 = vmatpush1.bf16.msra.mxu0 0
        %4270 = vmatprep.subr.bf16.mxu0 0
        %4271 = vmatpush1.bf16.msra.mxu0 0
        %4272 = vmatprep.subr.bf16.mxu0 0
        %4273 = vmatpush1.bf16.msra.mxu0 0
        %4274 = vmatprep.subr.bf16.mxu0 0
        %4275 = vmatpush1.bf16.msra.mxu0 0
        %4276 = vmatprep.subr.bf16.mxu0 0
        %4277 = vmatpush1.bf16.msra.mxu0 0
        %4278 = vmatprep.subr.bf16.mxu0 %v4258
        %4279 = vmatpush1.bf16.msra.mxu0 %v4257
        %4280 = vmatprep.subr.bf16.mxu0 0
        %4281 = vmatpush2.bf16.msra.mxu0 0
        %4282 = vmatprep.subr.bf16.mxu0 0
        %4283 = vmatpush2.bf16.msra.mxu0 0
        %4284 = vmatprep.subr.bf16.mxu0 0
        %4285 = vmatpush2.bf16.msra.mxu0 0
        %4286 = vmatprep.subr.bf16.mxu0 0
        %4287 = vmatpush2.bf16.msra.mxu0 0
        %4288 = vmatprep.subr.bf16.mxu0 0
        %4289 = vmatpush2.bf16.msra.mxu0 0
        %4290 = vmatprep.subr.bf16.mxu0 0
        %4291 = vmatpush2.bf16.msra.mxu0 0
        %4292 = vmatprep.subr.bf16.mxu0 0
        %4293 = vmatpush2.bf16.msra.mxu0 0
        %4294 = vmatprep.subr.bf16.mxu0 0
        %4295 = vmatpush2.bf16.msra.mxu0 0
        %4296 = vmatprep.mubr.bf16.mxu0 0
        %4297 = vmatmul.mubr.bf16.gmra.mxu0 %v4262
        %v4298 = vpop.f32.mrf.mxu0
        %v4299 = vadd.f32 0.0, %v4298
        %v4300 = vpop.f32.mrf.mxu0
        %v4301 = vadd.f32 0.0, %v4300
        %v4302 = vpop.f32.mrf.mxu0
        %v4303 = vpop.f32.mrf.mxu0
        %4304 = vdwg.mxu0
        %v4307 = vunpack.c.l.b16 %v4036
        %v4308 = vunpack.c.h.b16 %v4036
        %v4309 = vunpack.c.l.b16 %v4037
        %v4310 = vunpack.c.h.b16 %v4037
        %v4311 = vpack.c.b16 %v4309, %v4307
        %v4312 = vpack.c.b16 %v4310, %v4308
        %v4316 = vsel %vm545, %v4034, 0
        %4318 = vmatprep.subr.bf16.mxu0 0
        %4319 = vmatpush1.bf16.msra.mxu0 0
        %4320 = vmatprep.subr.bf16.mxu0 0
        %4321 = vmatpush1.bf16.msra.mxu0 0
        %4322 = vmatprep.subr.bf16.mxu0 0
        %4323 = vmatpush1.bf16.msra.mxu0 0
        %4324 = vmatprep.subr.bf16.mxu0 0
        %4325 = vmatpush1.bf16.msra.mxu0 0
        %4326 = vmatprep.subr.bf16.mxu0 0
        %4327 = vmatpush1.bf16.msra.mxu0 0
        %4328 = vmatprep.subr.bf16.mxu0 0
        %4329 = vmatpush1.bf16.msra.mxu0 0
        %4330 = vmatprep.subr.bf16.mxu0 0
        %4331 = vmatpush1.bf16.msra.mxu0 0
        %4332 = vmatprep.subr.bf16.mxu0 %v4312
        %4333 = vmatpush1.bf16.msra.mxu0 %v4311
        %4334 = vmatprep.subr.bf16.mxu0 0
        %4335 = vmatpush2.bf16.msra.mxu0 0
        %4336 = vmatprep.subr.bf16.mxu0 0
        %4337 = vmatpush2.bf16.msra.mxu0 0
        %4338 = vmatprep.subr.bf16.mxu0 0
        %4339 = vmatpush2.bf16.msra.mxu0 0
        %4340 = vmatprep.subr.bf16.mxu0 0
        %4341 = vmatpush2.bf16.msra.mxu0 0
        %4342 = vmatprep.subr.bf16.mxu0 0
        %4343 = vmatpush2.bf16.msra.mxu0 0
        %4344 = vmatprep.subr.bf16.mxu0 0
        %4345 = vmatpush2.bf16.msra.mxu0 0
        %4346 = vmatprep.subr.bf16.mxu0 0
        %4347 = vmatpush2.bf16.msra.mxu0 0
        %4348 = vmatprep.subr.bf16.mxu0 0
        %4349 = vmatpush2.bf16.msra.mxu0 0
        %4350 = vmatprep.mubr.bf16.mxu0 0
        %4351 = vmatmul.mubr.bf16.gmra.mxu0 %v4316
        %v4352 = vpop.f32.mrf.mxu0
        %v4353 = vadd.f32 %v4299, %v4352
        %v4354 = vpop.f32.mrf.mxu0
        %v4355 = vadd.f32 %v4301, %v4354
        %v4356 = vpop.f32.mrf.mxu0
        %v4357 = vpop.f32.mrf.mxu0
        %4358 = vdwg.mxu0
        %v4359 = vpack.c.bf16 %v4217, %v4217
        %v4360 = vld [vmem:[%s4035 + $0x20] sm:$0xff]
        %v4361 = vld [vmem:[%s4035 + $0x28] sm:$0xff]
        %v4364 = vunpack.c.l.b16 %v4360
        %v4365 = vunpack.c.h.b16 %v4360
        %v4366 = vunpack.c.l.b16 %v4361
        %v4367 = vunpack.c.h.b16 %v4361
        %v4368 = vpack.c.b16 %v4366, %v4364
        %v4369 = vpack.c.b16 %v4367, %v4365
        %v4373 = vsel %vm545, %v4359, 0
        %4375 = vmatprep.subr.bf16.mxu0 0
        %4376 = vmatpush1.bf16.msra.mxu0 0
        %4377 = vmatprep.subr.bf16.mxu0 0
        %4378 = vmatpush1.bf16.msra.mxu0 0
        %4379 = vmatprep.subr.bf16.mxu0 0
        %4380 = vmatpush1.bf16.msra.mxu0 0
        %4381 = vmatprep.subr.bf16.mxu0 0
        %4382 = vmatpush1.bf16.msra.mxu0 0
        %4383 = vmatprep.subr.bf16.mxu0 0
        %4384 = vmatpush1.bf16.msra.mxu0 0
        %4385 = vmatprep.subr.bf16.mxu0 0
        %4386 = vmatpush1.bf16.msra.mxu0 0
        %4387 = vmatprep.subr.bf16.mxu0 0
        %4388 = vmatpush1.bf16.msra.mxu0 0
        %4389 = vmatprep.subr.bf16.mxu0 %v4369
        %4390 = vmatpush1.bf16.msra.mxu0 %v4368
        %4391 = vmatprep.subr.bf16.mxu0 0
        %4392 = vmatpush2.bf16.msra.mxu0 0
        %4393 = vmatprep.subr.bf16.mxu0 0
        %4394 = vmatpush2.bf16.msra.mxu0 0
        %4395 = vmatprep.subr.bf16.mxu0 0
        %4396 = vmatpush2.bf16.msra.mxu0 0
        %4397 = vmatprep.subr.bf16.mxu0 0
        %4398 = vmatpush2.bf16.msra.mxu0 0
        %4399 = vmatprep.subr.bf16.mxu0 0
        %4400 = vmatpush2.bf16.msra.mxu0 0
        %4401 = vmatprep.subr.bf16.mxu0 0
        %4402 = vmatpush2.bf16.msra.mxu0 0
        %4403 = vmatprep.subr.bf16.mxu0 0
        %4404 = vmatpush2.bf16.msra.mxu0 0
        %4405 = vmatprep.subr.bf16.mxu0 0
        %4406 = vmatpush2.bf16.msra.mxu0 0
        %4407 = vmatprep.mubr.bf16.mxu0 0
        %4408 = vmatmul.mubr.bf16.gmra.mxu0 %v4373
        %v4409 = vpop.f32.mrf.mxu0
        %v4410 = vadd.f32 0.0, %v4409
        %v4411 = vpop.f32.mrf.mxu0
        %v4412 = vadd.f32 0.0, %v4411
        %v4413 = vpop.f32.mrf.mxu0
        %v4414 = vpop.f32.mrf.mxu0
        %4415 = vdwg.mxu0
        %v4416 = vadd.f32 %v4353, %v4410
        %v4417 = vadd.f32 %v4355, %v4412
        %v4418 = vpack.c.bf16 %v4222, %v4222
        %v4419 = vld [vmem:[%s4035 + $0x30] sm:$0xff]
        %v4420 = vld [vmem:[%s4035 + $0x38] sm:$0xff]
        %v4423 = vunpack.c.l.b16 %v4419
        %v4424 = vunpack.c.h.b16 %v4419
        %v4425 = vunpack.c.l.b16 %v4420
        %v4426 = vunpack.c.h.b16 %v4420
        %v4427 = vpack.c.b16 %v4425, %v4423
        %v4428 = vpack.c.b16 %v4426, %v4424
        %v4432 = vsel %vm545, %v4418, 0
        %4434 = vmatprep.subr.bf16.mxu0 0
        %4435 = vmatpush1.bf16.msra.mxu0 0
        %4436 = vmatprep.subr.bf16.mxu0 0
        %4437 = vmatpush1.bf16.msra.mxu0 0
        %4438 = vmatprep.subr.bf16.mxu0 0
        %4439 = vmatpush1.bf16.msra.mxu0 0
        %4440 = vmatprep.subr.bf16.mxu0 0
        %4441 = vmatpush1.bf16.msra.mxu0 0
        %4442 = vmatprep.subr.bf16.mxu0 0
        %4443 = vmatpush1.bf16.msra.mxu0 0
        %4444 = vmatprep.subr.bf16.mxu0 0
        %4445 = vmatpush1.bf16.msra.mxu0 0
        %4446 = vmatprep.subr.bf16.mxu0 0
        %4447 = vmatpush1.bf16.msra.mxu0 0
        %4448 = vmatprep.subr.bf16.mxu0 %v4428
        %4449 = vmatpush1.bf16.msra.mxu0 %v4427
        %4450 = vmatprep.subr.bf16.mxu0 0
        %4451 = vmatpush2.bf16.msra.mxu0 0
        %4452 = vmatprep.subr.bf16.mxu0 0
        %4453 = vmatpush2.bf16.msra.mxu0 0
        %4454 = vmatprep.subr.bf16.mxu0 0
        %4455 = vmatpush2.bf16.msra.mxu0 0
        %4456 = vmatprep.subr.bf16.mxu0 0
        %4457 = vmatpush2.bf16.msra.mxu0 0
        %4458 = vmatprep.subr.bf16.mxu0 0
        %4459 = vmatpush2.bf16.msra.mxu0 0
        %4460 = vmatprep.subr.bf16.mxu0 0
        %4461 = vmatpush2.bf16.msra.mxu0 0
        %4462 = vmatprep.subr.bf16.mxu0 0
        %4463 = vmatpush2.bf16.msra.mxu0 0
        %4464 = vmatprep.subr.bf16.mxu0 0
        %4465 = vmatpush2.bf16.msra.mxu0 0
        %4466 = vmatprep.mubr.bf16.mxu0 0
        %4467 = vmatmul.mubr.bf16.gmra.mxu0 %v4432
        %v4468 = vpop.f32.mrf.mxu0
        %v4469 = vadd.f32 0.0, %v4468
        %v4470 = vpop.f32.mrf.mxu0
        %v4471 = vadd.f32 0.0, %v4470
        %v4472 = vpop.f32.mrf.mxu0
        %v4473 = vpop.f32.mrf.mxu0
        %4474 = vdwg.mxu0
        %v4475 = vadd.f32 %v4416, %v4469
        %v4476 = vadd.f32 %v4417, %v4471
        %v4477 = vpack.c.bf16 %v4227, %v4227
        %v4478 = vld [vmem:[%s4035 + $0x40] sm:$0xff]
        %v4479 = vld [vmem:[%s4035 + $0x48] sm:$0xff]
        %v4482 = vunpack.c.l.b16 %v4478
        %v4483 = vunpack.c.h.b16 %v4478
        %v4484 = vunpack.c.l.b16 %v4479
        %v4485 = vunpack.c.h.b16 %v4479
        %v4486 = vpack.c.b16 %v4484, %v4482
        %v4487 = vpack.c.b16 %v4485, %v4483
        %v4491 = vsel %vm545, %v4477, 0
        %4493 = vmatprep.subr.bf16.mxu0 0
        %4494 = vmatpush1.bf16.msra.mxu0 0
        %4495 = vmatprep.subr.bf16.mxu0 0
        %4496 = vmatpush1.bf16.msra.mxu0 0
        %4497 = vmatprep.subr.bf16.mxu0 0
        %4498 = vmatpush1.bf16.msra.mxu0 0
        %4499 = vmatprep.subr.bf16.mxu0 0
        %4500 = vmatpush1.bf16.msra.mxu0 0
        %4501 = vmatprep.subr.bf16.mxu0 0
        %4502 = vmatpush1.bf16.msra.mxu0 0
        %4503 = vmatprep.subr.bf16.mxu0 0
        %4504 = vmatpush1.bf16.msra.mxu0 0
        %4505 = vmatprep.subr.bf16.mxu0 0
        %4506 = vmatpush1.bf16.msra.mxu0 0
        %4507 = vmatprep.subr.bf16.mxu0 %v4487
        %4508 = vmatpush1.bf16.msra.mxu0 %v4486
        %4509 = vmatprep.subr.bf16.mxu0 0
        %4510 = vmatpush2.bf16.msra.mxu0 0
        %4511 = vmatprep.subr.bf16.mxu0 0
        %4512 = vmatpush2.bf16.msra.mxu0 0
        %4513 = vmatprep.subr.bf16.mxu0 0
        %4514 = vmatpush2.bf16.msra.mxu0 0
        %4515 = vmatprep.subr.bf16.mxu0 0
        %4516 = vmatpush2.bf16.msra.mxu0 0
        %4517 = vmatprep.subr.bf16.mxu0 0
        %4518 = vmatpush2.bf16.msra.mxu0 0
        %4519 = vmatprep.subr.bf16.mxu0 0
        %4520 = vmatpush2.bf16.msra.mxu0 0
        %4521 = vmatprep.subr.bf16.mxu0 0
        %4522 = vmatpush2.bf16.msra.mxu0 0
        %4523 = vmatprep.subr.bf16.mxu0 0
        %4524 = vmatpush2.bf16.msra.mxu0 0
        %4525 = vmatprep.mubr.bf16.mxu0 0
        %4526 = vmatmul.mubr.bf16.gmra.mxu0 %v4491
        %v4527 = vpop.f32.mrf.mxu0
        %v4528 = vadd.f32 0.0, %v4527
        %v4529 = vpop.f32.mrf.mxu0
        %v4530 = vadd.f32 0.0, %v4529
        %v4531 = vpop.f32.mrf.mxu0
        %v4532 = vpop.f32.mrf.mxu0
        %4533 = vdwg.mxu0
        %v4534 = vadd.f32 %v4475, %v4528
        %v4535 = vadd.f32 %v4476, %v4530
        %v4536 = vpack.c.bf16 %v4232, %v4232
        %v4537 = vld [vmem:[%s4035 + $0x50] sm:$0xff]
        %v4538 = vld [vmem:[%s4035 + $0x58] sm:$0xff]
        %v4541 = vunpack.c.l.b16 %v4537
        %v4542 = vunpack.c.h.b16 %v4537
        %v4543 = vunpack.c.l.b16 %v4538
        %v4544 = vunpack.c.h.b16 %v4538
        %v4545 = vpack.c.b16 %v4543, %v4541
        %v4546 = vpack.c.b16 %v4544, %v4542
        %v4550 = vsel %vm545, %v4536, 0
        %4552 = vmatprep.subr.bf16.mxu0 0
        %4553 = vmatpush1.bf16.msra.mxu0 0
        %4554 = vmatprep.subr.bf16.mxu0 0
        %4555 = vmatpush1.bf16.msra.mxu0 0
        %4556 = vmatprep.subr.bf16.mxu0 0
        %4557 = vmatpush1.bf16.msra.mxu0 0
        %4558 = vmatprep.subr.bf16.mxu0 0
        %4559 = vmatpush1.bf16.msra.mxu0 0
        %4560 = vmatprep.subr.bf16.mxu0 0
        %4561 = vmatpush1.bf16.msra.mxu0 0
        %4562 = vmatprep.subr.bf16.mxu0 0
        %4563 = vmatpush1.bf16.msra.mxu0 0
        %4564 = vmatprep.subr.bf16.mxu0 0
        %4565 = vmatpush1.bf16.msra.mxu0 0
        %4566 = vmatprep.subr.bf16.mxu0 %v4546
        %4567 = vmatpush1.bf16.msra.mxu0 %v4545
        %4568 = vmatprep.subr.bf16.mxu0 0
        %4569 = vmatpush2.bf16.msra.mxu0 0
        %4570 = vmatprep.subr.bf16.mxu0 0
        %4571 = vmatpush2.bf16.msra.mxu0 0
        %4572 = vmatprep.subr.bf16.mxu0 0
        %4573 = vmatpush2.bf16.msra.mxu0 0
        %4574 = vmatprep.subr.bf16.mxu0 0
        %4575 = vmatpush2.bf16.msra.mxu0 0
        %4576 = vmatprep.subr.bf16.mxu0 0
        %4577 = vmatpush2.bf16.msra.mxu0 0
        %4578 = vmatprep.subr.bf16.mxu0 0
        %4579 = vmatpush2.bf16.msra.mxu0 0
        %4580 = vmatprep.subr.bf16.mxu0 0
        %4581 = vmatpush2.bf16.msra.mxu0 0
        %4582 = vmatprep.subr.bf16.mxu0 0
        %4583 = vmatpush2.bf16.msra.mxu0 0
        %4584 = vmatprep.mubr.bf16.mxu0 0
        %4585 = vmatmul.mubr.bf16.gmra.mxu0 %v4550
        %v4586 = vpop.f32.mrf.mxu0
        %v4587 = vadd.f32 0.0, %v4586
        %v4588 = vpop.f32.mrf.mxu0
        %v4589 = vadd.f32 0.0, %v4588
        %v4590 = vpop.f32.mrf.mxu0
        %v4591 = vpop.f32.mrf.mxu0
        %4592 = vdwg.mxu0
        %v4593 = vadd.f32 %v4534, %v4587
        %v4594 = vadd.f32 %v4535, %v4589
        %v4595 = vpack.c.bf16 %v4237, %v4237
        %v4596 = vld [vmem:[%s4035 + $0x60] sm:$0xff]
        %v4597 = vld [vmem:[%s4035 + $0x68] sm:$0xff]
        %v4600 = vunpack.c.l.b16 %v4596
        %v4601 = vunpack.c.h.b16 %v4596
        %v4602 = vunpack.c.l.b16 %v4597
        %v4603 = vunpack.c.h.b16 %v4597
        %v4604 = vpack.c.b16 %v4602, %v4600
        %v4605 = vpack.c.b16 %v4603, %v4601
        %v4609 = vsel %vm545, %v4595, 0
        %4611 = vmatprep.subr.bf16.mxu0 0
        %4612 = vmatpush1.bf16.msra.mxu0 0
        %4613 = vmatprep.subr.bf16.mxu0 0
        %4614 = vmatpush1.bf16.msra.mxu0 0
        %4615 = vmatprep.subr.bf16.mxu0 0
        %4616 = vmatpush1.bf16.msra.mxu0 0
        %4617 = vmatprep.subr.bf16.mxu0 0
        %4618 = vmatpush1.bf16.msra.mxu0 0
        %4619 = vmatprep.subr.bf16.mxu0 0
        %4620 = vmatpush1.bf16.msra.mxu0 0
        %4621 = vmatprep.subr.bf16.mxu0 0
        %4622 = vmatpush1.bf16.msra.mxu0 0
        %4623 = vmatprep.subr.bf16.mxu0 0
        %4624 = vmatpush1.bf16.msra.mxu0 0
        %4625 = vmatprep.subr.bf16.mxu0 %v4605
        %4626 = vmatpush1.bf16.msra.mxu0 %v4604
        %4627 = vmatprep.subr.bf16.mxu0 0
        %4628 = vmatpush2.bf16.msra.mxu0 0
        %4629 = vmatprep.subr.bf16.mxu0 0
        %4630 = vmatpush2.bf16.msra.mxu0 0
        %4631 = vmatprep.subr.bf16.mxu0 0
        %4632 = vmatpush2.bf16.msra.mxu0 0
        %4633 = vmatprep.subr.bf16.mxu0 0
        %4634 = vmatpush2.bf16.msra.mxu0 0
        %4635 = vmatprep.subr.bf16.mxu0 0
        %4636 = vmatpush2.bf16.msra.mxu0 0
        %4637 = vmatprep.subr.bf16.mxu0 0
        %4638 = vmatpush2.bf16.msra.mxu0 0
        %4639 = vmatprep.subr.bf16.mxu0 0
        %4640 = vmatpush2.bf16.msra.mxu0 0
        %4641 = vmatprep.subr.bf16.mxu0 0
        %4642 = vmatpush2.bf16.msra.mxu0 0
        %4643 = vmatprep.mubr.bf16.mxu0 0
        %4644 = vmatmul.mubr.bf16.gmra.mxu0 %v4609
        %v4645 = vpop.f32.mrf.mxu0
        %v4646 = vadd.f32 0.0, %v4645
        %v4647 = vpop.f32.mrf.mxu0
        %v4648 = vadd.f32 0.0, %v4647
        %v4649 = vpop.f32.mrf.mxu0
        %v4650 = vpop.f32.mrf.mxu0
        %4651 = vdwg.mxu0
        %v4652 = vadd.f32 %v4593, %v4646
        %v4653 = vadd.f32 %v4594, %v4648
        %v4654 = vpack.c.bf16 %v4242, %v4242
        %v4655 = vld [vmem:[%s4035 + $0x70] sm:$0xff]
        %v4656 = vld [vmem:[%s4035 + $0x78] sm:$0xff]
        %v4659 = vunpack.c.l.b16 %v4655
        %v4660 = vunpack.c.h.b16 %v4655
        %v4661 = vunpack.c.l.b16 %v4656
        %v4662 = vunpack.c.h.b16 %v4656
        %v4663 = vpack.c.b16 %v4661, %v4659
        %v4664 = vpack.c.b16 %v4662, %v4660
        %v4668 = vsel %vm545, %v4654, 0
        %4670 = vmatprep.subr.bf16.mxu0 0
        %4671 = vmatpush1.bf16.msra.mxu0 0
        %4672 = vmatprep.subr.bf16.mxu0 0
        %4673 = vmatpush1.bf16.msra.mxu0 0
        %4674 = vmatprep.subr.bf16.mxu0 0
        %4675 = vmatpush1.bf16.msra.mxu0 0
        %4676 = vmatprep.subr.bf16.mxu0 0
        %4677 = vmatpush1.bf16.msra.mxu0 0
        %4678 = vmatprep.subr.bf16.mxu0 0
        %4679 = vmatpush1.bf16.msra.mxu0 0
        %4680 = vmatprep.subr.bf16.mxu0 0
        %4681 = vmatpush1.bf16.msra.mxu0 0
        %4682 = vmatprep.subr.bf16.mxu0 0
        %4683 = vmatpush1.bf16.msra.mxu0 0
        %4684 = vmatprep.subr.bf16.mxu0 %v4664
        %4685 = vmatpush1.bf16.msra.mxu0 %v4663
        %4686 = vmatprep.subr.bf16.mxu0 0
        %4687 = vmatpush2.bf16.msra.mxu0 0
        %4688 = vmatprep.subr.bf16.mxu0 0
        %4689 = vmatpush2.bf16.msra.mxu0 0
        %4690 = vmatprep.subr.bf16.mxu0 0
        %4691 = vmatpush2.bf16.msra.mxu0 0
        %4692 = vmatprep.subr.bf16.mxu0 0
        %4693 = vmatpush2.bf16.msra.mxu0 0
        %4694 = vmatprep.subr.bf16.mxu0 0
        %4695 = vmatpush2.bf16.msra.mxu0 0
        %4696 = vmatprep.subr.bf16.mxu0 0
        %4697 = vmatpush2.bf16.msra.mxu0 0
        %4698 = vmatprep.subr.bf16.mxu0 0
        %4699 = vmatpush2.bf16.msra.mxu0 0
        %4700 = vmatprep.subr.bf16.mxu0 0
        %4701 = vmatpush2.bf16.msra.mxu0 0
        %4702 = vmatprep.mubr.bf16.mxu0 0
        %4703 = vmatmul.mubr.bf16.gmra.mxu0 %v4668
        %v4704 = vpop.f32.mrf.mxu0
        %v4705 = vadd.f32 0.0, %v4704
        %v4706 = vpop.f32.mrf.mxu0
        %v4707 = vadd.f32 0.0, %v4706
        %v4708 = vpop.f32.mrf.mxu0
        %v4709 = vpop.f32.mrf.mxu0
        %4710 = vdwg.mxu0
        %v4711 = vadd.f32 %v4652, %v4705
        %v4712 = vadd.f32 %v4653, %v4707
        %v4713 = vpack.c.bf16 %v4247, %v4247
        %v4714 = vld [vmem:[%s4035 + $0x80] sm:$0xff]
        %v4715 = vld [vmem:[%s4035 + $0x88] sm:$0xff]
        %v4718 = vunpack.c.l.b16 %v4714
        %v4719 = vunpack.c.h.b16 %v4714
        %v4720 = vunpack.c.l.b16 %v4715
        %v4721 = vunpack.c.h.b16 %v4715
        %v4722 = vpack.c.b16 %v4720, %v4718
        %v4723 = vpack.c.b16 %v4721, %v4719
        %v4727 = vsel %vm545, %v4713, 0
        %4729 = vmatprep.subr.bf16.mxu0 0
        %4730 = vmatpush1.bf16.msra.mxu0 0
        %4731 = vmatprep.subr.bf16.mxu0 0
        %4732 = vmatpush1.bf16.msra.mxu0 0
        %4733 = vmatprep.subr.bf16.mxu0 0
        %4734 = vmatpush1.bf16.msra.mxu0 0
        %4735 = vmatprep.subr.bf16.mxu0 0
        %4736 = vmatpush1.bf16.msra.mxu0 0
        %4737 = vmatprep.subr.bf16.mxu0 0
        %4738 = vmatpush1.bf16.msra.mxu0 0
        %4739 = vmatprep.subr.bf16.mxu0 0
        %4740 = vmatpush1.bf16.msra.mxu0 0
        %4741 = vmatprep.subr.bf16.mxu0 0
        %4742 = vmatpush1.bf16.msra.mxu0 0
        %4743 = vmatprep.subr.bf16.mxu0 %v4723
        %4744 = vmatpush1.bf16.msra.mxu0 %v4722
        %4745 = vmatprep.subr.bf16.mxu0 0
        %4746 = vmatpush2.bf16.msra.mxu0 0
        %4747 = vmatprep.subr.bf16.mxu0 0
        %4748 = vmatpush2.bf16.msra.mxu0 0
        %4749 = vmatprep.subr.bf16.mxu0 0
        %4750 = vmatpush2.bf16.msra.mxu0 0
        %4751 = vmatprep.subr.bf16.mxu0 0
        %4752 = vmatpush2.bf16.msra.mxu0 0
        %4753 = vmatprep.subr.bf16.mxu0 0
        %4754 = vmatpush2.bf16.msra.mxu0 0
        %4755 = vmatprep.subr.bf16.mxu0 0
        %4756 = vmatpush2.bf16.msra.mxu0 0
        %4757 = vmatprep.subr.bf16.mxu0 0
        %4758 = vmatpush2.bf16.msra.mxu0 0
        %4759 = vmatprep.subr.bf16.mxu0 0
        %4760 = vmatpush2.bf16.msra.mxu0 0
        %4761 = vmatprep.mubr.bf16.mxu0 0
        %4762 = vmatmul.mubr.bf16.gmra.mxu0 %v4727
        %v4763 = vpop.f32.mrf.mxu0
        %v4764 = vadd.f32 0.0, %v4763
        %v4765 = vpop.f32.mrf.mxu0
        %v4766 = vadd.f32 0.0, %v4765
        %v4767 = vpop.f32.mrf.mxu0
        %v4768 = vpop.f32.mrf.mxu0
        %4769 = vdwg.mxu0
        %v4770 = vadd.f32 %v4711, %v4764
        %v4771 = vadd.f32 %v4712, %v4766
        %v4772 = vxor.u32 %v4770, 2147483648
        %v4773 = vxor.u32 %v4771, 2147483648
        %v4774 = vmul.f32 %v4772, 1.442695
        %v4775 = vpow.pop %v4774
        %v4776 = vmul.f32 %v4773, 1.442695
        %v4777 = vpow.pop %v4776
        %v4778 = vadd.f32 %v4775, 1.0
        %v4779 = vadd.f32 %v4777, 1.0
        %v4780 = vrcp.pop %v4778
        %v4781 = vmul.f32 1.0, %v4780
        %v4782 = vrcp.pop %v4779
        %v4783 = vmul.f32 1.0, %v4782
        %v4784 = vmul.f32 %v4770, %v4781
        %v4785 = vmul.f32 %v4771, %v4783
        %vm4786 = vcmp.ge.f32.partialorder %v4770, -2.2
        %vm4787 = vcmp.ge.f32.partialorder %v4771, -2.2
        %vm4788 = vcmp.lt.f32.partialorder %v4770, -1.8
        %vm4789 = vcmp.lt.f32.partialorder %v4771, -1.8
        %vm4790 = vmand %vm4786, %vm4788
        %vm4791 = vmand %vm4787, %vm4789
        %v4792 = vsel %vm4790, 1, 0
        %v4793 = vsel %vm4791, 1, 0
        %v4794 = vcvt.s32.f32 %v4792
        %v4795 = vcvt.s32.f32 %v4793
        %vm4796 = vcmp.ge.f32.partialorder %v4770, -1.8
        %vm4797 = vcmp.ge.f32.partialorder %v4771, -1.8
        %vm4798 = vcmp.lt.f32.partialorder %v4770, -1.4
        %vm4799 = vcmp.lt.f32.partialorder %v4771, -1.4
        %vm4800 = vmand %vm4796, %vm4798
        %vm4801 = vmand %vm4797, %vm4799
        %v4802 = vsel %vm4800, 1, 0
        %v4803 = vsel %vm4801, 1, 0
        %v4804 = vcvt.s32.f32 %v4802
        %v4805 = vcvt.s32.f32 %v4803
        %vm4806 = vcmp.ge.f32.partialorder %v4770, -1.4
        %vm4807 = vcmp.ge.f32.partialorder %v4771, -1.4
        %vm4808 = vcmp.lt.f32.partialorder %v4770, -1.0
        %vm4809 = vcmp.lt.f32.partialorder %v4771, -1.0
        %vm4810 = vmand %vm4806, %vm4808
        %vm4811 = vmand %vm4807, %vm4809
        %v4812 = vsel %vm4810, 1, 0
        %v4813 = vsel %vm4811, 1, 0
        %v4814 = vcvt.s32.f32 %v4812
        %v4815 = vcvt.s32.f32 %v4813
        %vm4816 = vcmp.ge.f32.partialorder %v4770, -1.0
        %vm4817 = vcmp.ge.f32.partialorder %v4771, -1.0
        %vm4818 = vcmp.lt.f32.partialorder %v4770, -0.6
        %vm4819 = vcmp.lt.f32.partialorder %v4771, -0.6
        %vm4820 = vmand %vm4816, %vm4818
        %vm4821 = vmand %vm4817, %vm4819
        %v4822 = vsel %vm4820, 1, 0
        %v4823 = vsel %vm4821, 1, 0
        %v4824 = vcvt.s32.f32 %v4822
        %v4825 = vcvt.s32.f32 %v4823
        %vm4826 = vcmp.ge.f32.partialorder %v4770, -0.6
        %vm4827 = vcmp.ge.f32.partialorder %v4771, -0.6
        %vm4828 = vcmp.lt.f32.partialorder %v4770, -0.2
        %vm4829 = vcmp.lt.f32.partialorder %v4771, -0.2
        %vm4830 = vmand %vm4826, %vm4828
        %vm4831 = vmand %vm4827, %vm4829
        %v4832 = vsel %vm4830, 1, 0
        %v4833 = vsel %vm4831, 1, 0
        %v4834 = vcvt.s32.f32 %v4832
        %v4835 = vcvt.s32.f32 %v4833
        %vm4836 = vcmp.ge.f32.partialorder %v4770, -0.2
        %vm4837 = vcmp.ge.f32.partialorder %v4771, -0.2
        %vm4838 = vcmp.lt.f32.partialorder %v4770, 0.2
        %vm4839 = vcmp.lt.f32.partialorder %v4771, 0.2
        %vm4840 = vmand %vm4836, %vm4838
        %vm4841 = vmand %vm4837, %vm4839
        %v4842 = vsel %vm4840, 1, 0
        %v4843 = vsel %vm4841, 1, 0
        %v4844 = vcvt.s32.f32 %v4842
        %v4845 = vcvt.s32.f32 %v4843
        %vm4846 = vcmp.ge.f32.partialorder %v4770, 0.2
        %vm4847 = vcmp.ge.f32.partialorder %v4771, 0.2
        %vm4848 = vcmp.lt.f32.partialorder %v4770, 0.6
        %vm4849 = vcmp.lt.f32.partialorder %v4771, 0.6
        %vm4850 = vmand %vm4846, %vm4848
        %vm4851 = vmand %vm4847, %vm4849
        %v4852 = vsel %vm4850, 1, 0
        %v4853 = vsel %vm4851, 1, 0
        %v4854 = vcvt.s32.f32 %v4852
        %v4855 = vcvt.s32.f32 %v4853
        %vm4856 = vcmp.ge.f32.partialorder %v4770, 0.6
        %vm4857 = vcmp.ge.f32.partialorder %v4771, 0.6
        %vm4858 = vcmp.lt.f32.partialorder %v4770, 1.0
        %vm4859 = vcmp.lt.f32.partialorder %v4771, 1.0
        %vm4860 = vmand %vm4856, %vm4858
        %vm4861 = vmand %vm4857, %vm4859
        %v4862 = vsel %vm4860, 1, 0
        %v4863 = vsel %vm4861, 1, 0
        %v4864 = vcvt.s32.f32 %v4862
        %v4865 = vcvt.s32.f32 %v4863
        %vm4866 = vcmp.ge.f32.partialorder %v4770, 1.0
        %vm4867 = vcmp.ge.f32.partialorder %v4771, 1.0
        %vm4868 = vcmp.lt.f32.partialorder %v4770, 1.4
        %vm4869 = vcmp.lt.f32.partialorder %v4771, 1.4
        %vm4870 = vmand %vm4866, %vm4868
        %vm4871 = vmand %vm4867, %vm4869
        %v4872 = vsel %vm4870, 1, 0
        %v4873 = vsel %vm4871, 1, 0
        %v4874 = vcvt.s32.f32 %v4872
        %v4875 = vcvt.s32.f32 %v4873
        %vm4876 = vcmp.ge.f32.partialorder %v4770, 1.4
        %vm4877 = vcmp.ge.f32.partialorder %v4771, 1.4
        %vm4878 = vcmp.lt.f32.partialorder %v4770, 1.8
        %vm4879 = vcmp.lt.f32.partialorder %v4771, 1.8
        %vm4880 = vmand %vm4876, %vm4878
        %vm4881 = vmand %vm4877, %vm4879
        %v4882 = vsel %vm4880, 1, 0
        %v4883 = vsel %vm4881, 1, 0
        %v4884 = vcvt.s32.f32 %v4882
        %v4885 = vcvt.s32.f32 %v4883
        %vm4886 = vcmp.ge.f32.partialorder %v4770, 1.8
        %vm4887 = vcmp.ge.f32.partialorder %v4771, 1.8
        %vm4888 = vcmp.lt.f32.partialorder %v4770, 2.2
        %vm4889 = vcmp.lt.f32.partialorder %v4771, 2.2
        %vm4890 = vmand %vm4886, %vm4888
        %vm4891 = vmand %vm4887, %vm4889
        %v4892 = vsel %vm4890, 1, 0
        %v4893 = vsel %vm4891, 1, 0
        %v4894 = vcvt.s32.f32 %v4892
        %v4895 = vcvt.s32.f32 %v4893
        %v4896 = vsub.f32 %v4770, -2.2
        %v4897 = vsub.f32 %v4771, -2.2
        %v4898 = vmul.f32 %v4896, 2.5
        %v4899 = vmul.f32 %v4897, 2.5
        %v4900 = vmul.f32 %v4898, %v4794
        %v4901 = vmul.f32 %v4899, %v4795
        %v4902 = vsub.f32 -1.4, %v4770
        %v4903 = vsub.f32 -1.4, %v4771
        %v4904 = vmul.f32 %v4902, 2.5
        %v4905 = vmul.f32 %v4903, 2.5
        %v4906 = vmul.f32 %v4904, %v4804
        %v4907 = vmul.f32 %v4905, %v4805
        %v4908 = vadd.f32 %v4900, %v4906
        %v4909 = vadd.f32 %v4901, %v4907
        %v4910 = vsub.f32 %v4770, -1.8
        %v4911 = vsub.f32 %v4771, -1.8
        %v4912 = vmul.f32 %v4910, 2.5
        %v4913 = vmul.f32 %v4911, 2.5
        %v4914 = vmul.f32 %v4912, %v4804
        %v4915 = vmul.f32 %v4913, %v4805
        %v4916 = vsub.f32 -1.0, %v4770
        %v4917 = vsub.f32 -1.0, %v4771
        %v4918 = vmul.f32 %v4916, 2.5
        %v4919 = vmul.f32 %v4917, 2.5
        %v4920 = vmul.f32 %v4918, %v4814
        %v4921 = vmul.f32 %v4919, %v4815
        %v4922 = vadd.f32 %v4914, %v4920
        %v4923 = vadd.f32 %v4915, %v4921
        %v4924 = vsub.f32 %v4770, -1.4
        %v4925 = vsub.f32 %v4771, -1.4
        %v4926 = vmul.f32 %v4924, 2.5
        %v4927 = vmul.f32 %v4925, 2.5
        %v4928 = vmul.f32 %v4926, %v4814
        %v4929 = vmul.f32 %v4927, %v4815
        %v4930 = vsub.f32 -0.6, %v4770
        %v4931 = vsub.f32 -0.6, %v4771
        %v4932 = vmul.f32 %v4930, 2.5
        %v4933 = vmul.f32 %v4931, 2.5
        %v4934 = vmul.f32 %v4932, %v4824
        %v4935 = vmul.f32 %v4933, %v4825
        %v4936 = vadd.f32 %v4928, %v4934
        %v4937 = vadd.f32 %v4929, %v4935
        %v4938 = vsub.f32 %v4770, -1.0
        %v4939 = vsub.f32 %v4771, -1.0
        %v4940 = vmul.f32 %v4938, 2.5
        %v4941 = vmul.f32 %v4939, 2.5
        %v4942 = vmul.f32 %v4940, %v4824
        %v4943 = vmul.f32 %v4941, %v4825
        %v4944 = vsub.f32 -0.2, %v4770
        %v4945 = vsub.f32 -0.2, %v4771
        %v4946 = vmul.f32 %v4944, 2.5
        %v4947 = vmul.f32 %v4945, 2.5
        %v4948 = vmul.f32 %v4946, %v4834
        %v4949 = vmul.f32 %v4947, %v4835
        %v4950 = vadd.f32 %v4942, %v4948
        %v4951 = vadd.f32 %v4943, %v4949
        %v4952 = vsub.f32 %v4770, -0.6
        %v4953 = vsub.f32 %v4771, -0.6
        %v4954 = vmul.f32 %v4952, 2.5
        %v4955 = vmul.f32 %v4953, 2.5
        %v4956 = vmul.f32 %v4954, %v4834
        %v4957 = vmul.f32 %v4955, %v4835
        %v4958 = vsub.f32 0.2, %v4770
        %v4959 = vsub.f32 0.2, %v4771
        %v4960 = vmul.f32 %v4958, 2.5
        %v4961 = vmul.f32 %v4959, 2.5
        %v4962 = vmul.f32 %v4960, %v4844
        %v4963 = vmul.f32 %v4961, %v4845
        %v4964 = vadd.f32 %v4956, %v4962
        %v4965 = vadd.f32 %v4957, %v4963
        %v4966 = vsub.f32 %v4770, -0.2
        %v4967 = vsub.f32 %v4771, -0.2
        %v4968 = vmul.f32 %v4966, 2.5
        %v4969 = vmul.f32 %v4967, 2.5
        %v4970 = vmul.f32 %v4968, %v4844
        %v4971 = vmul.f32 %v4969, %v4845
        %v4972 = vsub.f32 0.6, %v4770
        %v4973 = vsub.f32 0.6, %v4771
        %v4974 = vmul.f32 %v4972, 2.5
        %v4975 = vmul.f32 %v4973, 2.5
        %v4976 = vmul.f32 %v4974, %v4854
        %v4977 = vmul.f32 %v4975, %v4855
        %v4978 = vadd.f32 %v4970, %v4976
        %v4979 = vadd.f32 %v4971, %v4977
        %v4980 = vsub.f32 %v4770, 0.2
        %v4981 = vsub.f32 %v4771, 0.2
        %v4982 = vmul.f32 %v4980, 2.5
        %v4983 = vmul.f32 %v4981, 2.5
        %v4984 = vmul.f32 %v4982, %v4854
        %v4985 = vmul.f32 %v4983, %v4855
        %v4986 = vsub.f32 1.0, %v4770
        %v4987 = vsub.f32 1.0, %v4771
        %v4988 = vmul.f32 %v4986, 2.5
        %v4989 = vmul.f32 %v4987, 2.5
        %v4990 = vmul.f32 %v4988, %v4864
        %v4991 = vmul.f32 %v4989, %v4865
        %v4992 = vadd.f32 %v4984, %v4990
        %v4993 = vadd.f32 %v4985, %v4991
        %v4994 = vsub.f32 %v4770, 0.6
        %v4995 = vsub.f32 %v4771, 0.6
        %v4996 = vmul.f32 %v4994, 2.5
        %v4997 = vmul.f32 %v4995, 2.5
        %v4998 = vmul.f32 %v4996, %v4864
        %v4999 = vmul.f32 %v4997, %v4865
        %v5000 = vsub.f32 1.4, %v4770
        %v5001 = vsub.f32 1.4, %v4771
        %v5002 = vmul.f32 %v5000, 2.5
        %v5003 = vmul.f32 %v5001, 2.5
        %v5004 = vmul.f32 %v5002, %v4874
        %v5005 = vmul.f32 %v5003, %v4875
        %v5006 = vadd.f32 %v4998, %v5004
        %v5007 = vadd.f32 %v4999, %v5005
        %v5008 = vsub.f32 %v4770, 1.0
        %v5009 = vsub.f32 %v4771, 1.0
        %v5010 = vmul.f32 %v5008, 2.5
        %v5011 = vmul.f32 %v5009, 2.5
        %v5012 = vmul.f32 %v5010, %v4874
        %v5013 = vmul.f32 %v5011, %v4875
        %v5014 = vsub.f32 1.8, %v4770
        %v5015 = vsub.f32 1.8, %v4771
        %v5016 = vmul.f32 %v5014, 2.5
        %v5017 = vmul.f32 %v5015, 2.5
        %v5018 = vmul.f32 %v5016, %v4884
        %v5019 = vmul.f32 %v5017, %v4885
        %v5020 = vadd.f32 %v5012, %v5018
        %v5021 = vadd.f32 %v5013, %v5019
        %v5022 = vsub.f32 %v4770, 1.4
        %v5023 = vsub.f32 %v4771, 1.4
        %v5024 = vmul.f32 %v5022, 2.5
        %v5025 = vmul.f32 %v5023, 2.5
        %v5026 = vmul.f32 %v5024, %v4884
        %v5027 = vmul.f32 %v5025, %v4885
        %v5028 = vsub.f32 2.2, %v4770
        %v5029 = vsub.f32 2.2, %v4771
        %v5030 = vmul.f32 %v5028, 2.5
        %v5031 = vmul.f32 %v5029, 2.5
        %v5032 = vmul.f32 %v5030, %v4894
        %v5033 = vmul.f32 %v5031, %v4895
        %v5034 = vadd.f32 %v5026, %v5032
        %v5035 = vadd.f32 %v5027, %v5033
        %v5036 = vmul.f32 %v4896, 1.25
        %v5037 = vmul.f32 %v4897, 1.25
        %v5038 = vmul.f32 %v5036, %v4908
        %v5039 = vmul.f32 %v5037, %v4909
        %v5040 = vmul.f32 %v4916, 1.25
        %v5041 = vmul.f32 %v4917, 1.25
        %v5042 = vmul.f32 %v5040, %v4922
        %v5043 = vmul.f32 %v5041, %v4923
        %v5044 = vadd.f32 %v5038, %v5042
        %v5045 = vadd.f32 %v5039, %v5043
        %v5046 = vmul.f32 %v4910, 1.25
        %v5047 = vmul.f32 %v4911, 1.25
        %v5048 = vmul.f32 %v5046, %v4922
        %v5049 = vmul.f32 %v5047, %v4923
        %v5050 = vmul.f32 %v4930, 1.25
        %v5051 = vmul.f32 %v4931, 1.25
        %v5052 = vmul.f32 %v5050, %v4936
        %v5053 = vmul.f32 %v5051, %v4937
        %v5054 = vadd.f32 %v5048, %v5052
        %v5055 = vadd.f32 %v5049, %v5053
        %v5056 = vmul.f32 %v4924, 1.25
        %v5057 = vmul.f32 %v4925, 1.25
        %v5058 = vmul.f32 %v5056, %v4936
        %v5059 = vmul.f32 %v5057, %v4937
        %v5060 = vmul.f32 %v4944, 1.25
        %v5061 = vmul.f32 %v4945, 1.25
        %v5062 = vmul.f32 %v5060, %v4950
        %v5063 = vmul.f32 %v5061, %v4951
        %v5064 = vadd.f32 %v5058, %v5062
        %v5065 = vadd.f32 %v5059, %v5063
        %v5066 = vmul.f32 %v4938, 1.25
        %v5067 = vmul.f32 %v4939, 1.25
        %v5068 = vmul.f32 %v5066, %v4950
        %v5069 = vmul.f32 %v5067, %v4951
        %v5070 = vmul.f32 %v4958, 1.25
        %v5071 = vmul.f32 %v4959, 1.25
        %v5072 = vmul.f32 %v5070, %v4964
        %v5073 = vmul.f32 %v5071, %v4965
        %v5074 = vadd.f32 %v5068, %v5072
        %v5075 = vadd.f32 %v5069, %v5073
        %v5076 = vmul.f32 %v4952, 1.25
        %v5077 = vmul.f32 %v4953, 1.25
        %v5078 = vmul.f32 %v5076, %v4964
        %v5079 = vmul.f32 %v5077, %v4965
        %v5080 = vmul.f32 %v4972, 1.25
        %v5081 = vmul.f32 %v4973, 1.25
        %v5082 = vmul.f32 %v5080, %v4978
        %v5083 = vmul.f32 %v5081, %v4979
        %v5084 = vadd.f32 %v5078, %v5082
        %v5085 = vadd.f32 %v5079, %v5083
        %v5086 = vmul.f32 %v4966, 1.25
        %v5087 = vmul.f32 %v4967, 1.25
        %v5088 = vmul.f32 %v5086, %v4978
        %v5089 = vmul.f32 %v5087, %v4979
        %v5090 = vmul.f32 %v4986, 1.25
        %v5091 = vmul.f32 %v4987, 1.25
        %v5092 = vmul.f32 %v5090, %v4992
        %v5093 = vmul.f32 %v5091, %v4993
        %v5094 = vadd.f32 %v5088, %v5092
        %v5095 = vadd.f32 %v5089, %v5093
        %v5096 = vmul.f32 %v4980, 1.25
        %v5097 = vmul.f32 %v4981, 1.25
        %v5098 = vmul.f32 %v5096, %v4992
        %v5099 = vmul.f32 %v5097, %v4993
        %v5100 = vmul.f32 %v5000, 1.25
        %v5101 = vmul.f32 %v5001, 1.25
        %v5102 = vmul.f32 %v5100, %v5006
        %v5103 = vmul.f32 %v5101, %v5007
        %v5104 = vadd.f32 %v5098, %v5102
        %v5105 = vadd.f32 %v5099, %v5103
        %v5106 = vmul.f32 %v4994, 1.25
        %v5107 = vmul.f32 %v4995, 1.25
        %v5108 = vmul.f32 %v5106, %v5006
        %v5109 = vmul.f32 %v5107, %v5007
        %v5110 = vmul.f32 %v5014, 1.25
        %v5111 = vmul.f32 %v5015, 1.25
        %v5112 = vmul.f32 %v5110, %v5020
        %v5113 = vmul.f32 %v5111, %v5021
        %v5114 = vadd.f32 %v5108, %v5112
        %v5115 = vadd.f32 %v5109, %v5113
        %v5116 = vmul.f32 %v5008, 1.25
        %v5117 = vmul.f32 %v5009, 1.25
        %v5118 = vmul.f32 %v5116, %v5020
        %v5119 = vmul.f32 %v5117, %v5021
        %v5120 = vmul.f32 %v5028, 1.25
        %v5121 = vmul.f32 %v5029, 1.25
        %v5122 = vmul.f32 %v5120, %v5034
        %v5123 = vmul.f32 %v5121, %v5035
        %v5124 = vadd.f32 %v5118, %v5122
        %v5125 = vadd.f32 %v5119, %v5123
        %v5126 = vmul.f32 %v4896, 0.8333333
        %v5127 = vmul.f32 %v4897, 0.8333333
        %v5128 = vmul.f32 %v5126, %v5044
        %v5129 = vmul.f32 %v5127, %v5045
        %v5130 = vmul.f32 %v4930, 0.8333333
        %v5131 = vmul.f32 %v4931, 0.8333333
        %v5132 = vmul.f32 %v5130, %v5054
        %v5133 = vmul.f32 %v5131, %v5055
        %v5134 = vadd.f32 %v5128, %v5132
        %v5135 = vadd.f32 %v5129, %v5133
        %v5136 = vmul.f32 %v4910, 0.8333333
        %v5137 = vmul.f32 %v4911, 0.8333333
        %v5138 = vmul.f32 %v5136, %v5054
        %v5139 = vmul.f32 %v5137, %v5055
        %v5140 = vmul.f32 %v4944, 0.8333333
        %v5141 = vmul.f32 %v4945, 0.8333333
        %v5142 = vmul.f32 %v5140, %v5064
        %v5143 = vmul.f32 %v5141, %v5065
        %v5144 = vadd.f32 %v5138, %v5142
        %v5145 = vadd.f32 %v5139, %v5143
        %v5146 = vmul.f32 %v4924, 0.8333333
        %v5147 = vmul.f32 %v4925, 0.8333333
        %v5148 = vmul.f32 %v5146, %v5064
        %v5149 = vmul.f32 %v5147, %v5065
        %v5150 = vmul.f32 %v4958, 0.8333333
        %v5151 = vmul.f32 %v4959, 0.8333333
        %v5152 = vmul.f32 %v5150, %v5074
        %v5153 = vmul.f32 %v5151, %v5075
        %v5154 = vadd.f32 %v5148, %v5152
        %v5155 = vadd.f32 %v5149, %v5153
        %v5156 = vmul.f32 %v4938, 0.8333333
        %v5157 = vmul.f32 %v4939, 0.8333333
        %v5158 = vmul.f32 %v5156, %v5074
        %v5159 = vmul.f32 %v5157, %v5075
        %v5160 = vmul.f32 %v4972, 0.8333333
        %v5161 = vmul.f32 %v4973, 0.8333333
        %v5162 = vmul.f32 %v5160, %v5084
        %v5163 = vmul.f32 %v5161, %v5085
        %v5164 = vadd.f32 %v5158, %v5162
        %v5165 = vadd.f32 %v5159, %v5163
        %v5166 = vmul.f32 %v4952, 0.8333333
        %v5167 = vmul.f32 %v4953, 0.8333333
        %v5168 = vmul.f32 %v5166, %v5084
        %v5169 = vmul.f32 %v5167, %v5085
        %v5170 = vmul.f32 %v4986, 0.8333333
        %v5171 = vmul.f32 %v4987, 0.8333333
        %v5172 = vmul.f32 %v5170, %v5094
        %v5173 = vmul.f32 %v5171, %v5095
        %v5174 = vadd.f32 %v5168, %v5172
        %v5175 = vadd.f32 %v5169, %v5173
        %v5176 = vmul.f32 %v4966, 0.8333333
        %v5177 = vmul.f32 %v4967, 0.8333333
        %v5178 = vmul.f32 %v5176, %v5094
        %v5179 = vmul.f32 %v5177, %v5095
        %v5180 = vmul.f32 %v5000, 0.8333333
        %v5181 = vmul.f32 %v5001, 0.8333333
        %v5182 = vmul.f32 %v5180, %v5104
        %v5183 = vmul.f32 %v5181, %v5105
        %v5184 = vadd.f32 %v5178, %v5182
        %v5185 = vadd.f32 %v5179, %v5183
        %v5186 = vmul.f32 %v4980, 0.8333333
        %v5187 = vmul.f32 %v4981, 0.8333333
        %v5188 = vmul.f32 %v5186, %v5104
        %v5189 = vmul.f32 %v5187, %v5105
        %v5190 = vmul.f32 %v5014, 0.8333333
        %v5191 = vmul.f32 %v5015, 0.8333333
        %v5192 = vmul.f32 %v5190, %v5114
        %v5193 = vmul.f32 %v5191, %v5115
        %v5194 = vadd.f32 %v5188, %v5192
        %v5195 = vadd.f32 %v5189, %v5193
        %v5196 = vmul.f32 %v4994, 0.8333333
        %v5197 = vmul.f32 %v4995, 0.8333333
        %v5198 = vmul.f32 %v5196, %v5114
        %v5199 = vmul.f32 %v5197, %v5115
        %v5200 = vmul.f32 %v5028, 0.8333333
        %v5201 = vmul.f32 %v5029, 0.8333333
        %v5202 = vmul.f32 %v5200, %v5124
        %v5203 = vmul.f32 %v5201, %v5125
        %v5204 = vadd.f32 %v5198, %v5202
        %v5205 = vadd.f32 %v5199, %v5203
        %v5206 = vpack.c.bf16 %v4784, %v4784
        %v5207 = vpack.c.bf16 %v4785, %v4785
        %v5208 = vpack.c.bf16 %v5134, %v5134
        %v5209 = vpack.c.bf16 %v5135, %v5135
        %v5210 = vpack.c.bf16 %v5144, %v5144
        %v5211 = vpack.c.bf16 %v5145, %v5145
        %v5212 = vpack.c.bf16 %v5154, %v5154
        %v5213 = vpack.c.bf16 %v5155, %v5155
        %v5214 = vpack.c.bf16 %v5164, %v5164
        %v5215 = vpack.c.bf16 %v5165, %v5165
        %v5216 = vpack.c.bf16 %v5174, %v5174
        %v5217 = vpack.c.bf16 %v5175, %v5175
        %v5218 = vpack.c.bf16 %v5184, %v5184
        %v5219 = vpack.c.bf16 %v5185, %v5185
        %v5220 = vpack.c.bf16 %v5194, %v5194
        %v5221 = vpack.c.bf16 %v5195, %v5195
        %v5222 = vpack.c.bf16 %v5204, %v5204
        %v5223 = vpack.c.bf16 %v5205, %v5205
        %s5224 = scalar_lea.vmem %s248, 1152 [#allocation4]
        %v5225 = vld [vmem:[%s5224] sm:$0xf]
        %v5226 = vld [vmem:[%s5224 + $0x4] sm:$0xf]
        %v5227 = vld [vmem:[%s5224 + $0x8] sm:$0xf]
        %v5228 = vld [vmem:[%s5224 + $0xc] sm:$0xf]
        %v5229 = vld [vmem:[%s5224 + $0x10] sm:$0xf]
        %v5230 = vld [vmem:[%s5224 + $0x14] sm:$0xf]
        %v5231 = vld [vmem:[%s5224 + $0x18] sm:$0xf]
        %v5232 = vld [vmem:[%s5224 + $0x1c] sm:$0xf]
        %v5233 = vld [vmem:[%s5224 + $0x20] sm:$0xf]
        %v5234 = vld [vmem:[%s5224 + $0x24] sm:$0xf]
        %v5235 = vld [vmem:[%s5224 + $0x28] sm:$0xf]
        %v5236 = vld [vmem:[%s5224 + $0x2c] sm:$0xf]
        %v5237 = vld [vmem:[%s5224 + $0x30] sm:$0xf]
        %v5238 = vld [vmem:[%s5224 + $0x34] sm:$0xf]
        %v5239 = vld [vmem:[%s5224 + $0x38] sm:$0xf]
        %v5240 = vld [vmem:[%s5224 + $0x3c] sm:$0xf]
        %v5241 = vld [vmem:[%s5224 + $0x40] sm:$0xf]
        %v5242 = vld [vmem:[%s5224 + $0x44] sm:$0xf]
        %v5243 = vld [vmem:[%s5224 + $0x48] sm:$0xf]
        %v5244 = vld [vmem:[%s5224 + $0x4c] sm:$0xf]
        %v5245 = vld [vmem:[%s5224 + $0x50] sm:$0xf]
        %v5246 = vld [vmem:[%s5224 + $0x54] sm:$0xf]
        %v5247 = vld [vmem:[%s5224 + $0x58] sm:$0xf]
        %v5248 = vld [vmem:[%s5224 + $0x5c] sm:$0xf]
        %v5249 = vld [vmem:[%s5224 + $0x60] sm:$0xf]
        %v5250 = vld [vmem:[%s5224 + $0x64] sm:$0xf]
        %v5251 = vld [vmem:[%s5224 + $0x68] sm:$0xf]
        %v5252 = vld [vmem:[%s5224 + $0x6c] sm:$0xf]
        %v5253 = vld [vmem:[%s5224 + $0x70] sm:$0xf]
        %v5254 = vld [vmem:[%s5224 + $0x74] sm:$0xf]
        %v5255 = vld [vmem:[%s5224 + $0x78] sm:$0xf]
        %v5256 = vld [vmem:[%s5224 + $0x7c] sm:$0xf]
        %v5257 = vld [vmem:[%s5224 + $0x80] sm:$0xf]
        %v5258 = vld [vmem:[%s5224 + $0x84] sm:$0xf]
        %v5259 = vld [vmem:[%s5224 + $0x88] sm:$0xf]
        %v5260 = vld [vmem:[%s5224 + $0x8c] sm:$0xf]
        %v5261 = vld [vmem:[%s5224 + $0x90] sm:$0xf]
        %v5262 = vld [vmem:[%s5224 + $0x94] sm:$0xf]
        %v5263 = vld [vmem:[%s5224 + $0x98] sm:$0xf]
        %v5264 = vld [vmem:[%s5224 + $0x9c] sm:$0xf]
        %v5265 = vld [vmem:[%s5224 + $0xa0] sm:$0xf]
        %v5266 = vld [vmem:[%s5224 + $0xa4] sm:$0xf]
        %v5267 = vld [vmem:[%s5224 + $0xa8] sm:$0xf]
        %v5268 = vld [vmem:[%s5224 + $0xac] sm:$0xf]
        %v5269 = vld [vmem:[%s5224 + $0xb0] sm:$0xf]
        %v5270 = vld [vmem:[%s5224 + $0xb4] sm:$0xf]
        %v5271 = vld [vmem:[%s5224 + $0xb8] sm:$0xf]
        %v5272 = vld [vmem:[%s5224 + $0xbc] sm:$0xf]
        %v5273 = vld [vmem:[%s5224 + $0xc0] sm:$0xf]
        %v5274 = vld [vmem:[%s5224 + $0xc4] sm:$0xf]
        %v5275 = vld [vmem:[%s5224 + $0xc8] sm:$0xf]
        %v5276 = vld [vmem:[%s5224 + $0xcc] sm:$0xf]
        %v5277 = vld [vmem:[%s5224 + $0xd0] sm:$0xf]
        %v5278 = vld [vmem:[%s5224 + $0xd4] sm:$0xf]
        %v5279 = vld [vmem:[%s5224 + $0xd8] sm:$0xf]
        %v5280 = vld [vmem:[%s5224 + $0xdc] sm:$0xf]
        %v5281 = vld [vmem:[%s5224 + $0xe0] sm:$0xf]
        %v5282 = vld [vmem:[%s5224 + $0xe4] sm:$0xf]
        %v5283 = vld [vmem:[%s5224 + $0xe8] sm:$0xf]
        %v5284 = vld [vmem:[%s5224 + $0xec] sm:$0xf]
        %v5285 = vld [vmem:[%s5224 + $0xf0] sm:$0xf]
        %v5286 = vld [vmem:[%s5224 + $0xf4] sm:$0xf]
        %v5287 = vld [vmem:[%s5224 + $0xf8] sm:$0xf]
        %v5288 = vld [vmem:[%s5224 + $0xfc] sm:$0xf]
        %v5289 = vld [vmem:[%s5224 + $0x100] sm:$0xf]
        %v5290 = vld [vmem:[%s5224 + $0x104] sm:$0xf]
        %v5291 = vld [vmem:[%s5224 + $0x108] sm:$0xf]
        %v5292 = vld [vmem:[%s5224 + $0x10c] sm:$0xf]
        %v5293 = vld [vmem:[%s5224 + $0x110] sm:$0xf]
        %v5294 = vld [vmem:[%s5224 + $0x114] sm:$0xf]
        %v5295 = vld [vmem:[%s5224 + $0x118] sm:$0xf]
        %v5296 = vld [vmem:[%s5224 + $0x11c] sm:$0xf]
        %v5297 = vld [vmem:[%s5224 + $0x120] sm:$0xf]
        %v5298 = vld [vmem:[%s5224 + $0x124] sm:$0xf]
        %v5299 = vld [vmem:[%s5224 + $0x128] sm:$0xf]
        %v5300 = vld [vmem:[%s5224 + $0x12c] sm:$0xf]
        %v5301 = vld [vmem:[%s5224 + $0x130] sm:$0xf]
        %v5302 = vld [vmem:[%s5224 + $0x134] sm:$0xf]
        %v5303 = vld [vmem:[%s5224 + $0x138] sm:$0xf]
        %v5304 = vld [vmem:[%s5224 + $0x13c] sm:$0xf]
        %v5305 = vld [vmem:[%s5224 + $0x140] sm:$0xf]
        %v5306 = vld [vmem:[%s5224 + $0x144] sm:$0xf]
        %v5307 = vld [vmem:[%s5224 + $0x148] sm:$0xf]
        %v5308 = vld [vmem:[%s5224 + $0x14c] sm:$0xf]
        %v5309 = vld [vmem:[%s5224 + $0x150] sm:$0xf]
        %v5310 = vld [vmem:[%s5224 + $0x154] sm:$0xf]
        %v5311 = vld [vmem:[%s5224 + $0x158] sm:$0xf]
        %v5312 = vld [vmem:[%s5224 + $0x15c] sm:$0xf]
        %v5313 = vld [vmem:[%s5224 + $0x160] sm:$0xf]
        %v5314 = vld [vmem:[%s5224 + $0x164] sm:$0xf]
        %v5315 = vld [vmem:[%s5224 + $0x168] sm:$0xf]
        %v5316 = vld [vmem:[%s5224 + $0x16c] sm:$0xf]
        %v5317 = vld [vmem:[%s5224 + $0x170] sm:$0xf]
        %v5318 = vld [vmem:[%s5224 + $0x174] sm:$0xf]
        %v5319 = vld [vmem:[%s5224 + $0x178] sm:$0xf]
        %v5320 = vld [vmem:[%s5224 + $0x17c] sm:$0xf]
        %v5321 = vld [vmem:[%s5224 + $0x180] sm:$0xf]
        %v5322 = vld [vmem:[%s5224 + $0x184] sm:$0xf]
        %v5323 = vld [vmem:[%s5224 + $0x188] sm:$0xf]
        %v5324 = vld [vmem:[%s5224 + $0x18c] sm:$0xf]
        %v5325 = vld [vmem:[%s5224 + $0x190] sm:$0xf]
        %v5326 = vld [vmem:[%s5224 + $0x194] sm:$0xf]
        %v5327 = vld [vmem:[%s5224 + $0x198] sm:$0xf]
        %v5328 = vld [vmem:[%s5224 + $0x19c] sm:$0xf]
        %v5329 = vld [vmem:[%s5224 + $0x1a0] sm:$0xf]
        %v5330 = vld [vmem:[%s5224 + $0x1a4] sm:$0xf]
        %v5331 = vld [vmem:[%s5224 + $0x1a8] sm:$0xf]
        %v5332 = vld [vmem:[%s5224 + $0x1ac] sm:$0xf]
        %v5333 = vld [vmem:[%s5224 + $0x1b0] sm:$0xf]
        %v5334 = vld [vmem:[%s5224 + $0x1b4] sm:$0xf]
        %v5335 = vld [vmem:[%s5224 + $0x1b8] sm:$0xf]
        %v5336 = vld [vmem:[%s5224 + $0x1bc] sm:$0xf]
        %v5337 = vld [vmem:[%s5224 + $0x1c0] sm:$0xf]
        %v5338 = vld [vmem:[%s5224 + $0x1c4] sm:$0xf]
        %v5339 = vld [vmem:[%s5224 + $0x1c8] sm:$0xf]
        %v5340 = vld [vmem:[%s5224 + $0x1cc] sm:$0xf]
        %v5341 = vld [vmem:[%s5224 + $0x1d0] sm:$0xf]
        %v5342 = vld [vmem:[%s5224 + $0x1d4] sm:$0xf]
        %v5343 = vld [vmem:[%s5224 + $0x1d8] sm:$0xf]
        %v5344 = vld [vmem:[%s5224 + $0x1dc] sm:$0xf]
        %v5345 = vld [vmem:[%s5224 + $0x1e0] sm:$0xf]
        %v5346 = vld [vmem:[%s5224 + $0x1e4] sm:$0xf]
        %v5347 = vld [vmem:[%s5224 + $0x1e8] sm:$0xf]
        %v5348 = vld [vmem:[%s5224 + $0x1ec] sm:$0xf]
        %v5349 = vld [vmem:[%s5224 + $0x1f0] sm:$0xf]
        %v5350 = vld [vmem:[%s5224 + $0x1f4] sm:$0xf]
        %v5351 = vld [vmem:[%s5224 + $0x1f8] sm:$0xf]
        %v5352 = vld [vmem:[%s5224 + $0x1fc] sm:$0xf]
        %v5353 = vld [vmem:[%s5224 + $0x200] sm:$0xf]
        %v5354 = vld [vmem:[%s5224 + $0x204] sm:$0xf]
        %v5355 = vld [vmem:[%s5224 + $0x208] sm:$0xf]
        %v5356 = vld [vmem:[%s5224 + $0x20c] sm:$0xf]
        %v5357 = vld [vmem:[%s5224 + $0x210] sm:$0xf]
        %v5358 = vld [vmem:[%s5224 + $0x214] sm:$0xf]
        %v5359 = vld [vmem:[%s5224 + $0x218] sm:$0xf]
        %v5360 = vld [vmem:[%s5224 + $0x21c] sm:$0xf]
        %v5361 = vld [vmem:[%s5224 + $0x220] sm:$0xf]
        %v5362 = vld [vmem:[%s5224 + $0x224] sm:$0xf]
        %v5363 = vld [vmem:[%s5224 + $0x228] sm:$0xf]
        %v5364 = vld [vmem:[%s5224 + $0x22c] sm:$0xf]
        %v5365 = vld [vmem:[%s5224 + $0x230] sm:$0xf]
        %v5366 = vld [vmem:[%s5224 + $0x234] sm:$0xf]
        %v5367 = vld [vmem:[%s5224 + $0x238] sm:$0xf]
        %v5368 = vld [vmem:[%s5224 + $0x23c] sm:$0xf]
        %v5369 = vld [vmem:[%s5224 + $0x240] sm:$0xf]
        %v5370 = vld [vmem:[%s5224 + $0x244] sm:$0xf]
        %v5371 = vld [vmem:[%s5224 + $0x248] sm:$0xf]
        %v5372 = vld [vmem:[%s5224 + $0x24c] sm:$0xf]
        %v5373 = vld [vmem:[%s5224 + $0x250] sm:$0xf]
        %v5374 = vld [vmem:[%s5224 + $0x254] sm:$0xf]
        %v5375 = vld [vmem:[%s5224 + $0x258] sm:$0xf]
        %v5376 = vld [vmem:[%s5224 + $0x25c] sm:$0xf]
        %v5377 = vld [vmem:[%s5224 + $0x260] sm:$0xf]
        %v5378 = vld [vmem:[%s5224 + $0x264] sm:$0xf]
        %v5379 = vld [vmem:[%s5224 + $0x268] sm:$0xf]
        %v5380 = vld [vmem:[%s5224 + $0x26c] sm:$0xf]
        %v5381 = vld [vmem:[%s5224 + $0x270] sm:$0xf]
        %v5382 = vld [vmem:[%s5224 + $0x274] sm:$0xf]
        %v5383 = vld [vmem:[%s5224 + $0x278] sm:$0xf]
        %v5384 = vld [vmem:[%s5224 + $0x27c] sm:$0xf]
        %v5385 = vld [vmem:[%s5224 + $0x280] sm:$0xf]
        %v5386 = vld [vmem:[%s5224 + $0x284] sm:$0xf]
        %v5387 = vld [vmem:[%s5224 + $0x288] sm:$0xf]
        %v5388 = vld [vmem:[%s5224 + $0x28c] sm:$0xf]
        %v5389 = vld [vmem:[%s5224 + $0x290] sm:$0xf]
        %v5390 = vld [vmem:[%s5224 + $0x294] sm:$0xf]
        %v5391 = vld [vmem:[%s5224 + $0x298] sm:$0xf]
        %v5392 = vld [vmem:[%s5224 + $0x29c] sm:$0xf]
        %v5393 = vld [vmem:[%s5224 + $0x2a0] sm:$0xf]
        %v5394 = vld [vmem:[%s5224 + $0x2a4] sm:$0xf]
        %v5395 = vld [vmem:[%s5224 + $0x2a8] sm:$0xf]
        %v5396 = vld [vmem:[%s5224 + $0x2ac] sm:$0xf]
        %v5397 = vld [vmem:[%s5224 + $0x2b0] sm:$0xf]
        %v5398 = vld [vmem:[%s5224 + $0x2b4] sm:$0xf]
        %v5399 = vld [vmem:[%s5224 + $0x2b8] sm:$0xf]
        %v5400 = vld [vmem:[%s5224 + $0x2bc] sm:$0xf]
        %v5401 = vld [vmem:[%s5224 + $0x2c0] sm:$0xf]
        %v5402 = vld [vmem:[%s5224 + $0x2c4] sm:$0xf]
        %v5403 = vld [vmem:[%s5224 + $0x2c8] sm:$0xf]
        %v5404 = vld [vmem:[%s5224 + $0x2cc] sm:$0xf]
        %v5405 = vld [vmem:[%s5224 + $0x2d0] sm:$0xf]
        %v5406 = vld [vmem:[%s5224 + $0x2d4] sm:$0xf]
        %v5407 = vld [vmem:[%s5224 + $0x2d8] sm:$0xf]
        %v5408 = vld [vmem:[%s5224 + $0x2dc] sm:$0xf]
        %v5409 = vld [vmem:[%s5224 + $0x2e0] sm:$0xf]
        %v5410 = vld [vmem:[%s5224 + $0x2e4] sm:$0xf]
        %v5411 = vld [vmem:[%s5224 + $0x2e8] sm:$0xf]
        %v5412 = vld [vmem:[%s5224 + $0x2ec] sm:$0xf]
        %v5413 = vld [vmem:[%s5224 + $0x2f0] sm:$0xf]
        %v5414 = vld [vmem:[%s5224 + $0x2f4] sm:$0xf]
        %v5415 = vld [vmem:[%s5224 + $0x2f8] sm:$0xf]
        %v5416 = vld [vmem:[%s5224 + $0x2fc] sm:$0xf]
        %v5417 = vld [vmem:[%s5224 + $0x300] sm:$0xf]
        %v5418 = vld [vmem:[%s5224 + $0x304] sm:$0xf]
        %v5419 = vld [vmem:[%s5224 + $0x308] sm:$0xf]
        %v5420 = vld [vmem:[%s5224 + $0x30c] sm:$0xf]
        %v5421 = vld [vmem:[%s5224 + $0x310] sm:$0xf]
        %v5422 = vld [vmem:[%s5224 + $0x314] sm:$0xf]
        %v5423 = vld [vmem:[%s5224 + $0x318] sm:$0xf]
        %v5424 = vld [vmem:[%s5224 + $0x31c] sm:$0xf]
        %v5425 = vld [vmem:[%s5224 + $0x320] sm:$0xf]
        %v5426 = vld [vmem:[%s5224 + $0x324] sm:$0xf]
        %v5427 = vld [vmem:[%s5224 + $0x328] sm:$0xf]
        %v5428 = vld [vmem:[%s5224 + $0x32c] sm:$0xf]
        %v5429 = vld [vmem:[%s5224 + $0x330] sm:$0xf]
        %v5430 = vld [vmem:[%s5224 + $0x334] sm:$0xf]
        %v5431 = vld [vmem:[%s5224 + $0x338] sm:$0xf]
        %v5432 = vld [vmem:[%s5224 + $0x33c] sm:$0xf]
        %v5433 = vld [vmem:[%s5224 + $0x340] sm:$0xf]
        %v5434 = vld [vmem:[%s5224 + $0x344] sm:$0xf]
        %v5435 = vld [vmem:[%s5224 + $0x348] sm:$0xf]
        %v5436 = vld [vmem:[%s5224 + $0x34c] sm:$0xf]
        %v5437 = vld [vmem:[%s5224 + $0x350] sm:$0xf]
        %v5438 = vld [vmem:[%s5224 + $0x354] sm:$0xf]
        %v5439 = vld [vmem:[%s5224 + $0x358] sm:$0xf]
        %v5440 = vld [vmem:[%s5224 + $0x35c] sm:$0xf]
        %v5441 = vld [vmem:[%s5224 + $0x360] sm:$0xf]
        %v5442 = vld [vmem:[%s5224 + $0x364] sm:$0xf]
        %v5443 = vld [vmem:[%s5224 + $0x368] sm:$0xf]
        %v5444 = vld [vmem:[%s5224 + $0x36c] sm:$0xf]
        %v5445 = vld [vmem:[%s5224 + $0x370] sm:$0xf]
        %v5446 = vld [vmem:[%s5224 + $0x374] sm:$0xf]
        %v5447 = vld [vmem:[%s5224 + $0x378] sm:$0xf]
        %v5448 = vld [vmem:[%s5224 + $0x37c] sm:$0xf]
        %v5449 = vld [vmem:[%s5224 + $0x380] sm:$0xf]
        %v5450 = vld [vmem:[%s5224 + $0x384] sm:$0xf]
        %v5451 = vld [vmem:[%s5224 + $0x388] sm:$0xf]
        %v5452 = vld [vmem:[%s5224 + $0x38c] sm:$0xf]
        %v5453 = vld [vmem:[%s5224 + $0x390] sm:$0xf]
        %v5454 = vld [vmem:[%s5224 + $0x394] sm:$0xf]
        %v5455 = vld [vmem:[%s5224 + $0x398] sm:$0xf]
        %v5456 = vld [vmem:[%s5224 + $0x39c] sm:$0xf]
        %v5457 = vld [vmem:[%s5224 + $0x3a0] sm:$0xf]
        %v5458 = vld [vmem:[%s5224 + $0x3a4] sm:$0xf]
        %v5459 = vld [vmem:[%s5224 + $0x3a8] sm:$0xf]
        %v5460 = vld [vmem:[%s5224 + $0x3ac] sm:$0xf]
        %v5461 = vld [vmem:[%s5224 + $0x3b0] sm:$0xf]
        %v5462 = vld [vmem:[%s5224 + $0x3b4] sm:$0xf]
        %v5463 = vld [vmem:[%s5224 + $0x3b8] sm:$0xf]
        %v5464 = vld [vmem:[%s5224 + $0x3bc] sm:$0xf]
        %v5465 = vld [vmem:[%s5224 + $0x3c0] sm:$0xf]
        %v5466 = vld [vmem:[%s5224 + $0x3c4] sm:$0xf]
        %v5467 = vld [vmem:[%s5224 + $0x3c8] sm:$0xf]
        %v5468 = vld [vmem:[%s5224 + $0x3cc] sm:$0xf]
        %v5469 = vld [vmem:[%s5224 + $0x3d0] sm:$0xf]
        %v5470 = vld [vmem:[%s5224 + $0x3d4] sm:$0xf]
        %v5471 = vld [vmem:[%s5224 + $0x3d8] sm:$0xf]
        %v5472 = vld [vmem:[%s5224 + $0x3dc] sm:$0xf]
        %v5473 = vld [vmem:[%s5224 + $0x3e0] sm:$0xf]
        %v5474 = vld [vmem:[%s5224 + $0x3e4] sm:$0xf]
        %v5475 = vld [vmem:[%s5224 + $0x3e8] sm:$0xf]
        %v5476 = vld [vmem:[%s5224 + $0x3ec] sm:$0xf]
        %v5477 = vld [vmem:[%s5224 + $0x3f0] sm:$0xf]
        %v5478 = vld [vmem:[%s5224 + $0x3f4] sm:$0xf]
        %v5479 = vld [vmem:[%s5224 + $0x3f8] sm:$0xf]
        %v5480 = vld [vmem:[%s5224 + $0x3fc] sm:$0xf]
        %v5481 = vld [vmem:[%s5224 + $0x400] sm:$0xf]
        %v5482 = vld [vmem:[%s5224 + $0x404] sm:$0xf]
        %v5483 = vld [vmem:[%s5224 + $0x408] sm:$0xf]
        %v5484 = vld [vmem:[%s5224 + $0x40c] sm:$0xf]
        %v5485 = vld [vmem:[%s5224 + $0x410] sm:$0xf]
        %v5486 = vld [vmem:[%s5224 + $0x414] sm:$0xf]
        %v5487 = vld [vmem:[%s5224 + $0x418] sm:$0xf]
        %v5488 = vld [vmem:[%s5224 + $0x41c] sm:$0xf]
        %v5489 = vld [vmem:[%s5224 + $0x420] sm:$0xf]
        %v5490 = vld [vmem:[%s5224 + $0x424] sm:$0xf]
        %v5491 = vld [vmem:[%s5224 + $0x428] sm:$0xf]
        %v5492 = vld [vmem:[%s5224 + $0x42c] sm:$0xf]
        %v5493 = vld [vmem:[%s5224 + $0x430] sm:$0xf]
        %v5494 = vld [vmem:[%s5224 + $0x434] sm:$0xf]
        %v5495 = vld [vmem:[%s5224 + $0x438] sm:$0xf]
        %v5496 = vld [vmem:[%s5224 + $0x43c] sm:$0xf]
        %v5497 = vld [vmem:[%s5224 + $0x440] sm:$0xf]
        %v5498 = vld [vmem:[%s5224 + $0x444] sm:$0xf]
        %v5499 = vld [vmem:[%s5224 + $0x448] sm:$0xf]
        %v5500 = vld [vmem:[%s5224 + $0x44c] sm:$0xf]
        %v5501 = vld [vmem:[%s5224 + $0x450] sm:$0xf]
        %v5502 = vld [vmem:[%s5224 + $0x454] sm:$0xf]
        %v5503 = vld [vmem:[%s5224 + $0x458] sm:$0xf]
        %v5504 = vld [vmem:[%s5224 + $0x45c] sm:$0xf]
        %v5505 = vld [vmem:[%s5224 + $0x460] sm:$0xf]
        %v5506 = vld [vmem:[%s5224 + $0x464] sm:$0xf]
        %v5507 = vld [vmem:[%s5224 + $0x468] sm:$0xf]
        %v5508 = vld [vmem:[%s5224 + $0x46c] sm:$0xf]
        %v5509 = vld [vmem:[%s5224 + $0x470] sm:$0xf]
        %v5510 = vld [vmem:[%s5224 + $0x474] sm:$0xf]
        %v5511 = vld [vmem:[%s5224 + $0x478] sm:$0xf]
        %v5512 = vld [vmem:[%s5224 + $0x47c] sm:$0xf]
        %v5801 = vunpack.c.l.b16 %v5225
        %v5802 = vunpack.c.l.b16 %v5226
        %v5803 = vunpack.c.l.b16 %v5227
        %v5804 = vunpack.c.l.b16 %v5228
        %v5805 = vunpack.c.l.b16 %v5229
        %v5806 = vunpack.c.l.b16 %v5230
        %v5807 = vunpack.c.l.b16 %v5231
        %v5808 = vunpack.c.l.b16 %v5232
        %v5809 = vunpack.c.l.b16 %v5233
        %v5810 = vunpack.c.l.b16 %v5234
        %v5811 = vunpack.c.l.b16 %v5235
        %v5812 = vunpack.c.l.b16 %v5236
        %v5813 = vunpack.c.l.b16 %v5237
        %v5814 = vunpack.c.l.b16 %v5238
        %v5815 = vunpack.c.l.b16 %v5239
        %v5816 = vunpack.c.l.b16 %v5240
        %v5817 = vunpack.c.l.b16 %v5241
        %v5818 = vunpack.c.l.b16 %v5242
        %v5819 = vunpack.c.l.b16 %v5243
        %v5820 = vunpack.c.l.b16 %v5244
        %v5821 = vunpack.c.l.b16 %v5245
        %v5822 = vunpack.c.l.b16 %v5246
        %v5823 = vunpack.c.l.b16 %v5247
        %v5824 = vunpack.c.l.b16 %v5248
        %v5825 = vunpack.c.l.b16 %v5249
        %v5826 = vunpack.c.l.b16 %v5250
        %v5827 = vunpack.c.l.b16 %v5251
        %v5828 = vunpack.c.l.b16 %v5252
        %v5829 = vunpack.c.l.b16 %v5253
        %v5830 = vunpack.c.l.b16 %v5254
        %v5831 = vunpack.c.l.b16 %v5255
        %v5832 = vunpack.c.l.b16 %v5256
        %v5833 = vunpack.c.l.b16 %v5257
        %v5834 = vunpack.c.l.b16 %v5258
        %v5835 = vunpack.c.l.b16 %v5259
        %v5836 = vunpack.c.l.b16 %v5260
        %v5837 = vunpack.c.l.b16 %v5261
        %v5838 = vunpack.c.l.b16 %v5262
        %v5839 = vunpack.c.l.b16 %v5263
        %v5840 = vunpack.c.l.b16 %v5264
        %v5841 = vunpack.c.l.b16 %v5265
        %v5842 = vunpack.c.l.b16 %v5266
        %v5843 = vunpack.c.l.b16 %v5267
        %v5844 = vunpack.c.l.b16 %v5268
        %v5845 = vunpack.c.l.b16 %v5269
        %v5846 = vunpack.c.l.b16 %v5270
        %v5847 = vunpack.c.l.b16 %v5271
        %v5848 = vunpack.c.l.b16 %v5272
        %v5849 = vunpack.c.l.b16 %v5273
        %v5850 = vunpack.c.l.b16 %v5274
        %v5851 = vunpack.c.l.b16 %v5275
        %v5852 = vunpack.c.l.b16 %v5276
        %v5853 = vunpack.c.l.b16 %v5277
        %v5854 = vunpack.c.l.b16 %v5278
        %v5855 = vunpack.c.l.b16 %v5279
        %v5856 = vunpack.c.l.b16 %v5280
        %v5857 = vunpack.c.l.b16 %v5281
        %v5858 = vunpack.c.l.b16 %v5282
        %v5859 = vunpack.c.l.b16 %v5283
        %v5860 = vunpack.c.l.b16 %v5284
        %v5861 = vunpack.c.l.b16 %v5285
        %v5862 = vunpack.c.l.b16 %v5286
        %v5863 = vunpack.c.l.b16 %v5287
        %v5864 = vunpack.c.l.b16 %v5288
        %v5865 = vunpack.c.l.b16 %v5289
        %v5866 = vunpack.c.l.b16 %v5290
        %v5867 = vunpack.c.l.b16 %v5291
        %v5868 = vunpack.c.l.b16 %v5292
        %v5869 = vunpack.c.l.b16 %v5293
        %v5870 = vunpack.c.l.b16 %v5294
        %v5871 = vunpack.c.l.b16 %v5295
        %v5872 = vunpack.c.l.b16 %v5296
        %v5873 = vunpack.c.l.b16 %v5297
        %v5874 = vunpack.c.l.b16 %v5298
        %v5875 = vunpack.c.l.b16 %v5299
        %v5876 = vunpack.c.l.b16 %v5300
        %v5877 = vunpack.c.l.b16 %v5301
        %v5878 = vunpack.c.l.b16 %v5302
        %v5879 = vunpack.c.l.b16 %v5303
        %v5880 = vunpack.c.l.b16 %v5304
        %v5881 = vunpack.c.l.b16 %v5305
        %v5882 = vunpack.c.l.b16 %v5306
        %v5883 = vunpack.c.l.b16 %v5307
        %v5884 = vunpack.c.l.b16 %v5308
        %v5885 = vunpack.c.l.b16 %v5309
        %v5886 = vunpack.c.l.b16 %v5310
        %v5887 = vunpack.c.l.b16 %v5311
        %v5888 = vunpack.c.l.b16 %v5312
        %v5889 = vunpack.c.l.b16 %v5313
        %v5890 = vunpack.c.l.b16 %v5314
        %v5891 = vunpack.c.l.b16 %v5315
        %v5892 = vunpack.c.l.b16 %v5316
        %v5893 = vunpack.c.l.b16 %v5317
        %v5894 = vunpack.c.l.b16 %v5318
        %v5895 = vunpack.c.l.b16 %v5319
        %v5896 = vunpack.c.l.b16 %v5320
        %v5897 = vunpack.c.l.b16 %v5321
        %v5898 = vunpack.c.l.b16 %v5322
        %v5899 = vunpack.c.l.b16 %v5323
        %v5900 = vunpack.c.l.b16 %v5324
        %v5901 = vunpack.c.l.b16 %v5325
        %v5902 = vunpack.c.l.b16 %v5326
        %v5903 = vunpack.c.l.b16 %v5327
        %v5904 = vunpack.c.l.b16 %v5328
        %v5905 = vunpack.c.l.b16 %v5329
        %v5906 = vunpack.c.l.b16 %v5330
        %v5907 = vunpack.c.l.b16 %v5331
        %v5908 = vunpack.c.l.b16 %v5332
        %v5909 = vunpack.c.l.b16 %v5333
        %v5910 = vunpack.c.l.b16 %v5334
        %v5911 = vunpack.c.l.b16 %v5335
        %v5912 = vunpack.c.l.b16 %v5336
        %v5913 = vunpack.c.l.b16 %v5337
        %v5914 = vunpack.c.l.b16 %v5338
        %v5915 = vunpack.c.l.b16 %v5339
        %v5916 = vunpack.c.l.b16 %v5340
        %v5917 = vunpack.c.l.b16 %v5341
        %v5918 = vunpack.c.l.b16 %v5342
        %v5919 = vunpack.c.l.b16 %v5343
        %v5920 = vunpack.c.l.b16 %v5344
        %v5921 = vunpack.c.l.b16 %v5345
        %v5922 = vunpack.c.l.b16 %v5346
        %v5923 = vunpack.c.l.b16 %v5347
        %v5924 = vunpack.c.l.b16 %v5348
        %v5925 = vunpack.c.l.b16 %v5349
        %v5926 = vunpack.c.l.b16 %v5350
        %v5927 = vunpack.c.l.b16 %v5351
        %v5928 = vunpack.c.l.b16 %v5352
        %v5929 = vunpack.c.l.b16 %v5353
        %v5930 = vunpack.c.l.b16 %v5354
        %v5931 = vunpack.c.l.b16 %v5355
        %v5932 = vunpack.c.l.b16 %v5356
        %v5933 = vunpack.c.l.b16 %v5357
        %v5934 = vunpack.c.l.b16 %v5358
        %v5935 = vunpack.c.l.b16 %v5359
        %v5936 = vunpack.c.l.b16 %v5360
        %v5937 = vunpack.c.l.b16 %v5361
        %v5938 = vunpack.c.l.b16 %v5362
        %v5939 = vunpack.c.l.b16 %v5363
        %v5940 = vunpack.c.l.b16 %v5364
        %v5941 = vunpack.c.l.b16 %v5365
        %v5942 = vunpack.c.l.b16 %v5366
        %v5943 = vunpack.c.l.b16 %v5367
        %v5944 = vunpack.c.l.b16 %v5368
        %v5945 = vunpack.c.l.b16 %v5369
        %v5946 = vunpack.c.l.b16 %v5370
        %v5947 = vunpack.c.l.b16 %v5371
        %v5948 = vunpack.c.l.b16 %v5372
        %v5949 = vunpack.c.l.b16 %v5373
        %v5950 = vunpack.c.l.b16 %v5374
        %v5951 = vunpack.c.l.b16 %v5375
        %v5952 = vunpack.c.l.b16 %v5376
        %v5953 = vunpack.c.l.b16 %v5377
        %v5954 = vunpack.c.l.b16 %v5378
        %v5955 = vunpack.c.l.b16 %v5379
        %v5956 = vunpack.c.l.b16 %v5380
        %v5957 = vunpack.c.l.b16 %v5381
        %v5958 = vunpack.c.l.b16 %v5382
        %v5959 = vunpack.c.l.b16 %v5383
        %v5960 = vunpack.c.l.b16 %v5384
        %v5961 = vunpack.c.l.b16 %v5385
        %v5962 = vunpack.c.l.b16 %v5386
        %v5963 = vunpack.c.l.b16 %v5387
        %v5964 = vunpack.c.l.b16 %v5388
        %v5965 = vunpack.c.l.b16 %v5389
        %v5966 = vunpack.c.l.b16 %v5390
        %v5967 = vunpack.c.l.b16 %v5391
        %v5968 = vunpack.c.l.b16 %v5392
        %v5969 = vunpack.c.l.b16 %v5393
        %v5970 = vunpack.c.l.b16 %v5394
        %v5971 = vunpack.c.l.b16 %v5395
        %v5972 = vunpack.c.l.b16 %v5396
        %v5973 = vunpack.c.l.b16 %v5397
        %v5974 = vunpack.c.l.b16 %v5398
        %v5975 = vunpack.c.l.b16 %v5399
        %v5976 = vunpack.c.l.b16 %v5400
        %v5977 = vunpack.c.l.b16 %v5401
        %v5978 = vunpack.c.l.b16 %v5402
        %v5979 = vunpack.c.l.b16 %v5403
        %v5980 = vunpack.c.l.b16 %v5404
        %v5981 = vunpack.c.l.b16 %v5405
        %v5982 = vunpack.c.l.b16 %v5406
        %v5983 = vunpack.c.l.b16 %v5407
        %v5984 = vunpack.c.l.b16 %v5408
        %v5985 = vunpack.c.l.b16 %v5409
        %v5986 = vunpack.c.l.b16 %v5410
        %v5987 = vunpack.c.l.b16 %v5411
        %v5988 = vunpack.c.l.b16 %v5412
        %v5989 = vunpack.c.l.b16 %v5413
        %v5990 = vunpack.c.l.b16 %v5414
        %v5991 = vunpack.c.l.b16 %v5415
        %v5992 = vunpack.c.l.b16 %v5416
        %v5993 = vunpack.c.l.b16 %v5417
        %v5994 = vunpack.c.l.b16 %v5418
        %v5995 = vunpack.c.l.b16 %v5419
        %v5996 = vunpack.c.l.b16 %v5420
        %v5997 = vunpack.c.l.b16 %v5421
        %v5998 = vunpack.c.l.b16 %v5422
        %v5999 = vunpack.c.l.b16 %v5423
        %v6000 = vunpack.c.l.b16 %v5424
        %v6001 = vunpack.c.l.b16 %v5425
        %v6002 = vunpack.c.l.b16 %v5426
        %v6003 = vunpack.c.l.b16 %v5427
        %v6004 = vunpack.c.l.b16 %v5428
        %v6005 = vunpack.c.l.b16 %v5429
        %v6006 = vunpack.c.l.b16 %v5430
        %v6007 = vunpack.c.l.b16 %v5431
        %v6008 = vunpack.c.l.b16 %v5432
        %v6009 = vunpack.c.l.b16 %v5433
        %v6010 = vunpack.c.l.b16 %v5434
        %v6011 = vunpack.c.l.b16 %v5435
        %v6012 = vunpack.c.l.b16 %v5436
        %v6013 = vunpack.c.l.b16 %v5437
        %v6014 = vunpack.c.l.b16 %v5438
        %v6015 = vunpack.c.l.b16 %v5439
        %v6016 = vunpack.c.l.b16 %v5440
        %v6017 = vunpack.c.l.b16 %v5441
        %v6018 = vunpack.c.l.b16 %v5442
        %v6019 = vunpack.c.l.b16 %v5443
        %v6020 = vunpack.c.l.b16 %v5444
        %v6021 = vunpack.c.l.b16 %v5445
        %v6022 = vunpack.c.l.b16 %v5446
        %v6023 = vunpack.c.l.b16 %v5447
        %v6024 = vunpack.c.l.b16 %v5448
        %v6025 = vunpack.c.l.b16 %v5449
        %v6026 = vunpack.c.l.b16 %v5450
        %v6027 = vunpack.c.l.b16 %v5451
        %v6028 = vunpack.c.l.b16 %v5452
        %v6029 = vunpack.c.l.b16 %v5453
        %v6030 = vunpack.c.l.b16 %v5454
        %v6031 = vunpack.c.l.b16 %v5455
        %v6032 = vunpack.c.l.b16 %v5456
        %v6033 = vunpack.c.l.b16 %v5457
        %v6034 = vunpack.c.l.b16 %v5458
        %v6035 = vunpack.c.l.b16 %v5459
        %v6036 = vunpack.c.l.b16 %v5460
        %v6037 = vunpack.c.l.b16 %v5461
        %v6038 = vunpack.c.l.b16 %v5462
        %v6039 = vunpack.c.l.b16 %v5463
        %v6040 = vunpack.c.l.b16 %v5464
        %v6041 = vunpack.c.l.b16 %v5465
        %v6042 = vunpack.c.l.b16 %v5466
        %v6043 = vunpack.c.l.b16 %v5467
        %v6044 = vunpack.c.l.b16 %v5468
        %v6045 = vunpack.c.l.b16 %v5469
        %v6046 = vunpack.c.l.b16 %v5470
        %v6047 = vunpack.c.l.b16 %v5471
        %v6048 = vunpack.c.l.b16 %v5472
        %v6049 = vunpack.c.l.b16 %v5473
        %v6050 = vunpack.c.l.b16 %v5474
        %v6051 = vunpack.c.l.b16 %v5475
        %v6052 = vunpack.c.l.b16 %v5476
        %v6053 = vunpack.c.l.b16 %v5477
        %v6054 = vunpack.c.l.b16 %v5478
        %v6055 = vunpack.c.l.b16 %v5479
        %v6056 = vunpack.c.l.b16 %v5480
        %v6057 = vunpack.c.l.b16 %v5481
        %v6058 = vunpack.c.l.b16 %v5482
        %v6059 = vunpack.c.l.b16 %v5483
        %v6060 = vunpack.c.l.b16 %v5484
        %v6061 = vunpack.c.l.b16 %v5485
        %v6062 = vunpack.c.l.b16 %v5486
        %v6063 = vunpack.c.l.b16 %v5487
        %v6064 = vunpack.c.l.b16 %v5488
        %v6065 = vunpack.c.l.b16 %v5489
        %v6066 = vunpack.c.l.b16 %v5490
        %v6067 = vunpack.c.l.b16 %v5491
        %v6068 = vunpack.c.l.b16 %v5492
        %v6069 = vunpack.c.l.b16 %v5493
        %v6070 = vunpack.c.l.b16 %v5494
        %v6071 = vunpack.c.l.b16 %v5495
        %v6072 = vunpack.c.l.b16 %v5496
        %v6073 = vunpack.c.l.b16 %v5497
        %v6074 = vunpack.c.l.b16 %v5498
        %v6075 = vunpack.c.l.b16 %v5499
        %v6076 = vunpack.c.l.b16 %v5500
        %v6077 = vunpack.c.l.b16 %v5501
        %v6078 = vunpack.c.l.b16 %v5502
        %v6079 = vunpack.c.l.b16 %v5503
        %v6080 = vunpack.c.l.b16 %v5504
        %v6081 = vunpack.c.l.b16 %v5505
        %v6082 = vunpack.c.l.b16 %v5506
        %v6083 = vunpack.c.l.b16 %v5507
        %v6084 = vunpack.c.l.b16 %v5508
        %v6085 = vunpack.c.l.b16 %v5509
        %v6086 = vunpack.c.l.b16 %v5510
        %v6087 = vunpack.c.l.b16 %v5511
        %v6088 = vunpack.c.l.b16 %v5512
        %v6089 = vpack.c.b16 %v5802, %v5801
        %v6090 = vpack.c.b16 %v5804, %v5803
        %v6091 = vpack.c.b16 %v5806, %v5805
        %v6092 = vpack.c.b16 %v5808, %v5807
        %v6093 = vpack.c.b16 %v5810, %v5809
        %v6094 = vpack.c.b16 %v5812, %v5811
        %v6095 = vpack.c.b16 %v5814, %v5813
        %v6096 = vpack.c.b16 %v5816, %v5815
        %v6097 = vpack.c.b16 %v5818, %v5817
        %v6098 = vpack.c.b16 %v5820, %v5819
        %v6099 = vpack.c.b16 %v5822, %v5821
        %v6100 = vpack.c.b16 %v5824, %v5823
        %v6101 = vpack.c.b16 %v5826, %v5825
        %v6102 = vpack.c.b16 %v5828, %v5827
        %v6103 = vpack.c.b16 %v5830, %v5829
        %v6104 = vpack.c.b16 %v5832, %v5831
        %v6105 = vpack.c.b16 %v5834, %v5833
        %v6106 = vpack.c.b16 %v5836, %v5835
        %v6107 = vpack.c.b16 %v5838, %v5837
        %v6108 = vpack.c.b16 %v5840, %v5839
        %v6109 = vpack.c.b16 %v5842, %v5841
        %v6110 = vpack.c.b16 %v5844, %v5843
        %v6111 = vpack.c.b16 %v5846, %v5845
        %v6112 = vpack.c.b16 %v5848, %v5847
        %v6113 = vpack.c.b16 %v5850, %v5849
        %v6114 = vpack.c.b16 %v5852, %v5851
        %v6115 = vpack.c.b16 %v5854, %v5853
        %v6116 = vpack.c.b16 %v5856, %v5855
        %v6117 = vpack.c.b16 %v5858, %v5857
        %v6118 = vpack.c.b16 %v5860, %v5859
        %v6119 = vpack.c.b16 %v5862, %v5861
        %v6120 = vpack.c.b16 %v5864, %v5863
        %v6121 = vpack.c.b16 %v5866, %v5865
        %v6122 = vpack.c.b16 %v5868, %v5867
        %v6123 = vpack.c.b16 %v5870, %v5869
        %v6124 = vpack.c.b16 %v5872, %v5871
        %v6125 = vpack.c.b16 %v5874, %v5873
        %v6126 = vpack.c.b16 %v5876, %v5875
        %v6127 = vpack.c.b16 %v5878, %v5877
        %v6128 = vpack.c.b16 %v5880, %v5879
        %v6129 = vpack.c.b16 %v5882, %v5881
        %v6130 = vpack.c.b16 %v5884, %v5883
        %v6131 = vpack.c.b16 %v5886, %v5885
        %v6132 = vpack.c.b16 %v5888, %v5887
        %v6133 = vpack.c.b16 %v5890, %v5889
        %v6134 = vpack.c.b16 %v5892, %v5891
        %v6135 = vpack.c.b16 %v5894, %v5893
        %v6136 = vpack.c.b16 %v5896, %v5895
        %v6137 = vpack.c.b16 %v5898, %v5897
        %v6138 = vpack.c.b16 %v5900, %v5899
        %v6139 = vpack.c.b16 %v5902, %v5901
        %v6140 = vpack.c.b16 %v5904, %v5903
        %v6141 = vpack.c.b16 %v5906, %v5905
        %v6142 = vpack.c.b16 %v5908, %v5907
        %v6143 = vpack.c.b16 %v5910, %v5909
        %v6144 = vpack.c.b16 %v5912, %v5911
        %v6145 = vpack.c.b16 %v5914, %v5913
        %v6146 = vpack.c.b16 %v5916, %v5915
        %v6147 = vpack.c.b16 %v5918, %v5917
        %v6148 = vpack.c.b16 %v5920, %v5919
        %v6149 = vpack.c.b16 %v5922, %v5921
        %v6150 = vpack.c.b16 %v5924, %v5923
        %v6151 = vpack.c.b16 %v5926, %v5925
        %v6152 = vpack.c.b16 %v5928, %v5927
        %v6153 = vpack.c.b16 %v5930, %v5929
        %v6154 = vpack.c.b16 %v5932, %v5931
        %v6155 = vpack.c.b16 %v5934, %v5933
        %v6156 = vpack.c.b16 %v5936, %v5935
        %v6157 = vpack.c.b16 %v5938, %v5937
        %v6158 = vpack.c.b16 %v5940, %v5939
        %v6159 = vpack.c.b16 %v5942, %v5941
        %v6160 = vpack.c.b16 %v5944, %v5943
        %v6161 = vpack.c.b16 %v5946, %v5945
        %v6162 = vpack.c.b16 %v5948, %v5947
        %v6163 = vpack.c.b16 %v5950, %v5949
        %v6164 = vpack.c.b16 %v5952, %v5951
        %v6165 = vpack.c.b16 %v5954, %v5953
        %v6166 = vpack.c.b16 %v5956, %v5955
        %v6167 = vpack.c.b16 %v5958, %v5957
        %v6168 = vpack.c.b16 %v5960, %v5959
        %v6169 = vpack.c.b16 %v5962, %v5961
        %v6170 = vpack.c.b16 %v5964, %v5963
        %v6171 = vpack.c.b16 %v5966, %v5965
        %v6172 = vpack.c.b16 %v5968, %v5967
        %v6173 = vpack.c.b16 %v5970, %v5969
        %v6174 = vpack.c.b16 %v5972, %v5971
        %v6175 = vpack.c.b16 %v5974, %v5973
        %v6176 = vpack.c.b16 %v5976, %v5975
        %v6177 = vpack.c.b16 %v5978, %v5977
        %v6178 = vpack.c.b16 %v5980, %v5979
        %v6179 = vpack.c.b16 %v5982, %v5981
        %v6180 = vpack.c.b16 %v5984, %v5983
        %v6181 = vpack.c.b16 %v5986, %v5985
        %v6182 = vpack.c.b16 %v5988, %v5987
        %v6183 = vpack.c.b16 %v5990, %v5989
        %v6184 = vpack.c.b16 %v5992, %v5991
        %v6185 = vpack.c.b16 %v5994, %v5993
        %v6186 = vpack.c.b16 %v5996, %v5995
        %v6187 = vpack.c.b16 %v5998, %v5997
        %v6188 = vpack.c.b16 %v6000, %v5999
        %v6189 = vpack.c.b16 %v6002, %v6001
        %v6190 = vpack.c.b16 %v6004, %v6003
        %v6191 = vpack.c.b16 %v6006, %v6005
        %v6192 = vpack.c.b16 %v6008, %v6007
        %v6193 = vpack.c.b16 %v6010, %v6009
        %v6194 = vpack.c.b16 %v6012, %v6011
        %v6195 = vpack.c.b16 %v6014, %v6013
        %v6196 = vpack.c.b16 %v6016, %v6015
        %v6197 = vpack.c.b16 %v6018, %v6017
        %v6198 = vpack.c.b16 %v6020, %v6019
        %v6199 = vpack.c.b16 %v6022, %v6021
        %v6200 = vpack.c.b16 %v6024, %v6023
        %v6201 = vpack.c.b16 %v6026, %v6025
        %v6202 = vpack.c.b16 %v6028, %v6027
        %v6203 = vpack.c.b16 %v6030, %v6029
        %v6204 = vpack.c.b16 %v6032, %v6031
        %v6205 = vpack.c.b16 %v6034, %v6033
        %v6206 = vpack.c.b16 %v6036, %v6035
        %v6207 = vpack.c.b16 %v6038, %v6037
        %v6208 = vpack.c.b16 %v6040, %v6039
        %v6209 = vpack.c.b16 %v6042, %v6041
        %v6210 = vpack.c.b16 %v6044, %v6043
        %v6211 = vpack.c.b16 %v6046, %v6045
        %v6212 = vpack.c.b16 %v6048, %v6047
        %v6213 = vpack.c.b16 %v6050, %v6049
        %v6214 = vpack.c.b16 %v6052, %v6051
        %v6215 = vpack.c.b16 %v6054, %v6053
        %v6216 = vpack.c.b16 %v6056, %v6055
        %v6217 = vpack.c.b16 %v6058, %v6057
        %v6218 = vpack.c.b16 %v6060, %v6059
        %v6219 = vpack.c.b16 %v6062, %v6061
        %v6220 = vpack.c.b16 %v6064, %v6063
        %v6221 = vpack.c.b16 %v6066, %v6065
        %v6222 = vpack.c.b16 %v6068, %v6067
        %v6223 = vpack.c.b16 %v6070, %v6069
        %v6224 = vpack.c.b16 %v6072, %v6071
        %v6225 = vpack.c.b16 %v6074, %v6073
        %v6226 = vpack.c.b16 %v6076, %v6075
        %v6227 = vpack.c.b16 %v6078, %v6077
        %v6228 = vpack.c.b16 %v6080, %v6079
        %v6229 = vpack.c.b16 %v6082, %v6081
        %v6230 = vpack.c.b16 %v6084, %v6083
        %v6231 = vpack.c.b16 %v6086, %v6085
        %v6232 = vpack.c.b16 %v6088, %v6087
        %6377 = vmatprep.subr.bf16.mxu0 0
        %6378 = vmatpush1.bf16.msra.mxu0 %v6096
        %6379 = vmatprep.subr.bf16.mxu0 0
        %6380 = vmatpush1.bf16.msra.mxu0 %v6095
        %6381 = vmatprep.subr.bf16.mxu0 0
        %6382 = vmatpush1.bf16.msra.mxu0 %v6094
        %6383 = vmatprep.subr.bf16.mxu0 0
        %6384 = vmatpush1.bf16.msra.mxu0 %v6093
        %6385 = vmatprep.subr.bf16.mxu0 0
        %6386 = vmatpush1.bf16.msra.mxu0 %v6092
        %6387 = vmatprep.subr.bf16.mxu0 0
        %6388 = vmatpush1.bf16.msra.mxu0 %v6091
        %6389 = vmatprep.subr.bf16.mxu0 0
        %6390 = vmatpush1.bf16.msra.mxu0 %v6090
        %6391 = vmatprep.subr.bf16.mxu0 0
        %6392 = vmatpush1.bf16.msra.mxu0 %v6089
        %6393 = vmatprep.subr.bf16.mxu0 0
        %6394 = vmatpush2.bf16.msra.mxu0 %v6104
        %6395 = vmatprep.subr.bf16.mxu0 0
        %6396 = vmatpush2.bf16.msra.mxu0 %v6103
        %6397 = vmatprep.subr.bf16.mxu0 0
        %6398 = vmatpush2.bf16.msra.mxu0 %v6102
        %6399 = vmatprep.subr.bf16.mxu0 0
        %6400 = vmatpush2.bf16.msra.mxu0 %v6101
        %6401 = vmatprep.subr.bf16.mxu0 0
        %6402 = vmatpush2.bf16.msra.mxu0 %v6100
        %6403 = vmatprep.subr.bf16.mxu0 0
        %6404 = vmatpush2.bf16.msra.mxu0 %v6099
        %6405 = vmatprep.subr.bf16.mxu0 0
        %6406 = vmatpush2.bf16.msra.mxu0 %v6098
        %6407 = vmatprep.subr.bf16.mxu0 0
        %6408 = vmatpush2.bf16.msra.mxu0 %v6097
        %6409 = vmatprep.mubr.bf16.mxu0 %v5207
        %6410 = vmatmul.mubr.bf16.gmra.mxu0 %v5206
        %v6411 = vpop.f32.mrf.mxu0
        %v6412 = vadd.f32 0.0, %v6411
        %v6413 = vpop.f32.mrf.mxu0
        %v6414 = vpop.f32.mrf.mxu0
        %v6415 = vpop.f32.mrf.mxu0
        %6416 = vdwg.mxu0
        %6417 = vmatprep.subr.bf16.mxu0 0
        %6418 = vmatpush1.bf16.msra.mxu0 %v6112
        %6419 = vmatprep.subr.bf16.mxu0 0
        %6420 = vmatpush1.bf16.msra.mxu0 %v6111
        %6421 = vmatprep.subr.bf16.mxu0 0
        %6422 = vmatpush1.bf16.msra.mxu0 %v6110
        %6423 = vmatprep.subr.bf16.mxu0 0
        %6424 = vmatpush1.bf16.msra.mxu0 %v6109
        %6425 = vmatprep.subr.bf16.mxu0 0
        %6426 = vmatpush1.bf16.msra.mxu0 %v6108
        %6427 = vmatprep.subr.bf16.mxu0 0
        %6428 = vmatpush1.bf16.msra.mxu0 %v6107
        %6429 = vmatprep.subr.bf16.mxu0 0
        %6430 = vmatpush1.bf16.msra.mxu0 %v6106
        %6431 = vmatprep.subr.bf16.mxu0 0
        %6432 = vmatpush1.bf16.msra.mxu0 %v6105
        %6433 = vmatprep.subr.bf16.mxu0 0
        %6434 = vmatpush2.bf16.msra.mxu0 %v6120
        %6435 = vmatprep.subr.bf16.mxu0 0
        %6436 = vmatpush2.bf16.msra.mxu0 %v6119
        %6437 = vmatprep.subr.bf16.mxu0 0
        %6438 = vmatpush2.bf16.msra.mxu0 %v6118
        %6439 = vmatprep.subr.bf16.mxu0 0
        %6440 = vmatpush2.bf16.msra.mxu0 %v6117
        %6441 = vmatprep.subr.bf16.mxu0 0
        %6442 = vmatpush2.bf16.msra.mxu0 %v6116
        %6443 = vmatprep.subr.bf16.mxu0 0
        %6444 = vmatpush2.bf16.msra.mxu0 %v6115
        %6445 = vmatprep.subr.bf16.mxu0 0
        %6446 = vmatpush2.bf16.msra.mxu0 %v6114
        %6447 = vmatprep.subr.bf16.mxu0 0
        %6448 = vmatpush2.bf16.msra.mxu0 %v6113
        %6449 = vmatprep.mubr.bf16.mxu0 %v5209
        %6450 = vmatmul.mubr.bf16.gmra.mxu0 %v5208
        %v6451 = vpop.f32.mrf.mxu0
        %v6452 = vadd.f32 %v6412, %v6451
        %v6453 = vpop.f32.mrf.mxu0
        %v6454 = vpop.f32.mrf.mxu0
        %v6455 = vpop.f32.mrf.mxu0
        %6456 = vdwg.mxu0
        %6457 = vmatprep.subr.bf16.mxu0 0
        %6458 = vmatpush1.bf16.msra.mxu0 %v6128
        %6459 = vmatprep.subr.bf16.mxu0 0
        %6460 = vmatpush1.bf16.msra.mxu0 %v6127
        %6461 = vmatprep.subr.bf16.mxu0 0
        %6462 = vmatpush1.bf16.msra.mxu0 %v6126
        %6463 = vmatprep.subr.bf16.mxu0 0
        %6464 = vmatpush1.bf16.msra.mxu0 %v6125
        %6465 = vmatprep.subr.bf16.mxu0 0
        %6466 = vmatpush1.bf16.msra.mxu0 %v6124
        %6467 = vmatprep.subr.bf16.mxu0 0
        %6468 = vmatpush1.bf16.msra.mxu0 %v6123
        %6469 = vmatprep.subr.bf16.mxu0 0
        %6470 = vmatpush1.bf16.msra.mxu0 %v6122
        %6471 = vmatprep.subr.bf16.mxu0 0
        %6472 = vmatpush1.bf16.msra.mxu0 %v6121
        %6473 = vmatprep.subr.bf16.mxu0 0
        %6474 = vmatpush2.bf16.msra.mxu0 %v6136
        %6475 = vmatprep.subr.bf16.mxu0 0
        %6476 = vmatpush2.bf16.msra.mxu0 %v6135
        %6477 = vmatprep.subr.bf16.mxu0 0
        %6478 = vmatpush2.bf16.msra.mxu0 %v6134
        %6479 = vmatprep.subr.bf16.mxu0 0
        %6480 = vmatpush2.bf16.msra.mxu0 %v6133
        %6481 = vmatprep.subr.bf16.mxu0 0
        %6482 = vmatpush2.bf16.msra.mxu0 %v6132
        %6483 = vmatprep.subr.bf16.mxu0 0
        %6484 = vmatpush2.bf16.msra.mxu0 %v6131
        %6485 = vmatprep.subr.bf16.mxu0 0
        %6486 = vmatpush2.bf16.msra.mxu0 %v6130
        %6487 = vmatprep.subr.bf16.mxu0 0
        %6488 = vmatpush2.bf16.msra.mxu0 %v6129
        %6489 = vmatprep.mubr.bf16.mxu0 %v5211
        %6490 = vmatmul.mubr.bf16.gmra.mxu0 %v5210
        %v6491 = vpop.f32.mrf.mxu0
        %v6492 = vadd.f32 %v6452, %v6491
        %v6493 = vpop.f32.mrf.mxu0
        %v6494 = vpop.f32.mrf.mxu0
        %v6495 = vpop.f32.mrf.mxu0
        %6496 = vdwg.mxu0
        %6497 = vmatprep.subr.bf16.mxu0 0
        %6498 = vmatpush1.bf16.msra.mxu0 %v6144
        %6499 = vmatprep.subr.bf16.mxu0 0
        %6500 = vmatpush1.bf16.msra.mxu0 %v6143
        %6501 = vmatprep.subr.bf16.mxu0 0
        %6502 = vmatpush1.bf16.msra.mxu0 %v6142
        %6503 = vmatprep.subr.bf16.mxu0 0
        %6504 = vmatpush1.bf16.msra.mxu0 %v6141
        %6505 = vmatprep.subr.bf16.mxu0 0
        %6506 = vmatpush1.bf16.msra.mxu0 %v6140
        %6507 = vmatprep.subr.bf16.mxu0 0
        %6508 = vmatpush1.bf16.msra.mxu0 %v6139
        %6509 = vmatprep.subr.bf16.mxu0 0
        %6510 = vmatpush1.bf16.msra.mxu0 %v6138
        %6511 = vmatprep.subr.bf16.mxu0 0
        %6512 = vmatpush1.bf16.msra.mxu0 %v6137
        %6513 = vmatprep.subr.bf16.mxu0 0
        %6514 = vmatpush2.bf16.msra.mxu0 %v6152
        %6515 = vmatprep.subr.bf16.mxu0 0
        %6516 = vmatpush2.bf16.msra.mxu0 %v6151
        %6517 = vmatprep.subr.bf16.mxu0 0
        %6518 = vmatpush2.bf16.msra.mxu0 %v6150
        %6519 = vmatprep.subr.bf16.mxu0 0
        %6520 = vmatpush2.bf16.msra.mxu0 %v6149
        %6521 = vmatprep.subr.bf16.mxu0 0
        %6522 = vmatpush2.bf16.msra.mxu0 %v6148
        %6523 = vmatprep.subr.bf16.mxu0 0
        %6524 = vmatpush2.bf16.msra.mxu0 %v6147
        %6525 = vmatprep.subr.bf16.mxu0 0
        %6526 = vmatpush2.bf16.msra.mxu0 %v6146
        %6527 = vmatprep.subr.bf16.mxu0 0
        %6528 = vmatpush2.bf16.msra.mxu0 %v6145
        %6529 = vmatprep.mubr.bf16.mxu0 %v5213
        %6530 = vmatmul.mubr.bf16.gmra.mxu0 %v5212
        %v6531 = vpop.f32.mrf.mxu0
        %v6532 = vadd.f32 %v6492, %v6531
        %v6533 = vpop.f32.mrf.mxu0
        %v6534 = vpop.f32.mrf.mxu0
        %v6535 = vpop.f32.mrf.mxu0
        %6536 = vdwg.mxu0
        %6537 = vmatprep.subr.bf16.mxu0 0
        %6538 = vmatpush1.bf16.msra.mxu0 %v6160
        %6539 = vmatprep.subr.bf16.mxu0 0
        %6540 = vmatpush1.bf16.msra.mxu0 %v6159
        %6541 = vmatprep.subr.bf16.mxu0 0
        %6542 = vmatpush1.bf16.msra.mxu0 %v6158
        %6543 = vmatprep.subr.bf16.mxu0 0
        %6544 = vmatpush1.bf16.msra.mxu0 %v6157
        %6545 = vmatprep.subr.bf16.mxu0 0
        %6546 = vmatpush1.bf16.msra.mxu0 %v6156
        %6547 = vmatprep.subr.bf16.mxu0 0
        %6548 = vmatpush1.bf16.msra.mxu0 %v6155
        %6549 = vmatprep.subr.bf16.mxu0 0
        %6550 = vmatpush1.bf16.msra.mxu0 %v6154
        %6551 = vmatprep.subr.bf16.mxu0 0
        %6552 = vmatpush1.bf16.msra.mxu0 %v6153
        %6553 = vmatprep.subr.bf16.mxu0 0
        %6554 = vmatpush2.bf16.msra.mxu0 %v6168
        %6555 = vmatprep.subr.bf16.mxu0 0
        %6556 = vmatpush2.bf16.msra.mxu0 %v6167
        %6557 = vmatprep.subr.bf16.mxu0 0
        %6558 = vmatpush2.bf16.msra.mxu0 %v6166
        %6559 = vmatprep.subr.bf16.mxu0 0
        %6560 = vmatpush2.bf16.msra.mxu0 %v6165
        %6561 = vmatprep.subr.bf16.mxu0 0
        %6562 = vmatpush2.bf16.msra.mxu0 %v6164
        %6563 = vmatprep.subr.bf16.mxu0 0
        %6564 = vmatpush2.bf16.msra.mxu0 %v6163
        %6565 = vmatprep.subr.bf16.mxu0 0
        %6566 = vmatpush2.bf16.msra.mxu0 %v6162
        %6567 = vmatprep.subr.bf16.mxu0 0
        %6568 = vmatpush2.bf16.msra.mxu0 %v6161
        %6569 = vmatprep.mubr.bf16.mxu0 %v5215
        %6570 = vmatmul.mubr.bf16.gmra.mxu0 %v5214
        %v6571 = vpop.f32.mrf.mxu0
        %v6572 = vadd.f32 %v6532, %v6571
        %v6573 = vpop.f32.mrf.mxu0
        %v6574 = vpop.f32.mrf.mxu0
        %v6575 = vpop.f32.mrf.mxu0
        %6576 = vdwg.mxu0
        %6577 = vmatprep.subr.bf16.mxu0 0
        %6578 = vmatpush1.bf16.msra.mxu0 %v6176
        %6579 = vmatprep.subr.bf16.mxu0 0
        %6580 = vmatpush1.bf16.msra.mxu0 %v6175
        %6581 = vmatprep.subr.bf16.mxu0 0
        %6582 = vmatpush1.bf16.msra.mxu0 %v6174
        %6583 = vmatprep.subr.bf16.mxu0 0
        %6584 = vmatpush1.bf16.msra.mxu0 %v6173
        %6585 = vmatprep.subr.bf16.mxu0 0
        %6586 = vmatpush1.bf16.msra.mxu0 %v6172
        %6587 = vmatprep.subr.bf16.mxu0 0
        %6588 = vmatpush1.bf16.msra.mxu0 %v6171
        %6589 = vmatprep.subr.bf16.mxu0 0
        %6590 = vmatpush1.bf16.msra.mxu0 %v6170
        %6591 = vmatprep.subr.bf16.mxu0 0
        %6592 = vmatpush1.bf16.msra.mxu0 %v6169
        %6593 = vmatprep.subr.bf16.mxu0 0
        %6594 = vmatpush2.bf16.msra.mxu0 %v6184
        %6595 = vmatprep.subr.bf16.mxu0 0
        %6596 = vmatpush2.bf16.msra.mxu0 %v6183
        %6597 = vmatprep.subr.bf16.mxu0 0
        %6598 = vmatpush2.bf16.msra.mxu0 %v6182
        %6599 = vmatprep.subr.bf16.mxu0 0
        %6600 = vmatpush2.bf16.msra.mxu0 %v6181
        %6601 = vmatprep.subr.bf16.mxu0 0
        %6602 = vmatpush2.bf16.msra.mxu0 %v6180
        %6603 = vmatprep.subr.bf16.mxu0 0
        %6604 = vmatpush2.bf16.msra.mxu0 %v6179
        %6605 = vmatprep.subr.bf16.mxu0 0
        %6606 = vmatpush2.bf16.msra.mxu0 %v6178
        %6607 = vmatprep.subr.bf16.mxu0 0
        %6608 = vmatpush2.bf16.msra.mxu0 %v6177
        %6609 = vmatprep.mubr.bf16.mxu0 %v5217
        %6610 = vmatmul.mubr.bf16.gmra.mxu0 %v5216
        %v6611 = vpop.f32.mrf.mxu0
        %v6612 = vadd.f32 %v6572, %v6611
        %v6613 = vpop.f32.mrf.mxu0
        %v6614 = vpop.f32.mrf.mxu0
        %v6615 = vpop.f32.mrf.mxu0
        %6616 = vdwg.mxu0
        %6617 = vmatprep.subr.bf16.mxu0 0
        %6618 = vmatpush1.bf16.msra.mxu0 %v6192
        %6619 = vmatprep.subr.bf16.mxu0 0
        %6620 = vmatpush1.bf16.msra.mxu0 %v6191
        %6621 = vmatprep.subr.bf16.mxu0 0
        %6622 = vmatpush1.bf16.msra.mxu0 %v6190
        %6623 = vmatprep.subr.bf16.mxu0 0
        %6624 = vmatpush1.bf16.msra.mxu0 %v6189
        %6625 = vmatprep.subr.bf16.mxu0 0
        %6626 = vmatpush1.bf16.msra.mxu0 %v6188
        %6627 = vmatprep.subr.bf16.mxu0 0
        %6628 = vmatpush1.bf16.msra.mxu0 %v6187
        %6629 = vmatprep.subr.bf16.mxu0 0
        %6630 = vmatpush1.bf16.msra.mxu0 %v6186
        %6631 = vmatprep.subr.bf16.mxu0 0
        %6632 = vmatpush1.bf16.msra.mxu0 %v6185
        %6633 = vmatprep.subr.bf16.mxu0 0
        %6634 = vmatpush2.bf16.msra.mxu0 %v6200
        %6635 = vmatprep.subr.bf16.mxu0 0
        %6636 = vmatpush2.bf16.msra.mxu0 %v6199
        %6637 = vmatprep.subr.bf16.mxu0 0
        %6638 = vmatpush2.bf16.msra.mxu0 %v6198
        %6639 = vmatprep.subr.bf16.mxu0 0
        %6640 = vmatpush2.bf16.msra.mxu0 %v6197
        %6641 = vmatprep.subr.bf16.mxu0 0
        %6642 = vmatpush2.bf16.msra.mxu0 %v6196
        %6643 = vmatprep.subr.bf16.mxu0 0
        %6644 = vmatpush2.bf16.msra.mxu0 %v6195
        %6645 = vmatprep.subr.bf16.mxu0 0
        %6646 = vmatpush2.bf16.msra.mxu0 %v6194
        %6647 = vmatprep.subr.bf16.mxu0 0
        %6648 = vmatpush2.bf16.msra.mxu0 %v6193
        %6649 = vmatprep.mubr.bf16.mxu0 %v5219
        %6650 = vmatmul.mubr.bf16.gmra.mxu0 %v5218
        %v6651 = vpop.f32.mrf.mxu0
        %v6652 = vadd.f32 %v6612, %v6651
        %v6653 = vpop.f32.mrf.mxu0
        %v6654 = vpop.f32.mrf.mxu0
        %v6655 = vpop.f32.mrf.mxu0
        %6656 = vdwg.mxu0
        %6657 = vmatprep.subr.bf16.mxu0 0
        %6658 = vmatpush1.bf16.msra.mxu0 %v6208
        %6659 = vmatprep.subr.bf16.mxu0 0
        %6660 = vmatpush1.bf16.msra.mxu0 %v6207
        %6661 = vmatprep.subr.bf16.mxu0 0
        %6662 = vmatpush1.bf16.msra.mxu0 %v6206
        %6663 = vmatprep.subr.bf16.mxu0 0
        %6664 = vmatpush1.bf16.msra.mxu0 %v6205
        %6665 = vmatprep.subr.bf16.mxu0 0
        %6666 = vmatpush1.bf16.msra.mxu0 %v6204
        %6667 = vmatprep.subr.bf16.mxu0 0
        %6668 = vmatpush1.bf16.msra.mxu0 %v6203
        %6669 = vmatprep.subr.bf16.mxu0 0
        %6670 = vmatpush1.bf16.msra.mxu0 %v6202
        %6671 = vmatprep.subr.bf16.mxu0 0
        %6672 = vmatpush1.bf16.msra.mxu0 %v6201
        %6673 = vmatprep.subr.bf16.mxu0 0
        %6674 = vmatpush2.bf16.msra.mxu0 %v6216
        %6675 = vmatprep.subr.bf16.mxu0 0
        %6676 = vmatpush2.bf16.msra.mxu0 %v6215
        %6677 = vmatprep.subr.bf16.mxu0 0
        %6678 = vmatpush2.bf16.msra.mxu0 %v6214
        %6679 = vmatprep.subr.bf16.mxu0 0
        %6680 = vmatpush2.bf16.msra.mxu0 %v6213
        %6681 = vmatprep.subr.bf16.mxu0 0
        %6682 = vmatpush2.bf16.msra.mxu0 %v6212
        %6683 = vmatprep.subr.bf16.mxu0 0
        %6684 = vmatpush2.bf16.msra.mxu0 %v6211
        %6685 = vmatprep.subr.bf16.mxu0 0
        %6686 = vmatpush2.bf16.msra.mxu0 %v6210
        %6687 = vmatprep.subr.bf16.mxu0 0
        %6688 = vmatpush2.bf16.msra.mxu0 %v6209
        %6689 = vmatprep.mubr.bf16.mxu0 %v5221
        %6690 = vmatmul.mubr.bf16.gmra.mxu0 %v5220
        %v6691 = vpop.f32.mrf.mxu0
        %v6692 = vadd.f32 %v6652, %v6691
        %v6693 = vpop.f32.mrf.mxu0
        %v6694 = vpop.f32.mrf.mxu0
        %v6695 = vpop.f32.mrf.mxu0
        %6696 = vdwg.mxu0
        %6697 = vmatprep.subr.bf16.mxu0 0
        %6698 = vmatpush1.bf16.msra.mxu0 %v6224
        %6699 = vmatprep.subr.bf16.mxu0 0
        %6700 = vmatpush1.bf16.msra.mxu0 %v6223
        %6701 = vmatprep.subr.bf16.mxu0 0
        %6702 = vmatpush1.bf16.msra.mxu0 %v6222
        %6703 = vmatprep.subr.bf16.mxu0 0
        %6704 = vmatpush1.bf16.msra.mxu0 %v6221
        %6705 = vmatprep.subr.bf16.mxu0 0
        %6706 = vmatpush1.bf16.msra.mxu0 %v6220
        %6707 = vmatprep.subr.bf16.mxu0 0
        %6708 = vmatpush1.bf16.msra.mxu0 %v6219
        %6709 = vmatprep.subr.bf16.mxu0 0
        %6710 = vmatpush1.bf16.msra.mxu0 %v6218
        %6711 = vmatprep.subr.bf16.mxu0 0
        %6712 = vmatpush1.bf16.msra.mxu0 %v6217
        %6713 = vmatprep.subr.bf16.mxu0 0
        %6714 = vmatpush2.bf16.msra.mxu0 %v6232
        %6715 = vmatprep.subr.bf16.mxu0 0
        %6716 = vmatpush2.bf16.msra.mxu0 %v6231
        %6717 = vmatprep.subr.bf16.mxu0 0
        %6718 = vmatpush2.bf16.msra.mxu0 %v6230
        %6719 = vmatprep.subr.bf16.mxu0 0
        %6720 = vmatpush2.bf16.msra.mxu0 %v6229
        %6721 = vmatprep.subr.bf16.mxu0 0
        %6722 = vmatpush2.bf16.msra.mxu0 %v6228
        %6723 = vmatprep.subr.bf16.mxu0 0
        %6724 = vmatpush2.bf16.msra.mxu0 %v6227
        %6725 = vmatprep.subr.bf16.mxu0 0
        %6726 = vmatpush2.bf16.msra.mxu0 %v6226
        %6727 = vmatprep.subr.bf16.mxu0 0
        %6728 = vmatpush2.bf16.msra.mxu0 %v6225
        %6729 = vmatprep.mubr.bf16.mxu0 %v5223
        %6730 = vmatmul.mubr.bf16.gmra.mxu0 %v5222
        %v6731 = vpop.f32.mrf.mxu0
        %v6732 = vadd.f32 %v6692, %v6731
        %v6733 = vpop.f32.mrf.mxu0
        %v6734 = vpop.f32.mrf.mxu0
        %v6735 = vpop.f32.mrf.mxu0
        %6736 = vdwg.mxu0
        %v6737 = vxor.u32 %v6732, 2147483648
        %v6738 = vmul.f32 %v6737, 1.442695
        %v6739 = vpow.pop %v6738
        %v6740 = vadd.f32 %v6739, 1.0
        %v6741 = vrcp.pop %v6740
        %v6742 = vmul.f32 1.0, %v6741
        %v6743 = vmul.f32 %v6732, %v6742
        %vm6744 = vcmp.ge.f32.partialorder %v6732, -2.2
        %vm6745 = vcmp.lt.f32.partialorder %v6732, -1.8
        %vm6746 = vmand %vm6744, %vm6745
        %v6747 = vsel %vm6746, 1, 0
        %v6748 = vcvt.s32.f32 %v6747
        %vm6749 = vcmp.ge.f32.partialorder %v6732, -1.8
        %vm6750 = vcmp.lt.f32.partialorder %v6732, -1.4
        %vm6751 = vmand %vm6749, %vm6750
        %v6752 = vsel %vm6751, 1, 0
        %v6753 = vcvt.s32.f32 %v6752
        %vm6754 = vcmp.ge.f32.partialorder %v6732, -1.4
        %vm6755 = vcmp.lt.f32.partialorder %v6732, -1.0
        %vm6756 = vmand %vm6754, %vm6755
        %v6757 = vsel %vm6756, 1, 0
        %v6758 = vcvt.s32.f32 %v6757
        %vm6759 = vcmp.ge.f32.partialorder %v6732, -1.0
        %vm6760 = vcmp.lt.f32.partialorder %v6732, -0.6
        %vm6761 = vmand %vm6759, %vm6760
        %v6762 = vsel %vm6761, 1, 0
        %v6763 = vcvt.s32.f32 %v6762
        %vm6764 = vcmp.ge.f32.partialorder %v6732, -0.6
        %vm6765 = vcmp.lt.f32.partialorder %v6732, -0.2
        %vm6766 = vmand %vm6764, %vm6765
        %v6767 = vsel %vm6766, 1, 0
        %v6768 = vcvt.s32.f32 %v6767
        %vm6769 = vcmp.ge.f32.partialorder %v6732, -0.2
        %vm6770 = vcmp.lt.f32.partialorder %v6732, 0.2
        %vm6771 = vmand %vm6769, %vm6770
        %v6772 = vsel %vm6771, 1, 0
        %v6773 = vcvt.s32.f32 %v6772
        %vm6774 = vcmp.ge.f32.partialorder %v6732, 0.2
        %vm6775 = vcmp.lt.f32.partialorder %v6732, 0.6
        %vm6776 = vmand %vm6774, %vm6775
        %v6777 = vsel %vm6776, 1, 0
        %v6778 = vcvt.s32.f32 %v6777
        %vm6779 = vcmp.ge.f32.partialorder %v6732, 0.6
        %vm6780 = vcmp.lt.f32.partialorder %v6732, 1.0
        %vm6781 = vmand %vm6779, %vm6780
        %v6782 = vsel %vm6781, 1, 0
        %v6783 = vcvt.s32.f32 %v6782
        %vm6784 = vcmp.ge.f32.partialorder %v6732, 1.0
        %vm6785 = vcmp.lt.f32.partialorder %v6732, 1.4
        %vm6786 = vmand %vm6784, %vm6785
        %v6787 = vsel %vm6786, 1, 0
        %v6788 = vcvt.s32.f32 %v6787
        %vm6789 = vcmp.ge.f32.partialorder %v6732, 1.4
        %vm6790 = vcmp.lt.f32.partialorder %v6732, 1.8
        %vm6791 = vmand %vm6789, %vm6790
        %v6792 = vsel %vm6791, 1, 0
        %v6793 = vcvt.s32.f32 %v6792
        %vm6794 = vcmp.ge.f32.partialorder %v6732, 1.8
        %vm6795 = vcmp.lt.f32.partialorder %v6732, 2.2
        %vm6796 = vmand %vm6794, %vm6795
        %v6797 = vsel %vm6796, 1, 0
        %v6798 = vcvt.s32.f32 %v6797
        %v6799 = vsub.f32 %v6732, -2.2
        %v6800 = vmul.f32 %v6799, 2.5
        %v6801 = vmul.f32 %v6800, %v6748
        %v6802 = vsub.f32 -1.4, %v6732
        %v6803 = vmul.f32 %v6802, 2.5
        %v6804 = vmul.f32 %v6803, %v6753
        %v6805 = vadd.f32 %v6801, %v6804
        %v6806 = vsub.f32 %v6732, -1.8
        %v6807 = vmul.f32 %v6806, 2.5
        %v6808 = vmul.f32 %v6807, %v6753
        %v6809 = vsub.f32 -1.0, %v6732
        %v6810 = vmul.f32 %v6809, 2.5
        %v6811 = vmul.f32 %v6810, %v6758
        %v6812 = vadd.f32 %v6808, %v6811
        %v6813 = vsub.f32 %v6732, -1.4
        %v6814 = vmul.f32 %v6813, 2.5
        %v6815 = vmul.f32 %v6814, %v6758
        %v6816 = vsub.f32 -0.6, %v6732
        %v6817 = vmul.f32 %v6816, 2.5
        %v6818 = vmul.f32 %v6817, %v6763
        %v6819 = vadd.f32 %v6815, %v6818
        %v6820 = vsub.f32 %v6732, -1.0
        %v6821 = vmul.f32 %v6820, 2.5
        %v6822 = vmul.f32 %v6821, %v6763
        %v6823 = vsub.f32 -0.2, %v6732
        %v6824 = vmul.f32 %v6823, 2.5
        %v6825 = vmul.f32 %v6824, %v6768
        %v6826 = vadd.f32 %v6822, %v6825
        %v6827 = vsub.f32 %v6732, -0.6
        %v6828 = vmul.f32 %v6827, 2.5
        %v6829 = vmul.f32 %v6828, %v6768
        %v6830 = vsub.f32 0.2, %v6732
        %v6831 = vmul.f32 %v6830, 2.5
        %v6832 = vmul.f32 %v6831, %v6773
        %v6833 = vadd.f32 %v6829, %v6832
        %v6834 = vsub.f32 %v6732, -0.2
        %v6835 = vmul.f32 %v6834, 2.5
        %v6836 = vmul.f32 %v6835, %v6773
        %v6837 = vsub.f32 0.6, %v6732
        %v6838 = vmul.f32 %v6837, 2.5
        %v6839 = vmul.f32 %v6838, %v6778
        %v6840 = vadd.f32 %v6836, %v6839
        %v6841 = vsub.f32 %v6732, 0.2
        %v6842 = vmul.f32 %v6841, 2.5
        %v6843 = vmul.f32 %v6842, %v6778
        %v6844 = vsub.f32 1.0, %v6732
        %v6845 = vmul.f32 %v6844, 2.5
        %v6846 = vmul.f32 %v6845, %v6783
        %v6847 = vadd.f32 %v6843, %v6846
        %v6848 = vsub.f32 %v6732, 0.6
        %v6849 = vmul.f32 %v6848, 2.5
        %v6850 = vmul.f32 %v6849, %v6783
        %v6851 = vsub.f32 1.4, %v6732
        %v6852 = vmul.f32 %v6851, 2.5
        %v6853 = vmul.f32 %v6852, %v6788
        %v6854 = vadd.f32 %v6850, %v6853
        %v6855 = vsub.f32 %v6732, 1.0
        %v6856 = vmul.f32 %v6855, 2.5
        %v6857 = vmul.f32 %v6856, %v6788
        %v6858 = vsub.f32 1.8, %v6732
        %v6859 = vmul.f32 %v6858, 2.5
        %v6860 = vmul.f32 %v6859, %v6793
        %v6861 = vadd.f32 %v6857, %v6860
        %v6862 = vsub.f32 %v6732, 1.4
        %v6863 = vmul.f32 %v6862, 2.5
        %v6864 = vmul.f32 %v6863, %v6793
        %v6865 = vsub.f32 2.2, %v6732
        %v6866 = vmul.f32 %v6865, 2.5
        %v6867 = vmul.f32 %v6866, %v6798
        %v6868 = vadd.f32 %v6864, %v6867
        %v6869 = vmul.f32 %v6799, 1.25
        %v6870 = vmul.f32 %v6869, %v6805
        %v6871 = vmul.f32 %v6809, 1.25
        %v6872 = vmul.f32 %v6871, %v6812
        %v6873 = vadd.f32 %v6870, %v6872
        %v6874 = vmul.f32 %v6806, 1.25
        %v6875 = vmul.f32 %v6874, %v6812
        %v6876 = vmul.f32 %v6816, 1.25
        %v6877 = vmul.f32 %v6876, %v6819
        %v6878 = vadd.f32 %v6875, %v6877
        %v6879 = vmul.f32 %v6813, 1.25
        %v6880 = vmul.f32 %v6879, %v6819
        %v6881 = vmul.f32 %v6823, 1.25
        %v6882 = vmul.f32 %v6881, %v6826
        %v6883 = vadd.f32 %v6880, %v6882
        %v6884 = vmul.f32 %v6820, 1.25
        %v6885 = vmul.f32 %v6884, %v6826
        %v6886 = vmul.f32 %v6830, 1.25
        %v6887 = vmul.f32 %v6886, %v6833
        %v6888 = vadd.f32 %v6885, %v6887
        %v6889 = vmul.f32 %v6827, 1.25
        %v6890 = vmul.f32 %v6889, %v6833
        %v6891 = vmul.f32 %v6837, 1.25
        %v6892 = vmul.f32 %v6891, %v6840
        %v6893 = vadd.f32 %v6890, %v6892
        %v6894 = vmul.f32 %v6834, 1.25
        %v6895 = vmul.f32 %v6894, %v6840
        %v6896 = vmul.f32 %v6844, 1.25
        %v6897 = vmul.f32 %v6896, %v6847
        %v6898 = vadd.f32 %v6895, %v6897
        %v6899 = vmul.f32 %v6841, 1.25
        %v6900 = vmul.f32 %v6899, %v6847
        %v6901 = vmul.f32 %v6851, 1.25
        %v6902 = vmul.f32 %v6901, %v6854
        %v6903 = vadd.f32 %v6900, %v6902
        %v6904 = vmul.f32 %v6848, 1.25
        %v6905 = vmul.f32 %v6904, %v6854
        %v6906 = vmul.f32 %v6858, 1.25
        %v6907 = vmul.f32 %v6906, %v6861
        %v6908 = vadd.f32 %v6905, %v6907
        %v6909 = vmul.f32 %v6855, 1.25
        %v6910 = vmul.f32 %v6909, %v6861
        %v6911 = vmul.f32 %v6865, 1.25
        %v6912 = vmul.f32 %v6911, %v6868
        %v6913 = vadd.f32 %v6910, %v6912
        %v6914 = vmul.f32 %v6799, 0.8333333
        %v6915 = vmul.f32 %v6914, %v6873
        %v6916 = vmul.f32 %v6816, 0.8333333
        %v6917 = vmul.f32 %v6916, %v6878
        %v6918 = vadd.f32 %v6915, %v6917
        %v6919 = vmul.f32 %v6806, 0.8333333
        %v6920 = vmul.f32 %v6919, %v6878
        %v6921 = vmul.f32 %v6823, 0.8333333
        %v6922 = vmul.f32 %v6921, %v6883
        %v6923 = vadd.f32 %v6920, %v6922
        %v6924 = vmul.f32 %v6813, 0.8333333
        %v6925 = vmul.f32 %v6924, %v6883
        %v6926 = vmul.f32 %v6830, 0.8333333
        %v6927 = vmul.f32 %v6926, %v6888
        %v6928 = vadd.f32 %v6925, %v6927
        %v6929 = vmul.f32 %v6820, 0.8333333
        %v6930 = vmul.f32 %v6929, %v6888
        %v6931 = vmul.f32 %v6837, 0.8333333
        %v6932 = vmul.f32 %v6931, %v6893
        %v6933 = vadd.f32 %v6930, %v6932
        %v6934 = vmul.f32 %v6827, 0.8333333
        %v6935 = vmul.f32 %v6934, %v6893
        %v6936 = vmul.f32 %v6844, 0.8333333
        %v6937 = vmul.f32 %v6936, %v6898
        %v6938 = vadd.f32 %v6935, %v6937
        %v6939 = vmul.f32 %v6834, 0.8333333
        %v6940 = vmul.f32 %v6939, %v6898
        %v6941 = vmul.f32 %v6851, 0.8333333
        %v6942 = vmul.f32 %v6941, %v6903
        %v6943 = vadd.f32 %v6940, %v6942
        %v6944 = vmul.f32 %v6841, 0.8333333
        %v6945 = vmul.f32 %v6944, %v6903
        %v6946 = vmul.f32 %v6858, 0.8333333
        %v6947 = vmul.f32 %v6946, %v6908
        %v6948 = vadd.f32 %v6945, %v6947
        %v6949 = vmul.f32 %v6848, 0.8333333
        %v6950 = vmul.f32 %v6949, %v6908
        %v6951 = vmul.f32 %v6865, 0.8333333
        %v6952 = vmul.f32 %v6951, %v6913
        %v6953 = vadd.f32 %v6950, %v6952
        %v6954 = vpack.c.bf16 %v6743, %v6743
        %v6955 = vpack.c.bf16 %v6918, %v6918
        %v6956 = vpack.c.bf16 %v6923, %v6923
        %v6957 = vpack.c.bf16 %v6928, %v6928
        %v6958 = vpack.c.bf16 %v6933, %v6933
        %v6959 = vpack.c.bf16 %v6938, %v6938
        %v6960 = vpack.c.bf16 %v6943, %v6943
        %v6961 = vpack.c.bf16 %v6948, %v6948
        %v6962 = vpack.c.bf16 %v6953, %v6953
        %s6963 = scalar_lea.vmem %s302, 576
        %v6964 = vld [vmem:[%s6963] sm:$0xf]
        %v6965 = vld [vmem:[%s6963 + $0x4] sm:$0xf]
        %v6966 = vld [vmem:[%s6963 + $0x8] sm:$0xf]
        %v6967 = vld [vmem:[%s6963 + $0xc] sm:$0xf]
        %v6968 = vld [vmem:[%s6963 + $0x10] sm:$0xf]
        %v6969 = vld [vmem:[%s6963 + $0x14] sm:$0xf]
        %v6970 = vld [vmem:[%s6963 + $0x18] sm:$0xf]
        %v6971 = vld [vmem:[%s6963 + $0x1c] sm:$0xf]
        %v6972 = vld [vmem:[%s6963 + $0x20] sm:$0xf]
        %v6973 = vld [vmem:[%s6963 + $0x24] sm:$0xf]
        %v6974 = vld [vmem:[%s6963 + $0x28] sm:$0xf]
        %v6975 = vld [vmem:[%s6963 + $0x2c] sm:$0xf]
        %v6976 = vld [vmem:[%s6963 + $0x30] sm:$0xf]
        %v6977 = vld [vmem:[%s6963 + $0x34] sm:$0xf]
        %v6978 = vld [vmem:[%s6963 + $0x38] sm:$0xf]
        %v6979 = vld [vmem:[%s6963 + $0x3c] sm:$0xf]
        %v6980 = vld [vmem:[%s6963 + $0x40] sm:$0xf]
        %v6981 = vld [vmem:[%s6963 + $0x44] sm:$0xf]
        %v6982 = vld [vmem:[%s6963 + $0x48] sm:$0xf]
        %v6983 = vld [vmem:[%s6963 + $0x4c] sm:$0xf]
        %v6984 = vld [vmem:[%s6963 + $0x50] sm:$0xf]
        %v6985 = vld [vmem:[%s6963 + $0x54] sm:$0xf]
        %v6986 = vld [vmem:[%s6963 + $0x58] sm:$0xf]
        %v6987 = vld [vmem:[%s6963 + $0x5c] sm:$0xf]
        %v6988 = vld [vmem:[%s6963 + $0x60] sm:$0xf]
        %v6989 = vld [vmem:[%s6963 + $0x64] sm:$0xf]
        %v6990 = vld [vmem:[%s6963 + $0x68] sm:$0xf]
        %v6991 = vld [vmem:[%s6963 + $0x6c] sm:$0xf]
        %v6992 = vld [vmem:[%s6963 + $0x70] sm:$0xf]
        %v6993 = vld [vmem:[%s6963 + $0x74] sm:$0xf]
        %v6994 = vld [vmem:[%s6963 + $0x78] sm:$0xf]
        %v6995 = vld [vmem:[%s6963 + $0x7c] sm:$0xf]
        %v6996 = vld [vmem:[%s6963 + $0x80] sm:$0xf]
        %v6997 = vld [vmem:[%s6963 + $0x84] sm:$0xf]
        %v6998 = vld [vmem:[%s6963 + $0x88] sm:$0xf]
        %v6999 = vld [vmem:[%s6963 + $0x8c] sm:$0xf]
        %v7000 = vld [vmem:[%s6963 + $0x90] sm:$0xf]
        %v7001 = vld [vmem:[%s6963 + $0x94] sm:$0xf]
        %v7002 = vld [vmem:[%s6963 + $0x98] sm:$0xf]
        %v7003 = vld [vmem:[%s6963 + $0x9c] sm:$0xf]
        %v7004 = vld [vmem:[%s6963 + $0xa0] sm:$0xf]
        %v7005 = vld [vmem:[%s6963 + $0xa4] sm:$0xf]
        %v7006 = vld [vmem:[%s6963 + $0xa8] sm:$0xf]
        %v7007 = vld [vmem:[%s6963 + $0xac] sm:$0xf]
        %v7008 = vld [vmem:[%s6963 + $0xb0] sm:$0xf]
        %v7009 = vld [vmem:[%s6963 + $0xb4] sm:$0xf]
        %v7010 = vld [vmem:[%s6963 + $0xb8] sm:$0xf]
        %v7011 = vld [vmem:[%s6963 + $0xbc] sm:$0xf]
        %v7012 = vld [vmem:[%s6963 + $0xc0] sm:$0xf]
        %v7013 = vld [vmem:[%s6963 + $0xc4] sm:$0xf]
        %v7014 = vld [vmem:[%s6963 + $0xc8] sm:$0xf]
        %v7015 = vld [vmem:[%s6963 + $0xcc] sm:$0xf]
        %v7016 = vld [vmem:[%s6963 + $0xd0] sm:$0xf]
        %v7017 = vld [vmem:[%s6963 + $0xd4] sm:$0xf]
        %v7018 = vld [vmem:[%s6963 + $0xd8] sm:$0xf]
        %v7019 = vld [vmem:[%s6963 + $0xdc] sm:$0xf]
        %v7020 = vld [vmem:[%s6963 + $0xe0] sm:$0xf]
        %v7021 = vld [vmem:[%s6963 + $0xe4] sm:$0xf]
        %v7022 = vld [vmem:[%s6963 + $0xe8] sm:$0xf]
        %v7023 = vld [vmem:[%s6963 + $0xec] sm:$0xf]
        %v7024 = vld [vmem:[%s6963 + $0xf0] sm:$0xf]
        %v7025 = vld [vmem:[%s6963 + $0xf4] sm:$0xf]
        %v7026 = vld [vmem:[%s6963 + $0xf8] sm:$0xf]
        %v7027 = vld [vmem:[%s6963 + $0xfc] sm:$0xf]
        %v7028 = vld [vmem:[%s6963 + $0x100] sm:$0xf]
        %v7029 = vld [vmem:[%s6963 + $0x104] sm:$0xf]
        %v7030 = vld [vmem:[%s6963 + $0x108] sm:$0xf]
        %v7031 = vld [vmem:[%s6963 + $0x10c] sm:$0xf]
        %v7032 = vld [vmem:[%s6963 + $0x110] sm:$0xf]
        %v7033 = vld [vmem:[%s6963 + $0x114] sm:$0xf]
        %v7034 = vld [vmem:[%s6963 + $0x118] sm:$0xf]
        %v7035 = vld [vmem:[%s6963 + $0x11c] sm:$0xf]
        %v7036 = vld [vmem:[%s6963 + $0x120] sm:$0xf]
        %v7037 = vld [vmem:[%s6963 + $0x124] sm:$0xf]
        %v7038 = vld [vmem:[%s6963 + $0x128] sm:$0xf]
        %v7039 = vld [vmem:[%s6963 + $0x12c] sm:$0xf]
        %v7040 = vld [vmem:[%s6963 + $0x130] sm:$0xf]
        %v7041 = vld [vmem:[%s6963 + $0x134] sm:$0xf]
        %v7042 = vld [vmem:[%s6963 + $0x138] sm:$0xf]
        %v7043 = vld [vmem:[%s6963 + $0x13c] sm:$0xf]
        %v7044 = vld [vmem:[%s6963 + $0x140] sm:$0xf]
        %v7045 = vld [vmem:[%s6963 + $0x144] sm:$0xf]
        %v7046 = vld [vmem:[%s6963 + $0x148] sm:$0xf]
        %v7047 = vld [vmem:[%s6963 + $0x14c] sm:$0xf]
        %v7048 = vld [vmem:[%s6963 + $0x150] sm:$0xf]
        %v7049 = vld [vmem:[%s6963 + $0x154] sm:$0xf]
        %v7050 = vld [vmem:[%s6963 + $0x158] sm:$0xf]
        %v7051 = vld [vmem:[%s6963 + $0x15c] sm:$0xf]
        %v7052 = vld [vmem:[%s6963 + $0x160] sm:$0xf]
        %v7053 = vld [vmem:[%s6963 + $0x164] sm:$0xf]
        %v7054 = vld [vmem:[%s6963 + $0x168] sm:$0xf]
        %v7055 = vld [vmem:[%s6963 + $0x16c] sm:$0xf]
        %v7056 = vld [vmem:[%s6963 + $0x170] sm:$0xf]
        %v7057 = vld [vmem:[%s6963 + $0x174] sm:$0xf]
        %v7058 = vld [vmem:[%s6963 + $0x178] sm:$0xf]
        %v7059 = vld [vmem:[%s6963 + $0x17c] sm:$0xf]
        %v7060 = vld [vmem:[%s6963 + $0x180] sm:$0xf]
        %v7061 = vld [vmem:[%s6963 + $0x184] sm:$0xf]
        %v7062 = vld [vmem:[%s6963 + $0x188] sm:$0xf]
        %v7063 = vld [vmem:[%s6963 + $0x18c] sm:$0xf]
        %v7064 = vld [vmem:[%s6963 + $0x190] sm:$0xf]
        %v7065 = vld [vmem:[%s6963 + $0x194] sm:$0xf]
        %v7066 = vld [vmem:[%s6963 + $0x198] sm:$0xf]
        %v7067 = vld [vmem:[%s6963 + $0x19c] sm:$0xf]
        %v7068 = vld [vmem:[%s6963 + $0x1a0] sm:$0xf]
        %v7069 = vld [vmem:[%s6963 + $0x1a4] sm:$0xf]
        %v7070 = vld [vmem:[%s6963 + $0x1a8] sm:$0xf]
        %v7071 = vld [vmem:[%s6963 + $0x1ac] sm:$0xf]
        %v7072 = vld [vmem:[%s6963 + $0x1b0] sm:$0xf]
        %v7073 = vld [vmem:[%s6963 + $0x1b4] sm:$0xf]
        %v7074 = vld [vmem:[%s6963 + $0x1b8] sm:$0xf]
        %v7075 = vld [vmem:[%s6963 + $0x1bc] sm:$0xf]
        %v7076 = vld [vmem:[%s6963 + $0x1c0] sm:$0xf]
        %v7077 = vld [vmem:[%s6963 + $0x1c4] sm:$0xf]
        %v7078 = vld [vmem:[%s6963 + $0x1c8] sm:$0xf]
        %v7079 = vld [vmem:[%s6963 + $0x1cc] sm:$0xf]
        %v7080 = vld [vmem:[%s6963 + $0x1d0] sm:$0xf]
        %v7081 = vld [vmem:[%s6963 + $0x1d4] sm:$0xf]
        %v7082 = vld [vmem:[%s6963 + $0x1d8] sm:$0xf]
        %v7083 = vld [vmem:[%s6963 + $0x1dc] sm:$0xf]
        %v7084 = vld [vmem:[%s6963 + $0x1e0] sm:$0xf]
        %v7085 = vld [vmem:[%s6963 + $0x1e4] sm:$0xf]
        %v7086 = vld [vmem:[%s6963 + $0x1e8] sm:$0xf]
        %v7087 = vld [vmem:[%s6963 + $0x1ec] sm:$0xf]
        %v7088 = vld [vmem:[%s6963 + $0x1f0] sm:$0xf]
        %v7089 = vld [vmem:[%s6963 + $0x1f4] sm:$0xf]
        %v7090 = vld [vmem:[%s6963 + $0x1f8] sm:$0xf]
        %v7091 = vld [vmem:[%s6963 + $0x1fc] sm:$0xf]
        %v7092 = vld [vmem:[%s6963 + $0x200] sm:$0xf]
        %v7093 = vld [vmem:[%s6963 + $0x204] sm:$0xf]
        %v7094 = vld [vmem:[%s6963 + $0x208] sm:$0xf]
        %v7095 = vld [vmem:[%s6963 + $0x20c] sm:$0xf]
        %v7096 = vld [vmem:[%s6963 + $0x210] sm:$0xf]
        %v7097 = vld [vmem:[%s6963 + $0x214] sm:$0xf]
        %v7098 = vld [vmem:[%s6963 + $0x218] sm:$0xf]
        %v7099 = vld [vmem:[%s6963 + $0x21c] sm:$0xf]
        %v7100 = vld [vmem:[%s6963 + $0x220] sm:$0xf]
        %v7101 = vld [vmem:[%s6963 + $0x224] sm:$0xf]
        %v7102 = vld [vmem:[%s6963 + $0x228] sm:$0xf]
        %v7103 = vld [vmem:[%s6963 + $0x22c] sm:$0xf]
        %v7104 = vld [vmem:[%s6963 + $0x230] sm:$0xf]
        %v7105 = vld [vmem:[%s6963 + $0x234] sm:$0xf]
        %v7106 = vld [vmem:[%s6963 + $0x238] sm:$0xf]
        %v7107 = vld [vmem:[%s6963 + $0x23c] sm:$0xf]
        %v7252 = vunpack.c.l.b16 %v6964
        %v7253 = vunpack.c.l.b16 %v6965
        %v7254 = vunpack.c.l.b16 %v6966
        %v7255 = vunpack.c.l.b16 %v6967
        %v7256 = vunpack.c.l.b16 %v6968
        %v7257 = vunpack.c.l.b16 %v6969
        %v7258 = vunpack.c.l.b16 %v6970
        %v7259 = vunpack.c.l.b16 %v6971
        %v7260 = vunpack.c.l.b16 %v6972
        %v7261 = vunpack.c.l.b16 %v6973
        %v7262 = vunpack.c.l.b16 %v6974
        %v7263 = vunpack.c.l.b16 %v6975
        %v7264 = vunpack.c.l.b16 %v6976
        %v7265 = vunpack.c.l.b16 %v6977
        %v7266 = vunpack.c.l.b16 %v6978
        %v7267 = vunpack.c.l.b16 %v6979
        %v7268 = vunpack.c.l.b16 %v6980
        %v7269 = vunpack.c.l.b16 %v6981
        %v7270 = vunpack.c.l.b16 %v6982
        %v7271 = vunpack.c.l.b16 %v6983
        %v7272 = vunpack.c.l.b16 %v6984
        %v7273 = vunpack.c.l.b16 %v6985
        %v7274 = vunpack.c.l.b16 %v6986
        %v7275 = vunpack.c.l.b16 %v6987
        %v7276 = vunpack.c.l.b16 %v6988
        %v7277 = vunpack.c.l.b16 %v6989
        %v7278 = vunpack.c.l.b16 %v6990
        %v7279 = vunpack.c.l.b16 %v6991
        %v7280 = vunpack.c.l.b16 %v6992
        %v7281 = vunpack.c.l.b16 %v6993
        %v7282 = vunpack.c.l.b16 %v6994
        %v7283 = vunpack.c.l.b16 %v6995
        %v7284 = vunpack.c.l.b16 %v6996
        %v7285 = vunpack.c.l.b16 %v6997
        %v7286 = vunpack.c.l.b16 %v6998
        %v7287 = vunpack.c.l.b16 %v6999
        %v7288 = vunpack.c.l.b16 %v7000
        %v7289 = vunpack.c.l.b16 %v7001
        %v7290 = vunpack.c.l.b16 %v7002
        %v7291 = vunpack.c.l.b16 %v7003
        %v7292 = vunpack.c.l.b16 %v7004
        %v7293 = vunpack.c.l.b16 %v7005
        %v7294 = vunpack.c.l.b16 %v7006
        %v7295 = vunpack.c.l.b16 %v7007
        %v7296 = vunpack.c.l.b16 %v7008
        %v7297 = vunpack.c.l.b16 %v7009
        %v7298 = vunpack.c.l.b16 %v7010
        %v7299 = vunpack.c.l.b16 %v7011
        %v7300 = vunpack.c.l.b16 %v7012
        %v7301 = vunpack.c.l.b16 %v7013
        %v7302 = vunpack.c.l.b16 %v7014
        %v7303 = vunpack.c.l.b16 %v7015
        %v7304 = vunpack.c.l.b16 %v7016
        %v7305 = vunpack.c.l.b16 %v7017
        %v7306 = vunpack.c.l.b16 %v7018
        %v7307 = vunpack.c.l.b16 %v7019
        %v7308 = vunpack.c.l.b16 %v7020
        %v7309 = vunpack.c.l.b16 %v7021
        %v7310 = vunpack.c.l.b16 %v7022
        %v7311 = vunpack.c.l.b16 %v7023
        %v7312 = vunpack.c.l.b16 %v7024
        %v7313 = vunpack.c.l.b16 %v7025
        %v7314 = vunpack.c.l.b16 %v7026
        %v7315 = vunpack.c.l.b16 %v7027
        %v7316 = vunpack.c.l.b16 %v7028
        %v7317 = vunpack.c.l.b16 %v7029
        %v7318 = vunpack.c.l.b16 %v7030
        %v7319 = vunpack.c.l.b16 %v7031
        %v7320 = vunpack.c.l.b16 %v7032
        %v7321 = vunpack.c.l.b16 %v7033
        %v7322 = vunpack.c.l.b16 %v7034
        %v7323 = vunpack.c.l.b16 %v7035
        %v7324 = vunpack.c.l.b16 %v7036
        %v7325 = vunpack.c.l.b16 %v7037
        %v7326 = vunpack.c.l.b16 %v7038
        %v7327 = vunpack.c.l.b16 %v7039
        %v7328 = vunpack.c.l.b16 %v7040
        %v7329 = vunpack.c.l.b16 %v7041
        %v7330 = vunpack.c.l.b16 %v7042
        %v7331 = vunpack.c.l.b16 %v7043
        %v7332 = vunpack.c.l.b16 %v7044
        %v7333 = vunpack.c.l.b16 %v7045
        %v7334 = vunpack.c.l.b16 %v7046
        %v7335 = vunpack.c.l.b16 %v7047
        %v7336 = vunpack.c.l.b16 %v7048
        %v7337 = vunpack.c.l.b16 %v7049
        %v7338 = vunpack.c.l.b16 %v7050
        %v7339 = vunpack.c.l.b16 %v7051
        %v7340 = vunpack.c.l.b16 %v7052
        %v7341 = vunpack.c.l.b16 %v7053
        %v7342 = vunpack.c.l.b16 %v7054
        %v7343 = vunpack.c.l.b16 %v7055
        %v7344 = vunpack.c.l.b16 %v7056
        %v7345 = vunpack.c.l.b16 %v7057
        %v7346 = vunpack.c.l.b16 %v7058
        %v7347 = vunpack.c.l.b16 %v7059
        %v7348 = vunpack.c.l.b16 %v7060
        %v7349 = vunpack.c.l.b16 %v7061
        %v7350 = vunpack.c.l.b16 %v7062
        %v7351 = vunpack.c.l.b16 %v7063
        %v7352 = vunpack.c.l.b16 %v7064
        %v7353 = vunpack.c.l.b16 %v7065
        %v7354 = vunpack.c.l.b16 %v7066
        %v7355 = vunpack.c.l.b16 %v7067
        %v7356 = vunpack.c.l.b16 %v7068
        %v7357 = vunpack.c.l.b16 %v7069
        %v7358 = vunpack.c.l.b16 %v7070
        %v7359 = vunpack.c.l.b16 %v7071
        %v7360 = vunpack.c.l.b16 %v7072
        %v7361 = vunpack.c.l.b16 %v7073
        %v7362 = vunpack.c.l.b16 %v7074
        %v7363 = vunpack.c.l.b16 %v7075
        %v7364 = vunpack.c.l.b16 %v7076
        %v7365 = vunpack.c.l.b16 %v7077
        %v7366 = vunpack.c.l.b16 %v7078
        %v7367 = vunpack.c.l.b16 %v7079
        %v7368 = vunpack.c.l.b16 %v7080
        %v7369 = vunpack.c.l.b16 %v7081
        %v7370 = vunpack.c.l.b16 %v7082
        %v7371 = vunpack.c.l.b16 %v7083
        %v7372 = vunpack.c.l.b16 %v7084
        %v7373 = vunpack.c.l.b16 %v7085
        %v7374 = vunpack.c.l.b16 %v7086
        %v7375 = vunpack.c.l.b16 %v7087
        %v7376 = vunpack.c.l.b16 %v7088
        %v7377 = vunpack.c.l.b16 %v7089
        %v7378 = vunpack.c.l.b16 %v7090
        %v7379 = vunpack.c.l.b16 %v7091
        %v7380 = vunpack.c.l.b16 %v7092
        %v7381 = vunpack.c.l.b16 %v7093
        %v7382 = vunpack.c.l.b16 %v7094
        %v7383 = vunpack.c.l.b16 %v7095
        %v7384 = vunpack.c.l.b16 %v7096
        %v7385 = vunpack.c.l.b16 %v7097
        %v7386 = vunpack.c.l.b16 %v7098
        %v7387 = vunpack.c.l.b16 %v7099
        %v7388 = vunpack.c.l.b16 %v7100
        %v7389 = vunpack.c.l.b16 %v7101
        %v7390 = vunpack.c.l.b16 %v7102
        %v7391 = vunpack.c.l.b16 %v7103
        %v7392 = vunpack.c.l.b16 %v7104
        %v7393 = vunpack.c.l.b16 %v7105
        %v7394 = vunpack.c.l.b16 %v7106
        %v7395 = vunpack.c.l.b16 %v7107
        %v7396 = vpack.c.b16 %v7253, %v7252
        %v7397 = vpack.c.b16 %v7255, %v7254
        %v7398 = vpack.c.b16 %v7257, %v7256
        %v7399 = vpack.c.b16 %v7259, %v7258
        %v7400 = vpack.c.b16 %v7261, %v7260
        %v7401 = vpack.c.b16 %v7263, %v7262
        %v7402 = vpack.c.b16 %v7265, %v7264
        %v7403 = vpack.c.b16 %v7267, %v7266
        %v7404 = vpack.c.b16 %v7269, %v7268
        %v7405 = vpack.c.b16 %v7271, %v7270
        %v7406 = vpack.c.b16 %v7273, %v7272
        %v7407 = vpack.c.b16 %v7275, %v7274
        %v7408 = vpack.c.b16 %v7277, %v7276
        %v7409 = vpack.c.b16 %v7279, %v7278
        %v7410 = vpack.c.b16 %v7281, %v7280
        %v7411 = vpack.c.b16 %v7283, %v7282
        %v7412 = vpack.c.b16 %v7285, %v7284
        %v7413 = vpack.c.b16 %v7287, %v7286
        %v7414 = vpack.c.b16 %v7289, %v7288
        %v7415 = vpack.c.b16 %v7291, %v7290
        %v7416 = vpack.c.b16 %v7293, %v7292
        %v7417 = vpack.c.b16 %v7295, %v7294
        %v7418 = vpack.c.b16 %v7297, %v7296
        %v7419 = vpack.c.b16 %v7299, %v7298
        %v7420 = vpack.c.b16 %v7301, %v7300
        %v7421 = vpack.c.b16 %v7303, %v7302
        %v7422 = vpack.c.b16 %v7305, %v7304
        %v7423 = vpack.c.b16 %v7307, %v7306
        %v7424 = vpack.c.b16 %v7309, %v7308
        %v7425 = vpack.c.b16 %v7311, %v7310
        %v7426 = vpack.c.b16 %v7313, %v7312
        %v7427 = vpack.c.b16 %v7315, %v7314
        %v7428 = vpack.c.b16 %v7317, %v7316
        %v7429 = vpack.c.b16 %v7319, %v7318
        %v7430 = vpack.c.b16 %v7321, %v7320
        %v7431 = vpack.c.b16 %v7323, %v7322
        %v7432 = vpack.c.b16 %v7325, %v7324
        %v7433 = vpack.c.b16 %v7327, %v7326
        %v7434 = vpack.c.b16 %v7329, %v7328
        %v7435 = vpack.c.b16 %v7331, %v7330
        %v7436 = vpack.c.b16 %v7333, %v7332
        %v7437 = vpack.c.b16 %v7335, %v7334
        %v7438 = vpack.c.b16 %v7337, %v7336
        %v7439 = vpack.c.b16 %v7339, %v7338
        %v7440 = vpack.c.b16 %v7341, %v7340
        %v7441 = vpack.c.b16 %v7343, %v7342
        %v7442 = vpack.c.b16 %v7345, %v7344
        %v7443 = vpack.c.b16 %v7347, %v7346
        %v7444 = vpack.c.b16 %v7349, %v7348
        %v7445 = vpack.c.b16 %v7351, %v7350
        %v7446 = vpack.c.b16 %v7353, %v7352
        %v7447 = vpack.c.b16 %v7355, %v7354
        %v7448 = vpack.c.b16 %v7357, %v7356
        %v7449 = vpack.c.b16 %v7359, %v7358
        %v7450 = vpack.c.b16 %v7361, %v7360
        %v7451 = vpack.c.b16 %v7363, %v7362
        %v7452 = vpack.c.b16 %v7365, %v7364
        %v7453 = vpack.c.b16 %v7367, %v7366
        %v7454 = vpack.c.b16 %v7369, %v7368
        %v7455 = vpack.c.b16 %v7371, %v7370
        %v7456 = vpack.c.b16 %v7373, %v7372
        %v7457 = vpack.c.b16 %v7375, %v7374
        %v7458 = vpack.c.b16 %v7377, %v7376
        %v7459 = vpack.c.b16 %v7379, %v7378
        %v7460 = vpack.c.b16 %v7381, %v7380
        %v7461 = vpack.c.b16 %v7383, %v7382
        %v7462 = vpack.c.b16 %v7385, %v7384
        %v7463 = vpack.c.b16 %v7387, %v7386
        %v7464 = vpack.c.b16 %v7389, %v7388
        %v7465 = vpack.c.b16 %v7391, %v7390
        %v7466 = vpack.c.b16 %v7393, %v7392
        %v7467 = vpack.c.b16 %v7395, %v7394
        %7540 = vmatprep.subr.bf16.mxu0 0
        %7541 = vmatpush1.bf16.msra.mxu0 %v7403
        %7542 = vmatprep.subr.bf16.mxu0 0
        %7543 = vmatpush1.bf16.msra.mxu0 %v7402
        %7544 = vmatprep.subr.bf16.mxu0 0
        %7545 = vmatpush1.bf16.msra.mxu0 %v7401
        %7546 = vmatprep.subr.bf16.mxu0 0
        %7547 = vmatpush1.bf16.msra.mxu0 %v7400
        %7548 = vmatprep.subr.bf16.mxu0 0
        %7549 = vmatpush1.bf16.msra.mxu0 %v7399
        %7550 = vmatprep.subr.bf16.mxu0 0
        %7551 = vmatpush1.bf16.msra.mxu0 %v7398
        %7552 = vmatprep.subr.bf16.mxu0 0
        %7553 = vmatpush1.bf16.msra.mxu0 %v7397
        %7554 = vmatprep.subr.bf16.mxu0 0
        %7555 = vmatpush1.bf16.msra.mxu0 %v7396
        %7556 = vmatprep.subr.bf16.mxu0 0
        %7557 = vmatpush2.bf16.msra.mxu0 %v7411
        %7558 = vmatprep.subr.bf16.mxu0 0
        %7559 = vmatpush2.bf16.msra.mxu0 %v7410
        %7560 = vmatprep.subr.bf16.mxu0 0
        %7561 = vmatpush2.bf16.msra.mxu0 %v7409
        %7562 = vmatprep.subr.bf16.mxu0 0
        %7563 = vmatpush2.bf16.msra.mxu0 %v7408
        %7564 = vmatprep.subr.bf16.mxu0 0
        %7565 = vmatpush2.bf16.msra.mxu0 %v7407
        %7566 = vmatprep.subr.bf16.mxu0 0
        %7567 = vmatpush2.bf16.msra.mxu0 %v7406
        %7568 = vmatprep.subr.bf16.mxu0 0
        %7569 = vmatpush2.bf16.msra.mxu0 %v7405
        %7570 = vmatprep.subr.bf16.mxu0 0
        %7571 = vmatpush2.bf16.msra.mxu0 %v7404
        %7572 = vmatprep.mubr.bf16.mxu0 %v6955
        %7573 = vmatmul.mubr.bf16.gmra.mxu0 %v6954
        %v7574 = vpop.f32.mrf.mxu0
        %v7575 = vadd.f32 0.0, %v7574
        %v7576 = vpop.f32.mrf.mxu0
        %v7577 = vpop.f32.mrf.mxu0
        %v7578 = vpop.f32.mrf.mxu0
        %7579 = vdwg.mxu0
        %7580 = vmatprep.subr.bf16.mxu0 0
        %7581 = vmatpush1.bf16.msra.mxu0 %v7419
        %7582 = vmatprep.subr.bf16.mxu0 0
        %7583 = vmatpush1.bf16.msra.mxu0 %v7418
        %7584 = vmatprep.subr.bf16.mxu0 0
        %7585 = vmatpush1.bf16.msra.mxu0 %v7417
        %7586 = vmatprep.subr.bf16.mxu0 0
        %7587 = vmatpush1.bf16.msra.mxu0 %v7416
        %7588 = vmatprep.subr.bf16.mxu0 0
        %7589 = vmatpush1.bf16.msra.mxu0 %v7415
        %7590 = vmatprep.subr.bf16.mxu0 0
        %7591 = vmatpush1.bf16.msra.mxu0 %v7414
        %7592 = vmatprep.subr.bf16.mxu0 0
        %7593 = vmatpush1.bf16.msra.mxu0 %v7413
        %7594 = vmatprep.subr.bf16.mxu0 0
        %7595 = vmatpush1.bf16.msra.mxu0 %v7412
        %7596 = vmatprep.subr.bf16.mxu0 0
        %7597 = vmatpush2.bf16.msra.mxu0 %v7427
        %7598 = vmatprep.subr.bf16.mxu0 0
        %7599 = vmatpush2.bf16.msra.mxu0 %v7426
        %7600 = vmatprep.subr.bf16.mxu0 0
        %7601 = vmatpush2.bf16.msra.mxu0 %v7425
        %7602 = vmatprep.subr.bf16.mxu0 0
        %7603 = vmatpush2.bf16.msra.mxu0 %v7424
        %7604 = vmatprep.subr.bf16.mxu0 0
        %7605 = vmatpush2.bf16.msra.mxu0 %v7423
        %7606 = vmatprep.subr.bf16.mxu0 0
        %7607 = vmatpush2.bf16.msra.mxu0 %v7422
        %7608 = vmatprep.subr.bf16.mxu0 0
        %7609 = vmatpush2.bf16.msra.mxu0 %v7421
        %7610 = vmatprep.subr.bf16.mxu0 0
        %7611 = vmatpush2.bf16.msra.mxu0 %v7420
        %7612 = vmatprep.mubr.bf16.mxu0 %v6957
        %7613 = vmatmul.mubr.bf16.gmra.mxu0 %v6956
        %v7614 = vpop.f32.mrf.mxu0
        %v7615 = vadd.f32 %v7575, %v7614
        %v7616 = vpop.f32.mrf.mxu0
        %v7617 = vpop.f32.mrf.mxu0
        %v7618 = vpop.f32.mrf.mxu0
        %7619 = vdwg.mxu0
        %7620 = vmatprep.subr.bf16.mxu0 0
        %7621 = vmatpush1.bf16.msra.mxu0 %v7435
        %7622 = vmatprep.subr.bf16.mxu0 0
        %7623 = vmatpush1.bf16.msra.mxu0 %v7434
        %7624 = vmatprep.subr.bf16.mxu0 0
        %7625 = vmatpush1.bf16.msra.mxu0 %v7433
        %7626 = vmatprep.subr.bf16.mxu0 0
        %7627 = vmatpush1.bf16.msra.mxu0 %v7432
        %7628 = vmatprep.subr.bf16.mxu0 0
        %7629 = vmatpush1.bf16.msra.mxu0 %v7431
        %7630 = vmatprep.subr.bf16.mxu0 0
        %7631 = vmatpush1.bf16.msra.mxu0 %v7430
        %7632 = vmatprep.subr.bf16.mxu0 0
        %7633 = vmatpush1.bf16.msra.mxu0 %v7429
        %7634 = vmatprep.subr.bf16.mxu0 0
        %7635 = vmatpush1.bf16.msra.mxu0 %v7428
        %7636 = vmatprep.subr.bf16.mxu0 0
        %7637 = vmatpush2.bf16.msra.mxu0 %v7443
        %7638 = vmatprep.subr.bf16.mxu0 0
        %7639 = vmatpush2.bf16.msra.mxu0 %v7442
        %7640 = vmatprep.subr.bf16.mxu0 0
        %7641 = vmatpush2.bf16.msra.mxu0 %v7441
        %7642 = vmatprep.subr.bf16.mxu0 0
        %7643 = vmatpush2.bf16.msra.mxu0 %v7440
        %7644 = vmatprep.subr.bf16.mxu0 0
        %7645 = vmatpush2.bf16.msra.mxu0 %v7439
        %7646 = vmatprep.subr.bf16.mxu0 0
        %7647 = vmatpush2.bf16.msra.mxu0 %v7438
        %7648 = vmatprep.subr.bf16.mxu0 0
        %7649 = vmatpush2.bf16.msra.mxu0 %v7437
        %7650 = vmatprep.subr.bf16.mxu0 0
        %7651 = vmatpush2.bf16.msra.mxu0 %v7436
        %7652 = vmatprep.mubr.bf16.mxu0 %v6959
        %7653 = vmatmul.mubr.bf16.gmra.mxu0 %v6958
        %v7654 = vpop.f32.mrf.mxu0
        %v7655 = vadd.f32 %v7615, %v7654
        %v7656 = vpop.f32.mrf.mxu0
        %v7657 = vpop.f32.mrf.mxu0
        %v7658 = vpop.f32.mrf.mxu0
        %7659 = vdwg.mxu0
        %7660 = vmatprep.subr.bf16.mxu0 0
        %7661 = vmatpush1.bf16.msra.mxu0 %v7451
        %7662 = vmatprep.subr.bf16.mxu0 0
        %7663 = vmatpush1.bf16.msra.mxu0 %v7450
        %7664 = vmatprep.subr.bf16.mxu0 0
        %7665 = vmatpush1.bf16.msra.mxu0 %v7449
        %7666 = vmatprep.subr.bf16.mxu0 0
        %7667 = vmatpush1.bf16.msra.mxu0 %v7448
        %7668 = vmatprep.subr.bf16.mxu0 0
        %7669 = vmatpush1.bf16.msra.mxu0 %v7447
        %7670 = vmatprep.subr.bf16.mxu0 0
        %7671 = vmatpush1.bf16.msra.mxu0 %v7446
        %7672 = vmatprep.subr.bf16.mxu0 0
        %7673 = vmatpush1.bf16.msra.mxu0 %v7445
        %7674 = vmatprep.subr.bf16.mxu0 0
        %7675 = vmatpush1.bf16.msra.mxu0 %v7444
        %7676 = vmatprep.subr.bf16.mxu0 0
        %7677 = vmatpush2.bf16.msra.mxu0 %v7459
        %7678 = vmatprep.subr.bf16.mxu0 0
        %7679 = vmatpush2.bf16.msra.mxu0 %v7458
        %7680 = vmatprep.subr.bf16.mxu0 0
        %7681 = vmatpush2.bf16.msra.mxu0 %v7457
        %7682 = vmatprep.subr.bf16.mxu0 0
        %7683 = vmatpush2.bf16.msra.mxu0 %v7456
        %7684 = vmatprep.subr.bf16.mxu0 0
        %7685 = vmatpush2.bf16.msra.mxu0 %v7455
        %7686 = vmatprep.subr.bf16.mxu0 0
        %7687 = vmatpush2.bf16.msra.mxu0 %v7454
        %7688 = vmatprep.subr.bf16.mxu0 0
        %7689 = vmatpush2.bf16.msra.mxu0 %v7453
        %7690 = vmatprep.subr.bf16.mxu0 0
        %7691 = vmatpush2.bf16.msra.mxu0 %v7452
        %7692 = vmatprep.mubr.bf16.mxu0 %v6961
        %7693 = vmatmul.mubr.bf16.gmra.mxu0 %v6960
        %v7694 = vpop.f32.mrf.mxu0
        %v7695 = vadd.f32 %v7655, %v7694
        %v7696 = vpop.f32.mrf.mxu0
        %v7697 = vpop.f32.mrf.mxu0
        %v7698 = vpop.f32.mrf.mxu0
        %7699 = vdwg.mxu0
        %7700 = vmatprep.subr.bf16.mxu0 0
        %7701 = vmatpush1.bf16.msra.mxu0 %v7467
        %7702 = vmatprep.subr.bf16.mxu0 0
        %7703 = vmatpush1.bf16.msra.mxu0 %v7466
        %7704 = vmatprep.subr.bf16.mxu0 0
        %7705 = vmatpush1.bf16.msra.mxu0 %v7465
        %7706 = vmatprep.subr.bf16.mxu0 0
        %7707 = vmatpush1.bf16.msra.mxu0 %v7464
        %7708 = vmatprep.subr.bf16.mxu0 0
        %7709 = vmatpush1.bf16.msra.mxu0 %v7463
        %7710 = vmatprep.subr.bf16.mxu0 0
        %7711 = vmatpush1.bf16.msra.mxu0 %v7462
        %7712 = vmatprep.subr.bf16.mxu0 0
        %7713 = vmatpush1.bf16.msra.mxu0 %v7461
        %7714 = vmatprep.subr.bf16.mxu0 0
        %7715 = vmatpush1.bf16.msra.mxu0 %v7460
        %7716 = vmatprep.subr.bf16.mxu0 0
        %7717 = vmatpush2.bf16.msra.mxu0 0
        %7718 = vmatprep.subr.bf16.mxu0 0
        %7719 = vmatpush2.bf16.msra.mxu0 0
        %7720 = vmatprep.subr.bf16.mxu0 0
        %7721 = vmatpush2.bf16.msra.mxu0 0
        %7722 = vmatprep.subr.bf16.mxu0 0
        %7723 = vmatpush2.bf16.msra.mxu0 0
        %7724 = vmatprep.subr.bf16.mxu0 0
        %7725 = vmatpush2.bf16.msra.mxu0 0
        %7726 = vmatprep.subr.bf16.mxu0 0
        %7727 = vmatpush2.bf16.msra.mxu0 0
        %7728 = vmatprep.subr.bf16.mxu0 0
        %7729 = vmatpush2.bf16.msra.mxu0 0
        %7730 = vmatprep.subr.bf16.mxu0 0
        %7731 = vmatpush2.bf16.msra.mxu0 0
        %7732 = vmatprep.mubr.bf16.mxu0 0
        %7733 = vmatmul.mubr.bf16.gmra.mxu0 %v6962
        %v7734 = vpop.f32.mrf.mxu0
        %v7735 = vadd.f32 %v7695, %v7734
        %v7736 = vpop.f32.mrf.mxu0
        %v7737 = vpop.f32.mrf.mxu0
        %v7738 = vpop.f32.mrf.mxu0
        %7739 = vdwg.mxu0
        %s7740 = scalar_lea.vmem %s308, 2
        %7741 = vst.msk [vmem:[%s7740] sm:$0x3] %vm4023, %v7735
        %s7742 = smul.u32 2, %s21
        %p7743 = scmp.lt.s32.totalorder %s7742, 3
        %s7744 = scalar_select %p7743, %s7742, 3
        %s7745 = smul.addr %s7744, 2
        %s7746 = scalar_lea.vmem %s4, %s7745
        // Predicated region
        $region45: #{model_forward.1} parent=35 // pred_check
          %p7747 = pneg %p143
        $region46: #{model_forward.1} parent=35 // pred_check_branch
          %7749 = sbr.rel (%p7747) target = $region48
        $region47: #{model_forward.1} parent=35 // pred_region
          %s7750 = smul.u32 2, %s21
        $region48: #{model_forward.1} parent=35 // pred_fallthru
          _
      $region36: #{model_forward.1} parent=5 // pred_fallthru
        _
      %p7751 = scmp.le.s32.totalorder 2, %s16
      // Predicated region
      $region49: #{model_forward.1} parent=5 // pred_check
        %p7752 = pneg %p7751
      $region50: #{model_forward.1} parent=5 // pred_check_branch
        %7754 = sbr.rel (%p7752) target = $region52
      $region51: #{model_forward.1} parent=5 // pred_region
        %s7755 = ssub.s32 %s16, 2
        // Predicated region
        $region53: #{model_forward.1} parent=51 // pred_check
          %p7756 = pneg %p149
        $region54: #{model_forward.1} parent=51 // pred_check_branch
          %7758 = sbr.rel (%p7756) target = $region56
        $region55: #{model_forward.1} parent=51 // pred_region
          %s7759 = smul.u32 2, %s22
          %p7760 = scmp.lt.s32.totalorder %s7759, 3
          %s7761 = scalar_select %p7760, %s7759, 3
          %s7762 = smul.addr %s7761, 2
          %s7763 = scalar_lea.vmem %s4, %s7762
        $region56: #{model_forward.1} parent=51 // pred_fallthru
          _
      $region52: #{model_forward.1} parent=5 // pred_fallthru
        _
    $region6: #{model_forward.1} parent=1 // loop_footer
      %s20 = sadd.s32 1, %s16
    $region7: #{model_forward.1} parent=1 // loop_footer_branch
      %15 = sbr.rel target = $region3
    $region8: #{model_forward.1} parent=1 // loop_exit
      _
    %7764 = vsyncpa [#allocation3], 1
    %s7765 = scalar_lea.sflag [#allocation3], 1
    %7766 = vsyncpa %s7765, 1
    %7767 = vsyncpa [#allocation5], 1
    %s7768 = scalar_lea.sflag [#allocation5], 1
    %7769 = vsyncpa %s7768, 1

</llo_original>
